<compile_context>
chip_gen: v7x
topology: tpu7x:2x2x1
jax: 0.10.0
libtpu: 0.0.40
codegen_flags: <defaults>
</compile_context>

<pallas_src>
import functools

import numpy as np
import jax
import jax.numpy as jnp
from jax.experimental import pallas as pl
from jax.experimental.pallas import tpu as pltpu

POOL_HW = 32                 # AdaptiveAvgPool2d((32, 32))
OP = POOL_HW * POOL_HW       # 1024 pooled positions (lane axis of the maps)
FEAT_C = 512                 # resnet18 final channel count
STEM_PATCH = 16              # stand-in backbone downsample factor
HEAD_PAD = 8                 # 2 decoder heads padded to 8 sublanes
PAD_LANES = 128              # class_num padded to one lane tile


# ----------------------------- Pallas kernel -------------------------------

def fused_kernel(xT_ref, w_stemT_ref, b_stemT_ref, w_decT_ref, b_decT_ref,
                 pmat_bd_ref, w_fc_ref, b_fc_ref, maps_ref, bin_ref):
    # xT:      (patch_dim, Bt*S)   bf16  -- Bt images folded onto lanes
    # w_stemT: (512, patch_dim)    bf16
    # b_stemT: (512, 1)            f32
    # w_decT:  (8, 512)            bf16  -- row 0 = ir conv, row 1 = depth conv
    # b_decT:  (8, 1)              f32
    # pmat_bd: (Bt*S, Bt*OP)       bf16  -- kron(I_Bt, adaptive-pool matrix^T)
    # w_fc:    (2*OP, 128)         bf16  -- fc weight transposed, lane-padded
    # b_fc:    (1, 128)            f32
    # maps:    (Bt, 8, OP)         f32   -- rows 0/1 = sigmoid(pooled ir/depth)
    # bin:     (Bt, 1, 128)        f32
    bt = maps_ref.shape[0]

    # --- stand-in backbone stem: relu(W_stem @ patches + b) -> (512, Bt*S) ---
    featT = jnp.dot(w_stemT_ref[...], xT_ref[...],
                    preferred_element_type=jnp.float32)
    featT = jnp.maximum(featT + b_stemT_ref[...], 0.0)

    # --- decoder 1x1 convs FIRST (K=512 contraction on the MXU) -> (8, Bt*S) --
    zT = jnp.dot(w_decT_ref[...], featT.astype(jnp.bfloat16),
                 preferred_element_type=jnp.float32) + b_decT_ref[...]

    # --- per-image adaptive avg pool (block-diagonal, row-stochastic matrix)
    #     then sigmoid -> (8, Bt*OP); all slices below are 128-lane aligned ---
    pooled = jnp.dot(zT.astype(jnp.bfloat16), pmat_bd_ref[...],
                     preferred_element_type=jnp.float32)
    maps_sig = jax.nn.sigmoid(pooled)            # f32 sigmoid (v5e-safe)

    for b in range(bt):                          # static, tiny trip count
        sl = maps_sig[:, b * OP:(b + 1) * OP]    # (8, OP), OP-aligned lanes
        maps_ref[b] = sl
        # cat((ir, depth)) + flatten + fc + sigmoid, as ONE dot per image
        fc_in = jnp.concatenate([sl[0:1, :], sl[1:2, :]], axis=1)   # (1, 2*OP)
        logits = jnp.dot(fc_in.astype(jnp.bfloat16), w_fc_ref[...],
                         preferred_element_type=jnp.float32) + b_fc_ref[...]
        bin_ref[b] = jax.nn.sigmoid(logits)


# ------------------------------ helpers ------------------------------------

def adaptive_pool_matrix(in_size, out_size):
    """Row-stochastic matrix reproducing torch AdaptiveAvgPool1d semantics."""
    P = np.zeros((out_size, in_size), np.float32)
    for i in range(out_size):
        start = (i * in_size) // out_size
        end = -(-((i + 1) * in_size) // out_size)   # ceil
        P[i, start:end] = 1.0 / (end - start)
    return P


def pick_batch_tile(batch, s):
    """Smallest batch tile whose lane count Bt*S is a multiple of 128.

    Keeps at least a few grid steps when possible (v7x megacore sharding)
    while making the stem/decoder matmuls lane-dense on v5e/v6e/v7x.
    """
    for bt in range(1, batch + 1):
        if batch % bt == 0 and (bt * s) % 128 == 0 and bt * s <= 1024:
            return bt
    return batch          # fall back: one tile spanning the whole batch


def init_params(key, class_num):
    ks = jax.random.split(key, 8)
    patch_dim = 3 * STEM_PATCH * STEM_PATCH

    # Stand-in backbone stem (see TODO above): patchify conv 3->512, bf16.
    w_stemT = (jax.random.normal(ks[0], (FEAT_C, patch_dim), jnp.float32)
               * 0.02).astype(jnp.bfloat16)
    b_stemT = jax.random.normal(ks[1], (FEAT_C, 1), jnp.float32) * 0.02

    # decoder_ir / decoder_depth 1x1 convs (512 -> 1), heads on sublanes
    w_ir = jax.random.normal(ks[2], (FEAT_C,), jnp.float32) * 0.05
    w_dp = jax.random.normal(ks[3], (FEAT_C,), jnp.float32) * 0.05
    b_ir = jax.random.normal(ks[4], (), jnp.float32) * 0.05
    b_dp = jax.random.normal(ks[5], (), jnp.float32) * 0.05
    w_decT = jnp.zeros((HEAD_PAD, FEAT_C), jnp.float32)
    w_decT = w_decT.at[0].set(w_ir).at[1].set(w_dp).astype(jnp.bfloat16)
    b_decT = jnp.zeros((HEAD_PAD, 1), jnp.float32)
    b_decT = b_decT.at[0, 0].set(b_ir).at[1, 0].set(b_dp)

    # fc: (2*32*32) -> class_num, stored transposed, lane-padded to 128, bf16.
    # NOTE: assumes class_num <= PAD_LANES.
    fc_in = 2 * OP
    w_fc_real = jax.random.normal(ks[6], (fc_in, class_num), jnp.float32) * 0.02
    b_fc_real = jax.random.normal(ks[7], (class_num,), jnp.float32) * 0.02
    w_fc = jnp.zeros((fc_in, PAD_LANES), jnp.float32)
    w_fc = w_fc.at[:, :class_num].set(w_fc_real).astype(jnp.bfloat16)
    b_fc = jnp.zeros((1, PAD_LANES), jnp.float32).at[0, :class_num].set(b_fc_real)

    return dict(w_stemT=w_stemT, b_stemT=b_stemT, w_decT=w_decT, b_decT=b_decT,
                w_fc=w_fc, b_fc=b_fc)


# ------------------------------ forward ------------------------------------

@functools.partial(jax.jit, static_argnums=(2,))
def surf_deeppix_forward(img_rgb, params, class_num):
    B, C, H, W = img_rgb.shape
    P = STEM_PATCH
    Hf, Wf = H // P, W // P
    S = Hf * Wf
    patch_dim = C * P * P
    Bt = pick_batch_tile(B, S)
    num_tiles = B // Bt

    # Patchify to (patch_dim, B*S): cast to bf16 FIRST so the materialised
    # transposed buffer is bf16.  Columns are ordered (b, hf, wf) so a batch
    # tile is a contiguous lane slab.
    x = img_rgb.astype(jnp.bfloat16)
    x = x.reshape(B, C, Hf, P, Wf, P).transpose(1, 3, 5, 0, 2, 4)
    xT = x.reshape(patch_dim, B * S)

    # Per-image adaptive-avg-pool matrix (transposed) and its per-tile
    # block-diagonal version kron(I_Bt, pmatT), stored in bf16.
    Ph = adaptive_pool_matrix(Hf, POOL_HW)
    Pw = adaptive_pool_matrix(Wf, POOL_HW)
    pmatT = np.einsum("oh,pw->ophw", Ph, Pw).reshape(OP, S).T
    pmat_bd = jnp.asarray(np.kron(np.eye(Bt, dtype=np.float32), pmatT),
                          dtype=jnp.bfloat16)

    # Grid-invariant weight specs keep the default double-buffering here
    # (~2.3 MiB extra VMEM, comfortably inside every generation's scoped
    # limit at these shapes); pin them single-buffered once the real
    # resnet18_se weights are substituted.
    maps, bin_pad = pl.pallas_call(
        fused_kernel,
        out_shape=(jax.ShapeDtypeStruct((B, HEAD_PAD, OP), jnp.float32),
                   jax.ShapeDtypeStruct((B, 1, PAD_LANES), jnp.float32)),
        grid=(num_tiles,),
        in_specs=[
            pl.BlockSpec((patch_dim, Bt * S), lambda t: (0, t)),
            pl.BlockSpec((FEAT_C, patch_dim), lambda t: (0, 0)),
            pl.BlockSpec((FEAT_C, 1), lambda t: (0, 0)),
            pl.BlockSpec((HEAD_PAD, FEAT_C), lambda t: (0, 0)),
            pl.BlockSpec((HEAD_PAD, 1), lambda t: (0, 0)),
            pl.BlockSpec((Bt * S, Bt * OP), lambda t: (0, 0)),
            pl.BlockSpec((2 * OP, PAD_LANES), lambda t: (0, 0)),
            pl.BlockSpec((1, PAD_LANES), lambda t: (0, 0)),
        ],
        out_specs=[
            pl.BlockSpec((Bt, HEAD_PAD, OP), lambda t: (t, 0, 0)),
            pl.BlockSpec((Bt, 1, PAD_LANES), lambda t: (t, 0, 0)),
        ],
        compiler_params=pltpu.CompilerParams(
            dimension_semantics=("parallel",)),
    )(xT, params["w_stemT"], params["b_stemT"], params["w_decT"],
      params["b_decT"], pmat_bd, params["w_fc"], params["b_fc"])

    ir_out = maps[:, 0, :].reshape(B, 1, POOL_HW, POOL_HW)
    depth_out = maps[:, 1, :].reshape(B, 1, POOL_HW, POOL_HW)
    binary_out = bin_pad[:, 0, :class_num]
    return ir_out, depth_out, binary_out


# ------------------------------- main ---------------------------------------

if __name__ == "__main__":
    class_num = 2
    key = jax.random.PRNGKey(0)
    k_img, k_param = jax.random.split(key)

    # B=4 RGB images, 128x128 -> 8x8 backbone features (downsample 16).
    # Batch tile Bt=2 folds two images into 128 matmul lanes per grid step,
    # giving grid=(2,) ("parallel" -> one tile per TensorCore on v7x).
    img_rgb = jax.random.normal(k_img, (4, 3, 128, 128), jnp.float32)
    params = init_params(k_param, class_num)

    ir_out, depth_out, binary_out = surf_deeppix_forward(img_rgb, params,
                                                         class_num)
    jax.block_until_ready((ir_out, depth_out, binary_out))

    assert ir_out.shape == (4, 1, 32, 32)
    assert depth_out.shape == (4, 1, 32, 32)
    assert binary_out.shape == (4, class_num)
    assert bool(jnp.all(jnp.isfinite(ir_out)))
    assert bool(jnp.all(jnp.isfinite(depth_out)))
    assert bool(jnp.all(jnp.isfinite(binary_out)))
    print("KERNEL_OK")
</pallas_src>

<mosaic_0001>
module attributes {stable_mosaic.version = 11 : i64} {
  func.func @fused_kernel(%arg0: i32, %arg1: memref<768x128xbf16, #tpu.memory_space<vmem>>, %arg2: memref<512x768xbf16, #tpu.memory_space<vmem>>, %arg3: memref<512x1xf32, #tpu.memory_space<vmem>>, %arg4: memref<8x512xbf16, #tpu.memory_space<vmem>>, %arg5: memref<8x1xf32, #tpu.memory_space<vmem>>, %arg6: memref<128x2048xbf16, #tpu.memory_space<vmem>>, %arg7: memref<2048x128xbf16, #tpu.memory_space<vmem>>, %arg8: memref<1x128xf32, #tpu.memory_space<vmem>>, %arg9: memref<2x8x1024xf32, #tpu.memory_space<vmem>>, %arg10: memref<2x1x128xf32, #tpu.memory_space<vmem>>) attributes {dimension_semantics = [#tpu.dimension_semantics<parallel>], iteration_bounds = array<i64: 2>, scalar_prefetch = 0 : i64, scratch_operands = 0 : i64, tpu.core_type = #tpu.core_type<tc>, window_params = [{transform_indices = @transform_0, window_bounds = array<i64: 768, 128>}, {pipeline_mode = #tpu.pipeline_mode<synchronous>, transform_indices = @transform_1, window_bounds = array<i64: 512, 768>}, {pipeline_mode = #tpu.pipeline_mode<synchronous>, transform_indices = @transform_2, window_bounds = array<i64: 512, 1>}, {pipeline_mode = #tpu.pipeline_mode<synchronous>, transform_indices = @transform_3, window_bounds = array<i64: 8, 512>}, {pipeline_mode = #tpu.pipeline_mode<synchronous>, transform_indices = @transform_4, window_bounds = array<i64: 8, 1>}, {pipeline_mode = #tpu.pipeline_mode<synchronous>, transform_indices = @transform_5, window_bounds = array<i64: 128, 2048>}, {pipeline_mode = #tpu.pipeline_mode<synchronous>, transform_indices = @transform_6, window_bounds = array<i64: 2048, 128>}, {pipeline_mode = #tpu.pipeline_mode<synchronous>, transform_indices = @transform_7, window_bounds = array<i64: 1, 128>}, {transform_indices = @transform_8, window_bounds = array<i64: 2, 8, 1024>}, {transform_indices = @transform_9, window_bounds = array<i64: 2, 1, 128>}]} {
    %c0 = arith.constant 0 : index
    %c0_0 = arith.constant 0 : index
    %0 = vector.load %arg2[%c0, %c0_0] : memref<512x768xbf16, #tpu.memory_space<vmem>>, vector<512x768xbf16>
    %c0_1 = arith.constant 0 : index
    %c0_2 = arith.constant 0 : index
    %1 = vector.load %arg1[%c0_1, %c0_2] : memref<768x128xbf16, #tpu.memory_space<vmem>>, vector<768x128xbf16>
    %cst = arith.constant dense<0.000000e+00> : vector<512x128xf32>
    %2 = tpu.matmul %0, %1, %cst {dimension_numbers = #tpu.dot_dimension_numbers<[1], [0], [0], [1], [0, 0, 1, 1], [], []>} : vector<512x768xbf16>, vector<768x128xbf16>, vector<512x128xf32> -> vector<512x128xf32>
    %c0_3 = arith.constant 0 : index
    %c0_4 = arith.constant 0 : index
    %3 = vector.load %arg3[%c0_3, %c0_4] : memref<512x1xf32, #tpu.memory_space<vmem>>, vector<512x1xf32>
    %4 = vector.broadcast %3 : vector<512x1xf32> to vector<512x128xf32>
    %5 = arith.addf %2, %4 : vector<512x128xf32>
    %cst_5 = arith.constant 0.000000e+00 : f32
    %6 = vector.broadcast %cst_5 : f32 to vector<512x128xf32>
    %7 = arith.maximumf %5, %6 : vector<512x128xf32>
    %c0_6 = arith.constant 0 : index
    %c0_7 = arith.constant 0 : index
    %8 = vector.load %arg4[%c0_6, %c0_7] : memref<8x512xbf16, #tpu.memory_space<vmem>>, vector<8x512xbf16>
    %9 = arith.truncf %7 : vector<512x128xf32> to vector<512x128xbf16>
    %cst_8 = arith.constant dense<0.000000e+00> : vector<8x128xf32>
    %10 = tpu.matmul %8, %9, %cst_8 {dimension_numbers = #tpu.dot_dimension_numbers<[1], [0], [0], [1], [0, 0, 1, 1], [], []>} : vector<8x512xbf16>, vector<512x128xbf16>, vector<8x128xf32> -> vector<8x128xf32>
    %c0_9 = arith.constant 0 : index
    %c0_10 = arith.constant 0 : index
    %11 = vector.load %arg5[%c0_9, %c0_10] : memref<8x1xf32, #tpu.memory_space<vmem>>, vector<8x1xf32>
    %12 = vector.broadcast %11 : vector<8x1xf32> to vector<8x128xf32>
    %13 = arith.addf %10, %12 : vector<8x128xf32>
    %14 = arith.truncf %13 : vector<8x128xf32> to vector<8x128xbf16>
    %c0_11 = arith.constant 0 : index
    %c0_12 = arith.constant 0 : index
    %15 = vector.load %arg6[%c0_11, %c0_12] : memref<128x2048xbf16, #tpu.memory_space<vmem>>, vector<128x2048xbf16>
    %cst_13 = arith.constant dense<0.000000e+00> : vector<8x2048xf32>
    %16 = tpu.matmul %14, %15, %cst_13 {dimension_numbers = #tpu.dot_dimension_numbers<[1], [0], [0], [1], [0, 0, 1, 1], [], []>} : vector<8x128xbf16>, vector<128x2048xbf16>, vector<8x2048xf32> -> vector<8x2048xf32>
    %17 = arith.negf %16 : vector<8x2048xf32>
    %18 = math.exp %17 : vector<8x2048xf32>
    %cst_14 = arith.constant 1.000000e+00 : f32
    %19 = vector.broadcast %cst_14 : f32 to vector<8x2048xf32>
    %20 = arith.addf %19, %18 : vector<8x2048xf32>
    %21 = arith.divf %19, %20 : vector<8x2048xf32>
    %22 = vector.extract_strided_slice %21 {offsets = [0, 0], sizes = [8, 1024], strides = [1, 1]} : vector<8x2048xf32> to vector<8x1024xf32>
    %c0_15 = arith.constant 0 : index
    %c0_16 = arith.constant 0 : index
    %c0_17 = arith.constant 0 : index
    %23 = vector.load %arg9[%c0_15, %c0_16, %c0_17] : memref<2x8x1024xf32, #tpu.memory_space<vmem>>, vector<1x8x1024xf32>
    %24 = vector.shape_cast %23 : vector<1x8x1024xf32> to vector<8x1024xf32>
    %25 = vector.shape_cast %22 : vector<8x1024xf32> to vector<1x8x1024xf32>
    tpu.vector_store %arg9[%c0_15, %c0_16, %c0_17], %25 {strides = array<i32>} : memref<2x8x1024xf32, #tpu.memory_space<vmem>>, vector<1x8x1024xf32>,
    %26 = vector.extract_strided_slice %22 {offsets = [0, 0], sizes = [1, 1024], strides = [1, 1]} : vector<8x1024xf32> to vector<1x1024xf32>
    %27 = vector.extract_strided_slice %22 {offsets = [1, 0], sizes = [1, 1024], strides = [1, 1]} : vector<8x1024xf32> to vector<1x1024xf32>
    %28 = tpu.concatenate %26, %27 in 1 : vector<1x1024xf32>, vector<1x1024xf32> -> vector<1x2048xf32>
    %29 = arith.truncf %28 : vector<1x2048xf32> to vector<1x2048xbf16>
    %c0_18 = arith.constant 0 : index
    %c0_19 = arith.constant 0 : index
    %30 = vector.load %arg7[%c0_18, %c0_19] : memref<2048x128xbf16, #tpu.memory_space<vmem>>, vector<2048x128xbf16>
    %cst_20 = arith.constant dense<0.000000e+00> : vector<1x128xf32>
    %31 = tpu.matmul %29, %30, %cst_20 {dimension_numbers = #tpu.dot_dimension_numbers<[1], [0], [0], [1], [0, 0, 1, 1], [], []>} : vector<1x2048xbf16>, vector<2048x128xbf16>, vector<1x128xf32> -> vector<1x128xf32>
    %c0_21 = arith.constant 0 : index
    %c0_22 = arith.constant 0 : index
    %32 = vector.load %arg8[%c0_21, %c0_22] : memref<1x128xf32, #tpu.memory_space<vmem>>, vector<1x128xf32>
    %33 = arith.addf %31, %32 : vector<1x128xf32>
    %34 = arith.negf %33 : vector<1x128xf32>
    %35 = math.exp %34 : vector<1x128xf32>
    %cst_23 = arith.constant 1.000000e+00 : f32
    %36 = vector.broadcast %cst_23 : f32 to vector<1x128xf32>
    %37 = arith.addf %36, %35 : vector<1x128xf32>
    %38 = arith.divf %36, %37 : vector<1x128xf32>
    %c0_24 = arith.constant 0 : index
    %c0_25 = arith.constant 0 : index
    %c0_26 = arith.constant 0 : index
    %39 = vector.load %arg10[%c0_24, %c0_25, %c0_26] : memref<2x1x128xf32, #tpu.memory_space<vmem>>, vector<1x1x128xf32>
    %40 = vector.shape_cast %39 : vector<1x1x128xf32> to vector<1x128xf32>
    %41 = vector.shape_cast %38 : vector<1x128xf32> to vector<1x1x128xf32>
    tpu.vector_store %arg10[%c0_24, %c0_25, %c0_26], %41 {strides = array<i32>} : memref<2x1x128xf32, #tpu.memory_space<vmem>>, vector<1x1x128xf32>,
    %42 = vector.extract_strided_slice %21 {offsets = [0, 1024], sizes = [8, 1024], strides = [1, 1]} : vector<8x2048xf32> to vector<8x1024xf32>
    %c1 = arith.constant 1 : index
    %c0_27 = arith.constant 0 : index
    %c0_28 = arith.constant 0 : index
    %43 = vector.load %arg9[%c1, %c0_27, %c0_28] : memref<2x8x1024xf32, #tpu.memory_space<vmem>>, vector<1x8x1024xf32>
    %44 = vector.shape_cast %43 : vector<1x8x1024xf32> to vector<8x1024xf32>
    %45 = vector.shape_cast %42 : vector<8x1024xf32> to vector<1x8x1024xf32>
    tpu.vector_store %arg9[%c1, %c0_27, %c0_28], %45 {strides = array<i32>} : memref<2x8x1024xf32, #tpu.memory_space<vmem>>, vector<1x8x1024xf32>,
    %46 = vector.extract_strided_slice %42 {offsets = [0, 0], sizes = [1, 1024], strides = [1, 1]} : vector<8x1024xf32> to vector<1x1024xf32>
    %47 = vector.extract_strided_slice %42 {offsets = [1, 0], sizes = [1, 1024], strides = [1, 1]} : vector<8x1024xf32> to vector<1x1024xf32>
    %48 = tpu.concatenate %46, %47 in 1 : vector<1x1024xf32>, vector<1x1024xf32> -> vector<1x2048xf32>
    %49 = arith.truncf %48 : vector<1x2048xf32> to vector<1x2048xbf16>
    %c0_29 = arith.constant 0 : index
    %c0_30 = arith.constant 0 : index
    %50 = vector.load %arg7[%c0_29, %c0_30] : memref<2048x128xbf16, #tpu.memory_space<vmem>>, vector<2048x128xbf16>
    %cst_31 = arith.constant dense<0.000000e+00> : vector<1x128xf32>
    %51 = tpu.matmul %49, %50, %cst_31 {dimension_numbers = #tpu.dot_dimension_numbers<[1], [0], [0], [1], [0, 0, 1, 1], [], []>} : vector<1x2048xbf16>, vector<2048x128xbf16>, vector<1x128xf32> -> vector<1x128xf32>
    %c0_32 = arith.constant 0 : index
    %c0_33 = arith.constant 0 : index
    %52 = vector.load %arg8[%c0_32, %c0_33] : memref<1x128xf32, #tpu.memory_space<vmem>>, vector<1x128xf32>
    %53 = arith.addf %51, %52 : vector<1x128xf32>
    %54 = arith.negf %53 : vector<1x128xf32>
    %55 = math.exp %54 : vector<1x128xf32>
    %cst_34 = arith.constant 1.000000e+00 : f32
    %56 = vector.broadcast %cst_34 : f32 to vector<1x128xf32>
    %57 = arith.addf %56, %55 : vector<1x128xf32>
    %58 = arith.divf %56, %57 : vector<1x128xf32>
    %c1_35 = arith.constant 1 : index
    %c0_36 = arith.constant 0 : index
    %c0_37 = arith.constant 0 : index
    %59 = vector.load %arg10[%c1_35, %c0_36, %c0_37] : memref<2x1x128xf32, #tpu.memory_space<vmem>>, vector<1x1x128xf32>
    %60 = vector.shape_cast %59 : vector<1x1x128xf32> to vector<1x128xf32>
    %61 = vector.shape_cast %58 : vector<1x128xf32> to vector<1x1x128xf32>
    tpu.vector_store %arg10[%c1_35, %c0_36, %c0_37], %61 {strides = array<i32>} : memref<2x1x128xf32, #tpu.memory_space<vmem>>, vector<1x1x128xf32>,
    return
  }
  func.func @transform_0(%arg0: i32) -> (i32, i32) {
    %c0_i32 = arith.constant 0 : i32
    %c0_i32_0 = arith.constant 0 : i32
    return %c0_i32, %arg0 : i32, i32
  }
  func.func @transform_1(%arg0: i32) -> (i32, i32) {
    %c0_i32 = arith.constant 0 : i32
    %c0_i32_0 = arith.constant 0 : i32
    %c0_i32_1 = arith.constant 0 : i32
    return %c0_i32, %c0_i32_0 : i32, i32
  }
  func.func @transform_2(%arg0: i32) -> (i32, i32) {
    %c0_i32 = arith.constant 0 : i32
    %c0_i32_0 = arith.constant 0 : i32
    %c0_i32_1 = arith.constant 0 : i32
    return %c0_i32, %c0_i32_0 : i32, i32
  }
  func.func @transform_3(%arg0: i32) -> (i32, i32) {
    %c0_i32 = arith.constant 0 : i32
    %c0_i32_0 = arith.constant 0 : i32
    %c0_i32_1 = arith.constant 0 : i32
    return %c0_i32, %c0_i32_0 : i32, i32
  }
  func.func @transform_4(%arg0: i32) -> (i32, i32) {
    %c0_i32 = arith.constant 0 : i32
    %c0_i32_0 = arith.constant 0 : i32
    %c0_i32_1 = arith.constant 0 : i32
    return %c0_i32, %c0_i32_0 : i32, i32
  }
  func.func @transform_5(%arg0: i32) -> (i32, i32) {
    %c0_i32 = arith.constant 0 : i32
    %c0_i32_0 = arith.constant 0 : i32
    %c0_i32_1 = arith.constant 0 : i32
    return %c0_i32, %c0_i32_0 : i32, i32
  }
  func.func @transform_6(%arg0: i32) -> (i32, i32) {
    %c0_i32 = arith.constant 0 : i32
    %c0_i32_0 = arith.constant 0 : i32
    %c0_i32_1 = arith.constant 0 : i32
    return %c0_i32, %c0_i32_0 : i32, i32
  }
  func.func @transform_7(%arg0: i32) -> (i32, i32) {
    %c0_i32 = arith.constant 0 : i32
    %c0_i32_0 = arith.constant 0 : i32
    %c0_i32_1 = arith.constant 0 : i32
    return %c0_i32, %c0_i32_0 : i32, i32
  }
  func.func @transform_8(%arg0: i32) -> (i32, i32, i32) {
    %c0_i32 = arith.constant 0 : i32
    %c0_i32_0 = arith.constant 0 : i32
    %c0_i32_1 = arith.constant 0 : i32
    return %arg0, %c0_i32, %c0_i32_0 : i32, i32, i32
  }
  func.func @transform_9(%arg0: i32) -> (i32, i32, i32) {
    %c0_i32 = arith.constant 0 : i32
    %c0_i32_0 = arith.constant 0 : i32
    %c0_i32_1 = arith.constant 0 : i32
    return %arg0, %c0_i32, %c0_i32_0 : i32, i32, i32
  }
}

</mosaic_0001>

<llo_original>
// kernel: squeeze.3
$region0: #{squeeze.3}
  %s0 = inlined_call_operand.vmem [shape: f32[4,1024], index: 0, kind: input, shape index: {}]
  %s1 = inlined_call_operand.hbm [shape: f32[4,1,32,32], index: 1, kind: output, shape index: {}]
  $region1: #{squeeze.3} parent=0
    #allocation0 [shape = 'u8[65536]{0}', space=vmem, size = 0x10000, scoped, tag = 'operand span for operand 1']
    #allocation1 [shape = 's32[1]{0}', space=sflag, size = 0x4, scoped, tag = 'scoped memory for squeeze.3']
    #allocation2 [shape = 'u8[32768]{0}', space=vmem, size = 0x8000, scoped, tag = 'scoped mem for input reshape']
    %2 = vsyncpa [#allocation1], 0
    %s4 = sshllo.u32 0, 4
    %s5 = smul.addr 4, 7
    %s6 = scalar_lea.vmem %s0, %s5
    %v7 = vld [vmem:[%s6] sm:%s4]
    %s8 = scalar_lea.vmem [#allocation2], 56
    %9 = vst [vmem:[%s8] sm:%s4] %v7
    %s10 = smul.addr 4, 6
    %s11 = scalar_lea.vmem %s0, %s10
    %v12 = vld [vmem:[%s11] sm:%s4]
    %s13 = scalar_lea.vmem [#allocation2], 48
    %14 = vst [vmem:[%s13] sm:%s4] %v12
    %s15 = smul.addr 4, 5
    %s16 = scalar_lea.vmem %s0, %s15
    %v17 = vld [vmem:[%s16] sm:%s4]
    %s18 = scalar_lea.vmem [#allocation2], 40
    %19 = vst [vmem:[%s18] sm:%s4] %v17
    %s20 = smul.addr 4, 4
    %s21 = scalar_lea.vmem %s0, %s20
    %v22 = vld [vmem:[%s21] sm:%s4]
    %s23 = scalar_lea.vmem [#allocation2], 32
    %24 = vst [vmem:[%s23] sm:%s4] %v22
    %s25 = smul.addr 4, 3
    %s26 = scalar_lea.vmem %s0, %s25
    %v27 = vld [vmem:[%s26] sm:%s4]
    %s28 = scalar_lea.vmem [#allocation2], 24
    %29 = vst [vmem:[%s28] sm:%s4] %v27
    %s30 = smul.addr 4, 2
    %s31 = scalar_lea.vmem %s0, %s30
    %v32 = vld [vmem:[%s31] sm:%s4]
    %s33 = scalar_lea.vmem [#allocation2], 16
    %34 = vst [vmem:[%s33] sm:%s4] %v32
    %s35 = scalar_lea.vmem %s0, 4
    %v36 = vld [vmem:[%s35] sm:%s4]
    %s37 = scalar_lea.vmem [#allocation2], 8
    %38 = vst [vmem:[%s37] sm:%s4] %v36
    %v39 = vld [vmem:[%s0] sm:%s4]
    %40 = vst [vmem:[#allocation2] sm:%s4] %v39
    %v41 = vld [vmem:[#allocation2] sm:$0xf]
    %vm42 = vcmask 261120
    %43 = vst.msk [vmem:[#allocation0] sm:$0x1] %vm42, %v41
    %s44 = scalar_lea.vmem [#allocation0], 31
    %45 = vst.msk [vmem:[%s44] sm:$0x2] %vm42, %v41
    %s46 = scalar_lea.vmem [#allocation0], 62
    %47 = vst.msk [vmem:[%s46] sm:$0x4] %vm42, %v41
    %s48 = scalar_lea.vmem [#allocation0], 93
    %49 = vst.msk [vmem:[%s48] sm:$0x8] %vm42, %v41
    %s50 = scalar_lea.vmem [#allocation2], 8
    %v51 = vld [vmem:[%s50] sm:$0xf]
    %vm52 = vcmask 261120
    %s53 = scalar_lea.vmem [#allocation0], 4
    %54 = vst.msk [vmem:[%s53] sm:$0x1] %vm52, %v51
    %s55 = scalar_lea.vmem [#allocation0], 35
    %56 = vst.msk [vmem:[%s55] sm:$0x2] %vm52, %v51
    %s57 = scalar_lea.vmem [#allocation0], 66
    %58 = vst.msk [vmem:[%s57] sm:$0x4] %vm52, %v51
    %s59 = scalar_lea.vmem [#allocation0], 97
    %60 = vst.msk [vmem:[%s59] sm:$0x8] %vm52, %v51
    %s61 = scalar_lea.vmem [#allocation2], 16
    %v62 = vld [vmem:[%s61] sm:$0xf]
    %vm63 = vcmask 261120
    %s64 = scalar_lea.vmem [#allocation0], 8
    %65 = vst.msk [vmem:[%s64] sm:$0x1] %vm63, %v62
    %s66 = scalar_lea.vmem [#allocation0], 39
    %67 = vst.msk [vmem:[%s66] sm:$0x2] %vm63, %v62
    %s68 = scalar_lea.vmem [#allocation0], 70
    %69 = vst.msk [vmem:[%s68] sm:$0x4] %vm63, %v62
    %s70 = scalar_lea.vmem [#allocation0], 101
    %71 = vst.msk [vmem:[%s70] sm:$0x8] %vm63, %v62
    %s72 = scalar_lea.vmem [#allocation2], 24
    %v73 = vld [vmem:[%s72] sm:$0xf]
    %vm74 = vcmask 261120
    %s75 = scalar_lea.vmem [#allocation0], 12
    %76 = vst.msk [vmem:[%s75] sm:$0x1] %vm74, %v73
    %s77 = scalar_lea.vmem [#allocation0], 43
    %78 = vst.msk [vmem:[%s77] sm:$0x2] %vm74, %v73
    %s79 = scalar_lea.vmem [#allocation0], 74
    %80 = vst.msk [vmem:[%s79] sm:$0x4] %vm74, %v73
    %s81 = scalar_lea.vmem [#allocation0], 105
    %82 = vst.msk [vmem:[%s81] sm:$0x8] %vm74, %v73
    %s83 = scalar_lea.vmem [#allocation2], 32
    %v84 = vld [vmem:[%s83] sm:$0xf]
    %vm85 = vcmask 261120
    %s86 = scalar_lea.vmem [#allocation0], 16
    %87 = vst.msk [vmem:[%s86] sm:$0x1] %vm85, %v84
    %s88 = scalar_lea.vmem [#allocation0], 47
    %89 = vst.msk [vmem:[%s88] sm:$0x2] %vm85, %v84
    %s90 = scalar_lea.vmem [#allocation0], 78
    %91 = vst.msk [vmem:[%s90] sm:$0x4] %vm85, %v84
    %s92 = scalar_lea.vmem [#allocation0], 109
    %93 = vst.msk [vmem:[%s92] sm:$0x8] %vm85, %v84
    %s94 = scalar_lea.vmem [#allocation2], 40
    %v95 = vld [vmem:[%s94] sm:$0xf]
    %vm96 = vcmask 261120
    %s97 = scalar_lea.vmem [#allocation0], 20
    %98 = vst.msk [vmem:[%s97] sm:$0x1] %vm96, %v95
    %s99 = scalar_lea.vmem [#allocation0], 51
    %100 = vst.msk [vmem:[%s99] sm:$0x2] %vm96, %v95
    %s101 = scalar_lea.vmem [#allocation0], 82
    %102 = vst.msk [vmem:[%s101] sm:$0x4] %vm96, %v95
    %s103 = scalar_lea.vmem [#allocation0], 113
    %104 = vst.msk [vmem:[%s103] sm:$0x8] %vm96, %v95
    %s105 = scalar_lea.vmem [#allocation2], 48
    %v106 = vld [vmem:[%s105] sm:$0xf]
    %vm107 = vcmask 261120
    %s108 = scalar_lea.vmem [#allocation0], 24
    %109 = vst.msk [vmem:[%s108] sm:$0x1] %vm107, %v106
    %s110 = scalar_lea.vmem [#allocation0], 55
    %111 = vst.msk [vmem:[%s110] sm:$0x2] %vm107, %v106
    %s112 = scalar_lea.vmem [#allocation0], 86
    %113 = vst.msk [vmem:[%s112] sm:$0x4] %vm107, %v106
    %s114 = scalar_lea.vmem [#allocation0], 117
    %115 = vst.msk [vmem:[%s114] sm:$0x8] %vm107, %v106
    %s116 = scalar_lea.vmem [#allocation2], 56
    %v117 = vld [vmem:[%s116] sm:$0xf]
    %vm118 = vcmask 261120
    %s119 = scalar_lea.vmem [#allocation0], 28
    %120 = vst.msk [vmem:[%s119] sm:$0x1] %vm118, %v117
    %s121 = scalar_lea.vmem [#allocation0], 59
    %122 = vst.msk [vmem:[%s121] sm:$0x2] %vm118, %v117
    %s123 = scalar_lea.vmem [#allocation0], 90
    %124 = vst.msk [vmem:[%s123] sm:$0x4] %vm118, %v117
    %s125 = scalar_lea.vmem [#allocation0], 121
    %126 = vst.msk [vmem:[%s125] sm:$0x8] %vm118, %v117
    %v127 = vld [vmem:[#allocation2] ss:$8 sm:$0xf]
    %v128 = vld [vmem:[#allocation2] ss:$8 sm:$0xf0]
    %vm129 = vcmask 1047556
    %v130 = vsel %vm129, %v128, %v127
    %131 = vrot.lane.b32.xlu0 %v130, 96
    %v132 = vpop.permute.xlu0 %131
    %vm133 = vcmask 261120
    %s134 = scalar_lea.vmem [#allocation0], 1
    %135 = vst.msk [vmem:[%s134] ss:$4 sm:$0xff] %vm133, %v132
    %s136 = scalar_lea.vmem [#allocation2], 1
    %v137 = vld [vmem:[%s136] ss:$8 sm:$0xf]
    %s138 = scalar_lea.vmem [#allocation2], 1
    %v139 = vld [vmem:[%s138] ss:$8 sm:$0xf0]
    %vm140 = vcmask 1047556
    %v141 = vsel %vm140, %v139, %v137
    %142 = vrot.lane.b32.xlu0 %v141, 96
    %v143 = vpop.permute.xlu0 %142
    %vm144 = vcmask 261120
    %s145 = scalar_lea.vmem [#allocation0], 33
    %146 = vst.msk [vmem:[%s145] ss:$4 sm:$0xff] %vm144, %v143
    %s147 = scalar_lea.vmem [#allocation2], 2
    %v148 = vld [vmem:[%s147] ss:$8 sm:$0xf]
    %s149 = scalar_lea.vmem [#allocation2], 2
    %v150 = vld [vmem:[%s149] ss:$8 sm:$0xf0]
    %vm151 = vcmask 1047556
    %v152 = vsel %vm151, %v150, %v148
    %153 = vrot.lane.b32.xlu0 %v152, 96
    %v154 = vpop.permute.xlu0 %153
    %vm155 = vcmask 261120
    %s156 = scalar_lea.vmem [#allocation0], 65
    %157 = vst.msk [vmem:[%s156] ss:$4 sm:$0xff] %vm155, %v154
    %s158 = scalar_lea.vmem [#allocation2], 3
    %v159 = vld [vmem:[%s158] ss:$8 sm:$0xf]
    %s160 = scalar_lea.vmem [#allocation2], 3
    %v161 = vld [vmem:[%s160] ss:$8 sm:$0xf0]
    %vm162 = vcmask 1047556
    %v163 = vsel %vm162, %v161, %v159
    %164 = vrot.lane.b32.xlu0 %v163, 96
    %v165 = vpop.permute.xlu0 %164
    %vm166 = vcmask 261120
    %s167 = scalar_lea.vmem [#allocation0], 97
    %168 = vst.msk [vmem:[%s167] ss:$4 sm:$0xff] %vm166, %v165
    %v169 = vld [vmem:[#allocation2] ss:$8 sm:$0xf]
    %v170 = vld [vmem:[#allocation2] ss:$8 sm:$0xf0]
    %vm171 = vcmask 1047556
    %v172 = vsel %vm171, %v170, %v169
    %173 = vrot.lane.b32.xlu0 %v172, 64
    %v174 = vpop.permute.xlu0 %173
    %vm175 = vcmask 261120
    %s176 = scalar_lea.vmem [#allocation0], 2
    %177 = vst.msk [vmem:[%s176] ss:$4 sm:$0xff] %vm175, %v174
    %s178 = scalar_lea.vmem [#allocation2], 1
    %v179 = vld [vmem:[%s178] ss:$8 sm:$0xf]
    %s180 = scalar_lea.vmem [#allocation2], 1
    %v181 = vld [vmem:[%s180] ss:$8 sm:$0xf0]
    %vm182 = vcmask 1047556
    %v183 = vsel %vm182, %v181, %v179
    %184 = vrot.lane.b32.xlu0 %v183, 64
    %v185 = vpop.permute.xlu0 %184
    %vm186 = vcmask 261120
    %s187 = scalar_lea.vmem [#allocation0], 34
    %188 = vst.msk [vmem:[%s187] ss:$4 sm:$0xff] %vm186, %v185
    %s189 = scalar_lea.vmem [#allocation2], 2
    %v190 = vld [vmem:[%s189] ss:$8 sm:$0xf]
    %s191 = scalar_lea.vmem [#allocation2], 2
    %v192 = vld [vmem:[%s191] ss:$8 sm:$0xf0]
    %vm193 = vcmask 1047556
    %v194 = vsel %vm193, %v192, %v190
    %195 = vrot.lane.b32.xlu0 %v194, 64
    %v196 = vpop.permute.xlu0 %195
    %vm197 = vcmask 261120
    %s198 = scalar_lea.vmem [#allocation0], 66
    %199 = vst.msk [vmem:[%s198] ss:$4 sm:$0xff] %vm197, %v196
    %s200 = scalar_lea.vmem [#allocation2], 3
    %v201 = vld [vmem:[%s200] ss:$8 sm:$0xf]
    %s202 = scalar_lea.vmem [#allocation2], 3
    %v203 = vld [vmem:[%s202] ss:$8 sm:$0xf0]
    %vm204 = vcmask 1047556
    %v205 = vsel %vm204, %v203, %v201
    %206 = vrot.lane.b32.xlu0 %v205, 64
    %v207 = vpop.permute.xlu0 %206
    %vm208 = vcmask 261120
    %s209 = scalar_lea.vmem [#allocation0], 98
    %210 = vst.msk [vmem:[%s209] ss:$4 sm:$0xff] %vm208, %v207
    %v211 = vld [vmem:[#allocation2] ss:$8 sm:$0xf]
    %v212 = vld [vmem:[#allocation2] ss:$8 sm:$0xf0]
    %vm213 = vcmask 1047556
    %v214 = vsel %vm213, %v212, %v211
    %215 = vrot.lane.b32.xlu0 %v214, 32
    %v216 = vpop.permute.xlu0 %215
    %vm217 = vcmask 261120
    %s218 = scalar_lea.vmem [#allocation0], 3
    %219 = vst.msk [vmem:[%s218] ss:$4 sm:$0xff] %vm217, %v216
    %s220 = scalar_lea.vmem [#allocation2], 1
    %v221 = vld [vmem:[%s220] ss:$8 sm:$0xf]
    %s222 = scalar_lea.vmem [#allocation2], 1
    %v223 = vld [vmem:[%s222] ss:$8 sm:$0xf0]
    %vm224 = vcmask 1047556
    %v225 = vsel %vm224, %v223, %v221
    %226 = vrot.lane.b32.xlu0 %v225, 32
    %v227 = vpop.permute.xlu0 %226
    %vm228 = vcmask 261120
    %s229 = scalar_lea.vmem [#allocation0], 35
    %230 = vst.msk [vmem:[%s229] ss:$4 sm:$0xff] %vm228, %v227
    %s231 = scalar_lea.vmem [#allocation2], 2
    %v232 = vld [vmem:[%s231] ss:$8 sm:$0xf]
    %s233 = scalar_lea.vmem [#allocation2], 2
    %v234 = vld [vmem:[%s233] ss:$8 sm:$0xf0]
    %vm235 = vcmask 1047556
    %v236 = vsel %vm235, %v234, %v232
    %237 = vrot.lane.b32.xlu0 %v236, 32
    %v238 = vpop.permute.xlu0 %237
    %vm239 = vcmask 261120
    %s240 = scalar_lea.vmem [#allocation0], 67
    %241 = vst.msk [vmem:[%s240] ss:$4 sm:$0xff] %vm239, %v238
    %s242 = scalar_lea.vmem [#allocation2], 3
    %v243 = vld [vmem:[%s242] ss:$8 sm:$0xf]
    %s244 = scalar_lea.vmem [#allocation2], 3
    %v245 = vld [vmem:[%s244] ss:$8 sm:$0xf0]
    %vm246 = vcmask 1047556
    %v247 = vsel %vm246, %v245, %v243
    %248 = vrot.lane.b32.xlu0 %v247, 32
    %v249 = vpop.permute.xlu0 %248
    %vm250 = vcmask 261120
    %s251 = scalar_lea.vmem [#allocation0], 99
    %252 = vst.msk [vmem:[%s251] ss:$4 sm:$0xff] %vm250, %v249
    %s254 = ssub.s32 2048, 2048
    %255 = vsyncadd [#allocation1], %s254
    %s257 = sshll.u32 [#allocation0], 4
    %s258 = int_to_ptr.vmem [resolvable:$true] %s257
    %260 = dma.vmem_to_hbm [thread:$0]  %s258, 2048, %s1, [#allocation1]
    %261 = dma.done [#allocation1], 2048
    %262 = vsyncpa [#allocation1], 1

// kernel: surf_deeppix_forward.1
$region0: #{surf_deeppix_forward.1}
  #allocation0 [shape = 'u32[]', space=smem, size = 0x4, offset = 0x4, fixed_abs, tag = 'smem constant byte address 0x4 - core index']
  #allocation1 [shape = 'u32[144,128]{1,0:T(1,128)}', space=vmem, size = 0x12000, scoped, tag = 'internal scratch']
  %s0 = inlined_call_operand.vmem [shape: bf16[768,256], index: 0, kind: input, shape index: {}]
  %s1 = inlined_call_operand.vmem [shape: bf16[512,768], index: 1, kind: input, shape index: {}]
  %s2 = inlined_call_operand.vmem [shape: f32[512,1], index: 2, kind: input, shape index: {}]
  %s3 = inlined_call_operand.vmem [shape: bf16[8,512], index: 3, kind: input, shape index: {}]
  %s4 = inlined_call_operand.vmem [shape: f32[8,1], index: 4, kind: input, shape index: {}]
  %s5 = inlined_call_operand.vmem [shape: bf16[128,2048], index: 5, kind: input, shape index: {}]
  %s6 = inlined_call_operand.vmem [shape: bf16[2048,128], index: 6, kind: input, shape index: {}]
  %s7 = inlined_call_operand.vmem [shape: f32[1,128], index: 7, kind: input, shape index: {}]
  %s8 = inlined_call_operand.vmem [shape: f32[4,8,1024], index: 8, kind: output, shape index: {0}]
  %s9 = inlined_call_operand.vmem [shape: f32[4,1,128], index: 9, kind: output, shape index: {1}]
  %10 = xla_tuple %s8, %s9
  %s11 = sld [smem:[#allocation0]]
  $region114: #{surf_deeppix_forward.1} parent=0
    _
  %s13 = ssub.s32 1, %s11
  %s14 = scalar_select 0, %s13, %s11
  $region1: #{surf_deeppix_forward.1} parent=0
    #allocation2 [shape = 'u8[393216]{0}', space=vmem, size = 0x60000, scoped, tag = 'input window, operand 0']
    loop: start=0, step=1, limit=4
    $region2: #{surf_deeppix_forward.1} parent=1 // loop_pre_header
      _
    $region3: #{surf_deeppix_forward.1} parent=1 // loop_header
      %s16 = sphi 0, %s20
      %p17 = scmp.ge.s32.totalorder %s16, 4
      %s26 = sphi 0, %s28
      %s29 = sphi 0, %s26
      %s30 = sphi 0, %s29
      %s46 = sphi 0, %s30
      %s50 = sphi 0, %s50
      %s52 = sphi 0, %s50
      %s53 = sphi 0, %s52
      %s67 = sphi 0, %s53
      %s71 = sphi 0, %s71
      %s73 = sphi 0, %s71
      %s74 = sphi 0, %s73
      %s88 = sphi 0, %s74
      %s92 = sphi 0, %s92
      %s94 = sphi 0, %s92
      %s95 = sphi 0, %s94
      %s109 = sphi 0, %s95
      %s113 = sphi 0, %s113
      %s115 = sphi 0, %s113
      %s116 = sphi 0, %s115
      %s130 = sphi 0, %s116
      %s134 = sphi 0, %s134
      %s136 = sphi 0, %s134
      %s137 = sphi 0, %s136
      %s151 = sphi 0, %s137
      %s155 = sphi 0, %s155
      %s157 = sphi 0, %s155
      %s158 = sphi 0, %s157
      %s172 = sphi 0, %s158
      %s176 = sphi 0, %s176
      %s178 = sphi 0, %s176
      %s179 = sphi 0, %s178
      %s193 = sphi 0, %s179
      %s199 = sphi 0, %s201
      %s202 = sphi 0, %s199
      %s203 = sphi 0, %s202
      %s219 = sphi 0, %s203
      %s225 = sphi 0, %s227
      %s228 = sphi 0, %s225
      %s229 = sphi 0, %s228
      %s245 = sphi 0, %s229
    $region4: #{surf_deeppix_forward.1} parent=1 // loop_header_branch
      %19 = sbr.rel (%p17) target = $region8
    $region5: #{surf_deeppix_forward.1} parent=1 // loop_body
      %s21 = ssub.s32 %s16, 1
      %s22 = ssub.s32 %s16, 2
      %s23 = sadd.s32 %s16, 1
      %s24 = ssub.s32 %s16, %s23
      %p25 = scmp.eq.s32.totalorder %s24, 0
      %s27 = sadd.s32 %s26, 1
      %s28 = scalar_select %p25, %s26, %s27
      %p31 = pneg %p25
      %p32 = scmp.eq.s32.totalorder %s16, 1
      %p33 = por %p31, %p32
      %p34 = scmp.ne.s32.totalorder %s26, %s29
      %p35 = scmp.eq.s32.totalorder %s16, 0
      %p36 = por %p34, %p35
      %p37 = scmp.ne.s32.totalorder %s26, %s29
      %p38 = scmp.eq.s32.totalorder %s21, 1
      %p39 = por %p37, %p38
      %p40 = scmp.ne.s32.totalorder %s29, %s30
      %p41 = scmp.eq.s32.totalorder %s21, 0
      %p42 = por %p40, %p41
      %p43 = scmp.ne.s32.totalorder %s29, %s30
      %p44 = scmp.eq.s32.totalorder %s22, 1
      %p45 = por %p43, %p44
      %p47 = scmp.ne.s32.totalorder %s30, %s46
      %p48 = scmp.eq.s32.totalorder %s22, 0
      %p49 = por %p47, %p48
      %s51 = sadd.s32 %s50, 1
      %p54 = scmp.eq.s32.totalorder %s16, 1
      %p55 = scmp.ne.s32.totalorder %s50, %s52
      %p56 = scmp.eq.s32.totalorder %s16, 0
      %p57 = por %p55, %p56
      %p58 = scmp.ne.s32.totalorder %s50, %s52
      %p59 = scmp.eq.s32.totalorder %s21, 1
      %p60 = por %p58, %p59
      %p61 = scmp.ne.s32.totalorder %s52, %s53
      %p62 = scmp.eq.s32.totalorder %s21, 0
      %p63 = por %p61, %p62
      %p64 = scmp.ne.s32.totalorder %s52, %s53
      %p65 = scmp.eq.s32.totalorder %s22, 1
      %p66 = por %p64, %p65
      %p68 = scmp.ne.s32.totalorder %s53, %s67
      %p69 = scmp.eq.s32.totalorder %s22, 0
      %p70 = por %p68, %p69
      %s72 = sadd.s32 %s71, 1
      %p75 = scmp.eq.s32.totalorder %s16, 1
      %p76 = scmp.ne.s32.totalorder %s71, %s73
      %p77 = scmp.eq.s32.totalorder %s16, 0
      %p78 = por %p76, %p77
      %p79 = scmp.ne.s32.totalorder %s71, %s73
      %p80 = scmp.eq.s32.totalorder %s21, 1
      %p81 = por %p79, %p80
      %p82 = scmp.ne.s32.totalorder %s73, %s74
      %p83 = scmp.eq.s32.totalorder %s21, 0
      %p84 = por %p82, %p83
      %p85 = scmp.ne.s32.totalorder %s73, %s74
      %p86 = scmp.eq.s32.totalorder %s22, 1
      %p87 = por %p85, %p86
      %p89 = scmp.ne.s32.totalorder %s74, %s88
      %p90 = scmp.eq.s32.totalorder %s22, 0
      %p91 = por %p89, %p90
      %s93 = sadd.s32 %s92, 1
      %p96 = scmp.eq.s32.totalorder %s16, 1
      %p97 = scmp.ne.s32.totalorder %s92, %s94
      %p98 = scmp.eq.s32.totalorder %s16, 0
      %p99 = por %p97, %p98
      %p100 = scmp.ne.s32.totalorder %s92, %s94
      %p101 = scmp.eq.s32.totalorder %s21, 1
      %p102 = por %p100, %p101
      %p103 = scmp.ne.s32.totalorder %s94, %s95
      %p104 = scmp.eq.s32.totalorder %s21, 0
      %p105 = por %p103, %p104
      %p106 = scmp.ne.s32.totalorder %s94, %s95
      %p107 = scmp.eq.s32.totalorder %s22, 1
      %p108 = por %p106, %p107
      %p110 = scmp.ne.s32.totalorder %s95, %s109
      %p111 = scmp.eq.s32.totalorder %s22, 0
      %p112 = por %p110, %p111
      %s114 = sadd.s32 %s113, 1
      %p117 = scmp.eq.s32.totalorder %s16, 1
      %p118 = scmp.ne.s32.totalorder %s113, %s115
      %p119 = scmp.eq.s32.totalorder %s16, 0
      %p120 = por %p118, %p119
      %p121 = scmp.ne.s32.totalorder %s113, %s115
      %p122 = scmp.eq.s32.totalorder %s21, 1
      %p123 = por %p121, %p122
      %p124 = scmp.ne.s32.totalorder %s115, %s116
      %p125 = scmp.eq.s32.totalorder %s21, 0
      %p126 = por %p124, %p125
      %p127 = scmp.ne.s32.totalorder %s115, %s116
      %p128 = scmp.eq.s32.totalorder %s22, 1
      %p129 = por %p127, %p128
      %p131 = scmp.ne.s32.totalorder %s116, %s130
      %p132 = scmp.eq.s32.totalorder %s22, 0
      %p133 = por %p131, %p132
      %s135 = sadd.s32 %s134, 1
      %p138 = scmp.eq.s32.totalorder %s16, 1
      %p139 = scmp.ne.s32.totalorder %s134, %s136
      %p140 = scmp.eq.s32.totalorder %s16, 0
      %p141 = por %p139, %p140
      %p142 = scmp.ne.s32.totalorder %s134, %s136
      %p143 = scmp.eq.s32.totalorder %s21, 1
      %p144 = por %p142, %p143
      %p145 = scmp.ne.s32.totalorder %s136, %s137
      %p146 = scmp.eq.s32.totalorder %s21, 0
      %p147 = por %p145, %p146
      %p148 = scmp.ne.s32.totalorder %s136, %s137
      %p149 = scmp.eq.s32.totalorder %s22, 1
      %p150 = por %p148, %p149
      %p152 = scmp.ne.s32.totalorder %s137, %s151
      %p153 = scmp.eq.s32.totalorder %s22, 0
      %p154 = por %p152, %p153
      %s156 = sadd.s32 %s155, 1
      %p159 = scmp.eq.s32.totalorder %s16, 1
      %p160 = scmp.ne.s32.totalorder %s155, %s157
      %p161 = scmp.eq.s32.totalorder %s16, 0
      %p162 = por %p160, %p161
      %p163 = scmp.ne.s32.totalorder %s155, %s157
      %p164 = scmp.eq.s32.totalorder %s21, 1
      %p165 = por %p163, %p164
      %p166 = scmp.ne.s32.totalorder %s157, %s158
      %p167 = scmp.eq.s32.totalorder %s21, 0
      %p168 = por %p166, %p167
      %p169 = scmp.ne.s32.totalorder %s157, %s158
      %p170 = scmp.eq.s32.totalorder %s22, 1
      %p171 = por %p169, %p170
      %p173 = scmp.ne.s32.totalorder %s158, %s172
      %p174 = scmp.eq.s32.totalorder %s22, 0
      %p175 = por %p173, %p174
      %s177 = sadd.s32 %s176, 1
      %p180 = scmp.eq.s32.totalorder %s16, 1
      %p181 = scmp.ne.s32.totalorder %s176, %s178
      %p182 = scmp.eq.s32.totalorder %s16, 0
      %p183 = por %p181, %p182
      %p184 = scmp.ne.s32.totalorder %s176, %s178
      %p185 = scmp.eq.s32.totalorder %s21, 1
      %p186 = por %p184, %p185
      %p187 = scmp.ne.s32.totalorder %s178, %s179
      %p188 = scmp.eq.s32.totalorder %s21, 0
      %p189 = por %p187, %p188
      %p190 = scmp.ne.s32.totalorder %s178, %s179
      %p191 = scmp.eq.s32.totalorder %s22, 1
      %p192 = por %p190, %p191
      %p194 = scmp.ne.s32.totalorder %s179, %s193
      %p195 = scmp.eq.s32.totalorder %s22, 0
      %p196 = por %p194, %p195
      %s197 = ssub.s32 %s16, %s23
      %p198 = scmp.eq.s32.totalorder %s197, 0
      %s200 = sadd.s32 %s199, 1
      %s201 = scalar_select %p198, %s199, %s200
      %p204 = pneg %p198
      %p205 = scmp.eq.s32.totalorder %s16, 1
      %p206 = por %p204, %p205
      %p207 = scmp.ne.s32.totalorder %s199, %s202
      %p208 = scmp.eq.s32.totalorder %s16, 0
      %p209 = por %p207, %p208
      %p210 = scmp.ne.s32.totalorder %s199, %s202
      %p211 = scmp.eq.s32.totalorder %s21, 1
      %p212 = por %p210, %p211
      %p213 = scmp.ne.s32.totalorder %s202, %s203
      %p214 = scmp.eq.s32.totalorder %s21, 0
      %p215 = por %p213, %p214
      %p216 = scmp.ne.s32.totalorder %s202, %s203
      %p217 = scmp.eq.s32.totalorder %s22, 1
      %p218 = por %p216, %p217
      %p220 = scmp.ne.s32.totalorder %s203, %s219
      %p221 = scmp.eq.s32.totalorder %s22, 0
      %p222 = por %p220, %p221
      %s223 = ssub.s32 %s16, %s23
      %p224 = scmp.eq.s32.totalorder %s223, 0
      %s226 = sadd.s32 %s225, 1
      %s227 = scalar_select %p224, %s225, %s226
      %p230 = pneg %p224
      %p231 = scmp.eq.s32.totalorder %s16, 1
      %p232 = por %p230, %p231
      %p233 = scmp.ne.s32.totalorder %s225, %s228
      %p234 = scmp.eq.s32.totalorder %s16, 0
      %p235 = por %p233, %p234
      %p236 = scmp.ne.s32.totalorder %s225, %s228
      %p237 = scmp.eq.s32.totalorder %s21, 1
      %p238 = por %p236, %p237
      %p239 = scmp.ne.s32.totalorder %s228, %s229
      %p240 = scmp.eq.s32.totalorder %s21, 0
      %p241 = por %p239, %p240
      %p242 = scmp.ne.s32.totalorder %s228, %s229
      %p243 = scmp.eq.s32.totalorder %s22, 1
      %p244 = por %p242, %p243
      %p246 = scmp.ne.s32.totalorder %s229, %s245
      %p247 = scmp.eq.s32.totalorder %s22, 0
      %p248 = por %p246, %p247
      %p249 = scmp.le.s32.totalorder 1, %s16
      %p250 = scmp.lt.s32.totalorder %s16, 3
      %p251 = pnand %p249, %p250
      %p252 = pneg %p251
      // Predicated region
      $region9: #{surf_deeppix_forward.1} parent=5 // pred_check
        _
      $region10: #{surf_deeppix_forward.1} parent=5 // pred_check_branch
        %254 = sbr.rel (%p251) target = $region12
      $region11: #{surf_deeppix_forward.1} parent=5 // pred_region
        %s255 = ssub.s32 %s16, 1
        // Predicated region
        $region13: #{surf_deeppix_forward.1} parent=11 // pred_check
          %p256 = pneg %p63
        $region14: #{surf_deeppix_forward.1} parent=11 // pred_check_branch
          %258 = sbr.rel (%p256) target = $region16
        $region15: #{surf_deeppix_forward.1} parent=11 // pred_region
          _
        $region16: #{surf_deeppix_forward.1} parent=11 // pred_fallthru
          _
        // Predicated region
        $region17: #{surf_deeppix_forward.1} parent=11 // pred_check
          %p259 = pneg %p84
        $region18: #{surf_deeppix_forward.1} parent=11 // pred_check_branch
          %261 = sbr.rel (%p259) target = $region20
        $region19: #{surf_deeppix_forward.1} parent=11 // pred_region
          _
        $region20: #{surf_deeppix_forward.1} parent=11 // pred_fallthru
          _
        // Predicated region
        $region21: #{surf_deeppix_forward.1} parent=11 // pred_check
          %p262 = pneg %p105
        $region22: #{surf_deeppix_forward.1} parent=11 // pred_check_branch
          %264 = sbr.rel (%p262) target = $region24
        $region23: #{surf_deeppix_forward.1} parent=11 // pred_region
          _
        $region24: #{surf_deeppix_forward.1} parent=11 // pred_fallthru
          _
        // Predicated region
        $region25: #{surf_deeppix_forward.1} parent=11 // pred_check
          %p265 = pneg %p126
        $region26: #{surf_deeppix_forward.1} parent=11 // pred_check_branch
          %267 = sbr.rel (%p265) target = $region28
        $region27: #{surf_deeppix_forward.1} parent=11 // pred_region
          _
        $region28: #{surf_deeppix_forward.1} parent=11 // pred_fallthru
          _
        // Predicated region
        $region29: #{surf_deeppix_forward.1} parent=11 // pred_check
          %p268 = pneg %p147
        $region30: #{surf_deeppix_forward.1} parent=11 // pred_check_branch
          %270 = sbr.rel (%p268) target = $region32
        $region31: #{surf_deeppix_forward.1} parent=11 // pred_region
          _
        $region32: #{surf_deeppix_forward.1} parent=11 // pred_fallthru
          _
        // Predicated region
        $region33: #{surf_deeppix_forward.1} parent=11 // pred_check
          %p271 = pneg %p168
        $region34: #{surf_deeppix_forward.1} parent=11 // pred_check_branch
          %273 = sbr.rel (%p271) target = $region36
        $region35: #{surf_deeppix_forward.1} parent=11 // pred_region
          _
        $region36: #{surf_deeppix_forward.1} parent=11 // pred_fallthru
          _
        // Predicated region
        $region37: #{surf_deeppix_forward.1} parent=11 // pred_check
          %p274 = pneg %p189
        $region38: #{surf_deeppix_forward.1} parent=11 // pred_check_branch
          %276 = sbr.rel (%p274) target = $region40
        $region39: #{surf_deeppix_forward.1} parent=11 // pred_region
          _
        $region40: #{surf_deeppix_forward.1} parent=11 // pred_fallthru
          _
      $region12: #{surf_deeppix_forward.1} parent=5 // pred_fallthru
        _
      %p277 = scmp.lt.s32.totalorder %s16, 2
      // Predicated region
      $region41: #{surf_deeppix_forward.1} parent=5 // pred_check
        %p278 = pneg %p277
      $region42: #{surf_deeppix_forward.1} parent=5 // pred_check_branch
        %280 = sbr.rel (%p278) target = $region44
      $region43: #{surf_deeppix_forward.1} parent=5 // pred_region
        // Predicated region
        $region45: #{surf_deeppix_forward.1} parent=43 // pred_check
          %p281 = pneg %p36
        $region46: #{surf_deeppix_forward.1} parent=43 // pred_check_branch
          %283 = sbr.rel (%p281) target = $region48
        $region47: #{surf_deeppix_forward.1} parent=43 // pred_region
          %s284 = sand.u32 %s26, 1
          %s285 = sand.u32 %s26, 1
          %s286 = smul.addr %s285, 384
          %s287 = scalar_lea.vmem [#allocation2], %s286
          %s288 = smul.addr %s16, 4
          %s289 = scalar_lea.vmem %s0, %s288
          // Predicated region
          $region49: #{surf_deeppix_forward.1} parent=47 // pred_check
            _
          $region50: #{surf_deeppix_forward.1} parent=47 // pred_check_branch
            %291 = sbr.rel (0) target = $region52
          $region51: #{surf_deeppix_forward.1} parent=47 // pred_region
            // Predicated region
            $region53: #{surf_deeppix_forward.1} parent=51 // pred_check
              _
            $region54: #{surf_deeppix_forward.1} parent=51 // pred_check_branch
              %293 = sbr.rel target = $region56
            $region55: #{surf_deeppix_forward.1} parent=51 // pred_region
              // Predicated region
              $region68: #{surf_deeppix_forward.1} parent=55 // pred_check
                _
              $region69: #{surf_deeppix_forward.1} parent=55 // pred_check_branch
                %498 = sbr.rel (0) target = $region71
              $region70: #{surf_deeppix_forward.1} parent=55 // pred_region
                loop: start=0, step=1, limit=1
                $region72: #{surf_deeppix_forward.1} parent=70 // loop_pre_header
                  _
                $region73: #{surf_deeppix_forward.1} parent=70 // loop_header
                  %s500 = sphi 0, %s504
                  %p501 = scmp.ge.s32.totalorder %s500, 1
                  %s505 = sphi %s289, %s289
                  %s506 = sphi %s287, %s287
                $region74: #{surf_deeppix_forward.1} parent=70 // loop_header_branch
                  %503 = sbr.rel (%p501) target = $region78
                $region75: #{surf_deeppix_forward.1} parent=70 // loop_body
                  _
                $region76: #{surf_deeppix_forward.1} parent=70 // loop_footer
                  %s504 = sadd.s32 1, %s500
                $region77: #{surf_deeppix_forward.1} parent=70 // loop_footer_branch
                  %499 = sbr.rel target = $region73
                $region78: #{surf_deeppix_forward.1} parent=70 // loop_exit
                  _
                loop: start=0, step=1, limit=1
                $region79: #{surf_deeppix_forward.1} parent=70 // loop_pre_header
                  _
                $region80: #{surf_deeppix_forward.1} parent=70 // loop_header
                  %s509 = sphi 0, %s513
                  %p510 = scmp.ge.s32.totalorder %s509, 1
                  %s514 = sphi %s289, %s289
                  %s515 = sphi %s287, %s287
                $region81: #{surf_deeppix_forward.1} parent=70 // loop_header_branch
                  %512 = sbr.rel (%p510) target = $region85
                $region82: #{surf_deeppix_forward.1} parent=70 // loop_body
                  %v516 = vld [vmem:[%s514] sm:$0xf]
                  %517 = vst [vmem:[%s515] sm:$0xf] %v516
                  %v518 = vld [vmem:[%s514 + $0x8] sm:$0xf]
                  %519 = vst [vmem:[%s515 + $0x4] sm:$0xf] %v518
                  %v520 = vld [vmem:[%s514 + $0x10] sm:$0xf]
                  %521 = vst [vmem:[%s515 + $0x8] sm:$0xf] %v520
                  %v522 = vld [vmem:[%s514 + $0x18] sm:$0xf]
                  %523 = vst [vmem:[%s515 + $0xc] sm:$0xf] %v522
                  %v524 = vld [vmem:[%s514 + $0x20] sm:$0xf]
                  %525 = vst [vmem:[%s515 + $0x10] sm:$0xf] %v524
                  %v526 = vld [vmem:[%s514 + $0x28] sm:$0xf]
                  %527 = vst [vmem:[%s515 + $0x14] sm:$0xf] %v526
                  %v528 = vld [vmem:[%s514 + $0x30] sm:$0xf]
                  %529 = vst [vmem:[%s515 + $0x18] sm:$0xf] %v528
                  %v530 = vld [vmem:[%s514 + $0x38] sm:$0xf]
                  %531 = vst [vmem:[%s515 + $0x1c] sm:$0xf] %v530
                  %v532 = vld [vmem:[%s514 + $0x40] sm:$0xf]
                  %533 = vst [vmem:[%s515 + $0x20] sm:$0xf] %v532
                  %v534 = vld [vmem:[%s514 + $0x48] sm:$0xf]
                  %535 = vst [vmem:[%s515 + $0x24] sm:$0xf] %v534
                  %v536 = vld [vmem:[%s514 + $0x50] sm:$0xf]
                  %537 = vst [vmem:[%s515 + $0x28] sm:$0xf] %v536
                  %v538 = vld [vmem:[%s514 + $0x58] sm:$0xf]
                  %539 = vst [vmem:[%s515 + $0x2c] sm:$0xf] %v538
                  %v540 = vld [vmem:[%s514 + $0x60] sm:$0xf]
                  %541 = vst [vmem:[%s515 + $0x30] sm:$0xf] %v540
                  %v542 = vld [vmem:[%s514 + $0x68] sm:$0xf]
                  %543 = vst [vmem:[%s515 + $0x34] sm:$0xf] %v542
                  %v544 = vld [vmem:[%s514 + $0x70] sm:$0xf]
                  %545 = vst [vmem:[%s515 + $0x38] sm:$0xf] %v544
                  %v546 = vld [vmem:[%s514 + $0x78] sm:$0xf]
                  %547 = vst [vmem:[%s515 + $0x3c] sm:$0xf] %v546
                  %v548 = vld [vmem:[%s514 + $0x80] sm:$0xf]
                  %549 = vst [vmem:[%s515 + $0x40] sm:$0xf] %v548
                  %v550 = vld [vmem:[%s514 + $0x88] sm:$0xf]
                  %551 = vst [vmem:[%s515 + $0x44] sm:$0xf] %v550
                  %v552 = vld [vmem:[%s514 + $0x90] sm:$0xf]
                  %553 = vst [vmem:[%s515 + $0x48] sm:$0xf] %v552
                  %v554 = vld [vmem:[%s514 + $0x98] sm:$0xf]
                  %555 = vst [vmem:[%s515 + $0x4c] sm:$0xf] %v554
                  %v556 = vld [vmem:[%s514 + $0xa0] sm:$0xf]
                  %557 = vst [vmem:[%s515 + $0x50] sm:$0xf] %v556
                  %v558 = vld [vmem:[%s514 + $0xa8] sm:$0xf]
                  %559 = vst [vmem:[%s515 + $0x54] sm:$0xf] %v558
                  %v560 = vld [vmem:[%s514 + $0xb0] sm:$0xf]
                  %561 = vst [vmem:[%s515 + $0x58] sm:$0xf] %v560
                  %v562 = vld [vmem:[%s514 + $0xb8] sm:$0xf]
                  %563 = vst [vmem:[%s515 + $0x5c] sm:$0xf] %v562
                  %v564 = vld [vmem:[%s514 + $0xc0] sm:$0xf]
                  %565 = vst [vmem:[%s515 + $0x60] sm:$0xf] %v564
                  %v566 = vld [vmem:[%s514 + $0xc8] sm:$0xf]
                  %567 = vst [vmem:[%s515 + $0x64] sm:$0xf] %v566
                  %v568 = vld [vmem:[%s514 + $0xd0] sm:$0xf]
                  %569 = vst [vmem:[%s515 + $0x68] sm:$0xf] %v568
                  %v570 = vld [vmem:[%s514 + $0xd8] sm:$0xf]
                  %571 = vst [vmem:[%s515 + $0x6c] sm:$0xf] %v570
                  %v572 = vld [vmem:[%s514 + $0xe0] sm:$0xf]
                  %573 = vst [vmem:[%s515 + $0x70] sm:$0xf] %v572
                  %v574 = vld [vmem:[%s514 + $0xe8] sm:$0xf]
                  %575 = vst [vmem:[%s515 + $0x74] sm:$0xf] %v574
                  %v576 = vld [vmem:[%s514 + $0xf0] sm:$0xf]
                  %577 = vst [vmem:[%s515 + $0x78] sm:$0xf] %v576
                  %v578 = vld [vmem:[%s514 + $0xf8] sm:$0xf]
                  %579 = vst [vmem:[%s515 + $0x7c] sm:$0xf] %v578
                  %v580 = vld [vmem:[%s514 + $0x100] sm:$0xf]
                  %581 = vst [vmem:[%s515 + $0x80] sm:$0xf] %v580
                  %v582 = vld [vmem:[%s514 + $0x108] sm:$0xf]
                  %583 = vst [vmem:[%s515 + $0x84] sm:$0xf] %v582
                  %v584 = vld [vmem:[%s514 + $0x110] sm:$0xf]
                  %585 = vst [vmem:[%s515 + $0x88] sm:$0xf] %v584
                  %v586 = vld [vmem:[%s514 + $0x118] sm:$0xf]
                  %587 = vst [vmem:[%s515 + $0x8c] sm:$0xf] %v586
                  %v588 = vld [vmem:[%s514 + $0x120] sm:$0xf]
                  %589 = vst [vmem:[%s515 + $0x90] sm:$0xf] %v588
                  %v590 = vld [vmem:[%s514 + $0x128] sm:$0xf]
                  %591 = vst [vmem:[%s515 + $0x94] sm:$0xf] %v590
                  %v592 = vld [vmem:[%s514 + $0x130] sm:$0xf]
                  %593 = vst [vmem:[%s515 + $0x98] sm:$0xf] %v592
                  %v594 = vld [vmem:[%s514 + $0x138] sm:$0xf]
                  %595 = vst [vmem:[%s515 + $0x9c] sm:$0xf] %v594
                  %v596 = vld [vmem:[%s514 + $0x140] sm:$0xf]
                  %597 = vst [vmem:[%s515 + $0xa0] sm:$0xf] %v596
                  %v598 = vld [vmem:[%s514 + $0x148] sm:$0xf]
                  %599 = vst [vmem:[%s515 + $0xa4] sm:$0xf] %v598
                  %v600 = vld [vmem:[%s514 + $0x150] sm:$0xf]
                  %601 = vst [vmem:[%s515 + $0xa8] sm:$0xf] %v600
                  %v602 = vld [vmem:[%s514 + $0x158] sm:$0xf]
                  %603 = vst [vmem:[%s515 + $0xac] sm:$0xf] %v602
                  %v604 = vld [vmem:[%s514 + $0x160] sm:$0xf]
                  %605 = vst [vmem:[%s515 + $0xb0] sm:$0xf] %v604
                  %v606 = vld [vmem:[%s514 + $0x168] sm:$0xf]
                  %607 = vst [vmem:[%s515 + $0xb4] sm:$0xf] %v606
                  %v608 = vld [vmem:[%s514 + $0x170] sm:$0xf]
                  %609 = vst [vmem:[%s515 + $0xb8] sm:$0xf] %v608
                  %v610 = vld [vmem:[%s514 + $0x178] sm:$0xf]
                  %611 = vst [vmem:[%s515 + $0xbc] sm:$0xf] %v610
                  %v612 = vld [vmem:[%s514 + $0x180] sm:$0xf]
                  %613 = vst [vmem:[%s515 + $0xc0] sm:$0xf] %v612
                  %v614 = vld [vmem:[%s514 + $0x188] sm:$0xf]
                  %615 = vst [vmem:[%s515 + $0xc4] sm:$0xf] %v614
                  %v616 = vld [vmem:[%s514 + $0x190] sm:$0xf]
                  %617 = vst [vmem:[%s515 + $0xc8] sm:$0xf] %v616
                  %v618 = vld [vmem:[%s514 + $0x198] sm:$0xf]
                  %619 = vst [vmem:[%s515 + $0xcc] sm:$0xf] %v618
                  %v620 = vld [vmem:[%s514 + $0x1a0] sm:$0xf]
                  %621 = vst [vmem:[%s515 + $0xd0] sm:$0xf] %v620
                  %v622 = vld [vmem:[%s514 + $0x1a8] sm:$0xf]
                  %623 = vst [vmem:[%s515 + $0xd4] sm:$0xf] %v622
                  %v624 = vld [vmem:[%s514 + $0x1b0] sm:$0xf]
                  %625 = vst [vmem:[%s515 + $0xd8] sm:$0xf] %v624
                  %v626 = vld [vmem:[%s514 + $0x1b8] sm:$0xf]
                  %627 = vst [vmem:[%s515 + $0xdc] sm:$0xf] %v626
                  %v628 = vld [vmem:[%s514 + $0x1c0] sm:$0xf]
                  %629 = vst [vmem:[%s515 + $0xe0] sm:$0xf] %v628
                  %v630 = vld [vmem:[%s514 + $0x1c8] sm:$0xf]
                  %631 = vst [vmem:[%s515 + $0xe4] sm:$0xf] %v630
                  %v632 = vld [vmem:[%s514 + $0x1d0] sm:$0xf]
                  %633 = vst [vmem:[%s515 + $0xe8] sm:$0xf] %v632
                  %v634 = vld [vmem:[%s514 + $0x1d8] sm:$0xf]
                  %635 = vst [vmem:[%s515 + $0xec] sm:$0xf] %v634
                  %v636 = vld [vmem:[%s514 + $0x1e0] sm:$0xf]
                  %637 = vst [vmem:[%s515 + $0xf0] sm:$0xf] %v636
                  %v638 = vld [vmem:[%s514 + $0x1e8] sm:$0xf]
                  %639 = vst [vmem:[%s515 + $0xf4] sm:$0xf] %v638
                  %v640 = vld [vmem:[%s514 + $0x1f0] sm:$0xf]
                  %641 = vst [vmem:[%s515 + $0xf8] sm:$0xf] %v640
                  %v642 = vld [vmem:[%s514 + $0x1f8] sm:$0xf]
                  %643 = vst [vmem:[%s515 + $0xfc] sm:$0xf] %v642
                  %v644 = vld [vmem:[%s514 + $0x200] sm:$0xf]
                  %645 = vst [vmem:[%s515 + $0x100] sm:$0xf] %v644
                  %v646 = vld [vmem:[%s514 + $0x208] sm:$0xf]
                  %647 = vst [vmem:[%s515 + $0x104] sm:$0xf] %v646
                  %v648 = vld [vmem:[%s514 + $0x210] sm:$0xf]
                  %649 = vst [vmem:[%s515 + $0x108] sm:$0xf] %v648
                  %v650 = vld [vmem:[%s514 + $0x218] sm:$0xf]
                  %651 = vst [vmem:[%s515 + $0x10c] sm:$0xf] %v650
                  %v652 = vld [vmem:[%s514 + $0x220] sm:$0xf]
                  %653 = vst [vmem:[%s515 + $0x110] sm:$0xf] %v652
                  %v654 = vld [vmem:[%s514 + $0x228] sm:$0xf]
                  %655 = vst [vmem:[%s515 + $0x114] sm:$0xf] %v654
                  %v656 = vld [vmem:[%s514 + $0x230] sm:$0xf]
                  %657 = vst [vmem:[%s515 + $0x118] sm:$0xf] %v656
                  %v658 = vld [vmem:[%s514 + $0x238] sm:$0xf]
                  %659 = vst [vmem:[%s515 + $0x11c] sm:$0xf] %v658
                  %v660 = vld [vmem:[%s514 + $0x240] sm:$0xf]
                  %661 = vst [vmem:[%s515 + $0x120] sm:$0xf] %v660
                  %v662 = vld [vmem:[%s514 + $0x248] sm:$0xf]
                  %663 = vst [vmem:[%s515 + $0x124] sm:$0xf] %v662
                  %v664 = vld [vmem:[%s514 + $0x250] sm:$0xf]
                  %665 = vst [vmem:[%s515 + $0x128] sm:$0xf] %v664
                  %v666 = vld [vmem:[%s514 + $0x258] sm:$0xf]
                  %667 = vst [vmem:[%s515 + $0x12c] sm:$0xf] %v666
                  %v668 = vld [vmem:[%s514 + $0x260] sm:$0xf]
                  %669 = vst [vmem:[%s515 + $0x130] sm:$0xf] %v668
                  %v670 = vld [vmem:[%s514 + $0x268] sm:$0xf]
                  %671 = vst [vmem:[%s515 + $0x134] sm:$0xf] %v670
                  %v672 = vld [vmem:[%s514 + $0x270] sm:$0xf]
                  %673 = vst [vmem:[%s515 + $0x138] sm:$0xf] %v672
                  %v674 = vld [vmem:[%s514 + $0x278] sm:$0xf]
                  %675 = vst [vmem:[%s515 + $0x13c] sm:$0xf] %v674
                  %v676 = vld [vmem:[%s514 + $0x280] sm:$0xf]
                  %677 = vst [vmem:[%s515 + $0x140] sm:$0xf] %v676
                  %v678 = vld [vmem:[%s514 + $0x288] sm:$0xf]
                  %679 = vst [vmem:[%s515 + $0x144] sm:$0xf] %v678
                  %v680 = vld [vmem:[%s514 + $0x290] sm:$0xf]
                  %681 = vst [vmem:[%s515 + $0x148] sm:$0xf] %v680
                  %v682 = vld [vmem:[%s514 + $0x298] sm:$0xf]
                  %683 = vst [vmem:[%s515 + $0x14c] sm:$0xf] %v682
                  %v684 = vld [vmem:[%s514 + $0x2a0] sm:$0xf]
                  %685 = vst [vmem:[%s515 + $0x150] sm:$0xf] %v684
                  %v686 = vld [vmem:[%s514 + $0x2a8] sm:$0xf]
                  %687 = vst [vmem:[%s515 + $0x154] sm:$0xf] %v686
                  %v688 = vld [vmem:[%s514 + $0x2b0] sm:$0xf]
                  %689 = vst [vmem:[%s515 + $0x158] sm:$0xf] %v688
                  %v690 = vld [vmem:[%s514 + $0x2b8] sm:$0xf]
                  %691 = vst [vmem:[%s515 + $0x15c] sm:$0xf] %v690
                  %v692 = vld [vmem:[%s514 + $0x2c0] sm:$0xf]
                  %693 = vst [vmem:[%s515 + $0x160] sm:$0xf] %v692
                  %v694 = vld [vmem:[%s514 + $0x2c8] sm:$0xf]
                  %695 = vst [vmem:[%s515 + $0x164] sm:$0xf] %v694
                  %v696 = vld [vmem:[%s514 + $0x2d0] sm:$0xf]
                  %697 = vst [vmem:[%s515 + $0x168] sm:$0xf] %v696
                  %v698 = vld [vmem:[%s514 + $0x2d8] sm:$0xf]
                  %699 = vst [vmem:[%s515 + $0x16c] sm:$0xf] %v698
                  %v700 = vld [vmem:[%s514 + $0x2e0] sm:$0xf]
                  %701 = vst [vmem:[%s515 + $0x170] sm:$0xf] %v700
                  %v702 = vld [vmem:[%s514 + $0x2e8] sm:$0xf]
                  %703 = vst [vmem:[%s515 + $0x174] sm:$0xf] %v702
                  %v704 = vld [vmem:[%s514 + $0x2f0] sm:$0xf]
                  %705 = vst [vmem:[%s515 + $0x178] sm:$0xf] %v704
                  %v706 = vld [vmem:[%s514 + $0x2f8] sm:$0xf]
                  %707 = vst [vmem:[%s515 + $0x17c] sm:$0xf] %v706
                $region83: #{surf_deeppix_forward.1} parent=70 // loop_footer
                  %s513 = sadd.s32 1, %s509
                $region84: #{surf_deeppix_forward.1} parent=70 // loop_footer_branch
                  %508 = sbr.rel target = $region80
                $region85: #{surf_deeppix_forward.1} parent=70 // loop_exit
                  _
              $region71: #{surf_deeppix_forward.1} parent=55 // pred_fallthru
                _
            $region56: #{surf_deeppix_forward.1} parent=51 // pred_fallthru
              _
            // Predicated region
            $region57: #{surf_deeppix_forward.1} parent=51 // pred_check
              _
            $region58: #{surf_deeppix_forward.1} parent=51 // pred_check_branch
              %295 = sbr.rel (0) target = $region60
            $region59: #{surf_deeppix_forward.1} parent=51 // pred_region
              loop: start=0, step=1, limit=1
              $region61: #{surf_deeppix_forward.1} parent=59 // loop_pre_header
                _
              $region62: #{surf_deeppix_forward.1} parent=59 // loop_header
                %s298 = sphi 0, %s302
                %p299 = scmp.ge.s32.totalorder %s298, 1
                %s303 = sphi %s289, %s289
                %s304 = sphi %s287, %s287
              $region63: #{surf_deeppix_forward.1} parent=59 // loop_header_branch
                %301 = sbr.rel (%p299) target = $region67
              $region64: #{surf_deeppix_forward.1} parent=59 // loop_body
                %v305 = vld [vmem:[%s303] sm:$0xf]
                %306 = vst [vmem:[%s304] sm:$0xf] %v305
                %v307 = vld [vmem:[%s303 + $0x8] sm:$0xf]
                %308 = vst [vmem:[%s304 + $0x4] sm:$0xf] %v307
                %v309 = vld [vmem:[%s303 + $0x10] sm:$0xf]
                %310 = vst [vmem:[%s304 + $0x8] sm:$0xf] %v309
                %v311 = vld [vmem:[%s303 + $0x18] sm:$0xf]
                %312 = vst [vmem:[%s304 + $0xc] sm:$0xf] %v311
                %v313 = vld [vmem:[%s303 + $0x20] sm:$0xf]
                %314 = vst [vmem:[%s304 + $0x10] sm:$0xf] %v313
                %v315 = vld [vmem:[%s303 + $0x28] sm:$0xf]
                %316 = vst [vmem:[%s304 + $0x14] sm:$0xf] %v315
                %v317 = vld [vmem:[%s303 + $0x30] sm:$0xf]
                %318 = vst [vmem:[%s304 + $0x18] sm:$0xf] %v317
                %v319 = vld [vmem:[%s303 + $0x38] sm:$0xf]
                %320 = vst [vmem:[%s304 + $0x1c] sm:$0xf] %v319
                %v321 = vld [vmem:[%s303 + $0x40] sm:$0xf]
                %322 = vst [vmem:[%s304 + $0x20] sm:$0xf] %v321
                %v323 = vld [vmem:[%s303 + $0x48] sm:$0xf]
                %324 = vst [vmem:[%s304 + $0x24] sm:$0xf] %v323
                %v325 = vld [vmem:[%s303 + $0x50] sm:$0xf]
                %326 = vst [vmem:[%s304 + $0x28] sm:$0xf] %v325
                %v327 = vld [vmem:[%s303 + $0x58] sm:$0xf]
                %328 = vst [vmem:[%s304 + $0x2c] sm:$0xf] %v327
                %v329 = vld [vmem:[%s303 + $0x60] sm:$0xf]
                %330 = vst [vmem:[%s304 + $0x30] sm:$0xf] %v329
                %v331 = vld [vmem:[%s303 + $0x68] sm:$0xf]
                %332 = vst [vmem:[%s304 + $0x34] sm:$0xf] %v331
                %v333 = vld [vmem:[%s303 + $0x70] sm:$0xf]
                %334 = vst [vmem:[%s304 + $0x38] sm:$0xf] %v333
                %v335 = vld [vmem:[%s303 + $0x78] sm:$0xf]
                %336 = vst [vmem:[%s304 + $0x3c] sm:$0xf] %v335
                %v337 = vld [vmem:[%s303 + $0x80] sm:$0xf]
                %338 = vst [vmem:[%s304 + $0x40] sm:$0xf] %v337
                %v339 = vld [vmem:[%s303 + $0x88] sm:$0xf]
                %340 = vst [vmem:[%s304 + $0x44] sm:$0xf] %v339
                %v341 = vld [vmem:[%s303 + $0x90] sm:$0xf]
                %342 = vst [vmem:[%s304 + $0x48] sm:$0xf] %v341
                %v343 = vld [vmem:[%s303 + $0x98] sm:$0xf]
                %344 = vst [vmem:[%s304 + $0x4c] sm:$0xf] %v343
                %v345 = vld [vmem:[%s303 + $0xa0] sm:$0xf]
                %346 = vst [vmem:[%s304 + $0x50] sm:$0xf] %v345
                %v347 = vld [vmem:[%s303 + $0xa8] sm:$0xf]
                %348 = vst [vmem:[%s304 + $0x54] sm:$0xf] %v347
                %v349 = vld [vmem:[%s303 + $0xb0] sm:$0xf]
                %350 = vst [vmem:[%s304 + $0x58] sm:$0xf] %v349
                %v351 = vld [vmem:[%s303 + $0xb8] sm:$0xf]
                %352 = vst [vmem:[%s304 + $0x5c] sm:$0xf] %v351
                %v353 = vld [vmem:[%s303 + $0xc0] sm:$0xf]
                %354 = vst [vmem:[%s304 + $0x60] sm:$0xf] %v353
                %v355 = vld [vmem:[%s303 + $0xc8] sm:$0xf]
                %356 = vst [vmem:[%s304 + $0x64] sm:$0xf] %v355
                %v357 = vld [vmem:[%s303 + $0xd0] sm:$0xf]
                %358 = vst [vmem:[%s304 + $0x68] sm:$0xf] %v357
                %v359 = vld [vmem:[%s303 + $0xd8] sm:$0xf]
                %360 = vst [vmem:[%s304 + $0x6c] sm:$0xf] %v359
                %v361 = vld [vmem:[%s303 + $0xe0] sm:$0xf]
                %362 = vst [vmem:[%s304 + $0x70] sm:$0xf] %v361
                %v363 = vld [vmem:[%s303 + $0xe8] sm:$0xf]
                %364 = vst [vmem:[%s304 + $0x74] sm:$0xf] %v363
                %v365 = vld [vmem:[%s303 + $0xf0] sm:$0xf]
                %366 = vst [vmem:[%s304 + $0x78] sm:$0xf] %v365
                %v367 = vld [vmem:[%s303 + $0xf8] sm:$0xf]
                %368 = vst [vmem:[%s304 + $0x7c] sm:$0xf] %v367
                %v369 = vld [vmem:[%s303 + $0x100] sm:$0xf]
                %370 = vst [vmem:[%s304 + $0x80] sm:$0xf] %v369
                %v371 = vld [vmem:[%s303 + $0x108] sm:$0xf]
                %372 = vst [vmem:[%s304 + $0x84] sm:$0xf] %v371
                %v373 = vld [vmem:[%s303 + $0x110] sm:$0xf]
                %374 = vst [vmem:[%s304 + $0x88] sm:$0xf] %v373
                %v375 = vld [vmem:[%s303 + $0x118] sm:$0xf]
                %376 = vst [vmem:[%s304 + $0x8c] sm:$0xf] %v375
                %v377 = vld [vmem:[%s303 + $0x120] sm:$0xf]
                %378 = vst [vmem:[%s304 + $0x90] sm:$0xf] %v377
                %v379 = vld [vmem:[%s303 + $0x128] sm:$0xf]
                %380 = vst [vmem:[%s304 + $0x94] sm:$0xf] %v379
                %v381 = vld [vmem:[%s303 + $0x130] sm:$0xf]
                %382 = vst [vmem:[%s304 + $0x98] sm:$0xf] %v381
                %v383 = vld [vmem:[%s303 + $0x138] sm:$0xf]
                %384 = vst [vmem:[%s304 + $0x9c] sm:$0xf] %v383
                %v385 = vld [vmem:[%s303 + $0x140] sm:$0xf]
                %386 = vst [vmem:[%s304 + $0xa0] sm:$0xf] %v385
                %v387 = vld [vmem:[%s303 + $0x148] sm:$0xf]
                %388 = vst [vmem:[%s304 + $0xa4] sm:$0xf] %v387
                %v389 = vld [vmem:[%s303 + $0x150] sm:$0xf]
                %390 = vst [vmem:[%s304 + $0xa8] sm:$0xf] %v389
                %v391 = vld [vmem:[%s303 + $0x158] sm:$0xf]
                %392 = vst [vmem:[%s304 + $0xac] sm:$0xf] %v391
                %v393 = vld [vmem:[%s303 + $0x160] sm:$0xf]
                %394 = vst [vmem:[%s304 + $0xb0] sm:$0xf] %v393
                %v395 = vld [vmem:[%s303 + $0x168] sm:$0xf]
                %396 = vst [vmem:[%s304 + $0xb4] sm:$0xf] %v395
                %v397 = vld [vmem:[%s303 + $0x170] sm:$0xf]
                %398 = vst [vmem:[%s304 + $0xb8] sm:$0xf] %v397
                %v399 = vld [vmem:[%s303 + $0x178] sm:$0xf]
                %400 = vst [vmem:[%s304 + $0xbc] sm:$0xf] %v399
                %v401 = vld [vmem:[%s303 + $0x180] sm:$0xf]
                %402 = vst [vmem:[%s304 + $0xc0] sm:$0xf] %v401
                %v403 = vld [vmem:[%s303 + $0x188] sm:$0xf]
                %404 = vst [vmem:[%s304 + $0xc4] sm:$0xf] %v403
                %v405 = vld [vmem:[%s303 + $0x190] sm:$0xf]
                %406 = vst [vmem:[%s304 + $0xc8] sm:$0xf] %v405
                %v407 = vld [vmem:[%s303 + $0x198] sm:$0xf]
                %408 = vst [vmem:[%s304 + $0xcc] sm:$0xf] %v407
                %v409 = vld [vmem:[%s303 + $0x1a0] sm:$0xf]
                %410 = vst [vmem:[%s304 + $0xd0] sm:$0xf] %v409
                %v411 = vld [vmem:[%s303 + $0x1a8] sm:$0xf]
                %412 = vst [vmem:[%s304 + $0xd4] sm:$0xf] %v411
                %v413 = vld [vmem:[%s303 + $0x1b0] sm:$0xf]
                %414 = vst [vmem:[%s304 + $0xd8] sm:$0xf] %v413
                %v415 = vld [vmem:[%s303 + $0x1b8] sm:$0xf]
                %416 = vst [vmem:[%s304 + $0xdc] sm:$0xf] %v415
                %v417 = vld [vmem:[%s303 + $0x1c0] sm:$0xf]
                %418 = vst [vmem:[%s304 + $0xe0] sm:$0xf] %v417
                %v419 = vld [vmem:[%s303 + $0x1c8] sm:$0xf]
                %420 = vst [vmem:[%s304 + $0xe4] sm:$0xf] %v419
                %v421 = vld [vmem:[%s303 + $0x1d0] sm:$0xf]
                %422 = vst [vmem:[%s304 + $0xe8] sm:$0xf] %v421
                %v423 = vld [vmem:[%s303 + $0x1d8] sm:$0xf]
                %424 = vst [vmem:[%s304 + $0xec] sm:$0xf] %v423
                %v425 = vld [vmem:[%s303 + $0x1e0] sm:$0xf]
                %426 = vst [vmem:[%s304 + $0xf0] sm:$0xf] %v425
                %v427 = vld [vmem:[%s303 + $0x1e8] sm:$0xf]
                %428 = vst [vmem:[%s304 + $0xf4] sm:$0xf] %v427
                %v429 = vld [vmem:[%s303 + $0x1f0] sm:$0xf]
                %430 = vst [vmem:[%s304 + $0xf8] sm:$0xf] %v429
                %v431 = vld [vmem:[%s303 + $0x1f8] sm:$0xf]
                %432 = vst [vmem:[%s304 + $0xfc] sm:$0xf] %v431
                %v433 = vld [vmem:[%s303 + $0x200] sm:$0xf]
                %434 = vst [vmem:[%s304 + $0x100] sm:$0xf] %v433
                %v435 = vld [vmem:[%s303 + $0x208] sm:$0xf]
                %436 = vst [vmem:[%s304 + $0x104] sm:$0xf] %v435
                %v437 = vld [vmem:[%s303 + $0x210] sm:$0xf]
                %438 = vst [vmem:[%s304 + $0x108] sm:$0xf] %v437
                %v439 = vld [vmem:[%s303 + $0x218] sm:$0xf]
                %440 = vst [vmem:[%s304 + $0x10c] sm:$0xf] %v439
                %v441 = vld [vmem:[%s303 + $0x220] sm:$0xf]
                %442 = vst [vmem:[%s304 + $0x110] sm:$0xf] %v441
                %v443 = vld [vmem:[%s303 + $0x228] sm:$0xf]
                %444 = vst [vmem:[%s304 + $0x114] sm:$0xf] %v443
                %v445 = vld [vmem:[%s303 + $0x230] sm:$0xf]
                %446 = vst [vmem:[%s304 + $0x118] sm:$0xf] %v445
                %v447 = vld [vmem:[%s303 + $0x238] sm:$0xf]
                %448 = vst [vmem:[%s304 + $0x11c] sm:$0xf] %v447
                %v449 = vld [vmem:[%s303 + $0x240] sm:$0xf]
                %450 = vst [vmem:[%s304 + $0x120] sm:$0xf] %v449
                %v451 = vld [vmem:[%s303 + $0x248] sm:$0xf]
                %452 = vst [vmem:[%s304 + $0x124] sm:$0xf] %v451
                %v453 = vld [vmem:[%s303 + $0x250] sm:$0xf]
                %454 = vst [vmem:[%s304 + $0x128] sm:$0xf] %v453
                %v455 = vld [vmem:[%s303 + $0x258] sm:$0xf]
                %456 = vst [vmem:[%s304 + $0x12c] sm:$0xf] %v455
                %v457 = vld [vmem:[%s303 + $0x260] sm:$0xf]
                %458 = vst [vmem:[%s304 + $0x130] sm:$0xf] %v457
                %v459 = vld [vmem:[%s303 + $0x268] sm:$0xf]
                %460 = vst [vmem:[%s304 + $0x134] sm:$0xf] %v459
                %v461 = vld [vmem:[%s303 + $0x270] sm:$0xf]
                %462 = vst [vmem:[%s304 + $0x138] sm:$0xf] %v461
                %v463 = vld [vmem:[%s303 + $0x278] sm:$0xf]
                %464 = vst [vmem:[%s304 + $0x13c] sm:$0xf] %v463
                %v465 = vld [vmem:[%s303 + $0x280] sm:$0xf]
                %466 = vst [vmem:[%s304 + $0x140] sm:$0xf] %v465
                %v467 = vld [vmem:[%s303 + $0x288] sm:$0xf]
                %468 = vst [vmem:[%s304 + $0x144] sm:$0xf] %v467
                %v469 = vld [vmem:[%s303 + $0x290] sm:$0xf]
                %470 = vst [vmem:[%s304 + $0x148] sm:$0xf] %v469
                %v471 = vld [vmem:[%s303 + $0x298] sm:$0xf]
                %472 = vst [vmem:[%s304 + $0x14c] sm:$0xf] %v471
                %v473 = vld [vmem:[%s303 + $0x2a0] sm:$0xf]
                %474 = vst [vmem:[%s304 + $0x150] sm:$0xf] %v473
                %v475 = vld [vmem:[%s303 + $0x2a8] sm:$0xf]
                %476 = vst [vmem:[%s304 + $0x154] sm:$0xf] %v475
                %v477 = vld [vmem:[%s303 + $0x2b0] sm:$0xf]
                %478 = vst [vmem:[%s304 + $0x158] sm:$0xf] %v477
                %v479 = vld [vmem:[%s303 + $0x2b8] sm:$0xf]
                %480 = vst [vmem:[%s304 + $0x15c] sm:$0xf] %v479
                %v481 = vld [vmem:[%s303 + $0x2c0] sm:$0xf]
                %482 = vst [vmem:[%s304 + $0x160] sm:$0xf] %v481
                %v483 = vld [vmem:[%s303 + $0x2c8] sm:$0xf]
                %484 = vst [vmem:[%s304 + $0x164] sm:$0xf] %v483
                %v485 = vld [vmem:[%s303 + $0x2d0] sm:$0xf]
                %486 = vst [vmem:[%s304 + $0x168] sm:$0xf] %v485
                %v487 = vld [vmem:[%s303 + $0x2d8] sm:$0xf]
                %488 = vst [vmem:[%s304 + $0x16c] sm:$0xf] %v487
                %v489 = vld [vmem:[%s303 + $0x2e0] sm:$0xf]
                %490 = vst [vmem:[%s304 + $0x170] sm:$0xf] %v489
                %v491 = vld [vmem:[%s303 + $0x2e8] sm:$0xf]
                %492 = vst [vmem:[%s304 + $0x174] sm:$0xf] %v491
                %v493 = vld [vmem:[%s303 + $0x2f0] sm:$0xf]
                %494 = vst [vmem:[%s304 + $0x178] sm:$0xf] %v493
                %v495 = vld [vmem:[%s303 + $0x2f8] sm:$0xf]
                %496 = vst [vmem:[%s304 + $0x17c] sm:$0xf] %v495
              $region65: #{surf_deeppix_forward.1} parent=59 // loop_footer
                %s302 = sadd.s32 1, %s298
              $region66: #{surf_deeppix_forward.1} parent=59 // loop_footer_branch
                %297 = sbr.rel target = $region62
              $region67: #{surf_deeppix_forward.1} parent=59 // loop_exit
                _
            $region60: #{surf_deeppix_forward.1} parent=51 // pred_fallthru
              _
          $region52: #{surf_deeppix_forward.1} parent=47 // pred_fallthru
            _
          %708 = vnop
        $region48: #{surf_deeppix_forward.1} parent=43 // pred_fallthru
          _
      $region44: #{surf_deeppix_forward.1} parent=5 // pred_fallthru
        _
      %p709 = scmp.le.s32.totalorder 1, %s16
      %p710 = scmp.lt.s32.totalorder %s16, 3
      %p711 = pnand %p709, %p710
      %p712 = pneg %p711
      // Predicated region
      $region86: #{surf_deeppix_forward.1} parent=5 // pred_check
        _
      $region87: #{surf_deeppix_forward.1} parent=5 // pred_check_branch
        %714 = sbr.rel (%p711) target = $region89
      $region88: #{surf_deeppix_forward.1} parent=5 // pred_region
        %s715 = ssub.s32 %s16, 1
        %s716 = sand.u32 %s29, 1
        %s717 = sand.u32 %s29, 1
        %s718 = smul.addr %s717, 384
        %s719 = scalar_lea.vmem [#allocation2], %s718
        // Predicated region
        $region90: #{surf_deeppix_forward.1} parent=88 // pred_check
          %p720 = pneg %p42
        $region91: #{surf_deeppix_forward.1} parent=88 // pred_check_branch
          %722 = sbr.rel (%p720) target = $region93
        $region92: #{surf_deeppix_forward.1} parent=88 // pred_region
          _
        $region93: #{surf_deeppix_forward.1} parent=88 // pred_fallthru
          _
        %s723 = sand.u32 %s29, 1
        %s724 = sand.u32 %s29, 1
        %s725 = smul.addr %s724, 384
        %s726 = scalar_lea.vmem [#allocation2], %s725
        %p727 = pneg %p42
        %p728 = pneg %p39
        %p729 = pneg %p63
        %p730 = pneg %p60
        %p731 = pneg %p84
        %p732 = pneg %p81
        %p733 = pneg %p105
        %p734 = pneg %p102
        %p735 = pneg %p126
        %p736 = pneg %p123
        %p737 = pneg %p147
        %p738 = pneg %p144
        %p739 = pneg %p168
        %p740 = pneg %p165
        %p741 = pneg %p189
        %p742 = pneg %p186
        %p743 = pneg %p215
        %p744 = pneg %p212
        %s745 = smul.u32 2, %s21
        %p746 = scmp.lt.s32.totalorder %s745, 3
        %s747 = scalar_select %p746, %s745, 3
        %s748 = smul.addr %s747, 8
        %s749 = smul.addr %s748, 8
        %s750 = scalar_lea.vmem %s8, %s749
        %p751 = pneg %p241
        %p752 = pneg %p238
        %s753 = smul.u32 2, %s21
        %p754 = scmp.lt.s32.totalorder %s753, 3
        %s755 = scalar_select %p754, %s753, 3
        %s756 = scalar_lea.vmem %s9, %s755
        %s757 = smul.u32 2, %s21
        %p758 = scmp.lt.s32.totalorder %s757, 3
        %s759 = scalar_select %p758, %s757, 3
        %s760 = smul.addr %s759, 8
        %s761 = smul.addr %s760, 8
        %s762 = scalar_lea.vmem %s8, %s761
        %s763 = smul.u32 2, %s21
        %s764 = smul.u32 2, %s21
        %p765 = scmp.lt.s32.totalorder %s764, 3
        %s766 = scalar_select %p765, %s764, 3
        %s767 = scalar_lea.vmem %s9, %s766
        %s768 = smul.u32 2, %s21
        %v770 = vld [vmem:[%s1] sm:$0xff]
        %v771 = vld [vmem:[%s1 + $0x8] sm:$0xff]
        %v772 = vld [vmem:[%s1 + $0x10] sm:$0xff]
        %v773 = vld [vmem:[%s1 + $0x18] sm:$0xff]
        %v774 = vld [vmem:[%s1 + $0x20] sm:$0xff]
        %v775 = vld [vmem:[%s1 + $0x28] sm:$0xff]
        %v776 = vld [vmem:[%s1 + $0x30] sm:$0xff]
        %v777 = vld [vmem:[%s1 + $0x38] sm:$0xff]
        %v778 = vld [vmem:[%s1 + $0x40] sm:$0xff]
        %v779 = vld [vmem:[%s1 + $0x48] sm:$0xff]
        %v780 = vld [vmem:[%s1 + $0x50] sm:$0xff]
        %v781 = vld [vmem:[%s1 + $0x58] sm:$0xff]
        %v782 = vld [vmem:[%s1 + $0x60] sm:$0xff]
        %v783 = vld [vmem:[%s1 + $0x68] sm:$0xff]
        %v784 = vld [vmem:[%s1 + $0x70] sm:$0xff]
        %v785 = vld [vmem:[%s1 + $0x78] sm:$0xff]
        %v786 = vld [vmem:[%s1 + $0x80] sm:$0xff]
        %v787 = vld [vmem:[%s1 + $0x88] sm:$0xff]
        %v788 = vld [vmem:[%s1 + $0x90] sm:$0xff]
        %v789 = vld [vmem:[%s1 + $0x98] sm:$0xff]
        %v790 = vld [vmem:[%s1 + $0xa0] sm:$0xff]
        %v791 = vld [vmem:[%s1 + $0xa8] sm:$0xff]
        %v792 = vld [vmem:[%s1 + $0xb0] sm:$0xff]
        %v793 = vld [vmem:[%s1 + $0xb8] sm:$0xff]
        %v794 = vld [vmem:[%s1 + $0xc0] sm:$0xff]
        %v795 = vld [vmem:[%s1 + $0xc8] sm:$0xff]
        %v796 = vld [vmem:[%s1 + $0xd0] sm:$0xff]
        %v797 = vld [vmem:[%s1 + $0xd8] sm:$0xff]
        %v798 = vld [vmem:[%s1 + $0xe0] sm:$0xff]
        %v799 = vld [vmem:[%s1 + $0xe8] sm:$0xff]
        %v800 = vld [vmem:[%s1 + $0xf0] sm:$0xff]
        %v801 = vld [vmem:[%s1 + $0xf8] sm:$0xff]
        %v802 = vld [vmem:[%s1 + $0x100] sm:$0xff]
        %v803 = vld [vmem:[%s1 + $0x108] sm:$0xff]
        %v804 = vld [vmem:[%s1 + $0x110] sm:$0xff]
        %v805 = vld [vmem:[%s1 + $0x118] sm:$0xff]
        %v806 = vld [vmem:[%s1 + $0x120] sm:$0xff]
        %v807 = vld [vmem:[%s1 + $0x128] sm:$0xff]
        %v808 = vld [vmem:[%s1 + $0x130] sm:$0xff]
        %v809 = vld [vmem:[%s1 + $0x138] sm:$0xff]
        %v810 = vld [vmem:[%s1 + $0x140] sm:$0xff]
        %v811 = vld [vmem:[%s1 + $0x148] sm:$0xff]
        %v812 = vld [vmem:[%s1 + $0x150] sm:$0xff]
        %v813 = vld [vmem:[%s1 + $0x158] sm:$0xff]
        %v814 = vld [vmem:[%s1 + $0x160] sm:$0xff]
        %v815 = vld [vmem:[%s1 + $0x168] sm:$0xff]
        %v816 = vld [vmem:[%s1 + $0x170] sm:$0xff]
        %v817 = vld [vmem:[%s1 + $0x178] sm:$0xff]
        %v818 = vld [vmem:[%s1 + $0x180] sm:$0xff]
        %v819 = vld [vmem:[%s1 + $0x188] sm:$0xff]
        %v820 = vld [vmem:[%s1 + $0x190] sm:$0xff]
        %v821 = vld [vmem:[%s1 + $0x198] sm:$0xff]
        %v822 = vld [vmem:[%s1 + $0x1a0] sm:$0xff]
        %v823 = vld [vmem:[%s1 + $0x1a8] sm:$0xff]
        %v824 = vld [vmem:[%s1 + $0x1b0] sm:$0xff]
        %v825 = vld [vmem:[%s1 + $0x1b8] sm:$0xff]
        %v826 = vld [vmem:[%s1 + $0x1c0] sm:$0xff]
        %v827 = vld [vmem:[%s1 + $0x1c8] sm:$0xff]
        %v828 = vld [vmem:[%s1 + $0x1d0] sm:$0xff]
        %v829 = vld [vmem:[%s1 + $0x1d8] sm:$0xff]
        %v830 = vld [vmem:[%s1 + $0x1e0] sm:$0xff]
        %v831 = vld [vmem:[%s1 + $0x1e8] sm:$0xff]
        %v832 = vld [vmem:[%s1 + $0x1f0] sm:$0xff]
        %v833 = vld [vmem:[%s1 + $0x1f8] sm:$0xff]
        %v834 = vld [vmem:[%s1 + $0x200] sm:$0xff]
        %v835 = vld [vmem:[%s1 + $0x208] sm:$0xff]
        %v836 = vld [vmem:[%s1 + $0x210] sm:$0xff]
        %v837 = vld [vmem:[%s1 + $0x218] sm:$0xff]
        %v838 = vld [vmem:[%s1 + $0x220] sm:$0xff]
        %v839 = vld [vmem:[%s1 + $0x228] sm:$0xff]
        %v840 = vld [vmem:[%s1 + $0x230] sm:$0xff]
        %v841 = vld [vmem:[%s1 + $0x238] sm:$0xff]
        %v842 = vld [vmem:[%s1 + $0x240] sm:$0xff]
        %v843 = vld [vmem:[%s1 + $0x248] sm:$0xff]
        %v844 = vld [vmem:[%s1 + $0x250] sm:$0xff]
        %v845 = vld [vmem:[%s1 + $0x258] sm:$0xff]
        %v846 = vld [vmem:[%s1 + $0x260] sm:$0xff]
        %v847 = vld [vmem:[%s1 + $0x268] sm:$0xff]
        %v848 = vld [vmem:[%s1 + $0x270] sm:$0xff]
        %v849 = vld [vmem:[%s1 + $0x278] sm:$0xff]
        %v850 = vld [vmem:[%s1 + $0x280] sm:$0xff]
        %v851 = vld [vmem:[%s1 + $0x288] sm:$0xff]
        %v852 = vld [vmem:[%s1 + $0x290] sm:$0xff]
        %v853 = vld [vmem:[%s1 + $0x298] sm:$0xff]
        %v854 = vld [vmem:[%s1 + $0x2a0] sm:$0xff]
        %v855 = vld [vmem:[%s1 + $0x2a8] sm:$0xff]
        %v856 = vld [vmem:[%s1 + $0x2b0] sm:$0xff]
        %v857 = vld [vmem:[%s1 + $0x2b8] sm:$0xff]
        %v858 = vld [vmem:[%s1 + $0x2c0] sm:$0xff]
        %v859 = vld [vmem:[%s1 + $0x2c8] sm:$0xff]
        %v860 = vld [vmem:[%s1 + $0x2d0] sm:$0xff]
        %v861 = vld [vmem:[%s1 + $0x2d8] sm:$0xff]
        %v862 = vld [vmem:[%s1 + $0x2e0] sm:$0xff]
        %v863 = vld [vmem:[%s1 + $0x2e8] sm:$0xff]
        %v864 = vld [vmem:[%s1 + $0x2f0] sm:$0xff]
        %v865 = vld [vmem:[%s1 + $0x2f8] sm:$0xff]
        %v866 = vld [vmem:[%s1 + $0x300] sm:$0xff]
        %v867 = vld [vmem:[%s1 + $0x308] sm:$0xff]
        %v868 = vld [vmem:[%s1 + $0x310] sm:$0xff]
        %v869 = vld [vmem:[%s1 + $0x318] sm:$0xff]
        %v870 = vld [vmem:[%s1 + $0x320] sm:$0xff]
        %v871 = vld [vmem:[%s1 + $0x328] sm:$0xff]
        %v872 = vld [vmem:[%s1 + $0x330] sm:$0xff]
        %v873 = vld [vmem:[%s1 + $0x338] sm:$0xff]
        %v874 = vld [vmem:[%s1 + $0x340] sm:$0xff]
        %v875 = vld [vmem:[%s1 + $0x348] sm:$0xff]
        %v876 = vld [vmem:[%s1 + $0x350] sm:$0xff]
        %v877 = vld [vmem:[%s1 + $0x358] sm:$0xff]
        %v878 = vld [vmem:[%s1 + $0x360] sm:$0xff]
        %v879 = vld [vmem:[%s1 + $0x368] sm:$0xff]
        %v880 = vld [vmem:[%s1 + $0x370] sm:$0xff]
        %v881 = vld [vmem:[%s1 + $0x378] sm:$0xff]
        %v882 = vld [vmem:[%s1 + $0x380] sm:$0xff]
        %v883 = vld [vmem:[%s1 + $0x388] sm:$0xff]
        %v884 = vld [vmem:[%s1 + $0x390] sm:$0xff]
        %v885 = vld [vmem:[%s1 + $0x398] sm:$0xff]
        %v886 = vld [vmem:[%s1 + $0x3a0] sm:$0xff]
        %v887 = vld [vmem:[%s1 + $0x3a8] sm:$0xff]
        %v888 = vld [vmem:[%s1 + $0x3b0] sm:$0xff]
        %v889 = vld [vmem:[%s1 + $0x3b8] sm:$0xff]
        %v890 = vld [vmem:[%s1 + $0x3c0] sm:$0xff]
        %v891 = vld [vmem:[%s1 + $0x3c8] sm:$0xff]
        %v892 = vld [vmem:[%s1 + $0x3d0] sm:$0xff]
        %v893 = vld [vmem:[%s1 + $0x3d8] sm:$0xff]
        %v894 = vld [vmem:[%s1 + $0x3e0] sm:$0xff]
        %v895 = vld [vmem:[%s1 + $0x3e8] sm:$0xff]
        %v896 = vld [vmem:[%s1 + $0x3f0] sm:$0xff]
        %v897 = vld [vmem:[%s1 + $0x3f8] sm:$0xff]
        %v898 = vld [vmem:[%s1 + $0x400] sm:$0xff]
        %v899 = vld [vmem:[%s1 + $0x408] sm:$0xff]
        %v900 = vld [vmem:[%s1 + $0x410] sm:$0xff]
        %v901 = vld [vmem:[%s1 + $0x418] sm:$0xff]
        %v902 = vld [vmem:[%s1 + $0x420] sm:$0xff]
        %v903 = vld [vmem:[%s1 + $0x428] sm:$0xff]
        %v904 = vld [vmem:[%s1 + $0x430] sm:$0xff]
        %v905 = vld [vmem:[%s1 + $0x438] sm:$0xff]
        %v906 = vld [vmem:[%s1 + $0x440] sm:$0xff]
        %v907 = vld [vmem:[%s1 + $0x448] sm:$0xff]
        %v908 = vld [vmem:[%s1 + $0x450] sm:$0xff]
        %v909 = vld [vmem:[%s1 + $0x458] sm:$0xff]
        %v910 = vld [vmem:[%s1 + $0x460] sm:$0xff]
        %v911 = vld [vmem:[%s1 + $0x468] sm:$0xff]
        %v912 = vld [vmem:[%s1 + $0x470] sm:$0xff]
        %v913 = vld [vmem:[%s1 + $0x478] sm:$0xff]
        %v914 = vld [vmem:[%s1 + $0x480] sm:$0xff]
        %v915 = vld [vmem:[%s1 + $0x488] sm:$0xff]
        %v916 = vld [vmem:[%s1 + $0x490] sm:$0xff]
        %v917 = vld [vmem:[%s1 + $0x498] sm:$0xff]
        %v918 = vld [vmem:[%s1 + $0x4a0] sm:$0xff]
        %v919 = vld [vmem:[%s1 + $0x4a8] sm:$0xff]
        %v920 = vld [vmem:[%s1 + $0x4b0] sm:$0xff]
        %v921 = vld [vmem:[%s1 + $0x4b8] sm:$0xff]
        %v922 = vld [vmem:[%s1 + $0x4c0] sm:$0xff]
        %v923 = vld [vmem:[%s1 + $0x4c8] sm:$0xff]
        %v924 = vld [vmem:[%s1 + $0x4d0] sm:$0xff]
        %v925 = vld [vmem:[%s1 + $0x4d8] sm:$0xff]
        %v926 = vld [vmem:[%s1 + $0x4e0] sm:$0xff]
        %v927 = vld [vmem:[%s1 + $0x4e8] sm:$0xff]
        %v928 = vld [vmem:[%s1 + $0x4f0] sm:$0xff]
        %v929 = vld [vmem:[%s1 + $0x4f8] sm:$0xff]
        %v930 = vld [vmem:[%s1 + $0x500] sm:$0xff]
        %v931 = vld [vmem:[%s1 + $0x508] sm:$0xff]
        %v932 = vld [vmem:[%s1 + $0x510] sm:$0xff]
        %v933 = vld [vmem:[%s1 + $0x518] sm:$0xff]
        %v934 = vld [vmem:[%s1 + $0x520] sm:$0xff]
        %v935 = vld [vmem:[%s1 + $0x528] sm:$0xff]
        %v936 = vld [vmem:[%s1 + $0x530] sm:$0xff]
        %v937 = vld [vmem:[%s1 + $0x538] sm:$0xff]
        %v938 = vld [vmem:[%s1 + $0x540] sm:$0xff]
        %v939 = vld [vmem:[%s1 + $0x548] sm:$0xff]
        %v940 = vld [vmem:[%s1 + $0x550] sm:$0xff]
        %v941 = vld [vmem:[%s1 + $0x558] sm:$0xff]
        %v942 = vld [vmem:[%s1 + $0x560] sm:$0xff]
        %v943 = vld [vmem:[%s1 + $0x568] sm:$0xff]
        %v944 = vld [vmem:[%s1 + $0x570] sm:$0xff]
        %v945 = vld [vmem:[%s1 + $0x578] sm:$0xff]
        %v946 = vld [vmem:[%s1 + $0x580] sm:$0xff]
        %v947 = vld [vmem:[%s1 + $0x588] sm:$0xff]
        %v948 = vld [vmem:[%s1 + $0x590] sm:$0xff]
        %v949 = vld [vmem:[%s1 + $0x598] sm:$0xff]
        %v950 = vld [vmem:[%s1 + $0x5a0] sm:$0xff]
        %v951 = vld [vmem:[%s1 + $0x5a8] sm:$0xff]
        %v952 = vld [vmem:[%s1 + $0x5b0] sm:$0xff]
        %v953 = vld [vmem:[%s1 + $0x5b8] sm:$0xff]
        %v954 = vld [vmem:[%s1 + $0x5c0] sm:$0xff]
        %v955 = vld [vmem:[%s1 + $0x5c8] sm:$0xff]
        %v956 = vld [vmem:[%s1 + $0x5d0] sm:$0xff]
        %v957 = vld [vmem:[%s1 + $0x5d8] sm:$0xff]
        %v958 = vld [vmem:[%s1 + $0x5e0] sm:$0xff]
        %v959 = vld [vmem:[%s1 + $0x5e8] sm:$0xff]
        %v960 = vld [vmem:[%s1 + $0x5f0] sm:$0xff]
        %v961 = vld [vmem:[%s1 + $0x5f8] sm:$0xff]
        %v962 = vld [vmem:[%s719] sm:$0xf]
        %v963 = vld [vmem:[%s719 + $0x4] sm:$0xf]
        %v964 = vld [vmem:[%s719 + $0x8] sm:$0xf]
        %v965 = vld [vmem:[%s719 + $0xc] sm:$0xf]
        %v966 = vld [vmem:[%s719 + $0x10] sm:$0xf]
        %v967 = vld [vmem:[%s719 + $0x14] sm:$0xf]
        %v968 = vld [vmem:[%s719 + $0x18] sm:$0xf]
        %v969 = vld [vmem:[%s719 + $0x1c] sm:$0xf]
        %v970 = vld [vmem:[%s719 + $0x20] sm:$0xf]
        %v971 = vld [vmem:[%s719 + $0x24] sm:$0xf]
        %v972 = vld [vmem:[%s719 + $0x28] sm:$0xf]
        %v973 = vld [vmem:[%s719 + $0x2c] sm:$0xf]
        %v974 = vld [vmem:[%s719 + $0x30] sm:$0xf]
        %v975 = vld [vmem:[%s719 + $0x34] sm:$0xf]
        %v976 = vld [vmem:[%s719 + $0x38] sm:$0xf]
        %v977 = vld [vmem:[%s719 + $0x3c] sm:$0xf]
        %v978 = vld [vmem:[%s719 + $0x40] sm:$0xf]
        %v979 = vld [vmem:[%s719 + $0x44] sm:$0xf]
        %v980 = vld [vmem:[%s719 + $0x48] sm:$0xf]
        %v981 = vld [vmem:[%s719 + $0x4c] sm:$0xf]
        %v982 = vld [vmem:[%s719 + $0x50] sm:$0xf]
        %v983 = vld [vmem:[%s719 + $0x54] sm:$0xf]
        %v984 = vld [vmem:[%s719 + $0x58] sm:$0xf]
        %v985 = vld [vmem:[%s719 + $0x5c] sm:$0xf]
        %v986 = vld [vmem:[%s719 + $0x60] sm:$0xf]
        %v987 = vld [vmem:[%s719 + $0x64] sm:$0xf]
        %v988 = vld [vmem:[%s719 + $0x68] sm:$0xf]
        %v989 = vld [vmem:[%s719 + $0x6c] sm:$0xf]
        %v990 = vld [vmem:[%s719 + $0x70] sm:$0xf]
        %v991 = vld [vmem:[%s719 + $0x74] sm:$0xf]
        %v992 = vld [vmem:[%s719 + $0x78] sm:$0xf]
        %v993 = vld [vmem:[%s719 + $0x7c] sm:$0xf]
        %v994 = vld [vmem:[%s719 + $0x80] sm:$0xf]
        %v995 = vld [vmem:[%s719 + $0x84] sm:$0xf]
        %v996 = vld [vmem:[%s719 + $0x88] sm:$0xf]
        %v997 = vld [vmem:[%s719 + $0x8c] sm:$0xf]
        %v998 = vld [vmem:[%s719 + $0x90] sm:$0xf]
        %v999 = vld [vmem:[%s719 + $0x94] sm:$0xf]
        %v1000 = vld [vmem:[%s719 + $0x98] sm:$0xf]
        %v1001 = vld [vmem:[%s719 + $0x9c] sm:$0xf]
        %v1002 = vld [vmem:[%s719 + $0xa0] sm:$0xf]
        %v1003 = vld [vmem:[%s719 + $0xa4] sm:$0xf]
        %v1004 = vld [vmem:[%s719 + $0xa8] sm:$0xf]
        %v1005 = vld [vmem:[%s719 + $0xac] sm:$0xf]
        %v1006 = vld [vmem:[%s719 + $0xb0] sm:$0xf]
        %v1007 = vld [vmem:[%s719 + $0xb4] sm:$0xf]
        %v1008 = vld [vmem:[%s719 + $0xb8] sm:$0xf]
        %v1009 = vld [vmem:[%s719 + $0xbc] sm:$0xf]
        %v1010 = vld [vmem:[%s719 + $0xc0] sm:$0xf]
        %v1011 = vld [vmem:[%s719 + $0xc4] sm:$0xf]
        %v1012 = vld [vmem:[%s719 + $0xc8] sm:$0xf]
        %v1013 = vld [vmem:[%s719 + $0xcc] sm:$0xf]
        %v1014 = vld [vmem:[%s719 + $0xd0] sm:$0xf]
        %v1015 = vld [vmem:[%s719 + $0xd4] sm:$0xf]
        %v1016 = vld [vmem:[%s719 + $0xd8] sm:$0xf]
        %v1017 = vld [vmem:[%s719 + $0xdc] sm:$0xf]
        %v1018 = vld [vmem:[%s719 + $0xe0] sm:$0xf]
        %v1019 = vld [vmem:[%s719 + $0xe4] sm:$0xf]
        %v1020 = vld [vmem:[%s719 + $0xe8] sm:$0xf]
        %v1021 = vld [vmem:[%s719 + $0xec] sm:$0xf]
        %v1022 = vld [vmem:[%s719 + $0xf0] sm:$0xf]
        %v1023 = vld [vmem:[%s719 + $0xf4] sm:$0xf]
        %v1024 = vld [vmem:[%s719 + $0xf8] sm:$0xf]
        %v1025 = vld [vmem:[%s719 + $0xfc] sm:$0xf]
        %v1026 = vld [vmem:[%s719 + $0x100] sm:$0xf]
        %v1027 = vld [vmem:[%s719 + $0x104] sm:$0xf]
        %v1028 = vld [vmem:[%s719 + $0x108] sm:$0xf]
        %v1029 = vld [vmem:[%s719 + $0x10c] sm:$0xf]
        %v1030 = vld [vmem:[%s719 + $0x110] sm:$0xf]
        %v1031 = vld [vmem:[%s719 + $0x114] sm:$0xf]
        %v1032 = vld [vmem:[%s719 + $0x118] sm:$0xf]
        %v1033 = vld [vmem:[%s719 + $0x11c] sm:$0xf]
        %v1034 = vld [vmem:[%s719 + $0x120] sm:$0xf]
        %v1035 = vld [vmem:[%s719 + $0x124] sm:$0xf]
        %v1036 = vld [vmem:[%s719 + $0x128] sm:$0xf]
        %v1037 = vld [vmem:[%s719 + $0x12c] sm:$0xf]
        %v1038 = vld [vmem:[%s719 + $0x130] sm:$0xf]
        %v1039 = vld [vmem:[%s719 + $0x134] sm:$0xf]
        %v1040 = vld [vmem:[%s719 + $0x138] sm:$0xf]
        %v1041 = vld [vmem:[%s719 + $0x13c] sm:$0xf]
        %v1042 = vld [vmem:[%s719 + $0x140] sm:$0xf]
        %v1043 = vld [vmem:[%s719 + $0x144] sm:$0xf]
        %v1044 = vld [vmem:[%s719 + $0x148] sm:$0xf]
        %v1045 = vld [vmem:[%s719 + $0x14c] sm:$0xf]
        %v1046 = vld [vmem:[%s719 + $0x150] sm:$0xf]
        %v1047 = vld [vmem:[%s719 + $0x154] sm:$0xf]
        %v1048 = vld [vmem:[%s719 + $0x158] sm:$0xf]
        %v1049 = vld [vmem:[%s719 + $0x15c] sm:$0xf]
        %v1050 = vld [vmem:[%s719 + $0x160] sm:$0xf]
        %v1051 = vld [vmem:[%s719 + $0x164] sm:$0xf]
        %v1052 = vld [vmem:[%s719 + $0x168] sm:$0xf]
        %v1053 = vld [vmem:[%s719 + $0x16c] sm:$0xf]
        %v1054 = vld [vmem:[%s719 + $0x170] sm:$0xf]
        %v1055 = vld [vmem:[%s719 + $0x174] sm:$0xf]
        %v1056 = vld [vmem:[%s719 + $0x178] sm:$0xf]
        %v1057 = vld [vmem:[%s719 + $0x17c] sm:$0xf]
        %v1058 = vld [vmem:[%s2] sm:$0xff]
        %v1059 = vld [vmem:[%s2 + $0x8] sm:$0xff]
        %v1060 = vld [vmem:[%s2 + $0x10] sm:$0xff]
        %v1061 = vld [vmem:[%s2 + $0x18] sm:$0xff]
        %v1062 = vld [vmem:[%s2 + $0x20] sm:$0xff]
        %v1063 = vld [vmem:[%s2 + $0x28] sm:$0xff]
        %v1064 = vld [vmem:[%s2 + $0x30] sm:$0xff]
        %v1065 = vld [vmem:[%s2 + $0x38] sm:$0xff]
        %v1066 = vld [vmem:[%s2 + $0x40] sm:$0xff]
        %v1067 = vld [vmem:[%s2 + $0x48] sm:$0xff]
        %v1068 = vld [vmem:[%s2 + $0x50] sm:$0xff]
        %v1069 = vld [vmem:[%s2 + $0x58] sm:$0xff]
        %v1070 = vld [vmem:[%s2 + $0x60] sm:$0xff]
        %v1071 = vld [vmem:[%s2 + $0x68] sm:$0xff]
        %v1072 = vld [vmem:[%s2 + $0x70] sm:$0xff]
        %v1073 = vld [vmem:[%s2 + $0x78] sm:$0xff]
        %v1074 = vld [vmem:[%s2 + $0x80] sm:$0xff]
        %v1075 = vld [vmem:[%s2 + $0x88] sm:$0xff]
        %v1076 = vld [vmem:[%s2 + $0x90] sm:$0xff]
        %v1077 = vld [vmem:[%s2 + $0x98] sm:$0xff]
        %v1078 = vld [vmem:[%s2 + $0xa0] sm:$0xff]
        %v1079 = vld [vmem:[%s2 + $0xa8] sm:$0xff]
        %v1080 = vld [vmem:[%s2 + $0xb0] sm:$0xff]
        %v1081 = vld [vmem:[%s2 + $0xb8] sm:$0xff]
        %v1082 = vld [vmem:[%s2 + $0xc0] sm:$0xff]
        %v1083 = vld [vmem:[%s2 + $0xc8] sm:$0xff]
        %v1084 = vld [vmem:[%s2 + $0xd0] sm:$0xff]
        %v1085 = vld [vmem:[%s2 + $0xd8] sm:$0xff]
        %v1086 = vld [vmem:[%s2 + $0xe0] sm:$0xff]
        %v1087 = vld [vmem:[%s2 + $0xe8] sm:$0xff]
        %v1088 = vld [vmem:[%s2 + $0xf0] sm:$0xff]
        %v1089 = vld [vmem:[%s2 + $0xf8] sm:$0xff]
        %v1090 = vld [vmem:[%s2 + $0x100] sm:$0xff]
        %v1091 = vld [vmem:[%s2 + $0x108] sm:$0xff]
        %v1092 = vld [vmem:[%s2 + $0x110] sm:$0xff]
        %v1093 = vld [vmem:[%s2 + $0x118] sm:$0xff]
        %v1094 = vld [vmem:[%s2 + $0x120] sm:$0xff]
        %v1095 = vld [vmem:[%s2 + $0x128] sm:$0xff]
        %v1096 = vld [vmem:[%s2 + $0x130] sm:$0xff]
        %v1097 = vld [vmem:[%s2 + $0x138] sm:$0xff]
        %v1098 = vld [vmem:[%s2 + $0x140] sm:$0xff]
        %v1099 = vld [vmem:[%s2 + $0x148] sm:$0xff]
        %v1100 = vld [vmem:[%s2 + $0x150] sm:$0xff]
        %v1101 = vld [vmem:[%s2 + $0x158] sm:$0xff]
        %v1102 = vld [vmem:[%s2 + $0x160] sm:$0xff]
        %v1103 = vld [vmem:[%s2 + $0x168] sm:$0xff]
        %v1104 = vld [vmem:[%s2 + $0x170] sm:$0xff]
        %v1105 = vld [vmem:[%s2 + $0x178] sm:$0xff]
        %v1106 = vld [vmem:[%s2 + $0x180] sm:$0xff]
        %v1107 = vld [vmem:[%s2 + $0x188] sm:$0xff]
        %v1108 = vld [vmem:[%s2 + $0x190] sm:$0xff]
        %v1109 = vld [vmem:[%s2 + $0x198] sm:$0xff]
        %v1110 = vld [vmem:[%s2 + $0x1a0] sm:$0xff]
        %v1111 = vld [vmem:[%s2 + $0x1a8] sm:$0xff]
        %v1112 = vld [vmem:[%s2 + $0x1b0] sm:$0xff]
        %v1113 = vld [vmem:[%s2 + $0x1b8] sm:$0xff]
        %v1114 = vld [vmem:[%s2 + $0x1c0] sm:$0xff]
        %v1115 = vld [vmem:[%s2 + $0x1c8] sm:$0xff]
        %v1116 = vld [vmem:[%s2 + $0x1d0] sm:$0xff]
        %v1117 = vld [vmem:[%s2 + $0x1d8] sm:$0xff]
        %v1118 = vld [vmem:[%s2 + $0x1e0] sm:$0xff]
        %v1119 = vld [vmem:[%s2 + $0x1e8] sm:$0xff]
        %v1120 = vld [vmem:[%s2 + $0x1f0] sm:$0xff]
        %v1121 = vld [vmem:[%s2 + $0x1f8] sm:$0xff]
        %1123 = vset.pattern.permute.xlu0 0
        %1124 = vperm.xlu0 %1123, %v1058
        %v1125 = vpop.permute.xlu0 %1124
        %1128 = vset.pattern.permute.xlu0 0
        %1129 = vperm.xlu0 %1128, %v1059
        %v1130 = vpop.permute.xlu0 %1129
        %1133 = vset.pattern.permute.xlu0 0
        %1134 = vperm.xlu0 %1133, %v1060
        %v1135 = vpop.permute.xlu0 %1134
        %1138 = vset.pattern.permute.xlu0 0
        %1139 = vperm.xlu0 %1138, %v1061
        %v1140 = vpop.permute.xlu0 %1139
        %1143 = vset.pattern.permute.xlu0 0
        %1144 = vperm.xlu0 %1143, %v1062
        %v1145 = vpop.permute.xlu0 %1144
        %1148 = vset.pattern.permute.xlu0 0
        %1149 = vperm.xlu0 %1148, %v1063
        %v1150 = vpop.permute.xlu0 %1149
        %1153 = vset.pattern.permute.xlu0 0
        %1154 = vperm.xlu0 %1153, %v1064
        %v1155 = vpop.permute.xlu0 %1154
        %1158 = vset.pattern.permute.xlu0 0
        %1159 = vperm.xlu0 %1158, %v1065
        %v1160 = vpop.permute.xlu0 %1159
        %1163 = vset.pattern.permute.xlu0 0
        %1164 = vperm.xlu0 %1163, %v1066
        %v1165 = vpop.permute.xlu0 %1164
        %1168 = vset.pattern.permute.xlu0 0
        %1169 = vperm.xlu0 %1168, %v1067
        %v1170 = vpop.permute.xlu0 %1169
        %1173 = vset.pattern.permute.xlu0 0
        %1174 = vperm.xlu0 %1173, %v1068
        %v1175 = vpop.permute.xlu0 %1174
        %1178 = vset.pattern.permute.xlu0 0
        %1179 = vperm.xlu0 %1178, %v1069
        %v1180 = vpop.permute.xlu0 %1179
        %1183 = vset.pattern.permute.xlu0 0
        %1184 = vperm.xlu0 %1183, %v1070
        %v1185 = vpop.permute.xlu0 %1184
        %1188 = vset.pattern.permute.xlu0 0
        %1189 = vperm.xlu0 %1188, %v1071
        %v1190 = vpop.permute.xlu0 %1189
        %1193 = vset.pattern.permute.xlu0 0
        %1194 = vperm.xlu0 %1193, %v1072
        %v1195 = vpop.permute.xlu0 %1194
        %1198 = vset.pattern.permute.xlu0 0
        %1199 = vperm.xlu0 %1198, %v1073
        %v1200 = vpop.permute.xlu0 %1199
        %1203 = vset.pattern.permute.xlu0 0
        %1204 = vperm.xlu0 %1203, %v1074
        %v1205 = vpop.permute.xlu0 %1204
        %1208 = vset.pattern.permute.xlu0 0
        %1209 = vperm.xlu0 %1208, %v1075
        %v1210 = vpop.permute.xlu0 %1209
        %1213 = vset.pattern.permute.xlu0 0
        %1214 = vperm.xlu0 %1213, %v1076
        %v1215 = vpop.permute.xlu0 %1214
        %1218 = vset.pattern.permute.xlu0 0
        %1219 = vperm.xlu0 %1218, %v1077
        %v1220 = vpop.permute.xlu0 %1219
        %1223 = vset.pattern.permute.xlu0 0
        %1224 = vperm.xlu0 %1223, %v1078
        %v1225 = vpop.permute.xlu0 %1224
        %1228 = vset.pattern.permute.xlu0 0
        %1229 = vperm.xlu0 %1228, %v1079
        %v1230 = vpop.permute.xlu0 %1229
        %1233 = vset.pattern.permute.xlu0 0
        %1234 = vperm.xlu0 %1233, %v1080
        %v1235 = vpop.permute.xlu0 %1234
        %1238 = vset.pattern.permute.xlu0 0
        %1239 = vperm.xlu0 %1238, %v1081
        %v1240 = vpop.permute.xlu0 %1239
        %1243 = vset.pattern.permute.xlu0 0
        %1244 = vperm.xlu0 %1243, %v1082
        %v1245 = vpop.permute.xlu0 %1244
        %1248 = vset.pattern.permute.xlu0 0
        %1249 = vperm.xlu0 %1248, %v1083
        %v1250 = vpop.permute.xlu0 %1249
        %1253 = vset.pattern.permute.xlu0 0
        %1254 = vperm.xlu0 %1253, %v1084
        %v1255 = vpop.permute.xlu0 %1254
        %1258 = vset.pattern.permute.xlu0 0
        %1259 = vperm.xlu0 %1258, %v1085
        %v1260 = vpop.permute.xlu0 %1259
        %1263 = vset.pattern.permute.xlu0 0
        %1264 = vperm.xlu0 %1263, %v1086
        %v1265 = vpop.permute.xlu0 %1264
        %1268 = vset.pattern.permute.xlu0 0
        %1269 = vperm.xlu0 %1268, %v1087
        %v1270 = vpop.permute.xlu0 %1269
        %1273 = vset.pattern.permute.xlu0 0
        %1274 = vperm.xlu0 %1273, %v1088
        %v1275 = vpop.permute.xlu0 %1274
        %1278 = vset.pattern.permute.xlu0 0
        %1279 = vperm.xlu0 %1278, %v1089
        %v1280 = vpop.permute.xlu0 %1279
        %1283 = vset.pattern.permute.xlu0 0
        %1284 = vperm.xlu0 %1283, %v1090
        %v1285 = vpop.permute.xlu0 %1284
        %1288 = vset.pattern.permute.xlu0 0
        %1289 = vperm.xlu0 %1288, %v1091
        %v1290 = vpop.permute.xlu0 %1289
        %1293 = vset.pattern.permute.xlu0 0
        %1294 = vperm.xlu0 %1293, %v1092
        %v1295 = vpop.permute.xlu0 %1294
        %1298 = vset.pattern.permute.xlu0 0
        %1299 = vperm.xlu0 %1298, %v1093
        %v1300 = vpop.permute.xlu0 %1299
        %1303 = vset.pattern.permute.xlu0 0
        %1304 = vperm.xlu0 %1303, %v1094
        %v1305 = vpop.permute.xlu0 %1304
        %1308 = vset.pattern.permute.xlu0 0
        %1309 = vperm.xlu0 %1308, %v1095
        %v1310 = vpop.permute.xlu0 %1309
        %1313 = vset.pattern.permute.xlu0 0
        %1314 = vperm.xlu0 %1313, %v1096
        %v1315 = vpop.permute.xlu0 %1314
        %1318 = vset.pattern.permute.xlu0 0
        %1319 = vperm.xlu0 %1318, %v1097
        %v1320 = vpop.permute.xlu0 %1319
        %1323 = vset.pattern.permute.xlu0 0
        %1324 = vperm.xlu0 %1323, %v1098
        %v1325 = vpop.permute.xlu0 %1324
        %1328 = vset.pattern.permute.xlu0 0
        %1329 = vperm.xlu0 %1328, %v1099
        %v1330 = vpop.permute.xlu0 %1329
        %1333 = vset.pattern.permute.xlu0 0
        %1334 = vperm.xlu0 %1333, %v1100
        %v1335 = vpop.permute.xlu0 %1334
        %1338 = vset.pattern.permute.xlu0 0
        %1339 = vperm.xlu0 %1338, %v1101
        %v1340 = vpop.permute.xlu0 %1339
        %1343 = vset.pattern.permute.xlu0 0
        %1344 = vperm.xlu0 %1343, %v1102
        %v1345 = vpop.permute.xlu0 %1344
        %1348 = vset.pattern.permute.xlu0 0
        %1349 = vperm.xlu0 %1348, %v1103
        %v1350 = vpop.permute.xlu0 %1349
        %1353 = vset.pattern.permute.xlu0 0
        %1354 = vperm.xlu0 %1353, %v1104
        %v1355 = vpop.permute.xlu0 %1354
        %1358 = vset.pattern.permute.xlu0 0
        %1359 = vperm.xlu0 %1358, %v1105
        %v1360 = vpop.permute.xlu0 %1359
        %1363 = vset.pattern.permute.xlu0 0
        %1364 = vperm.xlu0 %1363, %v1106
        %v1365 = vpop.permute.xlu0 %1364
        %1368 = vset.pattern.permute.xlu0 0
        %1369 = vperm.xlu0 %1368, %v1107
        %v1370 = vpop.permute.xlu0 %1369
        %1373 = vset.pattern.permute.xlu0 0
        %1374 = vperm.xlu0 %1373, %v1108
        %v1375 = vpop.permute.xlu0 %1374
        %1378 = vset.pattern.permute.xlu0 0
        %1379 = vperm.xlu0 %1378, %v1109
        %v1380 = vpop.permute.xlu0 %1379
        %1383 = vset.pattern.permute.xlu0 0
        %1384 = vperm.xlu0 %1383, %v1110
        %v1385 = vpop.permute.xlu0 %1384
        %1388 = vset.pattern.permute.xlu0 0
        %1389 = vperm.xlu0 %1388, %v1111
        %v1390 = vpop.permute.xlu0 %1389
        %1393 = vset.pattern.permute.xlu0 0
        %1394 = vperm.xlu0 %1393, %v1112
        %v1395 = vpop.permute.xlu0 %1394
        %1398 = vset.pattern.permute.xlu0 0
        %1399 = vperm.xlu0 %1398, %v1113
        %v1400 = vpop.permute.xlu0 %1399
        %1403 = vset.pattern.permute.xlu0 0
        %1404 = vperm.xlu0 %1403, %v1114
        %v1405 = vpop.permute.xlu0 %1404
        %1408 = vset.pattern.permute.xlu0 0
        %1409 = vperm.xlu0 %1408, %v1115
        %v1410 = vpop.permute.xlu0 %1409
        %1413 = vset.pattern.permute.xlu0 0
        %1414 = vperm.xlu0 %1413, %v1116
        %v1415 = vpop.permute.xlu0 %1414
        %1418 = vset.pattern.permute.xlu0 0
        %1419 = vperm.xlu0 %1418, %v1117
        %v1420 = vpop.permute.xlu0 %1419
        %1423 = vset.pattern.permute.xlu0 0
        %1424 = vperm.xlu0 %1423, %v1118
        %v1425 = vpop.permute.xlu0 %1424
        %1428 = vset.pattern.permute.xlu0 0
        %1429 = vperm.xlu0 %1428, %v1119
        %v1430 = vpop.permute.xlu0 %1429
        %1433 = vset.pattern.permute.xlu0 0
        %1434 = vperm.xlu0 %1433, %v1120
        %v1435 = vpop.permute.xlu0 %1434
        %1438 = vset.pattern.permute.xlu0 0
        %1439 = vperm.xlu0 %1438, %v1121
        %v1440 = vpop.permute.xlu0 %1439
        %v1634 = vunpack.c.l.b16 %v770
        %v1635 = vunpack.c.h.b16 %v770
        %v1636 = vunpack.c.l.b16 %v771
        %v1637 = vunpack.c.h.b16 %v771
        %v1638 = vunpack.c.l.b16 %v772
        %v1639 = vunpack.c.h.b16 %v772
        %v1640 = vunpack.c.l.b16 %v773
        %v1641 = vunpack.c.h.b16 %v773
        %v1642 = vunpack.c.l.b16 %v774
        %v1643 = vunpack.c.h.b16 %v774
        %v1644 = vunpack.c.l.b16 %v775
        %v1645 = vunpack.c.h.b16 %v775
        %v1646 = vunpack.c.l.b16 %v776
        %v1647 = vunpack.c.h.b16 %v776
        %v1648 = vunpack.c.l.b16 %v777
        %v1649 = vunpack.c.h.b16 %v777
        %v1650 = vunpack.c.l.b16 %v778
        %v1651 = vunpack.c.h.b16 %v778
        %v1652 = vunpack.c.l.b16 %v779
        %v1653 = vunpack.c.h.b16 %v779
        %v1654 = vunpack.c.l.b16 %v780
        %v1655 = vunpack.c.h.b16 %v780
        %v1656 = vunpack.c.l.b16 %v781
        %v1657 = vunpack.c.h.b16 %v781
        %v1658 = vunpack.c.l.b16 %v782
        %v1659 = vunpack.c.h.b16 %v782
        %v1660 = vunpack.c.l.b16 %v783
        %v1661 = vunpack.c.h.b16 %v783
        %v1662 = vunpack.c.l.b16 %v784
        %v1663 = vunpack.c.h.b16 %v784
        %v1664 = vunpack.c.l.b16 %v785
        %v1665 = vunpack.c.h.b16 %v785
        %v1666 = vunpack.c.l.b16 %v786
        %v1667 = vunpack.c.h.b16 %v786
        %v1668 = vunpack.c.l.b16 %v787
        %v1669 = vunpack.c.h.b16 %v787
        %v1670 = vunpack.c.l.b16 %v788
        %v1671 = vunpack.c.h.b16 %v788
        %v1672 = vunpack.c.l.b16 %v789
        %v1673 = vunpack.c.h.b16 %v789
        %v1674 = vunpack.c.l.b16 %v790
        %v1675 = vunpack.c.h.b16 %v790
        %v1676 = vunpack.c.l.b16 %v791
        %v1677 = vunpack.c.h.b16 %v791
        %v1678 = vunpack.c.l.b16 %v792
        %v1679 = vunpack.c.h.b16 %v792
        %v1680 = vunpack.c.l.b16 %v793
        %v1681 = vunpack.c.h.b16 %v793
        %v1682 = vunpack.c.l.b16 %v794
        %v1683 = vunpack.c.h.b16 %v794
        %v1684 = vunpack.c.l.b16 %v795
        %v1685 = vunpack.c.h.b16 %v795
        %v1686 = vunpack.c.l.b16 %v796
        %v1687 = vunpack.c.h.b16 %v796
        %v1688 = vunpack.c.l.b16 %v797
        %v1689 = vunpack.c.h.b16 %v797
        %v1690 = vunpack.c.l.b16 %v798
        %v1691 = vunpack.c.h.b16 %v798
        %v1692 = vunpack.c.l.b16 %v799
        %v1693 = vunpack.c.h.b16 %v799
        %v1694 = vunpack.c.l.b16 %v800
        %v1695 = vunpack.c.h.b16 %v800
        %v1696 = vunpack.c.l.b16 %v801
        %v1697 = vunpack.c.h.b16 %v801
        %v1698 = vunpack.c.l.b16 %v802
        %v1699 = vunpack.c.h.b16 %v802
        %v1700 = vunpack.c.l.b16 %v803
        %v1701 = vunpack.c.h.b16 %v803
        %v1702 = vunpack.c.l.b16 %v804
        %v1703 = vunpack.c.h.b16 %v804
        %v1704 = vunpack.c.l.b16 %v805
        %v1705 = vunpack.c.h.b16 %v805
        %v1706 = vunpack.c.l.b16 %v806
        %v1707 = vunpack.c.h.b16 %v806
        %v1708 = vunpack.c.l.b16 %v807
        %v1709 = vunpack.c.h.b16 %v807
        %v1710 = vunpack.c.l.b16 %v808
        %v1711 = vunpack.c.h.b16 %v808
        %v1712 = vunpack.c.l.b16 %v809
        %v1713 = vunpack.c.h.b16 %v809
        %v1714 = vunpack.c.l.b16 %v810
        %v1715 = vunpack.c.h.b16 %v810
        %v1716 = vunpack.c.l.b16 %v811
        %v1717 = vunpack.c.h.b16 %v811
        %v1718 = vunpack.c.l.b16 %v812
        %v1719 = vunpack.c.h.b16 %v812
        %v1720 = vunpack.c.l.b16 %v813
        %v1721 = vunpack.c.h.b16 %v813
        %v1722 = vunpack.c.l.b16 %v814
        %v1723 = vunpack.c.h.b16 %v814
        %v1724 = vunpack.c.l.b16 %v815
        %v1725 = vunpack.c.h.b16 %v815
        %v1726 = vunpack.c.l.b16 %v816
        %v1727 = vunpack.c.h.b16 %v816
        %v1728 = vunpack.c.l.b16 %v817
        %v1729 = vunpack.c.h.b16 %v817
        %v1730 = vunpack.c.l.b16 %v818
        %v1731 = vunpack.c.h.b16 %v818
        %v1732 = vunpack.c.l.b16 %v819
        %v1733 = vunpack.c.h.b16 %v819
        %v1734 = vunpack.c.l.b16 %v820
        %v1735 = vunpack.c.h.b16 %v820
        %v1736 = vunpack.c.l.b16 %v821
        %v1737 = vunpack.c.h.b16 %v821
        %v1738 = vunpack.c.l.b16 %v822
        %v1739 = vunpack.c.h.b16 %v822
        %v1740 = vunpack.c.l.b16 %v823
        %v1741 = vunpack.c.h.b16 %v823
        %v1742 = vunpack.c.l.b16 %v824
        %v1743 = vunpack.c.h.b16 %v824
        %v1744 = vunpack.c.l.b16 %v825
        %v1745 = vunpack.c.h.b16 %v825
        %v1746 = vunpack.c.l.b16 %v826
        %v1747 = vunpack.c.h.b16 %v826
        %v1748 = vunpack.c.l.b16 %v827
        %v1749 = vunpack.c.h.b16 %v827
        %v1750 = vunpack.c.l.b16 %v828
        %v1751 = vunpack.c.h.b16 %v828
        %v1752 = vunpack.c.l.b16 %v829
        %v1753 = vunpack.c.h.b16 %v829
        %v1754 = vunpack.c.l.b16 %v830
        %v1755 = vunpack.c.h.b16 %v830
        %v1756 = vunpack.c.l.b16 %v831
        %v1757 = vunpack.c.h.b16 %v831
        %v1758 = vunpack.c.l.b16 %v832
        %v1759 = vunpack.c.h.b16 %v832
        %v1760 = vunpack.c.l.b16 %v833
        %v1761 = vunpack.c.h.b16 %v833
        %v1762 = vunpack.c.l.b16 %v834
        %v1763 = vunpack.c.h.b16 %v834
        %v1764 = vunpack.c.l.b16 %v835
        %v1765 = vunpack.c.h.b16 %v835
        %v1766 = vunpack.c.l.b16 %v836
        %v1767 = vunpack.c.h.b16 %v836
        %v1768 = vunpack.c.l.b16 %v837
        %v1769 = vunpack.c.h.b16 %v837
        %v1770 = vunpack.c.l.b16 %v838
        %v1771 = vunpack.c.h.b16 %v838
        %v1772 = vunpack.c.l.b16 %v839
        %v1773 = vunpack.c.h.b16 %v839
        %v1774 = vunpack.c.l.b16 %v840
        %v1775 = vunpack.c.h.b16 %v840
        %v1776 = vunpack.c.l.b16 %v841
        %v1777 = vunpack.c.h.b16 %v841
        %v1778 = vunpack.c.l.b16 %v842
        %v1779 = vunpack.c.h.b16 %v842
        %v1780 = vunpack.c.l.b16 %v843
        %v1781 = vunpack.c.h.b16 %v843
        %v1782 = vunpack.c.l.b16 %v844
        %v1783 = vunpack.c.h.b16 %v844
        %v1784 = vunpack.c.l.b16 %v845
        %v1785 = vunpack.c.h.b16 %v845
        %v1786 = vunpack.c.l.b16 %v846
        %v1787 = vunpack.c.h.b16 %v846
        %v1788 = vunpack.c.l.b16 %v847
        %v1789 = vunpack.c.h.b16 %v847
        %v1790 = vunpack.c.l.b16 %v848
        %v1791 = vunpack.c.h.b16 %v848
        %v1792 = vunpack.c.l.b16 %v849
        %v1793 = vunpack.c.h.b16 %v849
        %v1794 = vunpack.c.l.b16 %v850
        %v1795 = vunpack.c.h.b16 %v850
        %v1796 = vunpack.c.l.b16 %v851
        %v1797 = vunpack.c.h.b16 %v851
        %v1798 = vunpack.c.l.b16 %v852
        %v1799 = vunpack.c.h.b16 %v852
        %v1800 = vunpack.c.l.b16 %v853
        %v1801 = vunpack.c.h.b16 %v853
        %v1802 = vunpack.c.l.b16 %v854
        %v1803 = vunpack.c.h.b16 %v854
        %v1804 = vunpack.c.l.b16 %v855
        %v1805 = vunpack.c.h.b16 %v855
        %v1806 = vunpack.c.l.b16 %v856
        %v1807 = vunpack.c.h.b16 %v856
        %v1808 = vunpack.c.l.b16 %v857
        %v1809 = vunpack.c.h.b16 %v857
        %v1810 = vunpack.c.l.b16 %v858
        %v1811 = vunpack.c.h.b16 %v858
        %v1812 = vunpack.c.l.b16 %v859
        %v1813 = vunpack.c.h.b16 %v859
        %v1814 = vunpack.c.l.b16 %v860
        %v1815 = vunpack.c.h.b16 %v860
        %v1816 = vunpack.c.l.b16 %v861
        %v1817 = vunpack.c.h.b16 %v861
        %v1818 = vunpack.c.l.b16 %v862
        %v1819 = vunpack.c.h.b16 %v862
        %v1820 = vunpack.c.l.b16 %v863
        %v1821 = vunpack.c.h.b16 %v863
        %v1822 = vunpack.c.l.b16 %v864
        %v1823 = vunpack.c.h.b16 %v864
        %v1824 = vunpack.c.l.b16 %v865
        %v1825 = vunpack.c.h.b16 %v865
        %v1826 = vunpack.c.l.b16 %v866
        %v1827 = vunpack.c.h.b16 %v866
        %v1828 = vunpack.c.l.b16 %v867
        %v1829 = vunpack.c.h.b16 %v867
        %v1830 = vunpack.c.l.b16 %v868
        %v1831 = vunpack.c.h.b16 %v868
        %v1832 = vunpack.c.l.b16 %v869
        %v1833 = vunpack.c.h.b16 %v869
        %v1834 = vunpack.c.l.b16 %v870
        %v1835 = vunpack.c.h.b16 %v870
        %v1836 = vunpack.c.l.b16 %v871
        %v1837 = vunpack.c.h.b16 %v871
        %v1838 = vunpack.c.l.b16 %v872
        %v1839 = vunpack.c.h.b16 %v872
        %v1840 = vunpack.c.l.b16 %v873
        %v1841 = vunpack.c.h.b16 %v873
        %v1842 = vunpack.c.l.b16 %v874
        %v1843 = vunpack.c.h.b16 %v874
        %v1844 = vunpack.c.l.b16 %v875
        %v1845 = vunpack.c.h.b16 %v875
        %v1846 = vunpack.c.l.b16 %v876
        %v1847 = vunpack.c.h.b16 %v876
        %v1848 = vunpack.c.l.b16 %v877
        %v1849 = vunpack.c.h.b16 %v877
        %v1850 = vunpack.c.l.b16 %v878
        %v1851 = vunpack.c.h.b16 %v878
        %v1852 = vunpack.c.l.b16 %v879
        %v1853 = vunpack.c.h.b16 %v879
        %v1854 = vunpack.c.l.b16 %v880
        %v1855 = vunpack.c.h.b16 %v880
        %v1856 = vunpack.c.l.b16 %v881
        %v1857 = vunpack.c.h.b16 %v881
        %v1858 = vunpack.c.l.b16 %v882
        %v1859 = vunpack.c.h.b16 %v882
        %v1860 = vunpack.c.l.b16 %v883
        %v1861 = vunpack.c.h.b16 %v883
        %v1862 = vunpack.c.l.b16 %v884
        %v1863 = vunpack.c.h.b16 %v884
        %v1864 = vunpack.c.l.b16 %v885
        %v1865 = vunpack.c.h.b16 %v885
        %v1866 = vunpack.c.l.b16 %v886
        %v1867 = vunpack.c.h.b16 %v886
        %v1868 = vunpack.c.l.b16 %v887
        %v1869 = vunpack.c.h.b16 %v887
        %v1870 = vunpack.c.l.b16 %v888
        %v1871 = vunpack.c.h.b16 %v888
        %v1872 = vunpack.c.l.b16 %v889
        %v1873 = vunpack.c.h.b16 %v889
        %v1874 = vunpack.c.l.b16 %v890
        %v1875 = vunpack.c.h.b16 %v890
        %v1876 = vunpack.c.l.b16 %v891
        %v1877 = vunpack.c.h.b16 %v891
        %v1878 = vunpack.c.l.b16 %v892
        %v1879 = vunpack.c.h.b16 %v892
        %v1880 = vunpack.c.l.b16 %v893
        %v1881 = vunpack.c.h.b16 %v893
        %v1882 = vunpack.c.l.b16 %v894
        %v1883 = vunpack.c.h.b16 %v894
        %v1884 = vunpack.c.l.b16 %v895
        %v1885 = vunpack.c.h.b16 %v895
        %v1886 = vunpack.c.l.b16 %v896
        %v1887 = vunpack.c.h.b16 %v896
        %v1888 = vunpack.c.l.b16 %v897
        %v1889 = vunpack.c.h.b16 %v897
        %v1890 = vunpack.c.l.b16 %v898
        %v1891 = vunpack.c.h.b16 %v898
        %v1892 = vunpack.c.l.b16 %v899
        %v1893 = vunpack.c.h.b16 %v899
        %v1894 = vunpack.c.l.b16 %v900
        %v1895 = vunpack.c.h.b16 %v900
        %v1896 = vunpack.c.l.b16 %v901
        %v1897 = vunpack.c.h.b16 %v901
        %v1898 = vunpack.c.l.b16 %v902
        %v1899 = vunpack.c.h.b16 %v902
        %v1900 = vunpack.c.l.b16 %v903
        %v1901 = vunpack.c.h.b16 %v903
        %v1902 = vunpack.c.l.b16 %v904
        %v1903 = vunpack.c.h.b16 %v904
        %v1904 = vunpack.c.l.b16 %v905
        %v1905 = vunpack.c.h.b16 %v905
        %v1906 = vunpack.c.l.b16 %v906
        %v1907 = vunpack.c.h.b16 %v906
        %v1908 = vunpack.c.l.b16 %v907
        %v1909 = vunpack.c.h.b16 %v907
        %v1910 = vunpack.c.l.b16 %v908
        %v1911 = vunpack.c.h.b16 %v908
        %v1912 = vunpack.c.l.b16 %v909
        %v1913 = vunpack.c.h.b16 %v909
        %v1914 = vunpack.c.l.b16 %v910
        %v1915 = vunpack.c.h.b16 %v910
        %v1916 = vunpack.c.l.b16 %v911
        %v1917 = vunpack.c.h.b16 %v911
        %v1918 = vunpack.c.l.b16 %v912
        %v1919 = vunpack.c.h.b16 %v912
        %v1920 = vunpack.c.l.b16 %v913
        %v1921 = vunpack.c.h.b16 %v913
        %v1922 = vunpack.c.l.b16 %v914
        %v1923 = vunpack.c.h.b16 %v914
        %v1924 = vunpack.c.l.b16 %v915
        %v1925 = vunpack.c.h.b16 %v915
        %v1926 = vunpack.c.l.b16 %v916
        %v1927 = vunpack.c.h.b16 %v916
        %v1928 = vunpack.c.l.b16 %v917
        %v1929 = vunpack.c.h.b16 %v917
        %v1930 = vunpack.c.l.b16 %v918
        %v1931 = vunpack.c.h.b16 %v918
        %v1932 = vunpack.c.l.b16 %v919
        %v1933 = vunpack.c.h.b16 %v919
        %v1934 = vunpack.c.l.b16 %v920
        %v1935 = vunpack.c.h.b16 %v920
        %v1936 = vunpack.c.l.b16 %v921
        %v1937 = vunpack.c.h.b16 %v921
        %v1938 = vunpack.c.l.b16 %v922
        %v1939 = vunpack.c.h.b16 %v922
        %v1940 = vunpack.c.l.b16 %v923
        %v1941 = vunpack.c.h.b16 %v923
        %v1942 = vunpack.c.l.b16 %v924
        %v1943 = vunpack.c.h.b16 %v924
        %v1944 = vunpack.c.l.b16 %v925
        %v1945 = vunpack.c.h.b16 %v925
        %v1946 = vunpack.c.l.b16 %v926
        %v1947 = vunpack.c.h.b16 %v926
        %v1948 = vunpack.c.l.b16 %v927
        %v1949 = vunpack.c.h.b16 %v927
        %v1950 = vunpack.c.l.b16 %v928
        %v1951 = vunpack.c.h.b16 %v928
        %v1952 = vunpack.c.l.b16 %v929
        %v1953 = vunpack.c.h.b16 %v929
        %v1954 = vunpack.c.l.b16 %v930
        %v1955 = vunpack.c.h.b16 %v930
        %v1956 = vunpack.c.l.b16 %v931
        %v1957 = vunpack.c.h.b16 %v931
        %v1958 = vunpack.c.l.b16 %v932
        %v1959 = vunpack.c.h.b16 %v932
        %v1960 = vunpack.c.l.b16 %v933
        %v1961 = vunpack.c.h.b16 %v933
        %v1962 = vunpack.c.l.b16 %v934
        %v1963 = vunpack.c.h.b16 %v934
        %v1964 = vunpack.c.l.b16 %v935
        %v1965 = vunpack.c.h.b16 %v935
        %v1966 = vunpack.c.l.b16 %v936
        %v1967 = vunpack.c.h.b16 %v936
        %v1968 = vunpack.c.l.b16 %v937
        %v1969 = vunpack.c.h.b16 %v937
        %v1970 = vunpack.c.l.b16 %v938
        %v1971 = vunpack.c.h.b16 %v938
        %v1972 = vunpack.c.l.b16 %v939
        %v1973 = vunpack.c.h.b16 %v939
        %v1974 = vunpack.c.l.b16 %v940
        %v1975 = vunpack.c.h.b16 %v940
        %v1976 = vunpack.c.l.b16 %v941
        %v1977 = vunpack.c.h.b16 %v941
        %v1978 = vunpack.c.l.b16 %v942
        %v1979 = vunpack.c.h.b16 %v942
        %v1980 = vunpack.c.l.b16 %v943
        %v1981 = vunpack.c.h.b16 %v943
        %v1982 = vunpack.c.l.b16 %v944
        %v1983 = vunpack.c.h.b16 %v944
        %v1984 = vunpack.c.l.b16 %v945
        %v1985 = vunpack.c.h.b16 %v945
        %v1986 = vunpack.c.l.b16 %v946
        %v1987 = vunpack.c.h.b16 %v946
        %v1988 = vunpack.c.l.b16 %v947
        %v1989 = vunpack.c.h.b16 %v947
        %v1990 = vunpack.c.l.b16 %v948
        %v1991 = vunpack.c.h.b16 %v948
        %v1992 = vunpack.c.l.b16 %v949
        %v1993 = vunpack.c.h.b16 %v949
        %v1994 = vunpack.c.l.b16 %v950
        %v1995 = vunpack.c.h.b16 %v950
        %v1996 = vunpack.c.l.b16 %v951
        %v1997 = vunpack.c.h.b16 %v951
        %v1998 = vunpack.c.l.b16 %v952
        %v1999 = vunpack.c.h.b16 %v952
        %v2000 = vunpack.c.l.b16 %v953
        %v2001 = vunpack.c.h.b16 %v953
        %v2002 = vunpack.c.l.b16 %v954
        %v2003 = vunpack.c.h.b16 %v954
        %v2004 = vunpack.c.l.b16 %v955
        %v2005 = vunpack.c.h.b16 %v955
        %v2006 = vunpack.c.l.b16 %v956
        %v2007 = vunpack.c.h.b16 %v956
        %v2008 = vunpack.c.l.b16 %v957
        %v2009 = vunpack.c.h.b16 %v957
        %v2010 = vunpack.c.l.b16 %v958
        %v2011 = vunpack.c.h.b16 %v958
        %v2012 = vunpack.c.l.b16 %v959
        %v2013 = vunpack.c.h.b16 %v959
        %v2014 = vunpack.c.l.b16 %v960
        %v2015 = vunpack.c.h.b16 %v960
        %v2016 = vunpack.c.l.b16 %v961
        %v2017 = vunpack.c.h.b16 %v961
        %v2018 = vpack.c.b16 %v1640, %v1634
        %v2019 = vpack.c.b16 %v1641, %v1635
        %v2020 = vpack.c.b16 %v1642, %v1636
        %v2021 = vpack.c.b16 %v1643, %v1637
        %v2022 = vpack.c.b16 %v1644, %v1638
        %v2023 = vpack.c.b16 %v1645, %v1639
        %v2024 = vpack.c.b16 %v1652, %v1646
        %v2025 = vpack.c.b16 %v1653, %v1647
        %v2026 = vpack.c.b16 %v1654, %v1648
        %v2027 = vpack.c.b16 %v1655, %v1649
        %v2028 = vpack.c.b16 %v1656, %v1650
        %v2029 = vpack.c.b16 %v1657, %v1651
        %v2030 = vpack.c.b16 %v1664, %v1658
        %v2031 = vpack.c.b16 %v1665, %v1659
        %v2032 = vpack.c.b16 %v1666, %v1660
        %v2033 = vpack.c.b16 %v1667, %v1661
        %v2034 = vpack.c.b16 %v1668, %v1662
        %v2035 = vpack.c.b16 %v1669, %v1663
        %v2036 = vpack.c.b16 %v1676, %v1670
        %v2037 = vpack.c.b16 %v1677, %v1671
        %v2038 = vpack.c.b16 %v1678, %v1672
        %v2039 = vpack.c.b16 %v1679, %v1673
        %v2040 = vpack.c.b16 %v1680, %v1674
        %v2041 = vpack.c.b16 %v1681, %v1675
        %v2042 = vpack.c.b16 %v1688, %v1682
        %v2043 = vpack.c.b16 %v1689, %v1683
        %v2044 = vpack.c.b16 %v1690, %v1684
        %v2045 = vpack.c.b16 %v1691, %v1685
        %v2046 = vpack.c.b16 %v1692, %v1686
        %v2047 = vpack.c.b16 %v1693, %v1687
        %v2048 = vpack.c.b16 %v1700, %v1694
        %v2049 = vpack.c.b16 %v1701, %v1695
        %v2050 = vpack.c.b16 %v1702, %v1696
        %v2051 = vpack.c.b16 %v1703, %v1697
        %v2052 = vpack.c.b16 %v1704, %v1698
        %v2053 = vpack.c.b16 %v1705, %v1699
        %v2054 = vpack.c.b16 %v1712, %v1706
        %v2055 = vpack.c.b16 %v1713, %v1707
        %v2056 = vpack.c.b16 %v1714, %v1708
        %v2057 = vpack.c.b16 %v1715, %v1709
        %v2058 = vpack.c.b16 %v1716, %v1710
        %v2059 = vpack.c.b16 %v1717, %v1711
        %v2060 = vpack.c.b16 %v1724, %v1718
        %v2061 = vpack.c.b16 %v1725, %v1719
        %v2062 = vpack.c.b16 %v1726, %v1720
        %v2063 = vpack.c.b16 %v1727, %v1721
        %v2064 = vpack.c.b16 %v1728, %v1722
        %v2065 = vpack.c.b16 %v1729, %v1723
        %v2066 = vpack.c.b16 %v1736, %v1730
        %v2067 = vpack.c.b16 %v1737, %v1731
        %v2068 = vpack.c.b16 %v1738, %v1732
        %v2069 = vpack.c.b16 %v1739, %v1733
        %v2070 = vpack.c.b16 %v1740, %v1734
        %v2071 = vpack.c.b16 %v1741, %v1735
        %v2072 = vpack.c.b16 %v1748, %v1742
        %v2073 = vpack.c.b16 %v1749, %v1743
        %v2074 = vpack.c.b16 %v1750, %v1744
        %v2075 = vpack.c.b16 %v1751, %v1745
        %v2076 = vpack.c.b16 %v1752, %v1746
        %v2077 = vpack.c.b16 %v1753, %v1747
        %v2078 = vpack.c.b16 %v1760, %v1754
        %v2079 = vpack.c.b16 %v1761, %v1755
        %v2080 = vpack.c.b16 %v1762, %v1756
        %v2081 = vpack.c.b16 %v1763, %v1757
        %v2082 = vpack.c.b16 %v1764, %v1758
        %v2083 = vpack.c.b16 %v1765, %v1759
        %v2084 = vpack.c.b16 %v1772, %v1766
        %v2085 = vpack.c.b16 %v1773, %v1767
        %v2086 = vpack.c.b16 %v1774, %v1768
        %v2087 = vpack.c.b16 %v1775, %v1769
        %v2088 = vpack.c.b16 %v1776, %v1770
        %v2089 = vpack.c.b16 %v1777, %v1771
        %v2090 = vpack.c.b16 %v1784, %v1778
        %v2091 = vpack.c.b16 %v1785, %v1779
        %v2092 = vpack.c.b16 %v1786, %v1780
        %v2093 = vpack.c.b16 %v1787, %v1781
        %v2094 = vpack.c.b16 %v1788, %v1782
        %v2095 = vpack.c.b16 %v1789, %v1783
        %v2096 = vpack.c.b16 %v1796, %v1790
        %v2097 = vpack.c.b16 %v1797, %v1791
        %v2098 = vpack.c.b16 %v1798, %v1792
        %v2099 = vpack.c.b16 %v1799, %v1793
        %v2100 = vpack.c.b16 %v1800, %v1794
        %v2101 = vpack.c.b16 %v1801, %v1795
        %v2102 = vpack.c.b16 %v1808, %v1802
        %v2103 = vpack.c.b16 %v1809, %v1803
        %v2104 = vpack.c.b16 %v1810, %v1804
        %v2105 = vpack.c.b16 %v1811, %v1805
        %v2106 = vpack.c.b16 %v1812, %v1806
        %v2107 = vpack.c.b16 %v1813, %v1807
        %v2108 = vpack.c.b16 %v1820, %v1814
        %v2109 = vpack.c.b16 %v1821, %v1815
        %v2110 = vpack.c.b16 %v1822, %v1816
        %v2111 = vpack.c.b16 %v1823, %v1817
        %v2112 = vpack.c.b16 %v1824, %v1818
        %v2113 = vpack.c.b16 %v1825, %v1819
        %v2114 = vpack.c.b16 %v1832, %v1826
        %v2115 = vpack.c.b16 %v1833, %v1827
        %v2116 = vpack.c.b16 %v1834, %v1828
        %v2117 = vpack.c.b16 %v1835, %v1829
        %v2118 = vpack.c.b16 %v1836, %v1830
        %v2119 = vpack.c.b16 %v1837, %v1831
        %v2120 = vpack.c.b16 %v1844, %v1838
        %v2121 = vpack.c.b16 %v1845, %v1839
        %v2122 = vpack.c.b16 %v1846, %v1840
        %v2123 = vpack.c.b16 %v1847, %v1841
        %v2124 = vpack.c.b16 %v1848, %v1842
        %v2125 = vpack.c.b16 %v1849, %v1843
        %v2126 = vpack.c.b16 %v1856, %v1850
        %v2127 = vpack.c.b16 %v1857, %v1851
        %v2128 = vpack.c.b16 %v1858, %v1852
        %v2129 = vpack.c.b16 %v1859, %v1853
        %v2130 = vpack.c.b16 %v1860, %v1854
        %v2131 = vpack.c.b16 %v1861, %v1855
        %v2132 = vpack.c.b16 %v1868, %v1862
        %v2133 = vpack.c.b16 %v1869, %v1863
        %v2134 = vpack.c.b16 %v1870, %v1864
        %v2135 = vpack.c.b16 %v1871, %v1865
        %v2136 = vpack.c.b16 %v1872, %v1866
        %v2137 = vpack.c.b16 %v1873, %v1867
        %v2138 = vpack.c.b16 %v1880, %v1874
        %v2139 = vpack.c.b16 %v1881, %v1875
        %v2140 = vpack.c.b16 %v1882, %v1876
        %v2141 = vpack.c.b16 %v1883, %v1877
        %v2142 = vpack.c.b16 %v1884, %v1878
        %v2143 = vpack.c.b16 %v1885, %v1879
        %v2144 = vpack.c.b16 %v1892, %v1886
        %v2145 = vpack.c.b16 %v1893, %v1887
        %v2146 = vpack.c.b16 %v1894, %v1888
        %v2147 = vpack.c.b16 %v1895, %v1889
        %v2148 = vpack.c.b16 %v1896, %v1890
        %v2149 = vpack.c.b16 %v1897, %v1891
        %v2150 = vpack.c.b16 %v1904, %v1898
        %v2151 = vpack.c.b16 %v1905, %v1899
        %v2152 = vpack.c.b16 %v1906, %v1900
        %v2153 = vpack.c.b16 %v1907, %v1901
        %v2154 = vpack.c.b16 %v1908, %v1902
        %v2155 = vpack.c.b16 %v1909, %v1903
        %v2156 = vpack.c.b16 %v1916, %v1910
        %v2157 = vpack.c.b16 %v1917, %v1911
        %v2158 = vpack.c.b16 %v1918, %v1912
        %v2159 = vpack.c.b16 %v1919, %v1913
        %v2160 = vpack.c.b16 %v1920, %v1914
        %v2161 = vpack.c.b16 %v1921, %v1915
        %v2162 = vpack.c.b16 %v1928, %v1922
        %v2163 = vpack.c.b16 %v1929, %v1923
        %v2164 = vpack.c.b16 %v1930, %v1924
        %v2165 = vpack.c.b16 %v1931, %v1925
        %v2166 = vpack.c.b16 %v1932, %v1926
        %v2167 = vpack.c.b16 %v1933, %v1927
        %v2168 = vpack.c.b16 %v1940, %v1934
        %v2169 = vpack.c.b16 %v1941, %v1935
        %v2170 = vpack.c.b16 %v1942, %v1936
        %v2171 = vpack.c.b16 %v1943, %v1937
        %v2172 = vpack.c.b16 %v1944, %v1938
        %v2173 = vpack.c.b16 %v1945, %v1939
        %v2174 = vpack.c.b16 %v1952, %v1946
        %v2175 = vpack.c.b16 %v1953, %v1947
        %v2176 = vpack.c.b16 %v1954, %v1948
        %v2177 = vpack.c.b16 %v1955, %v1949
        %v2178 = vpack.c.b16 %v1956, %v1950
        %v2179 = vpack.c.b16 %v1957, %v1951
        %v2180 = vpack.c.b16 %v1964, %v1958
        %v2181 = vpack.c.b16 %v1965, %v1959
        %v2182 = vpack.c.b16 %v1966, %v1960
        %v2183 = vpack.c.b16 %v1967, %v1961
        %v2184 = vpack.c.b16 %v1968, %v1962
        %v2185 = vpack.c.b16 %v1969, %v1963
        %v2186 = vpack.c.b16 %v1976, %v1970
        %v2187 = vpack.c.b16 %v1977, %v1971
        %v2188 = vpack.c.b16 %v1978, %v1972
        %v2189 = vpack.c.b16 %v1979, %v1973
        %v2190 = vpack.c.b16 %v1980, %v1974
        %v2191 = vpack.c.b16 %v1981, %v1975
        %v2192 = vpack.c.b16 %v1988, %v1982
        %v2193 = vpack.c.b16 %v1989, %v1983
        %v2194 = vpack.c.b16 %v1990, %v1984
        %v2195 = vpack.c.b16 %v1991, %v1985
        %v2196 = vpack.c.b16 %v1992, %v1986
        %v2197 = vpack.c.b16 %v1993, %v1987
        %v2198 = vpack.c.b16 %v2000, %v1994
        %v2199 = vpack.c.b16 %v2001, %v1995
        %v2200 = vpack.c.b16 %v2002, %v1996
        %v2201 = vpack.c.b16 %v2003, %v1997
        %v2202 = vpack.c.b16 %v2004, %v1998
        %v2203 = vpack.c.b16 %v2005, %v1999
        %v2204 = vpack.c.b16 %v2012, %v2006
        %v2205 = vpack.c.b16 %v2013, %v2007
        %v2206 = vpack.c.b16 %v2014, %v2008
        %v2207 = vpack.c.b16 %v2015, %v2009
        %v2208 = vpack.c.b16 %v2016, %v2010
        %v2209 = vpack.c.b16 %v2017, %v2011
        %v2498 = vunpack.c.l.b16 %v962
        %v2499 = vunpack.c.l.b16 %v963
        %v2500 = vunpack.c.l.b16 %v964
        %v2501 = vunpack.c.l.b16 %v965
        %v2502 = vunpack.c.l.b16 %v966
        %v2503 = vunpack.c.l.b16 %v967
        %v2504 = vunpack.c.l.b16 %v968
        %v2505 = vunpack.c.l.b16 %v969
        %v2506 = vunpack.c.l.b16 %v970
        %v2507 = vunpack.c.l.b16 %v971
        %v2508 = vunpack.c.l.b16 %v972
        %v2509 = vunpack.c.l.b16 %v973
        %v2510 = vunpack.c.l.b16 %v974
        %v2511 = vunpack.c.l.b16 %v975
        %v2512 = vunpack.c.l.b16 %v976
        %v2513 = vunpack.c.l.b16 %v977
        %v2514 = vunpack.c.l.b16 %v978
        %v2515 = vunpack.c.l.b16 %v979
        %v2516 = vunpack.c.l.b16 %v980
        %v2517 = vunpack.c.l.b16 %v981
        %v2518 = vunpack.c.l.b16 %v982
        %v2519 = vunpack.c.l.b16 %v983
        %v2520 = vunpack.c.l.b16 %v984
        %v2521 = vunpack.c.l.b16 %v985
        %v2522 = vunpack.c.l.b16 %v986
        %v2523 = vunpack.c.l.b16 %v987
        %v2524 = vunpack.c.l.b16 %v988
        %v2525 = vunpack.c.l.b16 %v989
        %v2526 = vunpack.c.l.b16 %v990
        %v2527 = vunpack.c.l.b16 %v991
        %v2528 = vunpack.c.l.b16 %v992
        %v2529 = vunpack.c.l.b16 %v993
        %v2530 = vunpack.c.l.b16 %v994
        %v2531 = vunpack.c.l.b16 %v995
        %v2532 = vunpack.c.l.b16 %v996
        %v2533 = vunpack.c.l.b16 %v997
        %v2534 = vunpack.c.l.b16 %v998
        %v2535 = vunpack.c.l.b16 %v999
        %v2536 = vunpack.c.l.b16 %v1000
        %v2537 = vunpack.c.l.b16 %v1001
        %v2538 = vunpack.c.l.b16 %v1002
        %v2539 = vunpack.c.l.b16 %v1003
        %v2540 = vunpack.c.l.b16 %v1004
        %v2541 = vunpack.c.l.b16 %v1005
        %v2542 = vunpack.c.l.b16 %v1006
        %v2543 = vunpack.c.l.b16 %v1007
        %v2544 = vunpack.c.l.b16 %v1008
        %v2545 = vunpack.c.l.b16 %v1009
        %v2546 = vunpack.c.l.b16 %v1010
        %v2547 = vunpack.c.l.b16 %v1011
        %v2548 = vunpack.c.l.b16 %v1012
        %v2549 = vunpack.c.l.b16 %v1013
        %v2550 = vunpack.c.l.b16 %v1014
        %v2551 = vunpack.c.l.b16 %v1015
        %v2552 = vunpack.c.l.b16 %v1016
        %v2553 = vunpack.c.l.b16 %v1017
        %v2554 = vunpack.c.l.b16 %v1018
        %v2555 = vunpack.c.l.b16 %v1019
        %v2556 = vunpack.c.l.b16 %v1020
        %v2557 = vunpack.c.l.b16 %v1021
        %v2558 = vunpack.c.l.b16 %v1022
        %v2559 = vunpack.c.l.b16 %v1023
        %v2560 = vunpack.c.l.b16 %v1024
        %v2561 = vunpack.c.l.b16 %v1025
        %v2562 = vunpack.c.l.b16 %v1026
        %v2563 = vunpack.c.l.b16 %v1027
        %v2564 = vunpack.c.l.b16 %v1028
        %v2565 = vunpack.c.l.b16 %v1029
        %v2566 = vunpack.c.l.b16 %v1030
        %v2567 = vunpack.c.l.b16 %v1031
        %v2568 = vunpack.c.l.b16 %v1032
        %v2569 = vunpack.c.l.b16 %v1033
        %v2570 = vunpack.c.l.b16 %v1034
        %v2571 = vunpack.c.l.b16 %v1035
        %v2572 = vunpack.c.l.b16 %v1036
        %v2573 = vunpack.c.l.b16 %v1037
        %v2574 = vunpack.c.l.b16 %v1038
        %v2575 = vunpack.c.l.b16 %v1039
        %v2576 = vunpack.c.l.b16 %v1040
        %v2577 = vunpack.c.l.b16 %v1041
        %v2578 = vunpack.c.l.b16 %v1042
        %v2579 = vunpack.c.l.b16 %v1043
        %v2580 = vunpack.c.l.b16 %v1044
        %v2581 = vunpack.c.l.b16 %v1045
        %v2582 = vunpack.c.l.b16 %v1046
        %v2583 = vunpack.c.l.b16 %v1047
        %v2584 = vunpack.c.l.b16 %v1048
        %v2585 = vunpack.c.l.b16 %v1049
        %v2586 = vunpack.c.l.b16 %v1050
        %v2587 = vunpack.c.l.b16 %v1051
        %v2588 = vunpack.c.l.b16 %v1052
        %v2589 = vunpack.c.l.b16 %v1053
        %v2590 = vunpack.c.l.b16 %v1054
        %v2591 = vunpack.c.l.b16 %v1055
        %v2592 = vunpack.c.l.b16 %v1056
        %v2593 = vunpack.c.l.b16 %v1057
        %v2594 = vpack.c.b16 %v2499, %v2498
        %v2595 = vpack.c.b16 %v2501, %v2500
        %v2596 = vpack.c.b16 %v2503, %v2502
        %v2597 = vpack.c.b16 %v2505, %v2504
        %v2598 = vpack.c.b16 %v2507, %v2506
        %v2599 = vpack.c.b16 %v2509, %v2508
        %v2600 = vpack.c.b16 %v2511, %v2510
        %v2601 = vpack.c.b16 %v2513, %v2512
        %v2602 = vpack.c.b16 %v2515, %v2514
        %v2603 = vpack.c.b16 %v2517, %v2516
        %v2604 = vpack.c.b16 %v2519, %v2518
        %v2605 = vpack.c.b16 %v2521, %v2520
        %v2606 = vpack.c.b16 %v2523, %v2522
        %v2607 = vpack.c.b16 %v2525, %v2524
        %v2608 = vpack.c.b16 %v2527, %v2526
        %v2609 = vpack.c.b16 %v2529, %v2528
        %v2610 = vpack.c.b16 %v2531, %v2530
        %v2611 = vpack.c.b16 %v2533, %v2532
        %v2612 = vpack.c.b16 %v2535, %v2534
        %v2613 = vpack.c.b16 %v2537, %v2536
        %v2614 = vpack.c.b16 %v2539, %v2538
        %v2615 = vpack.c.b16 %v2541, %v2540
        %v2616 = vpack.c.b16 %v2543, %v2542
        %v2617 = vpack.c.b16 %v2545, %v2544
        %v2618 = vpack.c.b16 %v2547, %v2546
        %v2619 = vpack.c.b16 %v2549, %v2548
        %v2620 = vpack.c.b16 %v2551, %v2550
        %v2621 = vpack.c.b16 %v2553, %v2552
        %v2622 = vpack.c.b16 %v2555, %v2554
        %v2623 = vpack.c.b16 %v2557, %v2556
        %v2624 = vpack.c.b16 %v2559, %v2558
        %v2625 = vpack.c.b16 %v2561, %v2560
        %v2626 = vpack.c.b16 %v2563, %v2562
        %v2627 = vpack.c.b16 %v2565, %v2564
        %v2628 = vpack.c.b16 %v2567, %v2566
        %v2629 = vpack.c.b16 %v2569, %v2568
        %v2630 = vpack.c.b16 %v2571, %v2570
        %v2631 = vpack.c.b16 %v2573, %v2572
        %v2632 = vpack.c.b16 %v2575, %v2574
        %v2633 = vpack.c.b16 %v2577, %v2576
        %v2634 = vpack.c.b16 %v2579, %v2578
        %v2635 = vpack.c.b16 %v2581, %v2580
        %v2636 = vpack.c.b16 %v2583, %v2582
        %v2637 = vpack.c.b16 %v2585, %v2584
        %v2638 = vpack.c.b16 %v2587, %v2586
        %v2639 = vpack.c.b16 %v2589, %v2588
        %v2640 = vpack.c.b16 %v2591, %v2590
        %v2641 = vpack.c.b16 %v2593, %v2592
        %2690 = vmatprep.subr.bf16.mxu0 0
        %2691 = vmatpush1.bf16.msra.mxu0 %v2594
        %2692 = vmatprep.subr.bf16.mxu0 0
        %2693 = vmatpush1.bf16.msra.mxu0 %v2595
        %2694 = vmatprep.subr.bf16.mxu0 0
        %2695 = vmatpush1.bf16.msra.mxu0 %v2596
        %2696 = vmatprep.subr.bf16.mxu0 0
        %2697 = vmatpush1.bf16.msra.mxu0 %v2597
        %2698 = vmatprep.subr.bf16.mxu0 0
        %2699 = vmatpush1.bf16.msra.mxu0 %v2598
        %2700 = vmatprep.subr.bf16.mxu0 0
        %2701 = vmatpush1.bf16.msra.mxu0 %v2599
        %2702 = vmatprep.subr.bf16.mxu0 0
        %2703 = vmatpush1.bf16.msra.mxu0 %v2600
        %2704 = vmatprep.subr.bf16.mxu0 0
        %2705 = vmatpush1.bf16.msra.mxu0 %v2601
        %2706 = vmatprep.subr.bf16.mxu0 0
        %2707 = vmatpush1.bf16.msra.mxu0 %v2602
        %2708 = vmatprep.subr.bf16.mxu0 0
        %2709 = vmatpush1.bf16.msra.mxu0 %v2603
        %2710 = vmatprep.subr.bf16.mxu0 0
        %2711 = vmatpush1.bf16.msra.mxu0 %v2604
        %2712 = vmatprep.subr.bf16.mxu0 0
        %2713 = vmatpush1.bf16.msra.mxu0 %v2605
        %2714 = vmatprep.subr.bf16.mxu0 0
        %2715 = vmatpush1.bf16.msra.mxu0 %v2606
        %2716 = vmatprep.subr.bf16.mxu0 0
        %2717 = vmatpush1.bf16.msra.mxu0 %v2607
        %2718 = vmatprep.subr.bf16.mxu0 0
        %2719 = vmatpush1.bf16.msra.mxu0 %v2608
        %2720 = vmatprep.subr.bf16.mxu0 0
        %2721 = vmatpush1.bf16.msra.mxu0 %v2609
        %2722 = vmatprep.mubr.bf16.mxu0 %v2019
        %2723 = vmatmul.mubr.bf16.gmra.mrb[0].mxu0 %v2018
        %v2724 = vpop.f32.mrb[0].mxu0
        %v2725 = vadd.f32 %v1125, %v2724
        %v2726 = vpop.f32.mrb[0].mxu0
        %v2727 = vpop.f32.mrb[0].mxu0
        %v2728 = vadd.f32 %v1130, %v2727
        %v2729 = vpop.f32.mrb[0].mxu0
        %2730 = vmatprep.mubr.bf16.mxu0 %v2025
        %2731 = vmatmul.mubr.bf16.gmra.mrb[0].mxu0 %v2024
        %v2732 = vpop.f32.mrb[0].mxu0
        %v2733 = vadd.f32 %v1135, %v2732
        %v2734 = vpop.f32.mrb[0].mxu0
        %v2735 = vpop.f32.mrb[0].mxu0
        %v2736 = vadd.f32 %v1140, %v2735
        %v2737 = vpop.f32.mrb[0].mxu0
        %2738 = vmatprep.mubr.bf16.mxu0 %v2031
        %2739 = vmatmul.mubr.bf16.gmra.mrb[0].mxu0 %v2030
        %v2740 = vpop.f32.mrb[0].mxu0
        %v2741 = vadd.f32 %v1145, %v2740
        %v2742 = vpop.f32.mrb[0].mxu0
        %v2743 = vpop.f32.mrb[0].mxu0
        %v2744 = vadd.f32 %v1150, %v2743
        %v2745 = vpop.f32.mrb[0].mxu0
        %2746 = vmatprep.mubr.bf16.mxu0 %v2037
        %2747 = vmatmul.mubr.bf16.gmra.mrb[0].mxu0 %v2036
        %v2748 = vpop.f32.mrb[0].mxu0
        %v2749 = vadd.f32 %v1155, %v2748
        %v2750 = vpop.f32.mrb[0].mxu0
        %v2751 = vpop.f32.mrb[0].mxu0
        %v2752 = vadd.f32 %v1160, %v2751
        %v2753 = vpop.f32.mrb[0].mxu0
        %2754 = vmatprep.mubr.bf16.mxu0 %v2043
        %2755 = vmatmul.mubr.bf16.gmra.mrb[0].mxu0 %v2042
        %v2756 = vpop.f32.mrb[0].mxu0
        %v2757 = vadd.f32 %v1165, %v2756
        %v2758 = vpop.f32.mrb[0].mxu0
        %v2759 = vpop.f32.mrb[0].mxu0
        %v2760 = vadd.f32 %v1170, %v2759
        %v2761 = vpop.f32.mrb[0].mxu0
        %2762 = vmatprep.mubr.bf16.mxu0 %v2049
        %2763 = vmatmul.mubr.bf16.gmra.mrb[0].mxu0 %v2048
        %v2764 = vpop.f32.mrb[0].mxu0
        %v2765 = vadd.f32 %v1175, %v2764
        %v2766 = vpop.f32.mrb[0].mxu0
        %v2767 = vpop.f32.mrb[0].mxu0
        %v2768 = vadd.f32 %v1180, %v2767
        %v2769 = vpop.f32.mrb[0].mxu0
        %2770 = vmatprep.mubr.bf16.mxu0 %v2055
        %2771 = vmatmul.mubr.bf16.gmra.mrb[0].mxu0 %v2054
        %v2772 = vpop.f32.mrb[0].mxu0
        %v2773 = vadd.f32 %v1185, %v2772
        %v2774 = vpop.f32.mrb[0].mxu0
        %v2775 = vpop.f32.mrb[0].mxu0
        %v2776 = vadd.f32 %v1190, %v2775
        %v2777 = vpop.f32.mrb[0].mxu0
        %2778 = vmatprep.mubr.bf16.mxu0 %v2061
        %2779 = vmatmul.mubr.bf16.gmra.mrb[0].mxu0 %v2060
        %v2780 = vpop.f32.mrb[0].mxu0
        %v2781 = vadd.f32 %v1195, %v2780
        %v2782 = vpop.f32.mrb[0].mxu0
        %v2783 = vpop.f32.mrb[0].mxu0
        %v2784 = vadd.f32 %v1200, %v2783
        %v2785 = vpop.f32.mrb[0].mxu0
        %2786 = vmatprep.mubr.bf16.mxu0 %v2067
        %2787 = vmatmul.mubr.bf16.gmra.mrb[0].mxu0 %v2066
        %v2788 = vpop.f32.mrb[0].mxu0
        %v2789 = vadd.f32 %v1205, %v2788
        %v2790 = vpop.f32.mrb[0].mxu0
        %v2791 = vpop.f32.mrb[0].mxu0
        %v2792 = vadd.f32 %v1210, %v2791
        %v2793 = vpop.f32.mrb[0].mxu0
        %2794 = vmatprep.mubr.bf16.mxu0 %v2073
        %2795 = vmatmul.mubr.bf16.gmra.mrb[0].mxu0 %v2072
        %v2796 = vpop.f32.mrb[0].mxu0
        %v2797 = vadd.f32 %v1215, %v2796
        %v2798 = vpop.f32.mrb[0].mxu0
        %v2799 = vpop.f32.mrb[0].mxu0
        %v2800 = vadd.f32 %v1220, %v2799
        %v2801 = vpop.f32.mrb[0].mxu0
        %2802 = vmatprep.mubr.bf16.mxu0 %v2079
        %2803 = vmatmul.mubr.bf16.gmra.mrb[0].mxu0 %v2078
        %v2804 = vpop.f32.mrb[0].mxu0
        %v2805 = vadd.f32 %v1225, %v2804
        %v2806 = vpop.f32.mrb[0].mxu0
        %v2807 = vpop.f32.mrb[0].mxu0
        %v2808 = vadd.f32 %v1230, %v2807
        %v2809 = vpop.f32.mrb[0].mxu0
        %2810 = vmatprep.mubr.bf16.mxu0 %v2085
        %2811 = vmatmul.mubr.bf16.gmra.mrb[0].mxu0 %v2084
        %v2812 = vpop.f32.mrb[0].mxu0
        %v2813 = vadd.f32 %v1235, %v2812
        %v2814 = vpop.f32.mrb[0].mxu0
        %v2815 = vpop.f32.mrb[0].mxu0
        %v2816 = vadd.f32 %v1240, %v2815
        %v2817 = vpop.f32.mrb[0].mxu0
        %2818 = vmatprep.mubr.bf16.mxu0 %v2091
        %2819 = vmatmul.mubr.bf16.gmra.mrb[0].mxu0 %v2090
        %v2820 = vpop.f32.mrb[0].mxu0
        %v2821 = vadd.f32 %v1245, %v2820
        %v2822 = vpop.f32.mrb[0].mxu0
        %v2823 = vpop.f32.mrb[0].mxu0
        %v2824 = vadd.f32 %v1250, %v2823
        %v2825 = vpop.f32.mrb[0].mxu0
        %2826 = vmatprep.mubr.bf16.mxu0 %v2097
        %2827 = vmatmul.mubr.bf16.gmra.mrb[0].mxu0 %v2096
        %v2828 = vpop.f32.mrb[0].mxu0
        %v2829 = vadd.f32 %v1255, %v2828
        %v2830 = vpop.f32.mrb[0].mxu0
        %v2831 = vpop.f32.mrb[0].mxu0
        %v2832 = vadd.f32 %v1260, %v2831
        %v2833 = vpop.f32.mrb[0].mxu0
        %2834 = vmatprep.mubr.bf16.mxu0 %v2103
        %2835 = vmatmul.mubr.bf16.gmra.mrb[0].mxu0 %v2102
        %v2836 = vpop.f32.mrb[0].mxu0
        %v2837 = vadd.f32 %v1265, %v2836
        %v2838 = vpop.f32.mrb[0].mxu0
        %v2839 = vpop.f32.mrb[0].mxu0
        %v2840 = vadd.f32 %v1270, %v2839
        %v2841 = vpop.f32.mrb[0].mxu0
        %2842 = vmatprep.mubr.bf16.mxu0 %v2109
        %2843 = vmatmul.mubr.bf16.gmra.mrb[0].mxu0 %v2108
        %v2844 = vpop.f32.mrb[0].mxu0
        %v2845 = vadd.f32 %v1275, %v2844
        %v2846 = vpop.f32.mrb[0].mxu0
        %v2847 = vpop.f32.mrb[0].mxu0
        %v2848 = vadd.f32 %v1280, %v2847
        %v2849 = vpop.f32.mrb[0].mxu0
        %2850 = vmatprep.mubr.bf16.mxu0 %v2115
        %2851 = vmatmul.mubr.bf16.gmra.mrb[0].mxu0 %v2114
        %v2852 = vpop.f32.mrb[0].mxu0
        %v2853 = vadd.f32 %v1285, %v2852
        %v2854 = vpop.f32.mrb[0].mxu0
        %v2855 = vpop.f32.mrb[0].mxu0
        %v2856 = vadd.f32 %v1290, %v2855
        %v2857 = vpop.f32.mrb[0].mxu0
        %2858 = vmatprep.mubr.bf16.mxu0 %v2121
        %2859 = vmatmul.mubr.bf16.gmra.mrb[0].mxu0 %v2120
        %v2860 = vpop.f32.mrb[0].mxu0
        %v2861 = vadd.f32 %v1295, %v2860
        %v2862 = vpop.f32.mrb[0].mxu0
        %v2863 = vpop.f32.mrb[0].mxu0
        %v2864 = vadd.f32 %v1300, %v2863
        %v2865 = vpop.f32.mrb[0].mxu0
        %2866 = vmatprep.mubr.bf16.mxu0 %v2127
        %2867 = vmatmul.mubr.bf16.gmra.mrb[0].mxu0 %v2126
        %v2868 = vpop.f32.mrb[0].mxu0
        %v2869 = vadd.f32 %v1305, %v2868
        %v2870 = vpop.f32.mrb[0].mxu0
        %v2871 = vpop.f32.mrb[0].mxu0
        %v2872 = vadd.f32 %v1310, %v2871
        %v2873 = vpop.f32.mrb[0].mxu0
        %2874 = vmatprep.mubr.bf16.mxu0 %v2133
        %2875 = vmatmul.mubr.bf16.gmra.mrb[0].mxu0 %v2132
        %v2876 = vpop.f32.mrb[0].mxu0
        %v2877 = vadd.f32 %v1315, %v2876
        %v2878 = vpop.f32.mrb[0].mxu0
        %v2879 = vpop.f32.mrb[0].mxu0
        %v2880 = vadd.f32 %v1320, %v2879
        %v2881 = vpop.f32.mrb[0].mxu0
        %2882 = vmatprep.mubr.bf16.mxu0 %v2139
        %2883 = vmatmul.mubr.bf16.gmra.mrb[0].mxu0 %v2138
        %v2884 = vpop.f32.mrb[0].mxu0
        %v2885 = vadd.f32 %v1325, %v2884
        %v2886 = vpop.f32.mrb[0].mxu0
        %v2887 = vpop.f32.mrb[0].mxu0
        %v2888 = vadd.f32 %v1330, %v2887
        %v2889 = vpop.f32.mrb[0].mxu0
        %2890 = vmatprep.mubr.bf16.mxu0 %v2145
        %2891 = vmatmul.mubr.bf16.gmra.mrb[0].mxu0 %v2144
        %v2892 = vpop.f32.mrb[0].mxu0
        %v2893 = vadd.f32 %v1335, %v2892
        %v2894 = vpop.f32.mrb[0].mxu0
        %v2895 = vpop.f32.mrb[0].mxu0
        %v2896 = vadd.f32 %v1340, %v2895
        %v2897 = vpop.f32.mrb[0].mxu0
        %2898 = vmatprep.mubr.bf16.mxu0 %v2151
        %2899 = vmatmul.mubr.bf16.gmra.mrb[0].mxu0 %v2150
        %v2900 = vpop.f32.mrb[0].mxu0
        %v2901 = vadd.f32 %v1345, %v2900
        %v2902 = vpop.f32.mrb[0].mxu0
        %v2903 = vpop.f32.mrb[0].mxu0
        %v2904 = vadd.f32 %v1350, %v2903
        %v2905 = vpop.f32.mrb[0].mxu0
        %2906 = vmatprep.mubr.bf16.mxu0 %v2157
        %2907 = vmatmul.mubr.bf16.gmra.mrb[0].mxu0 %v2156
        %v2908 = vpop.f32.mrb[0].mxu0
        %v2909 = vadd.f32 %v1355, %v2908
        %v2910 = vpop.f32.mrb[0].mxu0
        %v2911 = vpop.f32.mrb[0].mxu0
        %v2912 = vadd.f32 %v1360, %v2911
        %v2913 = vpop.f32.mrb[0].mxu0
        %2914 = vmatprep.mubr.bf16.mxu0 %v2163
        %2915 = vmatmul.mubr.bf16.gmra.mrb[0].mxu0 %v2162
        %v2916 = vpop.f32.mrb[0].mxu0
        %v2917 = vadd.f32 %v1365, %v2916
        %v2918 = vpop.f32.mrb[0].mxu0
        %v2919 = vpop.f32.mrb[0].mxu0
        %v2920 = vadd.f32 %v1370, %v2919
        %v2921 = vpop.f32.mrb[0].mxu0
        %2922 = vmatprep.mubr.bf16.mxu0 %v2169
        %2923 = vmatmul.mubr.bf16.gmra.mrb[0].mxu0 %v2168
        %v2924 = vpop.f32.mrb[0].mxu0
        %v2925 = vadd.f32 %v1375, %v2924
        %v2926 = vpop.f32.mrb[0].mxu0
        %v2927 = vpop.f32.mrb[0].mxu0
        %v2928 = vadd.f32 %v1380, %v2927
        %v2929 = vpop.f32.mrb[0].mxu0
        %2930 = vmatprep.mubr.bf16.mxu0 %v2175
        %2931 = vmatmul.mubr.bf16.gmra.mrb[0].mxu0 %v2174
        %v2932 = vpop.f32.mrb[0].mxu0
        %v2933 = vadd.f32 %v1385, %v2932
        %v2934 = vpop.f32.mrb[0].mxu0
        %v2935 = vpop.f32.mrb[0].mxu0
        %v2936 = vadd.f32 %v1390, %v2935
        %v2937 = vpop.f32.mrb[0].mxu0
        %2938 = vmatprep.mubr.bf16.mxu0 %v2181
        %2939 = vmatmul.mubr.bf16.gmra.mrb[0].mxu0 %v2180
        %v2940 = vpop.f32.mrb[0].mxu0
        %v2941 = vadd.f32 %v1395, %v2940
        %v2942 = vpop.f32.mrb[0].mxu0
        %v2943 = vpop.f32.mrb[0].mxu0
        %v2944 = vadd.f32 %v1400, %v2943
        %v2945 = vpop.f32.mrb[0].mxu0
        %2946 = vmatprep.mubr.bf16.mxu0 %v2187
        %2947 = vmatmul.mubr.bf16.gmra.mrb[0].mxu0 %v2186
        %v2948 = vpop.f32.mrb[0].mxu0
        %v2949 = vadd.f32 %v1405, %v2948
        %v2950 = vpop.f32.mrb[0].mxu0
        %v2951 = vpop.f32.mrb[0].mxu0
        %v2952 = vadd.f32 %v1410, %v2951
        %v2953 = vpop.f32.mrb[0].mxu0
        %2954 = vmatprep.mubr.bf16.mxu0 %v2193
        %2955 = vmatmul.mubr.bf16.gmra.mrb[0].mxu0 %v2192
        %v2956 = vpop.f32.mrb[0].mxu0
        %v2957 = vadd.f32 %v1415, %v2956
        %v2958 = vpop.f32.mrb[0].mxu0
        %v2959 = vpop.f32.mrb[0].mxu0
        %v2960 = vadd.f32 %v1420, %v2959
        %v2961 = vpop.f32.mrb[0].mxu0
        %2962 = vmatprep.mubr.bf16.mxu0 %v2199
        %2963 = vmatmul.mubr.bf16.gmra.mrb[0].mxu0 %v2198
        %v2964 = vpop.f32.mrb[0].mxu0
        %v2965 = vadd.f32 %v1425, %v2964
        %v2966 = vpop.f32.mrb[0].mxu0
        %v2967 = vpop.f32.mrb[0].mxu0
        %v2968 = vadd.f32 %v1430, %v2967
        %v2969 = vpop.f32.mrb[0].mxu0
        %2970 = vmatprep.mubr.bf16.mxu0 %v2205
        %2971 = vmatmul.mubr.bf16.gmra.mrb[0].mxu0 %v2204
        %v2972 = vpop.f32.mrb[0].mxu0
        %v2973 = vadd.f32 %v1435, %v2972
        %v2974 = vpop.f32.mrb[0].mxu0
        %v2975 = vpop.f32.mrb[0].mxu0
        %v2976 = vadd.f32 %v1440, %v2975
        %v2977 = vpop.f32.mrb[0].mxu0
        %2978 = vdwg.mxu0
        %2979 = vmatprep.subr.bf16.mxu0 0
        %2980 = vmatpush1.bf16.msra.mxu0 %v2610
        %2981 = vmatprep.subr.bf16.mxu0 0
        %2982 = vmatpush1.bf16.msra.mxu0 %v2611
        %2983 = vmatprep.subr.bf16.mxu0 0
        %2984 = vmatpush1.bf16.msra.mxu0 %v2612
        %2985 = vmatprep.subr.bf16.mxu0 0
        %2986 = vmatpush1.bf16.msra.mxu0 %v2613
        %2987 = vmatprep.subr.bf16.mxu0 0
        %2988 = vmatpush1.bf16.msra.mxu0 %v2614
        %2989 = vmatprep.subr.bf16.mxu0 0
        %2990 = vmatpush1.bf16.msra.mxu0 %v2615
        %2991 = vmatprep.subr.bf16.mxu0 0
        %2992 = vmatpush1.bf16.msra.mxu0 %v2616
        %2993 = vmatprep.subr.bf16.mxu0 0
        %2994 = vmatpush1.bf16.msra.mxu0 %v2617
        %2995 = vmatprep.subr.bf16.mxu0 0
        %2996 = vmatpush1.bf16.msra.mxu0 %v2618
        %2997 = vmatprep.subr.bf16.mxu0 0
        %2998 = vmatpush1.bf16.msra.mxu0 %v2619
        %2999 = vmatprep.subr.bf16.mxu0 0
        %3000 = vmatpush1.bf16.msra.mxu0 %v2620
        %3001 = vmatprep.subr.bf16.mxu0 0
        %3002 = vmatpush1.bf16.msra.mxu0 %v2621
        %3003 = vmatprep.subr.bf16.mxu0 0
        %3004 = vmatpush1.bf16.msra.mxu0 %v2622
        %3005 = vmatprep.subr.bf16.mxu0 0
        %3006 = vmatpush1.bf16.msra.mxu0 %v2623
        %3007 = vmatprep.subr.bf16.mxu0 0
        %3008 = vmatpush1.bf16.msra.mxu0 %v2624
        %3009 = vmatprep.subr.bf16.mxu0 0
        %3010 = vmatpush1.bf16.msra.mxu0 %v2625
        %3011 = vmatprep.mubr.bf16.mxu0 %v2021
        %3012 = vmatmul.mubr.bf16.gmra.mrb[0].mxu0 %v2020
        %v3013 = vpop.f32.mrb[0].mxu0
        %v3014 = vadd.f32 %v2725, %v3013
        %v3015 = vpop.f32.mrb[0].mxu0
        %v3016 = vpop.f32.mrb[0].mxu0
        %v3017 = vadd.f32 %v2728, %v3016
        %v3018 = vpop.f32.mrb[0].mxu0
        %3019 = vmatprep.mubr.bf16.mxu0 %v2027
        %3020 = vmatmul.mubr.bf16.gmra.mrb[0].mxu0 %v2026
        %v3021 = vpop.f32.mrb[0].mxu0
        %v3022 = vadd.f32 %v2733, %v3021
        %v3023 = vpop.f32.mrb[0].mxu0
        %v3024 = vpop.f32.mrb[0].mxu0
        %v3025 = vadd.f32 %v2736, %v3024
        %v3026 = vpop.f32.mrb[0].mxu0
        %3027 = vmatprep.mubr.bf16.mxu0 %v2033
        %3028 = vmatmul.mubr.bf16.gmra.mrb[0].mxu0 %v2032
        %v3029 = vpop.f32.mrb[0].mxu0
        %v3030 = vadd.f32 %v2741, %v3029
        %v3031 = vpop.f32.mrb[0].mxu0
        %v3032 = vpop.f32.mrb[0].mxu0
        %v3033 = vadd.f32 %v2744, %v3032
        %v3034 = vpop.f32.mrb[0].mxu0
        %3035 = vmatprep.mubr.bf16.mxu0 %v2039
        %3036 = vmatmul.mubr.bf16.gmra.mrb[0].mxu0 %v2038
        %v3037 = vpop.f32.mrb[0].mxu0
        %v3038 = vadd.f32 %v2749, %v3037
        %v3039 = vpop.f32.mrb[0].mxu0
        %v3040 = vpop.f32.mrb[0].mxu0
        %v3041 = vadd.f32 %v2752, %v3040
        %v3042 = vpop.f32.mrb[0].mxu0
        %3043 = vmatprep.mubr.bf16.mxu0 %v2045
        %3044 = vmatmul.mubr.bf16.gmra.mrb[0].mxu0 %v2044
        %v3045 = vpop.f32.mrb[0].mxu0
        %v3046 = vadd.f32 %v2757, %v3045
        %v3047 = vpop.f32.mrb[0].mxu0
        %v3048 = vpop.f32.mrb[0].mxu0
        %v3049 = vadd.f32 %v2760, %v3048
        %v3050 = vpop.f32.mrb[0].mxu0
        %3051 = vmatprep.mubr.bf16.mxu0 %v2051
        %3052 = vmatmul.mubr.bf16.gmra.mrb[0].mxu0 %v2050
        %v3053 = vpop.f32.mrb[0].mxu0
        %v3054 = vadd.f32 %v2765, %v3053
        %v3055 = vpop.f32.mrb[0].mxu0
        %v3056 = vpop.f32.mrb[0].mxu0
        %v3057 = vadd.f32 %v2768, %v3056
        %v3058 = vpop.f32.mrb[0].mxu0
        %3059 = vmatprep.mubr.bf16.mxu0 %v2057
        %3060 = vmatmul.mubr.bf16.gmra.mrb[0].mxu0 %v2056
        %v3061 = vpop.f32.mrb[0].mxu0
        %v3062 = vadd.f32 %v2773, %v3061
        %v3063 = vpop.f32.mrb[0].mxu0
        %v3064 = vpop.f32.mrb[0].mxu0
        %v3065 = vadd.f32 %v2776, %v3064
        %v3066 = vpop.f32.mrb[0].mxu0
        %3067 = vmatprep.mubr.bf16.mxu0 %v2063
        %3068 = vmatmul.mubr.bf16.gmra.mrb[0].mxu0 %v2062
        %v3069 = vpop.f32.mrb[0].mxu0
        %v3070 = vadd.f32 %v2781, %v3069
        %v3071 = vpop.f32.mrb[0].mxu0
        %v3072 = vpop.f32.mrb[0].mxu0
        %v3073 = vadd.f32 %v2784, %v3072
        %v3074 = vpop.f32.mrb[0].mxu0
        %3075 = vmatprep.mubr.bf16.mxu0 %v2069
        %3076 = vmatmul.mubr.bf16.gmra.mrb[0].mxu0 %v2068
        %v3077 = vpop.f32.mrb[0].mxu0
        %v3078 = vadd.f32 %v2789, %v3077
        %v3079 = vpop.f32.mrb[0].mxu0
        %v3080 = vpop.f32.mrb[0].mxu0
        %v3081 = vadd.f32 %v2792, %v3080
        %v3082 = vpop.f32.mrb[0].mxu0
        %3083 = vmatprep.mubr.bf16.mxu0 %v2075
        %3084 = vmatmul.mubr.bf16.gmra.mrb[0].mxu0 %v2074
        %v3085 = vpop.f32.mrb[0].mxu0
        %v3086 = vadd.f32 %v2797, %v3085
        %v3087 = vpop.f32.mrb[0].mxu0
        %v3088 = vpop.f32.mrb[0].mxu0
        %v3089 = vadd.f32 %v2800, %v3088
        %v3090 = vpop.f32.mrb[0].mxu0
        %3091 = vmatprep.mubr.bf16.mxu0 %v2081
        %3092 = vmatmul.mubr.bf16.gmra.mrb[0].mxu0 %v2080
        %v3093 = vpop.f32.mrb[0].mxu0
        %v3094 = vadd.f32 %v2805, %v3093
        %v3095 = vpop.f32.mrb[0].mxu0
        %v3096 = vpop.f32.mrb[0].mxu0
        %v3097 = vadd.f32 %v2808, %v3096
        %v3098 = vpop.f32.mrb[0].mxu0
        %3099 = vmatprep.mubr.bf16.mxu0 %v2087
        %3100 = vmatmul.mubr.bf16.gmra.mrb[0].mxu0 %v2086
        %v3101 = vpop.f32.mrb[0].mxu0
        %v3102 = vadd.f32 %v2813, %v3101
        %v3103 = vpop.f32.mrb[0].mxu0
        %v3104 = vpop.f32.mrb[0].mxu0
        %v3105 = vadd.f32 %v2816, %v3104
        %v3106 = vpop.f32.mrb[0].mxu0
        %3107 = vmatprep.mubr.bf16.mxu0 %v2093
        %3108 = vmatmul.mubr.bf16.gmra.mrb[0].mxu0 %v2092
        %v3109 = vpop.f32.mrb[0].mxu0
        %v3110 = vadd.f32 %v2821, %v3109
        %v3111 = vpop.f32.mrb[0].mxu0
        %v3112 = vpop.f32.mrb[0].mxu0
        %v3113 = vadd.f32 %v2824, %v3112
        %v3114 = vpop.f32.mrb[0].mxu0
        %3115 = vmatprep.mubr.bf16.mxu0 %v2099
        %3116 = vmatmul.mubr.bf16.gmra.mrb[0].mxu0 %v2098
        %v3117 = vpop.f32.mrb[0].mxu0
        %v3118 = vadd.f32 %v2829, %v3117
        %v3119 = vpop.f32.mrb[0].mxu0
        %v3120 = vpop.f32.mrb[0].mxu0
        %v3121 = vadd.f32 %v2832, %v3120
        %v3122 = vpop.f32.mrb[0].mxu0
        %3123 = vmatprep.mubr.bf16.mxu0 %v2105
        %3124 = vmatmul.mubr.bf16.gmra.mrb[0].mxu0 %v2104
        %v3125 = vpop.f32.mrb[0].mxu0
        %v3126 = vadd.f32 %v2837, %v3125
        %v3127 = vpop.f32.mrb[0].mxu0
        %v3128 = vpop.f32.mrb[0].mxu0
        %v3129 = vadd.f32 %v2840, %v3128
        %v3130 = vpop.f32.mrb[0].mxu0
        %3131 = vmatprep.mubr.bf16.mxu0 %v2111
        %3132 = vmatmul.mubr.bf16.gmra.mrb[0].mxu0 %v2110
        %v3133 = vpop.f32.mrb[0].mxu0
        %v3134 = vadd.f32 %v2845, %v3133
        %v3135 = vpop.f32.mrb[0].mxu0
        %v3136 = vpop.f32.mrb[0].mxu0
        %v3137 = vadd.f32 %v2848, %v3136
        %v3138 = vpop.f32.mrb[0].mxu0
        %3139 = vmatprep.mubr.bf16.mxu0 %v2117
        %3140 = vmatmul.mubr.bf16.gmra.mrb[0].mxu0 %v2116
        %v3141 = vpop.f32.mrb[0].mxu0
        %v3142 = vadd.f32 %v2853, %v3141
        %v3143 = vpop.f32.mrb[0].mxu0
        %v3144 = vpop.f32.mrb[0].mxu0
        %v3145 = vadd.f32 %v2856, %v3144
        %v3146 = vpop.f32.mrb[0].mxu0
        %3147 = vmatprep.mubr.bf16.mxu0 %v2123
        %3148 = vmatmul.mubr.bf16.gmra.mrb[0].mxu0 %v2122
        %v3149 = vpop.f32.mrb[0].mxu0
        %v3150 = vadd.f32 %v2861, %v3149
        %v3151 = vpop.f32.mrb[0].mxu0
        %v3152 = vpop.f32.mrb[0].mxu0
        %v3153 = vadd.f32 %v2864, %v3152
        %v3154 = vpop.f32.mrb[0].mxu0
        %3155 = vmatprep.mubr.bf16.mxu0 %v2129
        %3156 = vmatmul.mubr.bf16.gmra.mrb[0].mxu0 %v2128
        %v3157 = vpop.f32.mrb[0].mxu0
        %v3158 = vadd.f32 %v2869, %v3157
        %v3159 = vpop.f32.mrb[0].mxu0
        %v3160 = vpop.f32.mrb[0].mxu0
        %v3161 = vadd.f32 %v2872, %v3160
        %v3162 = vpop.f32.mrb[0].mxu0
        %3163 = vmatprep.mubr.bf16.mxu0 %v2135
        %3164 = vmatmul.mubr.bf16.gmra.mrb[0].mxu0 %v2134
        %v3165 = vpop.f32.mrb[0].mxu0
        %v3166 = vadd.f32 %v2877, %v3165
        %v3167 = vpop.f32.mrb[0].mxu0
        %v3168 = vpop.f32.mrb[0].mxu0
        %v3169 = vadd.f32 %v2880, %v3168
        %v3170 = vpop.f32.mrb[0].mxu0
        %3171 = vmatprep.mubr.bf16.mxu0 %v2141
        %3172 = vmatmul.mubr.bf16.gmra.mrb[0].mxu0 %v2140
        %v3173 = vpop.f32.mrb[0].mxu0
        %v3174 = vadd.f32 %v2885, %v3173
        %v3175 = vpop.f32.mrb[0].mxu0
        %v3176 = vpop.f32.mrb[0].mxu0
        %v3177 = vadd.f32 %v2888, %v3176
        %v3178 = vpop.f32.mrb[0].mxu0
        %3179 = vmatprep.mubr.bf16.mxu0 %v2147
        %3180 = vmatmul.mubr.bf16.gmra.mrb[0].mxu0 %v2146
        %v3181 = vpop.f32.mrb[0].mxu0
        %v3182 = vadd.f32 %v2893, %v3181
        %v3183 = vpop.f32.mrb[0].mxu0
        %v3184 = vpop.f32.mrb[0].mxu0
        %v3185 = vadd.f32 %v2896, %v3184
        %v3186 = vpop.f32.mrb[0].mxu0
        %3187 = vmatprep.mubr.bf16.mxu0 %v2153
        %3188 = vmatmul.mubr.bf16.gmra.mrb[0].mxu0 %v2152
        %v3189 = vpop.f32.mrb[0].mxu0
        %v3190 = vadd.f32 %v2901, %v3189
        %v3191 = vpop.f32.mrb[0].mxu0
        %v3192 = vpop.f32.mrb[0].mxu0
        %v3193 = vadd.f32 %v2904, %v3192
        %v3194 = vpop.f32.mrb[0].mxu0
        %3195 = vmatprep.mubr.bf16.mxu0 %v2159
        %3196 = vmatmul.mubr.bf16.gmra.mrb[0].mxu0 %v2158
        %v3197 = vpop.f32.mrb[0].mxu0
        %v3198 = vadd.f32 %v2909, %v3197
        %v3199 = vpop.f32.mrb[0].mxu0
        %v3200 = vpop.f32.mrb[0].mxu0
        %v3201 = vadd.f32 %v2912, %v3200
        %v3202 = vpop.f32.mrb[0].mxu0
        %3203 = vmatprep.mubr.bf16.mxu0 %v2165
        %3204 = vmatmul.mubr.bf16.gmra.mrb[0].mxu0 %v2164
        %v3205 = vpop.f32.mrb[0].mxu0
        %v3206 = vadd.f32 %v2917, %v3205
        %v3207 = vpop.f32.mrb[0].mxu0
        %v3208 = vpop.f32.mrb[0].mxu0
        %v3209 = vadd.f32 %v2920, %v3208
        %v3210 = vpop.f32.mrb[0].mxu0
        %3211 = vmatprep.mubr.bf16.mxu0 %v2171
        %3212 = vmatmul.mubr.bf16.gmra.mrb[0].mxu0 %v2170
        %v3213 = vpop.f32.mrb[0].mxu0
        %v3214 = vadd.f32 %v2925, %v3213
        %v3215 = vpop.f32.mrb[0].mxu0
        %v3216 = vpop.f32.mrb[0].mxu0
        %v3217 = vadd.f32 %v2928, %v3216
        %v3218 = vpop.f32.mrb[0].mxu0
        %3219 = vmatprep.mubr.bf16.mxu0 %v2177
        %3220 = vmatmul.mubr.bf16.gmra.mrb[0].mxu0 %v2176
        %v3221 = vpop.f32.mrb[0].mxu0
        %v3222 = vadd.f32 %v2933, %v3221
        %v3223 = vpop.f32.mrb[0].mxu0
        %v3224 = vpop.f32.mrb[0].mxu0
        %v3225 = vadd.f32 %v2936, %v3224
        %v3226 = vpop.f32.mrb[0].mxu0
        %3227 = vmatprep.mubr.bf16.mxu0 %v2183
        %3228 = vmatmul.mubr.bf16.gmra.mrb[0].mxu0 %v2182
        %v3229 = vpop.f32.mrb[0].mxu0
        %v3230 = vadd.f32 %v2941, %v3229
        %v3231 = vpop.f32.mrb[0].mxu0
        %v3232 = vpop.f32.mrb[0].mxu0
        %v3233 = vadd.f32 %v2944, %v3232
        %v3234 = vpop.f32.mrb[0].mxu0
        %3235 = vmatprep.mubr.bf16.mxu0 %v2189
        %3236 = vmatmul.mubr.bf16.gmra.mrb[0].mxu0 %v2188
        %v3237 = vpop.f32.mrb[0].mxu0
        %v3238 = vadd.f32 %v2949, %v3237
        %v3239 = vpop.f32.mrb[0].mxu0
        %v3240 = vpop.f32.mrb[0].mxu0
        %v3241 = vadd.f32 %v2952, %v3240
        %v3242 = vpop.f32.mrb[0].mxu0
        %3243 = vmatprep.mubr.bf16.mxu0 %v2195
        %3244 = vmatmul.mubr.bf16.gmra.mrb[0].mxu0 %v2194
        %v3245 = vpop.f32.mrb[0].mxu0
        %v3246 = vadd.f32 %v2957, %v3245
        %v3247 = vpop.f32.mrb[0].mxu0
        %v3248 = vpop.f32.mrb[0].mxu0
        %v3249 = vadd.f32 %v2960, %v3248
        %v3250 = vpop.f32.mrb[0].mxu0
        %3251 = vmatprep.mubr.bf16.mxu0 %v2201
        %3252 = vmatmul.mubr.bf16.gmra.mrb[0].mxu0 %v2200
        %v3253 = vpop.f32.mrb[0].mxu0
        %v3254 = vadd.f32 %v2965, %v3253
        %v3255 = vpop.f32.mrb[0].mxu0
        %v3256 = vpop.f32.mrb[0].mxu0
        %v3257 = vadd.f32 %v2968, %v3256
        %v3258 = vpop.f32.mrb[0].mxu0
        %3259 = vmatprep.mubr.bf16.mxu0 %v2207
        %3260 = vmatmul.mubr.bf16.gmra.mrb[0].mxu0 %v2206
        %v3261 = vpop.f32.mrb[0].mxu0
        %v3262 = vadd.f32 %v2973, %v3261
        %v3263 = vpop.f32.mrb[0].mxu0
        %v3264 = vpop.f32.mrb[0].mxu0
        %v3265 = vadd.f32 %v2976, %v3264
        %v3266 = vpop.f32.mrb[0].mxu0
        %3267 = vdwg.mxu0
        %3268 = vmatprep.subr.bf16.mxu0 0
        %3269 = vmatpush1.bf16.msra.mxu0 %v2626
        %3270 = vmatprep.subr.bf16.mxu0 0
        %3271 = vmatpush1.bf16.msra.mxu0 %v2627
        %3272 = vmatprep.subr.bf16.mxu0 0
        %3273 = vmatpush1.bf16.msra.mxu0 %v2628
        %3274 = vmatprep.subr.bf16.mxu0 0
        %3275 = vmatpush1.bf16.msra.mxu0 %v2629
        %3276 = vmatprep.subr.bf16.mxu0 0
        %3277 = vmatpush1.bf16.msra.mxu0 %v2630
        %3278 = vmatprep.subr.bf16.mxu0 0
        %3279 = vmatpush1.bf16.msra.mxu0 %v2631
        %3280 = vmatprep.subr.bf16.mxu0 0
        %3281 = vmatpush1.bf16.msra.mxu0 %v2632
        %3282 = vmatprep.subr.bf16.mxu0 0
        %3283 = vmatpush1.bf16.msra.mxu0 %v2633
        %3284 = vmatprep.subr.bf16.mxu0 0
        %3285 = vmatpush1.bf16.msra.mxu0 %v2634
        %3286 = vmatprep.subr.bf16.mxu0 0
        %3287 = vmatpush1.bf16.msra.mxu0 %v2635
        %3288 = vmatprep.subr.bf16.mxu0 0
        %3289 = vmatpush1.bf16.msra.mxu0 %v2636
        %3290 = vmatprep.subr.bf16.mxu0 0
        %3291 = vmatpush1.bf16.msra.mxu0 %v2637
        %3292 = vmatprep.subr.bf16.mxu0 0
        %3293 = vmatpush1.bf16.msra.mxu0 %v2638
        %3294 = vmatprep.subr.bf16.mxu0 0
        %3295 = vmatpush1.bf16.msra.mxu0 %v2639
        %3296 = vmatprep.subr.bf16.mxu0 0
        %3297 = vmatpush1.bf16.msra.mxu0 %v2640
        %3298 = vmatprep.subr.bf16.mxu0 0
        %3299 = vmatpush1.bf16.msra.mxu0 %v2641
        %3300 = vmatprep.mubr.bf16.mxu0 %v2023
        %3301 = vmatmul.mubr.bf16.gmra.mrb[0].mxu0 %v2022
        %v3302 = vpop.f32.mrb[0].mxu0
        %v3303 = vadd.f32 %v3014, %v3302
        %v3304 = vpop.f32.mrb[0].mxu0
        %v3305 = vpop.f32.mrb[0].mxu0
        %v3306 = vadd.f32 %v3017, %v3305
        %v3307 = vpop.f32.mrb[0].mxu0
        %3308 = vmatprep.mubr.bf16.mxu0 %v2029
        %3309 = vmatmul.mubr.bf16.gmra.mrb[0].mxu0 %v2028
        %v3310 = vpop.f32.mrb[0].mxu0
        %v3311 = vadd.f32 %v3022, %v3310
        %v3312 = vpop.f32.mrb[0].mxu0
        %v3313 = vpop.f32.mrb[0].mxu0
        %v3314 = vadd.f32 %v3025, %v3313
        %v3315 = vpop.f32.mrb[0].mxu0
        %3316 = vmatprep.mubr.bf16.mxu0 %v2035
        %3317 = vmatmul.mubr.bf16.gmra.mrb[0].mxu0 %v2034
        %v3318 = vpop.f32.mrb[0].mxu0
        %v3319 = vadd.f32 %v3030, %v3318
        %v3320 = vpop.f32.mrb[0].mxu0
        %v3321 = vpop.f32.mrb[0].mxu0
        %v3322 = vadd.f32 %v3033, %v3321
        %v3323 = vpop.f32.mrb[0].mxu0
        %3324 = vmatprep.mubr.bf16.mxu0 %v2041
        %3325 = vmatmul.mubr.bf16.gmra.mrb[0].mxu0 %v2040
        %v3326 = vpop.f32.mrb[0].mxu0
        %v3327 = vadd.f32 %v3038, %v3326
        %v3328 = vpop.f32.mrb[0].mxu0
        %v3329 = vpop.f32.mrb[0].mxu0
        %v3330 = vadd.f32 %v3041, %v3329
        %v3331 = vpop.f32.mrb[0].mxu0
        %3332 = vmatprep.mubr.bf16.mxu0 %v2047
        %3333 = vmatmul.mubr.bf16.gmra.mrb[0].mxu0 %v2046
        %v3334 = vpop.f32.mrb[0].mxu0
        %v3335 = vadd.f32 %v3046, %v3334
        %v3336 = vpop.f32.mrb[0].mxu0
        %v3337 = vpop.f32.mrb[0].mxu0
        %v3338 = vadd.f32 %v3049, %v3337
        %v3339 = vpop.f32.mrb[0].mxu0
        %3340 = vmatprep.mubr.bf16.mxu0 %v2053
        %3341 = vmatmul.mubr.bf16.gmra.mrb[0].mxu0 %v2052
        %v3342 = vpop.f32.mrb[0].mxu0
        %v3343 = vadd.f32 %v3054, %v3342
        %v3344 = vpop.f32.mrb[0].mxu0
        %v3345 = vpop.f32.mrb[0].mxu0
        %v3346 = vadd.f32 %v3057, %v3345
        %v3347 = vpop.f32.mrb[0].mxu0
        %3348 = vmatprep.mubr.bf16.mxu0 %v2059
        %3349 = vmatmul.mubr.bf16.gmra.mrb[0].mxu0 %v2058
        %v3350 = vpop.f32.mrb[0].mxu0
        %v3351 = vadd.f32 %v3062, %v3350
        %v3352 = vpop.f32.mrb[0].mxu0
        %v3353 = vpop.f32.mrb[0].mxu0
        %v3354 = vadd.f32 %v3065, %v3353
        %v3355 = vpop.f32.mrb[0].mxu0
        %3356 = vmatprep.mubr.bf16.mxu0 %v2065
        %3357 = vmatmul.mubr.bf16.gmra.mrb[0].mxu0 %v2064
        %v3358 = vpop.f32.mrb[0].mxu0
        %v3359 = vadd.f32 %v3070, %v3358
        %v3360 = vpop.f32.mrb[0].mxu0
        %v3361 = vpop.f32.mrb[0].mxu0
        %v3362 = vadd.f32 %v3073, %v3361
        %v3363 = vpop.f32.mrb[0].mxu0
        %3364 = vmatprep.mubr.bf16.mxu0 %v2071
        %3365 = vmatmul.mubr.bf16.gmra.mrb[0].mxu0 %v2070
        %v3366 = vpop.f32.mrb[0].mxu0
        %v3367 = vadd.f32 %v3078, %v3366
        %v3368 = vpop.f32.mrb[0].mxu0
        %v3369 = vpop.f32.mrb[0].mxu0
        %v3370 = vadd.f32 %v3081, %v3369
        %v3371 = vpop.f32.mrb[0].mxu0
        %3372 = vmatprep.mubr.bf16.mxu0 %v2077
        %3373 = vmatmul.mubr.bf16.gmra.mrb[0].mxu0 %v2076
        %v3374 = vpop.f32.mrb[0].mxu0
        %v3375 = vadd.f32 %v3086, %v3374
        %v3376 = vpop.f32.mrb[0].mxu0
        %v3377 = vpop.f32.mrb[0].mxu0
        %v3378 = vadd.f32 %v3089, %v3377
        %v3379 = vpop.f32.mrb[0].mxu0
        %3380 = vmatprep.mubr.bf16.mxu0 %v2083
        %3381 = vmatmul.mubr.bf16.gmra.mrb[0].mxu0 %v2082
        %v3382 = vpop.f32.mrb[0].mxu0
        %v3383 = vadd.f32 %v3094, %v3382
        %v3384 = vpop.f32.mrb[0].mxu0
        %v3385 = vpop.f32.mrb[0].mxu0
        %v3386 = vadd.f32 %v3097, %v3385
        %v3387 = vpop.f32.mrb[0].mxu0
        %3388 = vmatprep.mubr.bf16.mxu0 %v2089
        %3389 = vmatmul.mubr.bf16.gmra.mrb[0].mxu0 %v2088
        %v3390 = vpop.f32.mrb[0].mxu0
        %v3391 = vadd.f32 %v3102, %v3390
        %v3392 = vpop.f32.mrb[0].mxu0
        %v3393 = vpop.f32.mrb[0].mxu0
        %v3394 = vadd.f32 %v3105, %v3393
        %v3395 = vpop.f32.mrb[0].mxu0
        %3396 = vmatprep.mubr.bf16.mxu0 %v2095
        %3397 = vmatmul.mubr.bf16.gmra.mrb[0].mxu0 %v2094
        %v3398 = vpop.f32.mrb[0].mxu0
        %v3399 = vadd.f32 %v3110, %v3398
        %v3400 = vpop.f32.mrb[0].mxu0
        %v3401 = vpop.f32.mrb[0].mxu0
        %v3402 = vadd.f32 %v3113, %v3401
        %v3403 = vpop.f32.mrb[0].mxu0
        %3404 = vmatprep.mubr.bf16.mxu0 %v2101
        %3405 = vmatmul.mubr.bf16.gmra.mrb[0].mxu0 %v2100
        %v3406 = vpop.f32.mrb[0].mxu0
        %v3407 = vadd.f32 %v3118, %v3406
        %v3408 = vpop.f32.mrb[0].mxu0
        %v3409 = vpop.f32.mrb[0].mxu0
        %v3410 = vadd.f32 %v3121, %v3409
        %v3411 = vpop.f32.mrb[0].mxu0
        %3412 = vmatprep.mubr.bf16.mxu0 %v2107
        %3413 = vmatmul.mubr.bf16.gmra.mrb[0].mxu0 %v2106
        %v3414 = vpop.f32.mrb[0].mxu0
        %v3415 = vadd.f32 %v3126, %v3414
        %v3416 = vpop.f32.mrb[0].mxu0
        %v3417 = vpop.f32.mrb[0].mxu0
        %v3418 = vadd.f32 %v3129, %v3417
        %v3419 = vpop.f32.mrb[0].mxu0
        %3420 = vmatprep.mubr.bf16.mxu0 %v2113
        %3421 = vmatmul.mubr.bf16.gmra.mrb[0].mxu0 %v2112
        %v3422 = vpop.f32.mrb[0].mxu0
        %v3423 = vadd.f32 %v3134, %v3422
        %v3424 = vpop.f32.mrb[0].mxu0
        %v3425 = vpop.f32.mrb[0].mxu0
        %v3426 = vadd.f32 %v3137, %v3425
        %v3427 = vpop.f32.mrb[0].mxu0
        %3428 = vmatprep.mubr.bf16.mxu0 %v2119
        %3429 = vmatmul.mubr.bf16.gmra.mrb[0].mxu0 %v2118
        %v3430 = vpop.f32.mrb[0].mxu0
        %v3431 = vadd.f32 %v3142, %v3430
        %v3432 = vpop.f32.mrb[0].mxu0
        %v3433 = vpop.f32.mrb[0].mxu0
        %v3434 = vadd.f32 %v3145, %v3433
        %v3435 = vpop.f32.mrb[0].mxu0
        %3436 = vmatprep.mubr.bf16.mxu0 %v2125
        %3437 = vmatmul.mubr.bf16.gmra.mrb[0].mxu0 %v2124
        %v3438 = vpop.f32.mrb[0].mxu0
        %v3439 = vadd.f32 %v3150, %v3438
        %v3440 = vpop.f32.mrb[0].mxu0
        %v3441 = vpop.f32.mrb[0].mxu0
        %v3442 = vadd.f32 %v3153, %v3441
        %v3443 = vpop.f32.mrb[0].mxu0
        %3444 = vmatprep.mubr.bf16.mxu0 %v2131
        %3445 = vmatmul.mubr.bf16.gmra.mrb[0].mxu0 %v2130
        %v3446 = vpop.f32.mrb[0].mxu0
        %v3447 = vadd.f32 %v3158, %v3446
        %v3448 = vpop.f32.mrb[0].mxu0
        %v3449 = vpop.f32.mrb[0].mxu0
        %v3450 = vadd.f32 %v3161, %v3449
        %v3451 = vpop.f32.mrb[0].mxu0
        %3452 = vmatprep.mubr.bf16.mxu0 %v2137
        %3453 = vmatmul.mubr.bf16.gmra.mrb[0].mxu0 %v2136
        %v3454 = vpop.f32.mrb[0].mxu0
        %v3455 = vadd.f32 %v3166, %v3454
        %v3456 = vpop.f32.mrb[0].mxu0
        %v3457 = vpop.f32.mrb[0].mxu0
        %v3458 = vadd.f32 %v3169, %v3457
        %v3459 = vpop.f32.mrb[0].mxu0
        %3460 = vmatprep.mubr.bf16.mxu0 %v2143
        %3461 = vmatmul.mubr.bf16.gmra.mrb[0].mxu0 %v2142
        %v3462 = vpop.f32.mrb[0].mxu0
        %v3463 = vadd.f32 %v3174, %v3462
        %v3464 = vpop.f32.mrb[0].mxu0
        %v3465 = vpop.f32.mrb[0].mxu0
        %v3466 = vadd.f32 %v3177, %v3465
        %v3467 = vpop.f32.mrb[0].mxu0
        %3468 = vmatprep.mubr.bf16.mxu0 %v2149
        %3469 = vmatmul.mubr.bf16.gmra.mrb[0].mxu0 %v2148
        %v3470 = vpop.f32.mrb[0].mxu0
        %v3471 = vadd.f32 %v3182, %v3470
        %v3472 = vpop.f32.mrb[0].mxu0
        %v3473 = vpop.f32.mrb[0].mxu0
        %v3474 = vadd.f32 %v3185, %v3473
        %v3475 = vpop.f32.mrb[0].mxu0
        %3476 = vmatprep.mubr.bf16.mxu0 %v2155
        %3477 = vmatmul.mubr.bf16.gmra.mrb[0].mxu0 %v2154
        %v3478 = vpop.f32.mrb[0].mxu0
        %v3479 = vadd.f32 %v3190, %v3478
        %v3480 = vpop.f32.mrb[0].mxu0
        %v3481 = vpop.f32.mrb[0].mxu0
        %v3482 = vadd.f32 %v3193, %v3481
        %v3483 = vpop.f32.mrb[0].mxu0
        %3484 = vmatprep.mubr.bf16.mxu0 %v2161
        %3485 = vmatmul.mubr.bf16.gmra.mrb[0].mxu0 %v2160
        %v3486 = vpop.f32.mrb[0].mxu0
        %v3487 = vadd.f32 %v3198, %v3486
        %v3488 = vpop.f32.mrb[0].mxu0
        %v3489 = vpop.f32.mrb[0].mxu0
        %v3490 = vadd.f32 %v3201, %v3489
        %v3491 = vpop.f32.mrb[0].mxu0
        %3492 = vmatprep.mubr.bf16.mxu0 %v2167
        %3493 = vmatmul.mubr.bf16.gmra.mrb[0].mxu0 %v2166
        %v3494 = vpop.f32.mrb[0].mxu0
        %v3495 = vadd.f32 %v3206, %v3494
        %v3496 = vpop.f32.mrb[0].mxu0
        %v3497 = vpop.f32.mrb[0].mxu0
        %v3498 = vadd.f32 %v3209, %v3497
        %v3499 = vpop.f32.mrb[0].mxu0
        %3500 = vmatprep.mubr.bf16.mxu0 %v2173
        %3501 = vmatmul.mubr.bf16.gmra.mrb[0].mxu0 %v2172
        %v3502 = vpop.f32.mrb[0].mxu0
        %v3503 = vadd.f32 %v3214, %v3502
        %v3504 = vpop.f32.mrb[0].mxu0
        %v3505 = vpop.f32.mrb[0].mxu0
        %v3506 = vadd.f32 %v3217, %v3505
        %v3507 = vpop.f32.mrb[0].mxu0
        %3508 = vmatprep.mubr.bf16.mxu0 %v2179
        %3509 = vmatmul.mubr.bf16.gmra.mrb[0].mxu0 %v2178
        %v3510 = vpop.f32.mrb[0].mxu0
        %v3511 = vadd.f32 %v3222, %v3510
        %v3512 = vpop.f32.mrb[0].mxu0
        %v3513 = vpop.f32.mrb[0].mxu0
        %v3514 = vadd.f32 %v3225, %v3513
        %v3515 = vpop.f32.mrb[0].mxu0
        %3516 = vmatprep.mubr.bf16.mxu0 %v2185
        %3517 = vmatmul.mubr.bf16.gmra.mrb[0].mxu0 %v2184
        %v3518 = vpop.f32.mrb[0].mxu0
        %v3519 = vadd.f32 %v3230, %v3518
        %v3520 = vpop.f32.mrb[0].mxu0
        %v3521 = vpop.f32.mrb[0].mxu0
        %v3522 = vadd.f32 %v3233, %v3521
        %v3523 = vpop.f32.mrb[0].mxu0
        %3524 = vmatprep.mubr.bf16.mxu0 %v2191
        %3525 = vmatmul.mubr.bf16.gmra.mrb[0].mxu0 %v2190
        %v3526 = vpop.f32.mrb[0].mxu0
        %v3527 = vadd.f32 %v3238, %v3526
        %v3528 = vpop.f32.mrb[0].mxu0
        %v3529 = vpop.f32.mrb[0].mxu0
        %v3530 = vadd.f32 %v3241, %v3529
        %v3531 = vpop.f32.mrb[0].mxu0
        %3532 = vmatprep.mubr.bf16.mxu0 %v2197
        %3533 = vmatmul.mubr.bf16.gmra.mrb[0].mxu0 %v2196
        %v3534 = vpop.f32.mrb[0].mxu0
        %v3535 = vadd.f32 %v3246, %v3534
        %v3536 = vpop.f32.mrb[0].mxu0
        %v3537 = vpop.f32.mrb[0].mxu0
        %v3538 = vadd.f32 %v3249, %v3537
        %v3539 = vpop.f32.mrb[0].mxu0
        %3540 = vmatprep.mubr.bf16.mxu0 %v2203
        %3541 = vmatmul.mubr.bf16.gmra.mrb[0].mxu0 %v2202
        %v3542 = vpop.f32.mrb[0].mxu0
        %v3543 = vadd.f32 %v3254, %v3542
        %v3544 = vpop.f32.mrb[0].mxu0
        %v3545 = vpop.f32.mrb[0].mxu0
        %v3546 = vadd.f32 %v3257, %v3545
        %v3547 = vpop.f32.mrb[0].mxu0
        %3548 = vmatprep.mubr.bf16.mxu0 %v2209
        %3549 = vmatmul.mubr.bf16.gmra.mrb[0].mxu0 %v2208
        %v3550 = vpop.f32.mrb[0].mxu0
        %v3551 = vadd.f32 %v3262, %v3550
        %v3552 = vpop.f32.mrb[0].mxu0
        %v3553 = vpop.f32.mrb[0].mxu0
        %v3554 = vadd.f32 %v3265, %v3553
        %v3555 = vpop.f32.mrb[0].mxu0
        %3556 = vdwg.mxu0
        %v3557 = vmax.f32 %v3303, 0.0
        %v3558 = vmax.f32 %v3306, 0.0
        %v3559 = vmax.f32 %v3311, 0.0
        %v3560 = vmax.f32 %v3314, 0.0
        %v3561 = vmax.f32 %v3319, 0.0
        %v3562 = vmax.f32 %v3322, 0.0
        %v3563 = vmax.f32 %v3327, 0.0
        %v3564 = vmax.f32 %v3330, 0.0
        %v3565 = vmax.f32 %v3335, 0.0
        %v3566 = vmax.f32 %v3338, 0.0
        %v3567 = vmax.f32 %v3343, 0.0
        %v3568 = vmax.f32 %v3346, 0.0
        %v3569 = vmax.f32 %v3351, 0.0
        %v3570 = vmax.f32 %v3354, 0.0
        %v3571 = vmax.f32 %v3359, 0.0
        %v3572 = vmax.f32 %v3362, 0.0
        %v3573 = vmax.f32 %v3367, 0.0
        %v3574 = vmax.f32 %v3370, 0.0
        %v3575 = vmax.f32 %v3375, 0.0
        %v3576 = vmax.f32 %v3378, 0.0
        %v3577 = vmax.f32 %v3383, 0.0
        %v3578 = vmax.f32 %v3386, 0.0
        %v3579 = vmax.f32 %v3391, 0.0
        %v3580 = vmax.f32 %v3394, 0.0
        %v3581 = vmax.f32 %v3399, 0.0
        %v3582 = vmax.f32 %v3402, 0.0
        %v3583 = vmax.f32 %v3407, 0.0
        %v3584 = vmax.f32 %v3410, 0.0
        %v3585 = vmax.f32 %v3415, 0.0
        %v3586 = vmax.f32 %v3418, 0.0
        %v3587 = vmax.f32 %v3423, 0.0
        %v3588 = vmax.f32 %v3426, 0.0
        %v3589 = vmax.f32 %v3431, 0.0
        %v3590 = vmax.f32 %v3434, 0.0
        %v3591 = vmax.f32 %v3439, 0.0
        %v3592 = vmax.f32 %v3442, 0.0
        %v3593 = vmax.f32 %v3447, 0.0
        %v3594 = vmax.f32 %v3450, 0.0
        %v3595 = vmax.f32 %v3455, 0.0
        %v3596 = vmax.f32 %v3458, 0.0
        %v3597 = vmax.f32 %v3463, 0.0
        %v3598 = vmax.f32 %v3466, 0.0
        %v3599 = vmax.f32 %v3471, 0.0
        %v3600 = vmax.f32 %v3474, 0.0
        %v3601 = vmax.f32 %v3479, 0.0
        %v3602 = vmax.f32 %v3482, 0.0
        %v3603 = vmax.f32 %v3487, 0.0
        %v3604 = vmax.f32 %v3490, 0.0
        %v3605 = vmax.f32 %v3495, 0.0
        %v3606 = vmax.f32 %v3498, 0.0
        %v3607 = vmax.f32 %v3503, 0.0
        %v3608 = vmax.f32 %v3506, 0.0
        %v3609 = vmax.f32 %v3511, 0.0
        %v3610 = vmax.f32 %v3514, 0.0
        %v3611 = vmax.f32 %v3519, 0.0
        %v3612 = vmax.f32 %v3522, 0.0
        %v3613 = vmax.f32 %v3527, 0.0
        %v3614 = vmax.f32 %v3530, 0.0
        %v3615 = vmax.f32 %v3535, 0.0
        %v3616 = vmax.f32 %v3538, 0.0
        %v3617 = vmax.f32 %v3543, 0.0
        %v3618 = vmax.f32 %v3546, 0.0
        %v3619 = vmax.f32 %v3551, 0.0
        %v3620 = vmax.f32 %v3554, 0.0
        %v3621 = vld [vmem:[%s3] sm:$0xff]
        %v3622 = vld [vmem:[%s3 + $0x8] sm:$0xff]
        %v3623 = vpack.c.bf16 %v3558, %v3557
        %v3624 = vpack.c.bf16 %v3560, %v3559
        %v3625 = vpack.c.bf16 %v3562, %v3561
        %v3626 = vpack.c.bf16 %v3564, %v3563
        %v3627 = vpack.c.bf16 %v3566, %v3565
        %v3628 = vpack.c.bf16 %v3568, %v3567
        %v3629 = vpack.c.bf16 %v3570, %v3569
        %v3630 = vpack.c.bf16 %v3572, %v3571
        %v3631 = vpack.c.bf16 %v3574, %v3573
        %v3632 = vpack.c.bf16 %v3576, %v3575
        %v3633 = vpack.c.bf16 %v3578, %v3577
        %v3634 = vpack.c.bf16 %v3580, %v3579
        %v3635 = vpack.c.bf16 %v3582, %v3581
        %v3636 = vpack.c.bf16 %v3584, %v3583
        %v3637 = vpack.c.bf16 %v3586, %v3585
        %v3638 = vpack.c.bf16 %v3588, %v3587
        %v3639 = vpack.c.bf16 %v3590, %v3589
        %v3640 = vpack.c.bf16 %v3592, %v3591
        %v3641 = vpack.c.bf16 %v3594, %v3593
        %v3642 = vpack.c.bf16 %v3596, %v3595
        %v3643 = vpack.c.bf16 %v3598, %v3597
        %v3644 = vpack.c.bf16 %v3600, %v3599
        %v3645 = vpack.c.bf16 %v3602, %v3601
        %v3646 = vpack.c.bf16 %v3604, %v3603
        %v3647 = vpack.c.bf16 %v3606, %v3605
        %v3648 = vpack.c.bf16 %v3608, %v3607
        %v3649 = vpack.c.bf16 %v3610, %v3609
        %v3650 = vpack.c.bf16 %v3612, %v3611
        %v3651 = vpack.c.bf16 %v3614, %v3613
        %v3652 = vpack.c.bf16 %v3616, %v3615
        %v3653 = vpack.c.bf16 %v3618, %v3617
        %v3654 = vpack.c.bf16 %v3620, %v3619
        %v3655 = vld [vmem:[%s4] sm:$0xff]
        %3657 = vset.pattern.permute.xlu0 0
        %3658 = vperm.xlu0 %3657, %v3655
        %v3659 = vpop.permute.xlu0 %3658
        %v3663 = vunpack.c.l.b16 %v3621
        %v3664 = vunpack.c.h.b16 %v3621
        %v3665 = vunpack.c.l.b16 %v3622
        %v3666 = vunpack.c.h.b16 %v3622
        %v3667 = vpack.c.b16 %v3663, %v3663
        %v3668 = vpack.c.b16 %v3664, %v3664
        %v3669 = vpack.c.b16 %v3665, %v3665
        %v3670 = vpack.c.b16 %v3666, %v3666
        %3675 = vmatprep.subr.bf16.mxu0 0
        %3676 = vmatpush1.bf16.msra.mxu0 %v3623
        %3677 = vmatprep.subr.bf16.mxu0 0
        %3678 = vmatpush1.bf16.msra.mxu0 %v3624
        %3679 = vmatprep.subr.bf16.mxu0 0
        %3680 = vmatpush1.bf16.msra.mxu0 %v3625
        %3681 = vmatprep.subr.bf16.mxu0 0
        %3682 = vmatpush1.bf16.msra.mxu0 %v3626
        %3683 = vmatprep.subr.bf16.mxu0 0
        %3684 = vmatpush1.bf16.msra.mxu0 %v3627
        %3685 = vmatprep.subr.bf16.mxu0 0
        %3686 = vmatpush1.bf16.msra.mxu0 %v3628
        %3687 = vmatprep.subr.bf16.mxu0 0
        %3688 = vmatpush1.bf16.msra.mxu0 %v3629
        %3689 = vmatprep.subr.bf16.mxu0 0
        %3690 = vmatpush1.bf16.msra.mxu0 %v3630
        %3691 = vmatprep.subr.bf16.mxu0 0
        %3692 = vmatpush1.bf16.msra.mxu0 %v3631
        %3693 = vmatprep.subr.bf16.mxu0 0
        %3694 = vmatpush1.bf16.msra.mxu0 %v3632
        %3695 = vmatprep.subr.bf16.mxu0 0
        %3696 = vmatpush1.bf16.msra.mxu0 %v3633
        %3697 = vmatprep.subr.bf16.mxu0 0
        %3698 = vmatpush1.bf16.msra.mxu0 %v3634
        %3699 = vmatprep.subr.bf16.mxu0 0
        %3700 = vmatpush1.bf16.msra.mxu0 %v3635
        %3701 = vmatprep.subr.bf16.mxu0 0
        %3702 = vmatpush1.bf16.msra.mxu0 %v3636
        %3703 = vmatprep.subr.bf16.mxu0 0
        %3704 = vmatpush1.bf16.msra.mxu0 %v3637
        %3705 = vmatprep.subr.bf16.mxu0 0
        %3706 = vmatpush1.bf16.msra.mxu0 %v3638
        %3707 = vmatprep.mubr.bf16.mxu0 %v3668
        %3708 = vmatmul.mubr.bf16.gmra.mrb[0].mxu0 %v3667
        %v3709 = vpop.f32.mrb[0].mxu0
        %v3710 = vadd.f32 %v3659, %v3709
        %v3711 = vpop.f32.mrb[0].mxu0
        %v3712 = vpop.f32.mrb[0].mxu0
        %v3713 = vpop.f32.mrb[0].mxu0
        %3714 = vdwg.mxu0
        %3715 = vmatprep.subr.bf16.mxu0 0
        %3716 = vmatpush1.bf16.msra.mxu0 %v3639
        %3717 = vmatprep.subr.bf16.mxu0 0
        %3718 = vmatpush1.bf16.msra.mxu0 %v3640
        %3719 = vmatprep.subr.bf16.mxu0 0
        %3720 = vmatpush1.bf16.msra.mxu0 %v3641
        %3721 = vmatprep.subr.bf16.mxu0 0
        %3722 = vmatpush1.bf16.msra.mxu0 %v3642
        %3723 = vmatprep.subr.bf16.mxu0 0
        %3724 = vmatpush1.bf16.msra.mxu0 %v3643
        %3725 = vmatprep.subr.bf16.mxu0 0
        %3726 = vmatpush1.bf16.msra.mxu0 %v3644
        %3727 = vmatprep.subr.bf16.mxu0 0
        %3728 = vmatpush1.bf16.msra.mxu0 %v3645
        %3729 = vmatprep.subr.bf16.mxu0 0
        %3730 = vmatpush1.bf16.msra.mxu0 %v3646
        %3731 = vmatprep.subr.bf16.mxu0 0
        %3732 = vmatpush1.bf16.msra.mxu0 %v3647
        %3733 = vmatprep.subr.bf16.mxu0 0
        %3734 = vmatpush1.bf16.msra.mxu0 %v3648
        %3735 = vmatprep.subr.bf16.mxu0 0
        %3736 = vmatpush1.bf16.msra.mxu0 %v3649
        %3737 = vmatprep.subr.bf16.mxu0 0
        %3738 = vmatpush1.bf16.msra.mxu0 %v3650
        %3739 = vmatprep.subr.bf16.mxu0 0
        %3740 = vmatpush1.bf16.msra.mxu0 %v3651
        %3741 = vmatprep.subr.bf16.mxu0 0
        %3742 = vmatpush1.bf16.msra.mxu0 %v3652
        %3743 = vmatprep.subr.bf16.mxu0 0
        %3744 = vmatpush1.bf16.msra.mxu0 %v3653
        %3745 = vmatprep.subr.bf16.mxu0 0
        %3746 = vmatpush1.bf16.msra.mxu0 %v3654
        %3747 = vmatprep.mubr.bf16.mxu0 %v3670
        %3748 = vmatmul.mubr.bf16.gmra.mrb[0].mxu0 %v3669
        %v3749 = vpop.f32.mrb[0].mxu0
        %v3750 = vadd.f32 %v3710, %v3749
        %v3751 = vpop.f32.mrb[0].mxu0
        %v3752 = vpop.f32.mrb[0].mxu0
        %v3753 = vpop.f32.mrb[0].mxu0
        %3754 = vdwg.mxu0
        %v3755 = vpack.c.bf16 %v3750, %v3750
        %v3756 = vld [vmem:[%s5] sm:$0xff]
        %v3757 = vld [vmem:[%s5 + $0x8] sm:$0xff]
        %v3758 = vld [vmem:[%s5 + $0x10] sm:$0xff]
        %v3759 = vld [vmem:[%s5 + $0x18] sm:$0xff]
        %v3760 = vld [vmem:[%s5 + $0x20] sm:$0xff]
        %v3761 = vld [vmem:[%s5 + $0x28] sm:$0xff]
        %v3762 = vld [vmem:[%s5 + $0x30] sm:$0xff]
        %v3763 = vld [vmem:[%s5 + $0x38] sm:$0xff]
        %v3764 = vld [vmem:[%s5 + $0x40] sm:$0xff]
        %v3765 = vld [vmem:[%s5 + $0x48] sm:$0xff]
        %v3766 = vld [vmem:[%s5 + $0x50] sm:$0xff]
        %v3767 = vld [vmem:[%s5 + $0x58] sm:$0xff]
        %v3768 = vld [vmem:[%s5 + $0x60] sm:$0xff]
        %v3769 = vld [vmem:[%s5 + $0x68] sm:$0xff]
        %v3770 = vld [vmem:[%s5 + $0x70] sm:$0xff]
        %v3771 = vld [vmem:[%s5 + $0x78] sm:$0xff]
        %v3772 = vld [vmem:[%s5 + $0x80] sm:$0xff]
        %v3773 = vld [vmem:[%s5 + $0x88] sm:$0xff]
        %v3774 = vld [vmem:[%s5 + $0x90] sm:$0xff]
        %v3775 = vld [vmem:[%s5 + $0x98] sm:$0xff]
        %v3776 = vld [vmem:[%s5 + $0xa0] sm:$0xff]
        %v3777 = vld [vmem:[%s5 + $0xa8] sm:$0xff]
        %v3778 = vld [vmem:[%s5 + $0xb0] sm:$0xff]
        %v3779 = vld [vmem:[%s5 + $0xb8] sm:$0xff]
        %v3780 = vld [vmem:[%s5 + $0xc0] sm:$0xff]
        %v3781 = vld [vmem:[%s5 + $0xc8] sm:$0xff]
        %v3782 = vld [vmem:[%s5 + $0xd0] sm:$0xff]
        %v3783 = vld [vmem:[%s5 + $0xd8] sm:$0xff]
        %v3784 = vld [vmem:[%s5 + $0xe0] sm:$0xff]
        %v3785 = vld [vmem:[%s5 + $0xe8] sm:$0xff]
        %v3786 = vld [vmem:[%s5 + $0xf0] sm:$0xff]
        %v3787 = vld [vmem:[%s5 + $0xf8] sm:$0xff]
        %v3788 = vld [vmem:[%s5 + $0x100] sm:$0xff]
        %v3789 = vld [vmem:[%s5 + $0x108] sm:$0xff]
        %v3790 = vld [vmem:[%s5 + $0x110] sm:$0xff]
        %v3791 = vld [vmem:[%s5 + $0x118] sm:$0xff]
        %v3792 = vld [vmem:[%s5 + $0x120] sm:$0xff]
        %v3793 = vld [vmem:[%s5 + $0x128] sm:$0xff]
        %v3794 = vld [vmem:[%s5 + $0x130] sm:$0xff]
        %v3795 = vld [vmem:[%s5 + $0x138] sm:$0xff]
        %v3796 = vld [vmem:[%s5 + $0x140] sm:$0xff]
        %v3797 = vld [vmem:[%s5 + $0x148] sm:$0xff]
        %v3798 = vld [vmem:[%s5 + $0x150] sm:$0xff]
        %v3799 = vld [vmem:[%s5 + $0x158] sm:$0xff]
        %v3800 = vld [vmem:[%s5 + $0x160] sm:$0xff]
        %v3801 = vld [vmem:[%s5 + $0x168] sm:$0xff]
        %v3802 = vld [vmem:[%s5 + $0x170] sm:$0xff]
        %v3803 = vld [vmem:[%s5 + $0x178] sm:$0xff]
        %v3804 = vld [vmem:[%s5 + $0x180] sm:$0xff]
        %v3805 = vld [vmem:[%s5 + $0x188] sm:$0xff]
        %v3806 = vld [vmem:[%s5 + $0x190] sm:$0xff]
        %v3807 = vld [vmem:[%s5 + $0x198] sm:$0xff]
        %v3808 = vld [vmem:[%s5 + $0x1a0] sm:$0xff]
        %v3809 = vld [vmem:[%s5 + $0x1a8] sm:$0xff]
        %v3810 = vld [vmem:[%s5 + $0x1b0] sm:$0xff]
        %v3811 = vld [vmem:[%s5 + $0x1b8] sm:$0xff]
        %v3812 = vld [vmem:[%s5 + $0x1c0] sm:$0xff]
        %v3813 = vld [vmem:[%s5 + $0x1c8] sm:$0xff]
        %v3814 = vld [vmem:[%s5 + $0x1d0] sm:$0xff]
        %v3815 = vld [vmem:[%s5 + $0x1d8] sm:$0xff]
        %v3816 = vld [vmem:[%s5 + $0x1e0] sm:$0xff]
        %v3817 = vld [vmem:[%s5 + $0x1e8] sm:$0xff]
        %v3818 = vld [vmem:[%s5 + $0x1f0] sm:$0xff]
        %v3819 = vld [vmem:[%s5 + $0x1f8] sm:$0xff]
        %v3820 = vld [vmem:[%s5 + $0x200] sm:$0xff]
        %v3821 = vld [vmem:[%s5 + $0x208] sm:$0xff]
        %v3822 = vld [vmem:[%s5 + $0x210] sm:$0xff]
        %v3823 = vld [vmem:[%s5 + $0x218] sm:$0xff]
        %v3824 = vld [vmem:[%s5 + $0x220] sm:$0xff]
        %v3825 = vld [vmem:[%s5 + $0x228] sm:$0xff]
        %v3826 = vld [vmem:[%s5 + $0x230] sm:$0xff]
        %v3827 = vld [vmem:[%s5 + $0x238] sm:$0xff]
        %v3828 = vld [vmem:[%s5 + $0x240] sm:$0xff]
        %v3829 = vld [vmem:[%s5 + $0x248] sm:$0xff]
        %v3830 = vld [vmem:[%s5 + $0x250] sm:$0xff]
        %v3831 = vld [vmem:[%s5 + $0x258] sm:$0xff]
        %v3832 = vld [vmem:[%s5 + $0x260] sm:$0xff]
        %v3833 = vld [vmem:[%s5 + $0x268] sm:$0xff]
        %v3834 = vld [vmem:[%s5 + $0x270] sm:$0xff]
        %v3835 = vld [vmem:[%s5 + $0x278] sm:$0xff]
        %v3836 = vld [vmem:[%s5 + $0x280] sm:$0xff]
        %v3837 = vld [vmem:[%s5 + $0x288] sm:$0xff]
        %v3838 = vld [vmem:[%s5 + $0x290] sm:$0xff]
        %v3839 = vld [vmem:[%s5 + $0x298] sm:$0xff]
        %v3840 = vld [vmem:[%s5 + $0x2a0] sm:$0xff]
        %v3841 = vld [vmem:[%s5 + $0x2a8] sm:$0xff]
        %v3842 = vld [vmem:[%s5 + $0x2b0] sm:$0xff]
        %v3843 = vld [vmem:[%s5 + $0x2b8] sm:$0xff]
        %v3844 = vld [vmem:[%s5 + $0x2c0] sm:$0xff]
        %v3845 = vld [vmem:[%s5 + $0x2c8] sm:$0xff]
        %v3846 = vld [vmem:[%s5 + $0x2d0] sm:$0xff]
        %v3847 = vld [vmem:[%s5 + $0x2d8] sm:$0xff]
        %v3848 = vld [vmem:[%s5 + $0x2e0] sm:$0xff]
        %v3849 = vld [vmem:[%s5 + $0x2e8] sm:$0xff]
        %v3850 = vld [vmem:[%s5 + $0x2f0] sm:$0xff]
        %v3851 = vld [vmem:[%s5 + $0x2f8] sm:$0xff]
        %v3852 = vld [vmem:[%s5 + $0x300] sm:$0xff]
        %v3853 = vld [vmem:[%s5 + $0x308] sm:$0xff]
        %v3854 = vld [vmem:[%s5 + $0x310] sm:$0xff]
        %v3855 = vld [vmem:[%s5 + $0x318] sm:$0xff]
        %v3856 = vld [vmem:[%s5 + $0x320] sm:$0xff]
        %v3857 = vld [vmem:[%s5 + $0x328] sm:$0xff]
        %v3858 = vld [vmem:[%s5 + $0x330] sm:$0xff]
        %v3859 = vld [vmem:[%s5 + $0x338] sm:$0xff]
        %v3860 = vld [vmem:[%s5 + $0x340] sm:$0xff]
        %v3861 = vld [vmem:[%s5 + $0x348] sm:$0xff]
        %v3862 = vld [vmem:[%s5 + $0x350] sm:$0xff]
        %v3863 = vld [vmem:[%s5 + $0x358] sm:$0xff]
        %v3864 = vld [vmem:[%s5 + $0x360] sm:$0xff]
        %v3865 = vld [vmem:[%s5 + $0x368] sm:$0xff]
        %v3866 = vld [vmem:[%s5 + $0x370] sm:$0xff]
        %v3867 = vld [vmem:[%s5 + $0x378] sm:$0xff]
        %v3868 = vld [vmem:[%s5 + $0x380] sm:$0xff]
        %v3869 = vld [vmem:[%s5 + $0x388] sm:$0xff]
        %v3870 = vld [vmem:[%s5 + $0x390] sm:$0xff]
        %v3871 = vld [vmem:[%s5 + $0x398] sm:$0xff]
        %v3872 = vld [vmem:[%s5 + $0x3a0] sm:$0xff]
        %v3873 = vld [vmem:[%s5 + $0x3a8] sm:$0xff]
        %v3874 = vld [vmem:[%s5 + $0x3b0] sm:$0xff]
        %v3875 = vld [vmem:[%s5 + $0x3b8] sm:$0xff]
        %v3876 = vld [vmem:[%s5 + $0x3c0] sm:$0xff]
        %v3877 = vld [vmem:[%s5 + $0x3c8] sm:$0xff]
        %v3878 = vld [vmem:[%s5 + $0x3d0] sm:$0xff]
        %v3879 = vld [vmem:[%s5 + $0x3d8] sm:$0xff]
        %v3880 = vld [vmem:[%s5 + $0x3e0] sm:$0xff]
        %v3881 = vld [vmem:[%s5 + $0x3e8] sm:$0xff]
        %v3882 = vld [vmem:[%s5 + $0x3f0] sm:$0xff]
        %v3883 = vld [vmem:[%s5 + $0x3f8] sm:$0xff]
        %v4012 = vunpack.c.l.b16 %v3756
        %v4013 = vunpack.c.h.b16 %v3756
        %v4014 = vunpack.c.l.b16 %v3757
        %v4015 = vunpack.c.h.b16 %v3757
        %v4016 = vunpack.c.l.b16 %v3758
        %v4017 = vunpack.c.h.b16 %v3758
        %v4018 = vunpack.c.l.b16 %v3759
        %v4019 = vunpack.c.h.b16 %v3759
        %v4020 = vunpack.c.l.b16 %v3760
        %v4021 = vunpack.c.h.b16 %v3760
        %v4022 = vunpack.c.l.b16 %v3761
        %v4023 = vunpack.c.h.b16 %v3761
        %v4024 = vunpack.c.l.b16 %v3762
        %v4025 = vunpack.c.h.b16 %v3762
        %v4026 = vunpack.c.l.b16 %v3763
        %v4027 = vunpack.c.h.b16 %v3763
        %v4028 = vunpack.c.l.b16 %v3764
        %v4029 = vunpack.c.h.b16 %v3764
        %v4030 = vunpack.c.l.b16 %v3765
        %v4031 = vunpack.c.h.b16 %v3765
        %v4032 = vunpack.c.l.b16 %v3766
        %v4033 = vunpack.c.h.b16 %v3766
        %v4034 = vunpack.c.l.b16 %v3767
        %v4035 = vunpack.c.h.b16 %v3767
        %v4036 = vunpack.c.l.b16 %v3768
        %v4037 = vunpack.c.h.b16 %v3768
        %v4038 = vunpack.c.l.b16 %v3769
        %v4039 = vunpack.c.h.b16 %v3769
        %v4040 = vunpack.c.l.b16 %v3770
        %v4041 = vunpack.c.h.b16 %v3770
        %v4042 = vunpack.c.l.b16 %v3771
        %v4043 = vunpack.c.h.b16 %v3771
        %v4044 = vunpack.c.l.b16 %v3772
        %v4045 = vunpack.c.h.b16 %v3772
        %v4046 = vunpack.c.l.b16 %v3773
        %v4047 = vunpack.c.h.b16 %v3773
        %v4048 = vunpack.c.l.b16 %v3774
        %v4049 = vunpack.c.h.b16 %v3774
        %v4050 = vunpack.c.l.b16 %v3775
        %v4051 = vunpack.c.h.b16 %v3775
        %v4052 = vunpack.c.l.b16 %v3776
        %v4053 = vunpack.c.h.b16 %v3776
        %v4054 = vunpack.c.l.b16 %v3777
        %v4055 = vunpack.c.h.b16 %v3777
        %v4056 = vunpack.c.l.b16 %v3778
        %v4057 = vunpack.c.h.b16 %v3778
        %v4058 = vunpack.c.l.b16 %v3779
        %v4059 = vunpack.c.h.b16 %v3779
        %v4060 = vunpack.c.l.b16 %v3780
        %v4061 = vunpack.c.h.b16 %v3780
        %v4062 = vunpack.c.l.b16 %v3781
        %v4063 = vunpack.c.h.b16 %v3781
        %v4064 = vunpack.c.l.b16 %v3782
        %v4065 = vunpack.c.h.b16 %v3782
        %v4066 = vunpack.c.l.b16 %v3783
        %v4067 = vunpack.c.h.b16 %v3783
        %v4068 = vunpack.c.l.b16 %v3784
        %v4069 = vunpack.c.h.b16 %v3784
        %v4070 = vunpack.c.l.b16 %v3785
        %v4071 = vunpack.c.h.b16 %v3785
        %v4072 = vunpack.c.l.b16 %v3786
        %v4073 = vunpack.c.h.b16 %v3786
        %v4074 = vunpack.c.l.b16 %v3787
        %v4075 = vunpack.c.h.b16 %v3787
        %v4076 = vunpack.c.l.b16 %v3788
        %v4077 = vunpack.c.h.b16 %v3788
        %v4078 = vunpack.c.l.b16 %v3789
        %v4079 = vunpack.c.h.b16 %v3789
        %v4080 = vunpack.c.l.b16 %v3790
        %v4081 = vunpack.c.h.b16 %v3790
        %v4082 = vunpack.c.l.b16 %v3791
        %v4083 = vunpack.c.h.b16 %v3791
        %v4084 = vunpack.c.l.b16 %v3792
        %v4085 = vunpack.c.h.b16 %v3792
        %v4086 = vunpack.c.l.b16 %v3793
        %v4087 = vunpack.c.h.b16 %v3793
        %v4088 = vunpack.c.l.b16 %v3794
        %v4089 = vunpack.c.h.b16 %v3794
        %v4090 = vunpack.c.l.b16 %v3795
        %v4091 = vunpack.c.h.b16 %v3795
        %v4092 = vunpack.c.l.b16 %v3796
        %v4093 = vunpack.c.h.b16 %v3796
        %v4094 = vunpack.c.l.b16 %v3797
        %v4095 = vunpack.c.h.b16 %v3797
        %v4096 = vunpack.c.l.b16 %v3798
        %v4097 = vunpack.c.h.b16 %v3798
        %v4098 = vunpack.c.l.b16 %v3799
        %v4099 = vunpack.c.h.b16 %v3799
        %v4100 = vunpack.c.l.b16 %v3800
        %v4101 = vunpack.c.h.b16 %v3800
        %v4102 = vunpack.c.l.b16 %v3801
        %v4103 = vunpack.c.h.b16 %v3801
        %v4104 = vunpack.c.l.b16 %v3802
        %v4105 = vunpack.c.h.b16 %v3802
        %v4106 = vunpack.c.l.b16 %v3803
        %v4107 = vunpack.c.h.b16 %v3803
        %v4108 = vunpack.c.l.b16 %v3804
        %v4109 = vunpack.c.h.b16 %v3804
        %v4110 = vunpack.c.l.b16 %v3805
        %v4111 = vunpack.c.h.b16 %v3805
        %v4112 = vunpack.c.l.b16 %v3806
        %v4113 = vunpack.c.h.b16 %v3806
        %v4114 = vunpack.c.l.b16 %v3807
        %v4115 = vunpack.c.h.b16 %v3807
        %v4116 = vunpack.c.l.b16 %v3808
        %v4117 = vunpack.c.h.b16 %v3808
        %v4118 = vunpack.c.l.b16 %v3809
        %v4119 = vunpack.c.h.b16 %v3809
        %v4120 = vunpack.c.l.b16 %v3810
        %v4121 = vunpack.c.h.b16 %v3810
        %v4122 = vunpack.c.l.b16 %v3811
        %v4123 = vunpack.c.h.b16 %v3811
        %v4124 = vunpack.c.l.b16 %v3812
        %v4125 = vunpack.c.h.b16 %v3812
        %v4126 = vunpack.c.l.b16 %v3813
        %v4127 = vunpack.c.h.b16 %v3813
        %v4128 = vunpack.c.l.b16 %v3814
        %v4129 = vunpack.c.h.b16 %v3814
        %v4130 = vunpack.c.l.b16 %v3815
        %v4131 = vunpack.c.h.b16 %v3815
        %v4132 = vunpack.c.l.b16 %v3816
        %v4133 = vunpack.c.h.b16 %v3816
        %v4134 = vunpack.c.l.b16 %v3817
        %v4135 = vunpack.c.h.b16 %v3817
        %v4136 = vunpack.c.l.b16 %v3818
        %v4137 = vunpack.c.h.b16 %v3818
        %v4138 = vunpack.c.l.b16 %v3819
        %v4139 = vunpack.c.h.b16 %v3819
        %v4140 = vunpack.c.l.b16 %v3820
        %v4141 = vunpack.c.h.b16 %v3820
        %v4142 = vunpack.c.l.b16 %v3821
        %v4143 = vunpack.c.h.b16 %v3821
        %v4144 = vunpack.c.l.b16 %v3822
        %v4145 = vunpack.c.h.b16 %v3822
        %v4146 = vunpack.c.l.b16 %v3823
        %v4147 = vunpack.c.h.b16 %v3823
        %v4148 = vunpack.c.l.b16 %v3824
        %v4149 = vunpack.c.h.b16 %v3824
        %v4150 = vunpack.c.l.b16 %v3825
        %v4151 = vunpack.c.h.b16 %v3825
        %v4152 = vunpack.c.l.b16 %v3826
        %v4153 = vunpack.c.h.b16 %v3826
        %v4154 = vunpack.c.l.b16 %v3827
        %v4155 = vunpack.c.h.b16 %v3827
        %v4156 = vunpack.c.l.b16 %v3828
        %v4157 = vunpack.c.h.b16 %v3828
        %v4158 = vunpack.c.l.b16 %v3829
        %v4159 = vunpack.c.h.b16 %v3829
        %v4160 = vunpack.c.l.b16 %v3830
        %v4161 = vunpack.c.h.b16 %v3830
        %v4162 = vunpack.c.l.b16 %v3831
        %v4163 = vunpack.c.h.b16 %v3831
        %v4164 = vunpack.c.l.b16 %v3832
        %v4165 = vunpack.c.h.b16 %v3832
        %v4166 = vunpack.c.l.b16 %v3833
        %v4167 = vunpack.c.h.b16 %v3833
        %v4168 = vunpack.c.l.b16 %v3834
        %v4169 = vunpack.c.h.b16 %v3834
        %v4170 = vunpack.c.l.b16 %v3835
        %v4171 = vunpack.c.h.b16 %v3835
        %v4172 = vunpack.c.l.b16 %v3836
        %v4173 = vunpack.c.h.b16 %v3836
        %v4174 = vunpack.c.l.b16 %v3837
        %v4175 = vunpack.c.h.b16 %v3837
        %v4176 = vunpack.c.l.b16 %v3838
        %v4177 = vunpack.c.h.b16 %v3838
        %v4178 = vunpack.c.l.b16 %v3839
        %v4179 = vunpack.c.h.b16 %v3839
        %v4180 = vunpack.c.l.b16 %v3840
        %v4181 = vunpack.c.h.b16 %v3840
        %v4182 = vunpack.c.l.b16 %v3841
        %v4183 = vunpack.c.h.b16 %v3841
        %v4184 = vunpack.c.l.b16 %v3842
        %v4185 = vunpack.c.h.b16 %v3842
        %v4186 = vunpack.c.l.b16 %v3843
        %v4187 = vunpack.c.h.b16 %v3843
        %v4188 = vunpack.c.l.b16 %v3844
        %v4189 = vunpack.c.h.b16 %v3844
        %v4190 = vunpack.c.l.b16 %v3845
        %v4191 = vunpack.c.h.b16 %v3845
        %v4192 = vunpack.c.l.b16 %v3846
        %v4193 = vunpack.c.h.b16 %v3846
        %v4194 = vunpack.c.l.b16 %v3847
        %v4195 = vunpack.c.h.b16 %v3847
        %v4196 = vunpack.c.l.b16 %v3848
        %v4197 = vunpack.c.h.b16 %v3848
        %v4198 = vunpack.c.l.b16 %v3849
        %v4199 = vunpack.c.h.b16 %v3849
        %v4200 = vunpack.c.l.b16 %v3850
        %v4201 = vunpack.c.h.b16 %v3850
        %v4202 = vunpack.c.l.b16 %v3851
        %v4203 = vunpack.c.h.b16 %v3851
        %v4204 = vunpack.c.l.b16 %v3852
        %v4205 = vunpack.c.h.b16 %v3852
        %v4206 = vunpack.c.l.b16 %v3853
        %v4207 = vunpack.c.h.b16 %v3853
        %v4208 = vunpack.c.l.b16 %v3854
        %v4209 = vunpack.c.h.b16 %v3854
        %v4210 = vunpack.c.l.b16 %v3855
        %v4211 = vunpack.c.h.b16 %v3855
        %v4212 = vunpack.c.l.b16 %v3856
        %v4213 = vunpack.c.h.b16 %v3856
        %v4214 = vunpack.c.l.b16 %v3857
        %v4215 = vunpack.c.h.b16 %v3857
        %v4216 = vunpack.c.l.b16 %v3858
        %v4217 = vunpack.c.h.b16 %v3858
        %v4218 = vunpack.c.l.b16 %v3859
        %v4219 = vunpack.c.h.b16 %v3859
        %v4220 = vunpack.c.l.b16 %v3860
        %v4221 = vunpack.c.h.b16 %v3860
        %v4222 = vunpack.c.l.b16 %v3861
        %v4223 = vunpack.c.h.b16 %v3861
        %v4224 = vunpack.c.l.b16 %v3862
        %v4225 = vunpack.c.h.b16 %v3862
        %v4226 = vunpack.c.l.b16 %v3863
        %v4227 = vunpack.c.h.b16 %v3863
        %v4228 = vunpack.c.l.b16 %v3864
        %v4229 = vunpack.c.h.b16 %v3864
        %v4230 = vunpack.c.l.b16 %v3865
        %v4231 = vunpack.c.h.b16 %v3865
        %v4232 = vunpack.c.l.b16 %v3866
        %v4233 = vunpack.c.h.b16 %v3866
        %v4234 = vunpack.c.l.b16 %v3867
        %v4235 = vunpack.c.h.b16 %v3867
        %v4236 = vunpack.c.l.b16 %v3868
        %v4237 = vunpack.c.h.b16 %v3868
        %v4238 = vunpack.c.l.b16 %v3869
        %v4239 = vunpack.c.h.b16 %v3869
        %v4240 = vunpack.c.l.b16 %v3870
        %v4241 = vunpack.c.h.b16 %v3870
        %v4242 = vunpack.c.l.b16 %v3871
        %v4243 = vunpack.c.h.b16 %v3871
        %v4244 = vunpack.c.l.b16 %v3872
        %v4245 = vunpack.c.h.b16 %v3872
        %v4246 = vunpack.c.l.b16 %v3873
        %v4247 = vunpack.c.h.b16 %v3873
        %v4248 = vunpack.c.l.b16 %v3874
        %v4249 = vunpack.c.h.b16 %v3874
        %v4250 = vunpack.c.l.b16 %v3875
        %v4251 = vunpack.c.h.b16 %v3875
        %v4252 = vunpack.c.l.b16 %v3876
        %v4253 = vunpack.c.h.b16 %v3876
        %v4254 = vunpack.c.l.b16 %v3877
        %v4255 = vunpack.c.h.b16 %v3877
        %v4256 = vunpack.c.l.b16 %v3878
        %v4257 = vunpack.c.h.b16 %v3878
        %v4258 = vunpack.c.l.b16 %v3879
        %v4259 = vunpack.c.h.b16 %v3879
        %v4260 = vunpack.c.l.b16 %v3880
        %v4261 = vunpack.c.h.b16 %v3880
        %v4262 = vunpack.c.l.b16 %v3881
        %v4263 = vunpack.c.h.b16 %v3881
        %v4264 = vunpack.c.l.b16 %v3882
        %v4265 = vunpack.c.h.b16 %v3882
        %v4266 = vunpack.c.l.b16 %v3883
        %v4267 = vunpack.c.h.b16 %v3883
        %v4268 = vpack.c.b16 %v4028, %v4012
        %v4269 = vpack.c.b16 %v4029, %v4013
        %v4270 = vpack.c.b16 %v4030, %v4014
        %v4271 = vpack.c.b16 %v4031, %v4015
        %v4272 = vpack.c.b16 %v4032, %v4016
        %v4273 = vpack.c.b16 %v4033, %v4017
        %v4274 = vpack.c.b16 %v4034, %v4018
        %v4275 = vpack.c.b16 %v4035, %v4019
        %v4276 = vpack.c.b16 %v4036, %v4020
        %v4277 = vpack.c.b16 %v4037, %v4021
        %v4278 = vpack.c.b16 %v4038, %v4022
        %v4279 = vpack.c.b16 %v4039, %v4023
        %v4280 = vpack.c.b16 %v4040, %v4024
        %v4281 = vpack.c.b16 %v4041, %v4025
        %v4282 = vpack.c.b16 %v4042, %v4026
        %v4283 = vpack.c.b16 %v4043, %v4027
        %v4284 = vpack.c.b16 %v4060, %v4044
        %v4285 = vpack.c.b16 %v4061, %v4045
        %v4286 = vpack.c.b16 %v4062, %v4046
        %v4287 = vpack.c.b16 %v4063, %v4047
        %v4288 = vpack.c.b16 %v4064, %v4048
        %v4289 = vpack.c.b16 %v4065, %v4049
        %v4290 = vpack.c.b16 %v4066, %v4050
        %v4291 = vpack.c.b16 %v4067, %v4051
        %v4292 = vpack.c.b16 %v4068, %v4052
        %v4293 = vpack.c.b16 %v4069, %v4053
        %v4294 = vpack.c.b16 %v4070, %v4054
        %v4295 = vpack.c.b16 %v4071, %v4055
        %v4296 = vpack.c.b16 %v4072, %v4056
        %v4297 = vpack.c.b16 %v4073, %v4057
        %v4298 = vpack.c.b16 %v4074, %v4058
        %v4299 = vpack.c.b16 %v4075, %v4059
        %v4300 = vpack.c.b16 %v4092, %v4076
        %v4301 = vpack.c.b16 %v4093, %v4077
        %v4302 = vpack.c.b16 %v4094, %v4078
        %v4303 = vpack.c.b16 %v4095, %v4079
        %v4304 = vpack.c.b16 %v4096, %v4080
        %v4305 = vpack.c.b16 %v4097, %v4081
        %v4306 = vpack.c.b16 %v4098, %v4082
        %v4307 = vpack.c.b16 %v4099, %v4083
        %v4308 = vpack.c.b16 %v4100, %v4084
        %v4309 = vpack.c.b16 %v4101, %v4085
        %v4310 = vpack.c.b16 %v4102, %v4086
        %v4311 = vpack.c.b16 %v4103, %v4087
        %v4312 = vpack.c.b16 %v4104, %v4088
        %v4313 = vpack.c.b16 %v4105, %v4089
        %v4314 = vpack.c.b16 %v4106, %v4090
        %v4315 = vpack.c.b16 %v4107, %v4091
        %v4316 = vpack.c.b16 %v4124, %v4108
        %v4317 = vpack.c.b16 %v4125, %v4109
        %v4318 = vpack.c.b16 %v4126, %v4110
        %v4319 = vpack.c.b16 %v4127, %v4111
        %v4320 = vpack.c.b16 %v4128, %v4112
        %v4321 = vpack.c.b16 %v4129, %v4113
        %v4322 = vpack.c.b16 %v4130, %v4114
        %v4323 = vpack.c.b16 %v4131, %v4115
        %v4324 = vpack.c.b16 %v4132, %v4116
        %v4325 = vpack.c.b16 %v4133, %v4117
        %v4326 = vpack.c.b16 %v4134, %v4118
        %v4327 = vpack.c.b16 %v4135, %v4119
        %v4328 = vpack.c.b16 %v4136, %v4120
        %v4329 = vpack.c.b16 %v4137, %v4121
        %v4330 = vpack.c.b16 %v4138, %v4122
        %v4331 = vpack.c.b16 %v4139, %v4123
        %v4332 = vpack.c.b16 %v4156, %v4140
        %v4333 = vpack.c.b16 %v4157, %v4141
        %v4334 = vpack.c.b16 %v4158, %v4142
        %v4335 = vpack.c.b16 %v4159, %v4143
        %v4336 = vpack.c.b16 %v4160, %v4144
        %v4337 = vpack.c.b16 %v4161, %v4145
        %v4338 = vpack.c.b16 %v4162, %v4146
        %v4339 = vpack.c.b16 %v4163, %v4147
        %v4340 = vpack.c.b16 %v4164, %v4148
        %v4341 = vpack.c.b16 %v4165, %v4149
        %v4342 = vpack.c.b16 %v4166, %v4150
        %v4343 = vpack.c.b16 %v4167, %v4151
        %v4344 = vpack.c.b16 %v4168, %v4152
        %v4345 = vpack.c.b16 %v4169, %v4153
        %v4346 = vpack.c.b16 %v4170, %v4154
        %v4347 = vpack.c.b16 %v4171, %v4155
        %v4348 = vpack.c.b16 %v4188, %v4172
        %v4349 = vpack.c.b16 %v4189, %v4173
        %v4350 = vpack.c.b16 %v4190, %v4174
        %v4351 = vpack.c.b16 %v4191, %v4175
        %v4352 = vpack.c.b16 %v4192, %v4176
        %v4353 = vpack.c.b16 %v4193, %v4177
        %v4354 = vpack.c.b16 %v4194, %v4178
        %v4355 = vpack.c.b16 %v4195, %v4179
        %v4356 = vpack.c.b16 %v4196, %v4180
        %v4357 = vpack.c.b16 %v4197, %v4181
        %v4358 = vpack.c.b16 %v4198, %v4182
        %v4359 = vpack.c.b16 %v4199, %v4183
        %v4360 = vpack.c.b16 %v4200, %v4184
        %v4361 = vpack.c.b16 %v4201, %v4185
        %v4362 = vpack.c.b16 %v4202, %v4186
        %v4363 = vpack.c.b16 %v4203, %v4187
        %v4364 = vpack.c.b16 %v4220, %v4204
        %v4365 = vpack.c.b16 %v4221, %v4205
        %v4366 = vpack.c.b16 %v4222, %v4206
        %v4367 = vpack.c.b16 %v4223, %v4207
        %v4368 = vpack.c.b16 %v4224, %v4208
        %v4369 = vpack.c.b16 %v4225, %v4209
        %v4370 = vpack.c.b16 %v4226, %v4210
        %v4371 = vpack.c.b16 %v4227, %v4211
        %v4372 = vpack.c.b16 %v4228, %v4212
        %v4373 = vpack.c.b16 %v4229, %v4213
        %v4374 = vpack.c.b16 %v4230, %v4214
        %v4375 = vpack.c.b16 %v4231, %v4215
        %v4376 = vpack.c.b16 %v4232, %v4216
        %v4377 = vpack.c.b16 %v4233, %v4217
        %v4378 = vpack.c.b16 %v4234, %v4218
        %v4379 = vpack.c.b16 %v4235, %v4219
        %v4380 = vpack.c.b16 %v4252, %v4236
        %v4381 = vpack.c.b16 %v4253, %v4237
        %v4382 = vpack.c.b16 %v4254, %v4238
        %v4383 = vpack.c.b16 %v4255, %v4239
        %v4384 = vpack.c.b16 %v4256, %v4240
        %v4385 = vpack.c.b16 %v4257, %v4241
        %v4386 = vpack.c.b16 %v4258, %v4242
        %v4387 = vpack.c.b16 %v4259, %v4243
        %v4388 = vpack.c.b16 %v4260, %v4244
        %v4389 = vpack.c.b16 %v4261, %v4245
        %v4390 = vpack.c.b16 %v4262, %v4246
        %v4391 = vpack.c.b16 %v4263, %v4247
        %v4392 = vpack.c.b16 %v4264, %v4248
        %v4393 = vpack.c.b16 %v4265, %v4249
        %v4394 = vpack.c.b16 %v4266, %v4250
        %v4395 = vpack.c.b16 %v4267, %v4251
        %4524 = vmatprep.subr.bf16.mxu0 %v4269
        %4525 = vmatpush1.bf16.msra.mxu0 %v4268
        %4526 = vmatprep.subr.bf16.mxu0 %v4285
        %4527 = vmatpush1.bf16.msra.mxu0 %v4284
        %4528 = vmatprep.subr.bf16.mxu0 %v4301
        %4529 = vmatpush1.bf16.msra.mxu0 %v4300
        %4530 = vmatprep.subr.bf16.mxu0 %v4317
        %4531 = vmatpush1.bf16.msra.mxu0 %v4316
        %4532 = vmatprep.subr.bf16.mxu0 %v4333
        %4533 = vmatpush1.bf16.msra.mxu0 %v4332
        %4534 = vmatprep.subr.bf16.mxu0 %v4349
        %4535 = vmatpush1.bf16.msra.mxu0 %v4348
        %4536 = vmatprep.subr.bf16.mxu0 %v4365
        %4537 = vmatpush1.bf16.msra.mxu0 %v4364
        %4538 = vmatprep.subr.bf16.mxu0 %v4381
        %4539 = vmatpush1.bf16.msra.mxu0 %v4380
        %4540 = vmatprep.subr.bf16.mxu0 0
        %4541 = vmatpush1.bf16.msra.mxu0 0
        %4542 = vmatprep.subr.bf16.mxu0 0
        %4543 = vmatpush1.bf16.msra.mxu0 0
        %4544 = vmatprep.subr.bf16.mxu0 0
        %4545 = vmatpush1.bf16.msra.mxu0 0
        %4546 = vmatprep.subr.bf16.mxu0 0
        %4547 = vmatpush1.bf16.msra.mxu0 0
        %4548 = vmatprep.subr.bf16.mxu0 0
        %4549 = vmatpush1.bf16.msra.mxu0 0
        %4550 = vmatprep.subr.bf16.mxu0 0
        %4551 = vmatpush1.bf16.msra.mxu0 0
        %4552 = vmatprep.subr.bf16.mxu0 0
        %4553 = vmatpush1.bf16.msra.mxu0 0
        %4554 = vmatprep.subr.bf16.mxu0 0
        %4555 = vmatpush1.bf16.msra.mxu0 0
        %4556 = vmatprep.mubr.bf16.mxu0 0
        %4557 = vmatmul.mubr.bf16.gmra.mrb[0].mxu0 %v3755
        %v4558 = vpop.f32.mrb[0].mxu0
        %v4559 = vadd.f32 0.0, %v4558
        %v4560 = vpop.f32.mrb[0].mxu0
        %v4561 = vadd.f32 0.0, %v4560
        %v4562 = vpop.f32.mrb[0].mxu0
        %v4563 = vpop.f32.mrb[0].mxu0
        %4564 = vdwg.mxu0
        %4565 = vmatprep.subr.bf16.mxu0 %v4271
        %4566 = vmatpush1.bf16.msra.mxu0 %v4270
        %4567 = vmatprep.subr.bf16.mxu0 %v4287
        %4568 = vmatpush1.bf16.msra.mxu0 %v4286
        %4569 = vmatprep.subr.bf16.mxu0 %v4303
        %4570 = vmatpush1.bf16.msra.mxu0 %v4302
        %4571 = vmatprep.subr.bf16.mxu0 %v4319
        %4572 = vmatpush1.bf16.msra.mxu0 %v4318
        %4573 = vmatprep.subr.bf16.mxu0 %v4335
        %4574 = vmatpush1.bf16.msra.mxu0 %v4334
        %4575 = vmatprep.subr.bf16.mxu0 %v4351
        %4576 = vmatpush1.bf16.msra.mxu0 %v4350
        %4577 = vmatprep.subr.bf16.mxu0 %v4367
        %4578 = vmatpush1.bf16.msra.mxu0 %v4366
        %4579 = vmatprep.subr.bf16.mxu0 %v4383
        %4580 = vmatpush1.bf16.msra.mxu0 %v4382
        %4581 = vmatprep.subr.bf16.mxu0 0
        %4582 = vmatpush1.bf16.msra.mxu0 0
        %4583 = vmatprep.subr.bf16.mxu0 0
        %4584 = vmatpush1.bf16.msra.mxu0 0
        %4585 = vmatprep.subr.bf16.mxu0 0
        %4586 = vmatpush1.bf16.msra.mxu0 0
        %4587 = vmatprep.subr.bf16.mxu0 0
        %4588 = vmatpush1.bf16.msra.mxu0 0
        %4589 = vmatprep.subr.bf16.mxu0 0
        %4590 = vmatpush1.bf16.msra.mxu0 0
        %4591 = vmatprep.subr.bf16.mxu0 0
        %4592 = vmatpush1.bf16.msra.mxu0 0
        %4593 = vmatprep.subr.bf16.mxu0 0
        %4594 = vmatpush1.bf16.msra.mxu0 0
        %4595 = vmatprep.subr.bf16.mxu0 0
        %4596 = vmatpush1.bf16.msra.mxu0 0
        %4597 = vmatprep.mubr.bf16.mxu0 0
        %4598 = vmatmul.mubr.bf16.gmra.mrb[0].mxu0 %v3755
        %v4599 = vpop.f32.mrb[0].mxu0
        %v4600 = vadd.f32 0.0, %v4599
        %v4601 = vpop.f32.mrb[0].mxu0
        %v4602 = vadd.f32 0.0, %v4601
        %v4603 = vpop.f32.mrb[0].mxu0
        %v4604 = vpop.f32.mrb[0].mxu0
        %4605 = vdwg.mxu0
        %4606 = vmatprep.subr.bf16.mxu0 %v4273
        %4607 = vmatpush1.bf16.msra.mxu0 %v4272
        %4608 = vmatprep.subr.bf16.mxu0 %v4289
        %4609 = vmatpush1.bf16.msra.mxu0 %v4288
        %4610 = vmatprep.subr.bf16.mxu0 %v4305
        %4611 = vmatpush1.bf16.msra.mxu0 %v4304
        %4612 = vmatprep.subr.bf16.mxu0 %v4321
        %4613 = vmatpush1.bf16.msra.mxu0 %v4320
        %4614 = vmatprep.subr.bf16.mxu0 %v4337
        %4615 = vmatpush1.bf16.msra.mxu0 %v4336
        %4616 = vmatprep.subr.bf16.mxu0 %v4353
        %4617 = vmatpush1.bf16.msra.mxu0 %v4352
        %4618 = vmatprep.subr.bf16.mxu0 %v4369
        %4619 = vmatpush1.bf16.msra.mxu0 %v4368
        %4620 = vmatprep.subr.bf16.mxu0 %v4385
        %4621 = vmatpush1.bf16.msra.mxu0 %v4384
        %4622 = vmatprep.subr.bf16.mxu0 0
        %4623 = vmatpush1.bf16.msra.mxu0 0
        %4624 = vmatprep.subr.bf16.mxu0 0
        %4625 = vmatpush1.bf16.msra.mxu0 0
        %4626 = vmatprep.subr.bf16.mxu0 0
        %4627 = vmatpush1.bf16.msra.mxu0 0
        %4628 = vmatprep.subr.bf16.mxu0 0
        %4629 = vmatpush1.bf16.msra.mxu0 0
        %4630 = vmatprep.subr.bf16.mxu0 0
        %4631 = vmatpush1.bf16.msra.mxu0 0
        %4632 = vmatprep.subr.bf16.mxu0 0
        %4633 = vmatpush1.bf16.msra.mxu0 0
        %4634 = vmatprep.subr.bf16.mxu0 0
        %4635 = vmatpush1.bf16.msra.mxu0 0
        %4636 = vmatprep.subr.bf16.mxu0 0
        %4637 = vmatpush1.bf16.msra.mxu0 0
        %4638 = vmatprep.mubr.bf16.mxu0 0
        %4639 = vmatmul.mubr.bf16.gmra.mrb[0].mxu0 %v3755
        %v4640 = vpop.f32.mrb[0].mxu0
        %v4641 = vadd.f32 0.0, %v4640
        %v4642 = vpop.f32.mrb[0].mxu0
        %v4643 = vadd.f32 0.0, %v4642
        %v4644 = vpop.f32.mrb[0].mxu0
        %v4645 = vpop.f32.mrb[0].mxu0
        %4646 = vdwg.mxu0
        %4647 = vmatprep.subr.bf16.mxu0 %v4275
        %4648 = vmatpush1.bf16.msra.mxu0 %v4274
        %4649 = vmatprep.subr.bf16.mxu0 %v4291
        %4650 = vmatpush1.bf16.msra.mxu0 %v4290
        %4651 = vmatprep.subr.bf16.mxu0 %v4307
        %4652 = vmatpush1.bf16.msra.mxu0 %v4306
        %4653 = vmatprep.subr.bf16.mxu0 %v4323
        %4654 = vmatpush1.bf16.msra.mxu0 %v4322
        %4655 = vmatprep.subr.bf16.mxu0 %v4339
        %4656 = vmatpush1.bf16.msra.mxu0 %v4338
        %4657 = vmatprep.subr.bf16.mxu0 %v4355
        %4658 = vmatpush1.bf16.msra.mxu0 %v4354
        %4659 = vmatprep.subr.bf16.mxu0 %v4371
        %4660 = vmatpush1.bf16.msra.mxu0 %v4370
        %4661 = vmatprep.subr.bf16.mxu0 %v4387
        %4662 = vmatpush1.bf16.msra.mxu0 %v4386
        %4663 = vmatprep.subr.bf16.mxu0 0
        %4664 = vmatpush1.bf16.msra.mxu0 0
        %4665 = vmatprep.subr.bf16.mxu0 0
        %4666 = vmatpush1.bf16.msra.mxu0 0
        %4667 = vmatprep.subr.bf16.mxu0 0
        %4668 = vmatpush1.bf16.msra.mxu0 0
        %4669 = vmatprep.subr.bf16.mxu0 0
        %4670 = vmatpush1.bf16.msra.mxu0 0
        %4671 = vmatprep.subr.bf16.mxu0 0
        %4672 = vmatpush1.bf16.msra.mxu0 0
        %4673 = vmatprep.subr.bf16.mxu0 0
        %4674 = vmatpush1.bf16.msra.mxu0 0
        %4675 = vmatprep.subr.bf16.mxu0 0
        %4676 = vmatpush1.bf16.msra.mxu0 0
        %4677 = vmatprep.subr.bf16.mxu0 0
        %4678 = vmatpush1.bf16.msra.mxu0 0
        %4679 = vmatprep.mubr.bf16.mxu0 0
        %4680 = vmatmul.mubr.bf16.gmra.mrb[0].mxu0 %v3755
        %v4681 = vpop.f32.mrb[0].mxu0
        %v4682 = vadd.f32 0.0, %v4681
        %v4683 = vpop.f32.mrb[0].mxu0
        %v4684 = vadd.f32 0.0, %v4683
        %v4685 = vpop.f32.mrb[0].mxu0
        %v4686 = vpop.f32.mrb[0].mxu0
        %4687 = vdwg.mxu0
        %4688 = vmatprep.subr.bf16.mxu0 %v4277
        %4689 = vmatpush1.bf16.msra.mxu0 %v4276
        %4690 = vmatprep.subr.bf16.mxu0 %v4293
        %4691 = vmatpush1.bf16.msra.mxu0 %v4292
        %4692 = vmatprep.subr.bf16.mxu0 %v4309
        %4693 = vmatpush1.bf16.msra.mxu0 %v4308
        %4694 = vmatprep.subr.bf16.mxu0 %v4325
        %4695 = vmatpush1.bf16.msra.mxu0 %v4324
        %4696 = vmatprep.subr.bf16.mxu0 %v4341
        %4697 = vmatpush1.bf16.msra.mxu0 %v4340
        %4698 = vmatprep.subr.bf16.mxu0 %v4357
        %4699 = vmatpush1.bf16.msra.mxu0 %v4356
        %4700 = vmatprep.subr.bf16.mxu0 %v4373
        %4701 = vmatpush1.bf16.msra.mxu0 %v4372
        %4702 = vmatprep.subr.bf16.mxu0 %v4389
        %4703 = vmatpush1.bf16.msra.mxu0 %v4388
        %4704 = vmatprep.subr.bf16.mxu0 0
        %4705 = vmatpush1.bf16.msra.mxu0 0
        %4706 = vmatprep.subr.bf16.mxu0 0
        %4707 = vmatpush1.bf16.msra.mxu0 0
        %4708 = vmatprep.subr.bf16.mxu0 0
        %4709 = vmatpush1.bf16.msra.mxu0 0
        %4710 = vmatprep.subr.bf16.mxu0 0
        %4711 = vmatpush1.bf16.msra.mxu0 0
        %4712 = vmatprep.subr.bf16.mxu0 0
        %4713 = vmatpush1.bf16.msra.mxu0 0
        %4714 = vmatprep.subr.bf16.mxu0 0
        %4715 = vmatpush1.bf16.msra.mxu0 0
        %4716 = vmatprep.subr.bf16.mxu0 0
        %4717 = vmatpush1.bf16.msra.mxu0 0
        %4718 = vmatprep.subr.bf16.mxu0 0
        %4719 = vmatpush1.bf16.msra.mxu0 0
        %4720 = vmatprep.mubr.bf16.mxu0 0
        %4721 = vmatmul.mubr.bf16.gmra.mrb[0].mxu0 %v3755
        %v4722 = vpop.f32.mrb[0].mxu0
        %v4723 = vadd.f32 0.0, %v4722
        %v4724 = vpop.f32.mrb[0].mxu0
        %v4725 = vadd.f32 0.0, %v4724
        %v4726 = vpop.f32.mrb[0].mxu0
        %v4727 = vpop.f32.mrb[0].mxu0
        %4728 = vdwg.mxu0
        %4729 = vmatprep.subr.bf16.mxu0 %v4279
        %4730 = vmatpush1.bf16.msra.mxu0 %v4278
        %4731 = vmatprep.subr.bf16.mxu0 %v4295
        %4732 = vmatpush1.bf16.msra.mxu0 %v4294
        %4733 = vmatprep.subr.bf16.mxu0 %v4311
        %4734 = vmatpush1.bf16.msra.mxu0 %v4310
        %4735 = vmatprep.subr.bf16.mxu0 %v4327
        %4736 = vmatpush1.bf16.msra.mxu0 %v4326
        %4737 = vmatprep.subr.bf16.mxu0 %v4343
        %4738 = vmatpush1.bf16.msra.mxu0 %v4342
        %4739 = vmatprep.subr.bf16.mxu0 %v4359
        %4740 = vmatpush1.bf16.msra.mxu0 %v4358
        %4741 = vmatprep.subr.bf16.mxu0 %v4375
        %4742 = vmatpush1.bf16.msra.mxu0 %v4374
        %4743 = vmatprep.subr.bf16.mxu0 %v4391
        %4744 = vmatpush1.bf16.msra.mxu0 %v4390
        %4745 = vmatprep.subr.bf16.mxu0 0
        %4746 = vmatpush1.bf16.msra.mxu0 0
        %4747 = vmatprep.subr.bf16.mxu0 0
        %4748 = vmatpush1.bf16.msra.mxu0 0
        %4749 = vmatprep.subr.bf16.mxu0 0
        %4750 = vmatpush1.bf16.msra.mxu0 0
        %4751 = vmatprep.subr.bf16.mxu0 0
        %4752 = vmatpush1.bf16.msra.mxu0 0
        %4753 = vmatprep.subr.bf16.mxu0 0
        %4754 = vmatpush1.bf16.msra.mxu0 0
        %4755 = vmatprep.subr.bf16.mxu0 0
        %4756 = vmatpush1.bf16.msra.mxu0 0
        %4757 = vmatprep.subr.bf16.mxu0 0
        %4758 = vmatpush1.bf16.msra.mxu0 0
        %4759 = vmatprep.subr.bf16.mxu0 0
        %4760 = vmatpush1.bf16.msra.mxu0 0
        %4761 = vmatprep.mubr.bf16.mxu0 0
        %4762 = vmatmul.mubr.bf16.gmra.mrb[0].mxu0 %v3755
        %v4763 = vpop.f32.mrb[0].mxu0
        %v4764 = vadd.f32 0.0, %v4763
        %v4765 = vpop.f32.mrb[0].mxu0
        %v4766 = vadd.f32 0.0, %v4765
        %v4767 = vpop.f32.mrb[0].mxu0
        %v4768 = vpop.f32.mrb[0].mxu0
        %4769 = vdwg.mxu0
        %4770 = vmatprep.subr.bf16.mxu0 %v4281
        %4771 = vmatpush1.bf16.msra.mxu0 %v4280
        %4772 = vmatprep.subr.bf16.mxu0 %v4297
        %4773 = vmatpush1.bf16.msra.mxu0 %v4296
        %4774 = vmatprep.subr.bf16.mxu0 %v4313
        %4775 = vmatpush1.bf16.msra.mxu0 %v4312
        %4776 = vmatprep.subr.bf16.mxu0 %v4329
        %4777 = vmatpush1.bf16.msra.mxu0 %v4328
        %4778 = vmatprep.subr.bf16.mxu0 %v4345
        %4779 = vmatpush1.bf16.msra.mxu0 %v4344
        %4780 = vmatprep.subr.bf16.mxu0 %v4361
        %4781 = vmatpush1.bf16.msra.mxu0 %v4360
        %4782 = vmatprep.subr.bf16.mxu0 %v4377
        %4783 = vmatpush1.bf16.msra.mxu0 %v4376
        %4784 = vmatprep.subr.bf16.mxu0 %v4393
        %4785 = vmatpush1.bf16.msra.mxu0 %v4392
        %4786 = vmatprep.subr.bf16.mxu0 0
        %4787 = vmatpush1.bf16.msra.mxu0 0
        %4788 = vmatprep.subr.bf16.mxu0 0
        %4789 = vmatpush1.bf16.msra.mxu0 0
        %4790 = vmatprep.subr.bf16.mxu0 0
        %4791 = vmatpush1.bf16.msra.mxu0 0
        %4792 = vmatprep.subr.bf16.mxu0 0
        %4793 = vmatpush1.bf16.msra.mxu0 0
        %4794 = vmatprep.subr.bf16.mxu0 0
        %4795 = vmatpush1.bf16.msra.mxu0 0
        %4796 = vmatprep.subr.bf16.mxu0 0
        %4797 = vmatpush1.bf16.msra.mxu0 0
        %4798 = vmatprep.subr.bf16.mxu0 0
        %4799 = vmatpush1.bf16.msra.mxu0 0
        %4800 = vmatprep.subr.bf16.mxu0 0
        %4801 = vmatpush1.bf16.msra.mxu0 0
        %4802 = vmatprep.mubr.bf16.mxu0 0
        %4803 = vmatmul.mubr.bf16.gmra.mrb[0].mxu0 %v3755
        %v4804 = vpop.f32.mrb[0].mxu0
        %v4805 = vadd.f32 0.0, %v4804
        %v4806 = vpop.f32.mrb[0].mxu0
        %v4807 = vadd.f32 0.0, %v4806
        %v4808 = vpop.f32.mrb[0].mxu0
        %v4809 = vpop.f32.mrb[0].mxu0
        %4810 = vdwg.mxu0
        %4811 = vmatprep.subr.bf16.mxu0 %v4283
        %4812 = vmatpush1.bf16.msra.mxu0 %v4282
        %4813 = vmatprep.subr.bf16.mxu0 %v4299
        %4814 = vmatpush1.bf16.msra.mxu0 %v4298
        %4815 = vmatprep.subr.bf16.mxu0 %v4315
        %4816 = vmatpush1.bf16.msra.mxu0 %v4314
        %4817 = vmatprep.subr.bf16.mxu0 %v4331
        %4818 = vmatpush1.bf16.msra.mxu0 %v4330
        %4819 = vmatprep.subr.bf16.mxu0 %v4347
        %4820 = vmatpush1.bf16.msra.mxu0 %v4346
        %4821 = vmatprep.subr.bf16.mxu0 %v4363
        %4822 = vmatpush1.bf16.msra.mxu0 %v4362
        %4823 = vmatprep.subr.bf16.mxu0 %v4379
        %4824 = vmatpush1.bf16.msra.mxu0 %v4378
        %4825 = vmatprep.subr.bf16.mxu0 %v4395
        %4826 = vmatpush1.bf16.msra.mxu0 %v4394
        %4827 = vmatprep.subr.bf16.mxu0 0
        %4828 = vmatpush1.bf16.msra.mxu0 0
        %4829 = vmatprep.subr.bf16.mxu0 0
        %4830 = vmatpush1.bf16.msra.mxu0 0
        %4831 = vmatprep.subr.bf16.mxu0 0
        %4832 = vmatpush1.bf16.msra.mxu0 0
        %4833 = vmatprep.subr.bf16.mxu0 0
        %4834 = vmatpush1.bf16.msra.mxu0 0
        %4835 = vmatprep.subr.bf16.mxu0 0
        %4836 = vmatpush1.bf16.msra.mxu0 0
        %4837 = vmatprep.subr.bf16.mxu0 0
        %4838 = vmatpush1.bf16.msra.mxu0 0
        %4839 = vmatprep.subr.bf16.mxu0 0
        %4840 = vmatpush1.bf16.msra.mxu0 0
        %4841 = vmatprep.subr.bf16.mxu0 0
        %4842 = vmatpush1.bf16.msra.mxu0 0
        %4843 = vmatprep.mubr.bf16.mxu0 0
        %4844 = vmatmul.mubr.bf16.gmra.mrb[0].mxu0 %v3755
        %v4845 = vpop.f32.mrb[0].mxu0
        %v4846 = vadd.f32 0.0, %v4845
        %v4847 = vpop.f32.mrb[0].mxu0
        %v4848 = vadd.f32 0.0, %v4847
        %v4849 = vpop.f32.mrb[0].mxu0
        %v4850 = vpop.f32.mrb[0].mxu0
        %4851 = vdwg.mxu0
        %v4852 = vxor.u32 %v4559, 2147483648
        %v4853 = vxor.u32 %v4561, 2147483648
        %v4854 = vxor.u32 %v4600, 2147483648
        %v4855 = vxor.u32 %v4602, 2147483648
        %v4856 = vxor.u32 %v4641, 2147483648
        %v4857 = vxor.u32 %v4643, 2147483648
        %v4858 = vxor.u32 %v4682, 2147483648
        %v4859 = vxor.u32 %v4684, 2147483648
        %v4860 = vxor.u32 %v4723, 2147483648
        %v4861 = vxor.u32 %v4725, 2147483648
        %v4862 = vxor.u32 %v4764, 2147483648
        %v4863 = vxor.u32 %v4766, 2147483648
        %v4864 = vxor.u32 %v4805, 2147483648
        %v4865 = vxor.u32 %v4807, 2147483648
        %v4866 = vxor.u32 %v4846, 2147483648
        %v4867 = vxor.u32 %v4848, 2147483648
        %v4868 = vmul.f32 %v4852, 1.442695
        %v4869 = vpow.pop %v4868
        %v4870 = vmul.f32 %v4853, 1.442695
        %v4871 = vpow.pop %v4870
        %v4872 = vmul.f32 %v4854, 1.442695
        %v4873 = vpow.pop %v4872
        %v4874 = vmul.f32 %v4855, 1.442695
        %v4875 = vpow.pop %v4874
        %v4876 = vmul.f32 %v4856, 1.442695
        %v4877 = vpow.pop %v4876
        %v4878 = vmul.f32 %v4857, 1.442695
        %v4879 = vpow.pop %v4878
        %v4880 = vmul.f32 %v4858, 1.442695
        %v4881 = vpow.pop %v4880
        %v4882 = vmul.f32 %v4859, 1.442695
        %v4883 = vpow.pop %v4882
        %v4884 = vmul.f32 %v4860, 1.442695
        %v4885 = vpow.pop %v4884
        %v4886 = vmul.f32 %v4861, 1.442695
        %v4887 = vpow.pop %v4886
        %v4888 = vmul.f32 %v4862, 1.442695
        %v4889 = vpow.pop %v4888
        %v4890 = vmul.f32 %v4863, 1.442695
        %v4891 = vpow.pop %v4890
        %v4892 = vmul.f32 %v4864, 1.442695
        %v4893 = vpow.pop %v4892
        %v4894 = vmul.f32 %v4865, 1.442695
        %v4895 = vpow.pop %v4894
        %v4896 = vmul.f32 %v4866, 1.442695
        %v4897 = vpow.pop %v4896
        %v4898 = vmul.f32 %v4867, 1.442695
        %v4899 = vpow.pop %v4898
        %v4900 = vadd.f32 %v4869, 1.0
        %v4901 = vadd.f32 %v4871, 1.0
        %v4902 = vadd.f32 %v4873, 1.0
        %v4903 = vadd.f32 %v4875, 1.0
        %v4904 = vadd.f32 %v4877, 1.0
        %v4905 = vadd.f32 %v4879, 1.0
        %v4906 = vadd.f32 %v4881, 1.0
        %v4907 = vadd.f32 %v4883, 1.0
        %v4908 = vadd.f32 %v4885, 1.0
        %v4909 = vadd.f32 %v4887, 1.0
        %v4910 = vadd.f32 %v4889, 1.0
        %v4911 = vadd.f32 %v4891, 1.0
        %v4912 = vadd.f32 %v4893, 1.0
        %v4913 = vadd.f32 %v4895, 1.0
        %v4914 = vadd.f32 %v4897, 1.0
        %v4915 = vadd.f32 %v4899, 1.0
        %v4916 = vrcp.pop %v4900
        %v4917 = vmul.f32 1.0, %v4916
        %v4918 = vrcp.pop %v4901
        %v4919 = vmul.f32 1.0, %v4918
        %v4920 = vrcp.pop %v4902
        %v4921 = vmul.f32 1.0, %v4920
        %v4922 = vrcp.pop %v4903
        %v4923 = vmul.f32 1.0, %v4922
        %v4924 = vrcp.pop %v4904
        %v4925 = vmul.f32 1.0, %v4924
        %v4926 = vrcp.pop %v4905
        %v4927 = vmul.f32 1.0, %v4926
        %v4928 = vrcp.pop %v4906
        %v4929 = vmul.f32 1.0, %v4928
        %v4930 = vrcp.pop %v4907
        %v4931 = vmul.f32 1.0, %v4930
        %v4932 = vrcp.pop %v4908
        %v4933 = vmul.f32 1.0, %v4932
        %v4934 = vrcp.pop %v4909
        %v4935 = vmul.f32 1.0, %v4934
        %v4936 = vrcp.pop %v4910
        %v4937 = vmul.f32 1.0, %v4936
        %v4938 = vrcp.pop %v4911
        %v4939 = vmul.f32 1.0, %v4938
        %v4940 = vrcp.pop %v4912
        %v4941 = vmul.f32 1.0, %v4940
        %v4942 = vrcp.pop %v4913
        %v4943 = vmul.f32 1.0, %v4942
        %v4944 = vrcp.pop %v4914
        %v4945 = vmul.f32 1.0, %v4944
        %v4946 = vrcp.pop %v4915
        %v4947 = vmul.f32 1.0, %v4946
        %4948 = vst [vmem:[%s762] sm:$0xff] %v4917
        %4949 = vst [vmem:[%s762 + $0x8] sm:$0xff] %v4919
        %4950 = vst [vmem:[%s762 + $0x10] sm:$0xff] %v4921
        %4951 = vst [vmem:[%s762 + $0x18] sm:$0xff] %v4923
        %4952 = vst [vmem:[%s762 + $0x20] sm:$0xff] %v4925
        %4953 = vst [vmem:[%s762 + $0x28] sm:$0xff] %v4927
        %4954 = vst [vmem:[%s762 + $0x30] sm:$0xff] %v4929
        %4955 = vst [vmem:[%s762 + $0x38] sm:$0xff] %v4931
        %v4964 = vrot.slane %v4917, 1
        %v4965 = vrot.slane %v4919, 1
        %v4966 = vrot.slane %v4921, 1
        %v4967 = vrot.slane %v4923, 1
        %v4968 = vrot.slane %v4925, 1
        %v4969 = vrot.slane %v4927, 1
        %v4970 = vrot.slane %v4929, 1
        %v4971 = vrot.slane %v4931, 1
        %v4980 = vpack.c.bf16 %v4917, %v4917
        %v4981 = vpack.c.bf16 %v4919, %v4919
        %v4982 = vpack.c.bf16 %v4921, %v4921
        %v4983 = vpack.c.bf16 %v4923, %v4923
        %v4984 = vpack.c.bf16 %v4925, %v4925
        %v4985 = vpack.c.bf16 %v4927, %v4927
        %v4986 = vpack.c.bf16 %v4929, %v4929
        %v4987 = vpack.c.bf16 %v4931, %v4931
        %v4988 = vpack.c.bf16 %v4964, %v4964
        %v4989 = vpack.c.bf16 %v4965, %v4965
        %v4990 = vpack.c.bf16 %v4966, %v4966
        %v4991 = vpack.c.bf16 %v4967, %v4967
        %v4992 = vpack.c.bf16 %v4968, %v4968
        %v4993 = vpack.c.bf16 %v4969, %v4969
        %v4994 = vpack.c.bf16 %v4970, %v4970
        %v4995 = vpack.c.bf16 %v4971, %v4971
        %v4996 = vld [vmem:[%s6] sm:$0xf]
        %v4997 = vld [vmem:[%s6 + $0x4] sm:$0xf]
        %v4998 = vld [vmem:[%s6 + $0x8] sm:$0xf]
        %v4999 = vld [vmem:[%s6 + $0xc] sm:$0xf]
        %v5000 = vld [vmem:[%s6 + $0x10] sm:$0xf]
        %v5001 = vld [vmem:[%s6 + $0x14] sm:$0xf]
        %v5002 = vld [vmem:[%s6 + $0x18] sm:$0xf]
        %v5003 = vld [vmem:[%s6 + $0x1c] sm:$0xf]
        %v5004 = vld [vmem:[%s6 + $0x20] sm:$0xf]
        %v5005 = vld [vmem:[%s6 + $0x24] sm:$0xf]
        %v5006 = vld [vmem:[%s6 + $0x28] sm:$0xf]
        %v5007 = vld [vmem:[%s6 + $0x2c] sm:$0xf]
        %v5008 = vld [vmem:[%s6 + $0x30] sm:$0xf]
        %v5009 = vld [vmem:[%s6 + $0x34] sm:$0xf]
        %v5010 = vld [vmem:[%s6 + $0x38] sm:$0xf]
        %v5011 = vld [vmem:[%s6 + $0x3c] sm:$0xf]
        %v5012 = vld [vmem:[%s6 + $0x40] sm:$0xf]
        %v5013 = vld [vmem:[%s6 + $0x44] sm:$0xf]
        %v5014 = vld [vmem:[%s6 + $0x48] sm:$0xf]
        %v5015 = vld [vmem:[%s6 + $0x4c] sm:$0xf]
        %v5016 = vld [vmem:[%s6 + $0x50] sm:$0xf]
        %v5017 = vld [vmem:[%s6 + $0x54] sm:$0xf]
        %v5018 = vld [vmem:[%s6 + $0x58] sm:$0xf]
        %v5019 = vld [vmem:[%s6 + $0x5c] sm:$0xf]
        %v5020 = vld [vmem:[%s6 + $0x60] sm:$0xf]
        %v5021 = vld [vmem:[%s6 + $0x64] sm:$0xf]
        %v5022 = vld [vmem:[%s6 + $0x68] sm:$0xf]
        %v5023 = vld [vmem:[%s6 + $0x6c] sm:$0xf]
        %v5024 = vld [vmem:[%s6 + $0x70] sm:$0xf]
        %v5025 = vld [vmem:[%s6 + $0x74] sm:$0xf]
        %v5026 = vld [vmem:[%s6 + $0x78] sm:$0xf]
        %v5027 = vld [vmem:[%s6 + $0x7c] sm:$0xf]
        %v5028 = vld [vmem:[%s6 + $0x80] sm:$0xf]
        %v5029 = vld [vmem:[%s6 + $0x84] sm:$0xf]
        %v5030 = vld [vmem:[%s6 + $0x88] sm:$0xf]
        %v5031 = vld [vmem:[%s6 + $0x8c] sm:$0xf]
        %v5032 = vld [vmem:[%s6 + $0x90] sm:$0xf]
        %v5033 = vld [vmem:[%s6 + $0x94] sm:$0xf]
        %v5034 = vld [vmem:[%s6 + $0x98] sm:$0xf]
        %v5035 = vld [vmem:[%s6 + $0x9c] sm:$0xf]
        %v5036 = vld [vmem:[%s6 + $0xa0] sm:$0xf]
        %v5037 = vld [vmem:[%s6 + $0xa4] sm:$0xf]
        %v5038 = vld [vmem:[%s6 + $0xa8] sm:$0xf]
        %v5039 = vld [vmem:[%s6 + $0xac] sm:$0xf]
        %v5040 = vld [vmem:[%s6 + $0xb0] sm:$0xf]
        %v5041 = vld [vmem:[%s6 + $0xb4] sm:$0xf]
        %v5042 = vld [vmem:[%s6 + $0xb8] sm:$0xf]
        %v5043 = vld [vmem:[%s6 + $0xbc] sm:$0xf]
        %v5044 = vld [vmem:[%s6 + $0xc0] sm:$0xf]
        %v5045 = vld [vmem:[%s6 + $0xc4] sm:$0xf]
        %v5046 = vld [vmem:[%s6 + $0xc8] sm:$0xf]
        %v5047 = vld [vmem:[%s6 + $0xcc] sm:$0xf]
        %v5048 = vld [vmem:[%s6 + $0xd0] sm:$0xf]
        %v5049 = vld [vmem:[%s6 + $0xd4] sm:$0xf]
        %v5050 = vld [vmem:[%s6 + $0xd8] sm:$0xf]
        %v5051 = vld [vmem:[%s6 + $0xdc] sm:$0xf]
        %v5052 = vld [vmem:[%s6 + $0xe0] sm:$0xf]
        %v5053 = vld [vmem:[%s6 + $0xe4] sm:$0xf]
        %v5054 = vld [vmem:[%s6 + $0xe8] sm:$0xf]
        %v5055 = vld [vmem:[%s6 + $0xec] sm:$0xf]
        %v5056 = vld [vmem:[%s6 + $0xf0] sm:$0xf]
        %v5057 = vld [vmem:[%s6 + $0xf4] sm:$0xf]
        %v5058 = vld [vmem:[%s6 + $0xf8] sm:$0xf]
        %v5059 = vld [vmem:[%s6 + $0xfc] sm:$0xf]
        %v5060 = vld [vmem:[%s6 + $0x100] sm:$0xf]
        %v5061 = vld [vmem:[%s6 + $0x104] sm:$0xf]
        %v5062 = vld [vmem:[%s6 + $0x108] sm:$0xf]
        %v5063 = vld [vmem:[%s6 + $0x10c] sm:$0xf]
        %v5064 = vld [vmem:[%s6 + $0x110] sm:$0xf]
        %v5065 = vld [vmem:[%s6 + $0x114] sm:$0xf]
        %v5066 = vld [vmem:[%s6 + $0x118] sm:$0xf]
        %v5067 = vld [vmem:[%s6 + $0x11c] sm:$0xf]
        %v5068 = vld [vmem:[%s6 + $0x120] sm:$0xf]
        %v5069 = vld [vmem:[%s6 + $0x124] sm:$0xf]
        %v5070 = vld [vmem:[%s6 + $0x128] sm:$0xf]
        %v5071 = vld [vmem:[%s6 + $0x12c] sm:$0xf]
        %v5072 = vld [vmem:[%s6 + $0x130] sm:$0xf]
        %v5073 = vld [vmem:[%s6 + $0x134] sm:$0xf]
        %v5074 = vld [vmem:[%s6 + $0x138] sm:$0xf]
        %v5075 = vld [vmem:[%s6 + $0x13c] sm:$0xf]
        %v5076 = vld [vmem:[%s6 + $0x140] sm:$0xf]
        %v5077 = vld [vmem:[%s6 + $0x144] sm:$0xf]
        %v5078 = vld [vmem:[%s6 + $0x148] sm:$0xf]
        %v5079 = vld [vmem:[%s6 + $0x14c] sm:$0xf]
        %v5080 = vld [vmem:[%s6 + $0x150] sm:$0xf]
        %v5081 = vld [vmem:[%s6 + $0x154] sm:$0xf]
        %v5082 = vld [vmem:[%s6 + $0x158] sm:$0xf]
        %v5083 = vld [vmem:[%s6 + $0x15c] sm:$0xf]
        %v5084 = vld [vmem:[%s6 + $0x160] sm:$0xf]
        %v5085 = vld [vmem:[%s6 + $0x164] sm:$0xf]
        %v5086 = vld [vmem:[%s6 + $0x168] sm:$0xf]
        %v5087 = vld [vmem:[%s6 + $0x16c] sm:$0xf]
        %v5088 = vld [vmem:[%s6 + $0x170] sm:$0xf]
        %v5089 = vld [vmem:[%s6 + $0x174] sm:$0xf]
        %v5090 = vld [vmem:[%s6 + $0x178] sm:$0xf]
        %v5091 = vld [vmem:[%s6 + $0x17c] sm:$0xf]
        %v5092 = vld [vmem:[%s6 + $0x180] sm:$0xf]
        %v5093 = vld [vmem:[%s6 + $0x184] sm:$0xf]
        %v5094 = vld [vmem:[%s6 + $0x188] sm:$0xf]
        %v5095 = vld [vmem:[%s6 + $0x18c] sm:$0xf]
        %v5096 = vld [vmem:[%s6 + $0x190] sm:$0xf]
        %v5097 = vld [vmem:[%s6 + $0x194] sm:$0xf]
        %v5098 = vld [vmem:[%s6 + $0x198] sm:$0xf]
        %v5099 = vld [vmem:[%s6 + $0x19c] sm:$0xf]
        %v5100 = vld [vmem:[%s6 + $0x1a0] sm:$0xf]
        %v5101 = vld [vmem:[%s6 + $0x1a4] sm:$0xf]
        %v5102 = vld [vmem:[%s6 + $0x1a8] sm:$0xf]
        %v5103 = vld [vmem:[%s6 + $0x1ac] sm:$0xf]
        %v5104 = vld [vmem:[%s6 + $0x1b0] sm:$0xf]
        %v5105 = vld [vmem:[%s6 + $0x1b4] sm:$0xf]
        %v5106 = vld [vmem:[%s6 + $0x1b8] sm:$0xf]
        %v5107 = vld [vmem:[%s6 + $0x1bc] sm:$0xf]
        %v5108 = vld [vmem:[%s6 + $0x1c0] sm:$0xf]
        %v5109 = vld [vmem:[%s6 + $0x1c4] sm:$0xf]
        %v5110 = vld [vmem:[%s6 + $0x1c8] sm:$0xf]
        %v5111 = vld [vmem:[%s6 + $0x1cc] sm:$0xf]
        %v5112 = vld [vmem:[%s6 + $0x1d0] sm:$0xf]
        %v5113 = vld [vmem:[%s6 + $0x1d4] sm:$0xf]
        %v5114 = vld [vmem:[%s6 + $0x1d8] sm:$0xf]
        %v5115 = vld [vmem:[%s6 + $0x1dc] sm:$0xf]
        %v5116 = vld [vmem:[%s6 + $0x1e0] sm:$0xf]
        %v5117 = vld [vmem:[%s6 + $0x1e4] sm:$0xf]
        %v5118 = vld [vmem:[%s6 + $0x1e8] sm:$0xf]
        %v5119 = vld [vmem:[%s6 + $0x1ec] sm:$0xf]
        %v5120 = vld [vmem:[%s6 + $0x1f0] sm:$0xf]
        %v5121 = vld [vmem:[%s6 + $0x1f4] sm:$0xf]
        %v5122 = vld [vmem:[%s6 + $0x1f8] sm:$0xf]
        %v5123 = vld [vmem:[%s6 + $0x1fc] sm:$0xf]
        %v5124 = vld [vmem:[%s6 + $0x200] sm:$0xf]
        %v5125 = vld [vmem:[%s6 + $0x204] sm:$0xf]
        %v5126 = vld [vmem:[%s6 + $0x208] sm:$0xf]
        %v5127 = vld [vmem:[%s6 + $0x20c] sm:$0xf]
        %v5128 = vld [vmem:[%s6 + $0x210] sm:$0xf]
        %v5129 = vld [vmem:[%s6 + $0x214] sm:$0xf]
        %v5130 = vld [vmem:[%s6 + $0x218] sm:$0xf]
        %v5131 = vld [vmem:[%s6 + $0x21c] sm:$0xf]
        %v5132 = vld [vmem:[%s6 + $0x220] sm:$0xf]
        %v5133 = vld [vmem:[%s6 + $0x224] sm:$0xf]
        %v5134 = vld [vmem:[%s6 + $0x228] sm:$0xf]
        %v5135 = vld [vmem:[%s6 + $0x22c] sm:$0xf]
        %v5136 = vld [vmem:[%s6 + $0x230] sm:$0xf]
        %v5137 = vld [vmem:[%s6 + $0x234] sm:$0xf]
        %v5138 = vld [vmem:[%s6 + $0x238] sm:$0xf]
        %v5139 = vld [vmem:[%s6 + $0x23c] sm:$0xf]
        %v5140 = vld [vmem:[%s6 + $0x240] sm:$0xf]
        %v5141 = vld [vmem:[%s6 + $0x244] sm:$0xf]
        %v5142 = vld [vmem:[%s6 + $0x248] sm:$0xf]
        %v5143 = vld [vmem:[%s6 + $0x24c] sm:$0xf]
        %v5144 = vld [vmem:[%s6 + $0x250] sm:$0xf]
        %v5145 = vld [vmem:[%s6 + $0x254] sm:$0xf]
        %v5146 = vld [vmem:[%s6 + $0x258] sm:$0xf]
        %v5147 = vld [vmem:[%s6 + $0x25c] sm:$0xf]
        %v5148 = vld [vmem:[%s6 + $0x260] sm:$0xf]
        %v5149 = vld [vmem:[%s6 + $0x264] sm:$0xf]
        %v5150 = vld [vmem:[%s6 + $0x268] sm:$0xf]
        %v5151 = vld [vmem:[%s6 + $0x26c] sm:$0xf]
        %v5152 = vld [vmem:[%s6 + $0x270] sm:$0xf]
        %v5153 = vld [vmem:[%s6 + $0x274] sm:$0xf]
        %v5154 = vld [vmem:[%s6 + $0x278] sm:$0xf]
        %v5155 = vld [vmem:[%s6 + $0x27c] sm:$0xf]
        %v5156 = vld [vmem:[%s6 + $0x280] sm:$0xf]
        %v5157 = vld [vmem:[%s6 + $0x284] sm:$0xf]
        %v5158 = vld [vmem:[%s6 + $0x288] sm:$0xf]
        %v5159 = vld [vmem:[%s6 + $0x28c] sm:$0xf]
        %v5160 = vld [vmem:[%s6 + $0x290] sm:$0xf]
        %v5161 = vld [vmem:[%s6 + $0x294] sm:$0xf]
        %v5162 = vld [vmem:[%s6 + $0x298] sm:$0xf]
        %v5163 = vld [vmem:[%s6 + $0x29c] sm:$0xf]
        %v5164 = vld [vmem:[%s6 + $0x2a0] sm:$0xf]
        %v5165 = vld [vmem:[%s6 + $0x2a4] sm:$0xf]
        %v5166 = vld [vmem:[%s6 + $0x2a8] sm:$0xf]
        %v5167 = vld [vmem:[%s6 + $0x2ac] sm:$0xf]
        %v5168 = vld [vmem:[%s6 + $0x2b0] sm:$0xf]
        %v5169 = vld [vmem:[%s6 + $0x2b4] sm:$0xf]
        %v5170 = vld [vmem:[%s6 + $0x2b8] sm:$0xf]
        %v5171 = vld [vmem:[%s6 + $0x2bc] sm:$0xf]
        %v5172 = vld [vmem:[%s6 + $0x2c0] sm:$0xf]
        %v5173 = vld [vmem:[%s6 + $0x2c4] sm:$0xf]
        %v5174 = vld [vmem:[%s6 + $0x2c8] sm:$0xf]
        %v5175 = vld [vmem:[%s6 + $0x2cc] sm:$0xf]
        %v5176 = vld [vmem:[%s6 + $0x2d0] sm:$0xf]
        %v5177 = vld [vmem:[%s6 + $0x2d4] sm:$0xf]
        %v5178 = vld [vmem:[%s6 + $0x2d8] sm:$0xf]
        %v5179 = vld [vmem:[%s6 + $0x2dc] sm:$0xf]
        %v5180 = vld [vmem:[%s6 + $0x2e0] sm:$0xf]
        %v5181 = vld [vmem:[%s6 + $0x2e4] sm:$0xf]
        %v5182 = vld [vmem:[%s6 + $0x2e8] sm:$0xf]
        %v5183 = vld [vmem:[%s6 + $0x2ec] sm:$0xf]
        %v5184 = vld [vmem:[%s6 + $0x2f0] sm:$0xf]
        %v5185 = vld [vmem:[%s6 + $0x2f4] sm:$0xf]
        %v5186 = vld [vmem:[%s6 + $0x2f8] sm:$0xf]
        %v5187 = vld [vmem:[%s6 + $0x2fc] sm:$0xf]
        %v5188 = vld [vmem:[%s6 + $0x300] sm:$0xf]
        %v5189 = vld [vmem:[%s6 + $0x304] sm:$0xf]
        %v5190 = vld [vmem:[%s6 + $0x308] sm:$0xf]
        %v5191 = vld [vmem:[%s6 + $0x30c] sm:$0xf]
        %v5192 = vld [vmem:[%s6 + $0x310] sm:$0xf]
        %v5193 = vld [vmem:[%s6 + $0x314] sm:$0xf]
        %v5194 = vld [vmem:[%s6 + $0x318] sm:$0xf]
        %v5195 = vld [vmem:[%s6 + $0x31c] sm:$0xf]
        %v5196 = vld [vmem:[%s6 + $0x320] sm:$0xf]
        %v5197 = vld [vmem:[%s6 + $0x324] sm:$0xf]
        %v5198 = vld [vmem:[%s6 + $0x328] sm:$0xf]
        %v5199 = vld [vmem:[%s6 + $0x32c] sm:$0xf]
        %v5200 = vld [vmem:[%s6 + $0x330] sm:$0xf]
        %v5201 = vld [vmem:[%s6 + $0x334] sm:$0xf]
        %v5202 = vld [vmem:[%s6 + $0x338] sm:$0xf]
        %v5203 = vld [vmem:[%s6 + $0x33c] sm:$0xf]
        %v5204 = vld [vmem:[%s6 + $0x340] sm:$0xf]
        %v5205 = vld [vmem:[%s6 + $0x344] sm:$0xf]
        %v5206 = vld [vmem:[%s6 + $0x348] sm:$0xf]
        %v5207 = vld [vmem:[%s6 + $0x34c] sm:$0xf]
        %v5208 = vld [vmem:[%s6 + $0x350] sm:$0xf]
        %v5209 = vld [vmem:[%s6 + $0x354] sm:$0xf]
        %v5210 = vld [vmem:[%s6 + $0x358] sm:$0xf]
        %v5211 = vld [vmem:[%s6 + $0x35c] sm:$0xf]
        %v5212 = vld [vmem:[%s6 + $0x360] sm:$0xf]
        %v5213 = vld [vmem:[%s6 + $0x364] sm:$0xf]
        %v5214 = vld [vmem:[%s6 + $0x368] sm:$0xf]
        %v5215 = vld [vmem:[%s6 + $0x36c] sm:$0xf]
        %v5216 = vld [vmem:[%s6 + $0x370] sm:$0xf]
        %v5217 = vld [vmem:[%s6 + $0x374] sm:$0xf]
        %v5218 = vld [vmem:[%s6 + $0x378] sm:$0xf]
        %v5219 = vld [vmem:[%s6 + $0x37c] sm:$0xf]
        %v5220 = vld [vmem:[%s6 + $0x380] sm:$0xf]
        %v5221 = vld [vmem:[%s6 + $0x384] sm:$0xf]
        %v5222 = vld [vmem:[%s6 + $0x388] sm:$0xf]
        %v5223 = vld [vmem:[%s6 + $0x38c] sm:$0xf]
        %v5224 = vld [vmem:[%s6 + $0x390] sm:$0xf]
        %v5225 = vld [vmem:[%s6 + $0x394] sm:$0xf]
        %v5226 = vld [vmem:[%s6 + $0x398] sm:$0xf]
        %v5227 = vld [vmem:[%s6 + $0x39c] sm:$0xf]
        %v5228 = vld [vmem:[%s6 + $0x3a0] sm:$0xf]
        %v5229 = vld [vmem:[%s6 + $0x3a4] sm:$0xf]
        %v5230 = vld [vmem:[%s6 + $0x3a8] sm:$0xf]
        %v5231 = vld [vmem:[%s6 + $0x3ac] sm:$0xf]
        %v5232 = vld [vmem:[%s6 + $0x3b0] sm:$0xf]
        %v5233 = vld [vmem:[%s6 + $0x3b4] sm:$0xf]
        %v5234 = vld [vmem:[%s6 + $0x3b8] sm:$0xf]
        %v5235 = vld [vmem:[%s6 + $0x3bc] sm:$0xf]
        %v5236 = vld [vmem:[%s6 + $0x3c0] sm:$0xf]
        %v5237 = vld [vmem:[%s6 + $0x3c4] sm:$0xf]
        %v5238 = vld [vmem:[%s6 + $0x3c8] sm:$0xf]
        %v5239 = vld [vmem:[%s6 + $0x3cc] sm:$0xf]
        %v5240 = vld [vmem:[%s6 + $0x3d0] sm:$0xf]
        %v5241 = vld [vmem:[%s6 + $0x3d4] sm:$0xf]
        %v5242 = vld [vmem:[%s6 + $0x3d8] sm:$0xf]
        %v5243 = vld [vmem:[%s6 + $0x3dc] sm:$0xf]
        %v5244 = vld [vmem:[%s6 + $0x3e0] sm:$0xf]
        %v5245 = vld [vmem:[%s6 + $0x3e4] sm:$0xf]
        %v5246 = vld [vmem:[%s6 + $0x3e8] sm:$0xf]
        %v5247 = vld [vmem:[%s6 + $0x3ec] sm:$0xf]
        %v5248 = vld [vmem:[%s6 + $0x3f0] sm:$0xf]
        %v5249 = vld [vmem:[%s6 + $0x3f4] sm:$0xf]
        %v5250 = vld [vmem:[%s6 + $0x3f8] sm:$0xf]
        %v5251 = vld [vmem:[%s6 + $0x3fc] sm:$0xf]
        %v5252 = vld [vmem:[%s7] sm:$0x1]
        %v5509 = vunpack.c.l.b16 %v4996
        %v5510 = vunpack.c.l.b16 %v4997
        %v5511 = vunpack.c.l.b16 %v4998
        %v5512 = vunpack.c.l.b16 %v4999
        %v5513 = vunpack.c.l.b16 %v5000
        %v5514 = vunpack.c.l.b16 %v5001
        %v5515 = vunpack.c.l.b16 %v5002
        %v5516 = vunpack.c.l.b16 %v5003
        %v5517 = vunpack.c.l.b16 %v5004
        %v5518 = vunpack.c.l.b16 %v5005
        %v5519 = vunpack.c.l.b16 %v5006
        %v5520 = vunpack.c.l.b16 %v5007
        %v5521 = vunpack.c.l.b16 %v5008
        %v5522 = vunpack.c.l.b16 %v5009
        %v5523 = vunpack.c.l.b16 %v5010
        %v5524 = vunpack.c.l.b16 %v5011
        %v5525 = vunpack.c.l.b16 %v5012
        %v5526 = vunpack.c.l.b16 %v5013
        %v5527 = vunpack.c.l.b16 %v5014
        %v5528 = vunpack.c.l.b16 %v5015
        %v5529 = vunpack.c.l.b16 %v5016
        %v5530 = vunpack.c.l.b16 %v5017
        %v5531 = vunpack.c.l.b16 %v5018
        %v5532 = vunpack.c.l.b16 %v5019
        %v5533 = vunpack.c.l.b16 %v5020
        %v5534 = vunpack.c.l.b16 %v5021
        %v5535 = vunpack.c.l.b16 %v5022
        %v5536 = vunpack.c.l.b16 %v5023
        %v5537 = vunpack.c.l.b16 %v5024
        %v5538 = vunpack.c.l.b16 %v5025
        %v5539 = vunpack.c.l.b16 %v5026
        %v5540 = vunpack.c.l.b16 %v5027
        %v5541 = vunpack.c.l.b16 %v5028
        %v5542 = vunpack.c.l.b16 %v5029
        %v5543 = vunpack.c.l.b16 %v5030
        %v5544 = vunpack.c.l.b16 %v5031
        %v5545 = vunpack.c.l.b16 %v5032
        %v5546 = vunpack.c.l.b16 %v5033
        %v5547 = vunpack.c.l.b16 %v5034
        %v5548 = vunpack.c.l.b16 %v5035
        %v5549 = vunpack.c.l.b16 %v5036
        %v5550 = vunpack.c.l.b16 %v5037
        %v5551 = vunpack.c.l.b16 %v5038
        %v5552 = vunpack.c.l.b16 %v5039
        %v5553 = vunpack.c.l.b16 %v5040
        %v5554 = vunpack.c.l.b16 %v5041
        %v5555 = vunpack.c.l.b16 %v5042
        %v5556 = vunpack.c.l.b16 %v5043
        %v5557 = vunpack.c.l.b16 %v5044
        %v5558 = vunpack.c.l.b16 %v5045
        %v5559 = vunpack.c.l.b16 %v5046
        %v5560 = vunpack.c.l.b16 %v5047
        %v5561 = vunpack.c.l.b16 %v5048
        %v5562 = vunpack.c.l.b16 %v5049
        %v5563 = vunpack.c.l.b16 %v5050
        %v5564 = vunpack.c.l.b16 %v5051
        %v5565 = vunpack.c.l.b16 %v5052
        %v5566 = vunpack.c.l.b16 %v5053
        %v5567 = vunpack.c.l.b16 %v5054
        %v5568 = vunpack.c.l.b16 %v5055
        %v5569 = vunpack.c.l.b16 %v5056
        %v5570 = vunpack.c.l.b16 %v5057
        %v5571 = vunpack.c.l.b16 %v5058
        %v5572 = vunpack.c.l.b16 %v5059
        %v5573 = vunpack.c.l.b16 %v5060
        %v5574 = vunpack.c.l.b16 %v5061
        %v5575 = vunpack.c.l.b16 %v5062
        %v5576 = vunpack.c.l.b16 %v5063
        %v5577 = vunpack.c.l.b16 %v5064
        %v5578 = vunpack.c.l.b16 %v5065
        %v5579 = vunpack.c.l.b16 %v5066
        %v5580 = vunpack.c.l.b16 %v5067
        %v5581 = vunpack.c.l.b16 %v5068
        %v5582 = vunpack.c.l.b16 %v5069
        %v5583 = vunpack.c.l.b16 %v5070
        %v5584 = vunpack.c.l.b16 %v5071
        %v5585 = vunpack.c.l.b16 %v5072
        %v5586 = vunpack.c.l.b16 %v5073
        %v5587 = vunpack.c.l.b16 %v5074
        %v5588 = vunpack.c.l.b16 %v5075
        %v5589 = vunpack.c.l.b16 %v5076
        %v5590 = vunpack.c.l.b16 %v5077
        %v5591 = vunpack.c.l.b16 %v5078
        %v5592 = vunpack.c.l.b16 %v5079
        %v5593 = vunpack.c.l.b16 %v5080
        %v5594 = vunpack.c.l.b16 %v5081
        %v5595 = vunpack.c.l.b16 %v5082
        %v5596 = vunpack.c.l.b16 %v5083
        %v5597 = vunpack.c.l.b16 %v5084
        %v5598 = vunpack.c.l.b16 %v5085
        %v5599 = vunpack.c.l.b16 %v5086
        %v5600 = vunpack.c.l.b16 %v5087
        %v5601 = vunpack.c.l.b16 %v5088
        %v5602 = vunpack.c.l.b16 %v5089
        %v5603 = vunpack.c.l.b16 %v5090
        %v5604 = vunpack.c.l.b16 %v5091
        %v5605 = vunpack.c.l.b16 %v5092
        %v5606 = vunpack.c.l.b16 %v5093
        %v5607 = vunpack.c.l.b16 %v5094
        %v5608 = vunpack.c.l.b16 %v5095
        %v5609 = vunpack.c.l.b16 %v5096
        %v5610 = vunpack.c.l.b16 %v5097
        %v5611 = vunpack.c.l.b16 %v5098
        %v5612 = vunpack.c.l.b16 %v5099
        %v5613 = vunpack.c.l.b16 %v5100
        %v5614 = vunpack.c.l.b16 %v5101
        %v5615 = vunpack.c.l.b16 %v5102
        %v5616 = vunpack.c.l.b16 %v5103
        %v5617 = vunpack.c.l.b16 %v5104
        %v5618 = vunpack.c.l.b16 %v5105
        %v5619 = vunpack.c.l.b16 %v5106
        %v5620 = vunpack.c.l.b16 %v5107
        %v5621 = vunpack.c.l.b16 %v5108
        %v5622 = vunpack.c.l.b16 %v5109
        %v5623 = vunpack.c.l.b16 %v5110
        %v5624 = vunpack.c.l.b16 %v5111
        %v5625 = vunpack.c.l.b16 %v5112
        %v5626 = vunpack.c.l.b16 %v5113
        %v5627 = vunpack.c.l.b16 %v5114
        %v5628 = vunpack.c.l.b16 %v5115
        %v5629 = vunpack.c.l.b16 %v5116
        %v5630 = vunpack.c.l.b16 %v5117
        %v5631 = vunpack.c.l.b16 %v5118
        %v5632 = vunpack.c.l.b16 %v5119
        %v5633 = vunpack.c.l.b16 %v5120
        %v5634 = vunpack.c.l.b16 %v5121
        %v5635 = vunpack.c.l.b16 %v5122
        %v5636 = vunpack.c.l.b16 %v5123
        %v5637 = vunpack.c.l.b16 %v5124
        %v5638 = vunpack.c.l.b16 %v5125
        %v5639 = vunpack.c.l.b16 %v5126
        %v5640 = vunpack.c.l.b16 %v5127
        %v5641 = vunpack.c.l.b16 %v5128
        %v5642 = vunpack.c.l.b16 %v5129
        %v5643 = vunpack.c.l.b16 %v5130
        %v5644 = vunpack.c.l.b16 %v5131
        %v5645 = vunpack.c.l.b16 %v5132
        %v5646 = vunpack.c.l.b16 %v5133
        %v5647 = vunpack.c.l.b16 %v5134
        %v5648 = vunpack.c.l.b16 %v5135
        %v5649 = vunpack.c.l.b16 %v5136
        %v5650 = vunpack.c.l.b16 %v5137
        %v5651 = vunpack.c.l.b16 %v5138
        %v5652 = vunpack.c.l.b16 %v5139
        %v5653 = vunpack.c.l.b16 %v5140
        %v5654 = vunpack.c.l.b16 %v5141
        %v5655 = vunpack.c.l.b16 %v5142
        %v5656 = vunpack.c.l.b16 %v5143
        %v5657 = vunpack.c.l.b16 %v5144
        %v5658 = vunpack.c.l.b16 %v5145
        %v5659 = vunpack.c.l.b16 %v5146
        %v5660 = vunpack.c.l.b16 %v5147
        %v5661 = vunpack.c.l.b16 %v5148
        %v5662 = vunpack.c.l.b16 %v5149
        %v5663 = vunpack.c.l.b16 %v5150
        %v5664 = vunpack.c.l.b16 %v5151
        %v5665 = vunpack.c.l.b16 %v5152
        %v5666 = vunpack.c.l.b16 %v5153
        %v5667 = vunpack.c.l.b16 %v5154
        %v5668 = vunpack.c.l.b16 %v5155
        %v5669 = vunpack.c.l.b16 %v5156
        %v5670 = vunpack.c.l.b16 %v5157
        %v5671 = vunpack.c.l.b16 %v5158
        %v5672 = vunpack.c.l.b16 %v5159
        %v5673 = vunpack.c.l.b16 %v5160
        %v5674 = vunpack.c.l.b16 %v5161
        %v5675 = vunpack.c.l.b16 %v5162
        %v5676 = vunpack.c.l.b16 %v5163
        %v5677 = vunpack.c.l.b16 %v5164
        %v5678 = vunpack.c.l.b16 %v5165
        %v5679 = vunpack.c.l.b16 %v5166
        %v5680 = vunpack.c.l.b16 %v5167
        %v5681 = vunpack.c.l.b16 %v5168
        %v5682 = vunpack.c.l.b16 %v5169
        %v5683 = vunpack.c.l.b16 %v5170
        %v5684 = vunpack.c.l.b16 %v5171
        %v5685 = vunpack.c.l.b16 %v5172
        %v5686 = vunpack.c.l.b16 %v5173
        %v5687 = vunpack.c.l.b16 %v5174
        %v5688 = vunpack.c.l.b16 %v5175
        %v5689 = vunpack.c.l.b16 %v5176
        %v5690 = vunpack.c.l.b16 %v5177
        %v5691 = vunpack.c.l.b16 %v5178
        %v5692 = vunpack.c.l.b16 %v5179
        %v5693 = vunpack.c.l.b16 %v5180
        %v5694 = vunpack.c.l.b16 %v5181
        %v5695 = vunpack.c.l.b16 %v5182
        %v5696 = vunpack.c.l.b16 %v5183
        %v5697 = vunpack.c.l.b16 %v5184
        %v5698 = vunpack.c.l.b16 %v5185
        %v5699 = vunpack.c.l.b16 %v5186
        %v5700 = vunpack.c.l.b16 %v5187
        %v5701 = vunpack.c.l.b16 %v5188
        %v5702 = vunpack.c.l.b16 %v5189
        %v5703 = vunpack.c.l.b16 %v5190
        %v5704 = vunpack.c.l.b16 %v5191
        %v5705 = vunpack.c.l.b16 %v5192
        %v5706 = vunpack.c.l.b16 %v5193
        %v5707 = vunpack.c.l.b16 %v5194
        %v5708 = vunpack.c.l.b16 %v5195
        %v5709 = vunpack.c.l.b16 %v5196
        %v5710 = vunpack.c.l.b16 %v5197
        %v5711 = vunpack.c.l.b16 %v5198
        %v5712 = vunpack.c.l.b16 %v5199
        %v5713 = vunpack.c.l.b16 %v5200
        %v5714 = vunpack.c.l.b16 %v5201
        %v5715 = vunpack.c.l.b16 %v5202
        %v5716 = vunpack.c.l.b16 %v5203
        %v5717 = vunpack.c.l.b16 %v5204
        %v5718 = vunpack.c.l.b16 %v5205
        %v5719 = vunpack.c.l.b16 %v5206
        %v5720 = vunpack.c.l.b16 %v5207
        %v5721 = vunpack.c.l.b16 %v5208
        %v5722 = vunpack.c.l.b16 %v5209
        %v5723 = vunpack.c.l.b16 %v5210
        %v5724 = vunpack.c.l.b16 %v5211
        %v5725 = vunpack.c.l.b16 %v5212
        %v5726 = vunpack.c.l.b16 %v5213
        %v5727 = vunpack.c.l.b16 %v5214
        %v5728 = vunpack.c.l.b16 %v5215
        %v5729 = vunpack.c.l.b16 %v5216
        %v5730 = vunpack.c.l.b16 %v5217
        %v5731 = vunpack.c.l.b16 %v5218
        %v5732 = vunpack.c.l.b16 %v5219
        %v5733 = vunpack.c.l.b16 %v5220
        %v5734 = vunpack.c.l.b16 %v5221
        %v5735 = vunpack.c.l.b16 %v5222
        %v5736 = vunpack.c.l.b16 %v5223
        %v5737 = vunpack.c.l.b16 %v5224
        %v5738 = vunpack.c.l.b16 %v5225
        %v5739 = vunpack.c.l.b16 %v5226
        %v5740 = vunpack.c.l.b16 %v5227
        %v5741 = vunpack.c.l.b16 %v5228
        %v5742 = vunpack.c.l.b16 %v5229
        %v5743 = vunpack.c.l.b16 %v5230
        %v5744 = vunpack.c.l.b16 %v5231
        %v5745 = vunpack.c.l.b16 %v5232
        %v5746 = vunpack.c.l.b16 %v5233
        %v5747 = vunpack.c.l.b16 %v5234
        %v5748 = vunpack.c.l.b16 %v5235
        %v5749 = vunpack.c.l.b16 %v5236
        %v5750 = vunpack.c.l.b16 %v5237
        %v5751 = vunpack.c.l.b16 %v5238
        %v5752 = vunpack.c.l.b16 %v5239
        %v5753 = vunpack.c.l.b16 %v5240
        %v5754 = vunpack.c.l.b16 %v5241
        %v5755 = vunpack.c.l.b16 %v5242
        %v5756 = vunpack.c.l.b16 %v5243
        %v5757 = vunpack.c.l.b16 %v5244
        %v5758 = vunpack.c.l.b16 %v5245
        %v5759 = vunpack.c.l.b16 %v5246
        %v5760 = vunpack.c.l.b16 %v5247
        %v5761 = vunpack.c.l.b16 %v5248
        %v5762 = vunpack.c.l.b16 %v5249
        %v5763 = vunpack.c.l.b16 %v5250
        %v5764 = vunpack.c.l.b16 %v5251
        %v5765 = vpack.c.b16 %v5510, %v5509
        %v5766 = vpack.c.b16 %v5512, %v5511
        %v5767 = vpack.c.b16 %v5514, %v5513
        %v5768 = vpack.c.b16 %v5516, %v5515
        %v5769 = vpack.c.b16 %v5518, %v5517
        %v5770 = vpack.c.b16 %v5520, %v5519
        %v5771 = vpack.c.b16 %v5522, %v5521
        %v5772 = vpack.c.b16 %v5524, %v5523
        %v5773 = vpack.c.b16 %v5526, %v5525
        %v5774 = vpack.c.b16 %v5528, %v5527
        %v5775 = vpack.c.b16 %v5530, %v5529
        %v5776 = vpack.c.b16 %v5532, %v5531
        %v5777 = vpack.c.b16 %v5534, %v5533
        %v5778 = vpack.c.b16 %v5536, %v5535
        %v5779 = vpack.c.b16 %v5538, %v5537
        %v5780 = vpack.c.b16 %v5540, %v5539
        %v5781 = vpack.c.b16 %v5542, %v5541
        %v5782 = vpack.c.b16 %v5544, %v5543
        %v5783 = vpack.c.b16 %v5546, %v5545
        %v5784 = vpack.c.b16 %v5548, %v5547
        %v5785 = vpack.c.b16 %v5550, %v5549
        %v5786 = vpack.c.b16 %v5552, %v5551
        %v5787 = vpack.c.b16 %v5554, %v5553
        %v5788 = vpack.c.b16 %v5556, %v5555
        %v5789 = vpack.c.b16 %v5558, %v5557
        %v5790 = vpack.c.b16 %v5560, %v5559
        %v5791 = vpack.c.b16 %v5562, %v5561
        %v5792 = vpack.c.b16 %v5564, %v5563
        %v5793 = vpack.c.b16 %v5566, %v5565
        %v5794 = vpack.c.b16 %v5568, %v5567
        %v5795 = vpack.c.b16 %v5570, %v5569
        %v5796 = vpack.c.b16 %v5572, %v5571
        %v5797 = vpack.c.b16 %v5574, %v5573
        %v5798 = vpack.c.b16 %v5576, %v5575
        %v5799 = vpack.c.b16 %v5578, %v5577
        %v5800 = vpack.c.b16 %v5580, %v5579
        %v5801 = vpack.c.b16 %v5582, %v5581
        %v5802 = vpack.c.b16 %v5584, %v5583
        %v5803 = vpack.c.b16 %v5586, %v5585
        %v5804 = vpack.c.b16 %v5588, %v5587
        %v5805 = vpack.c.b16 %v5590, %v5589
        %v5806 = vpack.c.b16 %v5592, %v5591
        %v5807 = vpack.c.b16 %v5594, %v5593
        %v5808 = vpack.c.b16 %v5596, %v5595
        %v5809 = vpack.c.b16 %v5598, %v5597
        %v5810 = vpack.c.b16 %v5600, %v5599
        %v5811 = vpack.c.b16 %v5602, %v5601
        %v5812 = vpack.c.b16 %v5604, %v5603
        %v5813 = vpack.c.b16 %v5606, %v5605
        %v5814 = vpack.c.b16 %v5608, %v5607
        %v5815 = vpack.c.b16 %v5610, %v5609
        %v5816 = vpack.c.b16 %v5612, %v5611
        %v5817 = vpack.c.b16 %v5614, %v5613
        %v5818 = vpack.c.b16 %v5616, %v5615
        %v5819 = vpack.c.b16 %v5618, %v5617
        %v5820 = vpack.c.b16 %v5620, %v5619
        %v5821 = vpack.c.b16 %v5622, %v5621
        %v5822 = vpack.c.b16 %v5624, %v5623
        %v5823 = vpack.c.b16 %v5626, %v5625
        %v5824 = vpack.c.b16 %v5628, %v5627
        %v5825 = vpack.c.b16 %v5630, %v5629
        %v5826 = vpack.c.b16 %v5632, %v5631
        %v5827 = vpack.c.b16 %v5634, %v5633
        %v5828 = vpack.c.b16 %v5636, %v5635
        %v5829 = vpack.c.b16 %v5638, %v5637
        %v5830 = vpack.c.b16 %v5640, %v5639
        %v5831 = vpack.c.b16 %v5642, %v5641
        %v5832 = vpack.c.b16 %v5644, %v5643
        %v5833 = vpack.c.b16 %v5646, %v5645
        %v5834 = vpack.c.b16 %v5648, %v5647
        %v5835 = vpack.c.b16 %v5650, %v5649
        %v5836 = vpack.c.b16 %v5652, %v5651
        %v5837 = vpack.c.b16 %v5654, %v5653
        %v5838 = vpack.c.b16 %v5656, %v5655
        %v5839 = vpack.c.b16 %v5658, %v5657
        %v5840 = vpack.c.b16 %v5660, %v5659
        %v5841 = vpack.c.b16 %v5662, %v5661
        %v5842 = vpack.c.b16 %v5664, %v5663
        %v5843 = vpack.c.b16 %v5666, %v5665
        %v5844 = vpack.c.b16 %v5668, %v5667
        %v5845 = vpack.c.b16 %v5670, %v5669
        %v5846 = vpack.c.b16 %v5672, %v5671
        %v5847 = vpack.c.b16 %v5674, %v5673
        %v5848 = vpack.c.b16 %v5676, %v5675
        %v5849 = vpack.c.b16 %v5678, %v5677
        %v5850 = vpack.c.b16 %v5680, %v5679
        %v5851 = vpack.c.b16 %v5682, %v5681
        %v5852 = vpack.c.b16 %v5684, %v5683
        %v5853 = vpack.c.b16 %v5686, %v5685
        %v5854 = vpack.c.b16 %v5688, %v5687
        %v5855 = vpack.c.b16 %v5690, %v5689
        %v5856 = vpack.c.b16 %v5692, %v5691
        %v5857 = vpack.c.b16 %v5694, %v5693
        %v5858 = vpack.c.b16 %v5696, %v5695
        %v5859 = vpack.c.b16 %v5698, %v5697
        %v5860 = vpack.c.b16 %v5700, %v5699
        %v5861 = vpack.c.b16 %v5702, %v5701
        %v5862 = vpack.c.b16 %v5704, %v5703
        %v5863 = vpack.c.b16 %v5706, %v5705
        %v5864 = vpack.c.b16 %v5708, %v5707
        %v5865 = vpack.c.b16 %v5710, %v5709
        %v5866 = vpack.c.b16 %v5712, %v5711
        %v5867 = vpack.c.b16 %v5714, %v5713
        %v5868 = vpack.c.b16 %v5716, %v5715
        %v5869 = vpack.c.b16 %v5718, %v5717
        %v5870 = vpack.c.b16 %v5720, %v5719
        %v5871 = vpack.c.b16 %v5722, %v5721
        %v5872 = vpack.c.b16 %v5724, %v5723
        %v5873 = vpack.c.b16 %v5726, %v5725
        %v5874 = vpack.c.b16 %v5728, %v5727
        %v5875 = vpack.c.b16 %v5730, %v5729
        %v5876 = vpack.c.b16 %v5732, %v5731
        %v5877 = vpack.c.b16 %v5734, %v5733
        %v5878 = vpack.c.b16 %v5736, %v5735
        %v5879 = vpack.c.b16 %v5738, %v5737
        %v5880 = vpack.c.b16 %v5740, %v5739
        %v5881 = vpack.c.b16 %v5742, %v5741
        %v5882 = vpack.c.b16 %v5744, %v5743
        %v5883 = vpack.c.b16 %v5746, %v5745
        %v5884 = vpack.c.b16 %v5748, %v5747
        %v5885 = vpack.c.b16 %v5750, %v5749
        %v5886 = vpack.c.b16 %v5752, %v5751
        %v5887 = vpack.c.b16 %v5754, %v5753
        %v5888 = vpack.c.b16 %v5756, %v5755
        %v5889 = vpack.c.b16 %v5758, %v5757
        %v5890 = vpack.c.b16 %v5760, %v5759
        %v5891 = vpack.c.b16 %v5762, %v5761
        %v5892 = vpack.c.b16 %v5764, %v5763
        %6021 = vmatprep.subr.bf16.mxu0 0
        %6022 = vmatpush1.bf16.msra.mxu0 %v5765
        %6023 = vmatprep.subr.bf16.mxu0 0
        %6024 = vmatpush1.bf16.msra.mxu0 %v5766
        %6025 = vmatprep.subr.bf16.mxu0 0
        %6026 = vmatpush1.bf16.msra.mxu0 %v5767
        %6027 = vmatprep.subr.bf16.mxu0 0
        %6028 = vmatpush1.bf16.msra.mxu0 %v5768
        %6029 = vmatprep.subr.bf16.mxu0 0
        %6030 = vmatpush1.bf16.msra.mxu0 %v5769
        %6031 = vmatprep.subr.bf16.mxu0 0
        %6032 = vmatpush1.bf16.msra.mxu0 %v5770
        %6033 = vmatprep.subr.bf16.mxu0 0
        %6034 = vmatpush1.bf16.msra.mxu0 %v5771
        %6035 = vmatprep.subr.bf16.mxu0 0
        %6036 = vmatpush1.bf16.msra.mxu0 %v5772
        %6037 = vmatprep.subr.bf16.mxu0 0
        %6038 = vmatpush1.bf16.msra.mxu0 %v5773
        %6039 = vmatprep.subr.bf16.mxu0 0
        %6040 = vmatpush1.bf16.msra.mxu0 %v5774
        %6041 = vmatprep.subr.bf16.mxu0 0
        %6042 = vmatpush1.bf16.msra.mxu0 %v5775
        %6043 = vmatprep.subr.bf16.mxu0 0
        %6044 = vmatpush1.bf16.msra.mxu0 %v5776
        %6045 = vmatprep.subr.bf16.mxu0 0
        %6046 = vmatpush1.bf16.msra.mxu0 %v5777
        %6047 = vmatprep.subr.bf16.mxu0 0
        %6048 = vmatpush1.bf16.msra.mxu0 %v5778
        %6049 = vmatprep.subr.bf16.mxu0 0
        %6050 = vmatpush1.bf16.msra.mxu0 %v5779
        %6051 = vmatprep.subr.bf16.mxu0 0
        %6052 = vmatpush1.bf16.msra.mxu0 %v5780
        %6053 = vmatprep.mubr.bf16.mxu0 %v4981
        %6054 = vmatmul.mubr.bf16.gmra.mrb[0].mxu0 %v4980
        %v6055 = vpop.f32.mrb[0].mxu0
        %v6056 = vadd.f32 %v5252, %v6055
        %v6057 = vpop.f32.mrb[0].mxu0
        %v6058 = vpop.f32.mrb[0].mxu0
        %v6059 = vpop.f32.mrb[0].mxu0
        %6060 = vdwg.mxu0
        %6061 = vmatprep.subr.bf16.mxu0 0
        %6062 = vmatpush1.bf16.msra.mxu0 %v5781
        %6063 = vmatprep.subr.bf16.mxu0 0
        %6064 = vmatpush1.bf16.msra.mxu0 %v5782
        %6065 = vmatprep.subr.bf16.mxu0 0
        %6066 = vmatpush1.bf16.msra.mxu0 %v5783
        %6067 = vmatprep.subr.bf16.mxu0 0
        %6068 = vmatpush1.bf16.msra.mxu0 %v5784
        %6069 = vmatprep.subr.bf16.mxu0 0
        %6070 = vmatpush1.bf16.msra.mxu0 %v5785
        %6071 = vmatprep.subr.bf16.mxu0 0
        %6072 = vmatpush1.bf16.msra.mxu0 %v5786
        %6073 = vmatprep.subr.bf16.mxu0 0
        %6074 = vmatpush1.bf16.msra.mxu0 %v5787
        %6075 = vmatprep.subr.bf16.mxu0 0
        %6076 = vmatpush1.bf16.msra.mxu0 %v5788
        %6077 = vmatprep.subr.bf16.mxu0 0
        %6078 = vmatpush1.bf16.msra.mxu0 %v5789
        %6079 = vmatprep.subr.bf16.mxu0 0
        %6080 = vmatpush1.bf16.msra.mxu0 %v5790
        %6081 = vmatprep.subr.bf16.mxu0 0
        %6082 = vmatpush1.bf16.msra.mxu0 %v5791
        %6083 = vmatprep.subr.bf16.mxu0 0
        %6084 = vmatpush1.bf16.msra.mxu0 %v5792
        %6085 = vmatprep.subr.bf16.mxu0 0
        %6086 = vmatpush1.bf16.msra.mxu0 %v5793
        %6087 = vmatprep.subr.bf16.mxu0 0
        %6088 = vmatpush1.bf16.msra.mxu0 %v5794
        %6089 = vmatprep.subr.bf16.mxu0 0
        %6090 = vmatpush1.bf16.msra.mxu0 %v5795
        %6091 = vmatprep.subr.bf16.mxu0 0
        %6092 = vmatpush1.bf16.msra.mxu0 %v5796
        %6093 = vmatprep.mubr.bf16.mxu0 %v4983
        %6094 = vmatmul.mubr.bf16.gmra.mrb[0].mxu0 %v4982
        %v6095 = vpop.f32.mrb[0].mxu0
        %v6096 = vadd.f32 %v6056, %v6095
        %v6097 = vpop.f32.mrb[0].mxu0
        %v6098 = vpop.f32.mrb[0].mxu0
        %v6099 = vpop.f32.mrb[0].mxu0
        %6100 = vdwg.mxu0
        %6101 = vmatprep.subr.bf16.mxu0 0
        %6102 = vmatpush1.bf16.msra.mxu0 %v5797
        %6103 = vmatprep.subr.bf16.mxu0 0
        %6104 = vmatpush1.bf16.msra.mxu0 %v5798
        %6105 = vmatprep.subr.bf16.mxu0 0
        %6106 = vmatpush1.bf16.msra.mxu0 %v5799
        %6107 = vmatprep.subr.bf16.mxu0 0
        %6108 = vmatpush1.bf16.msra.mxu0 %v5800
        %6109 = vmatprep.subr.bf16.mxu0 0
        %6110 = vmatpush1.bf16.msra.mxu0 %v5801
        %6111 = vmatprep.subr.bf16.mxu0 0
        %6112 = vmatpush1.bf16.msra.mxu0 %v5802
        %6113 = vmatprep.subr.bf16.mxu0 0
        %6114 = vmatpush1.bf16.msra.mxu0 %v5803
        %6115 = vmatprep.subr.bf16.mxu0 0
        %6116 = vmatpush1.bf16.msra.mxu0 %v5804
        %6117 = vmatprep.subr.bf16.mxu0 0
        %6118 = vmatpush1.bf16.msra.mxu0 %v5805
        %6119 = vmatprep.subr.bf16.mxu0 0
        %6120 = vmatpush1.bf16.msra.mxu0 %v5806
        %6121 = vmatprep.subr.bf16.mxu0 0
        %6122 = vmatpush1.bf16.msra.mxu0 %v5807
        %6123 = vmatprep.subr.bf16.mxu0 0
        %6124 = vmatpush1.bf16.msra.mxu0 %v5808
        %6125 = vmatprep.subr.bf16.mxu0 0
        %6126 = vmatpush1.bf16.msra.mxu0 %v5809
        %6127 = vmatprep.subr.bf16.mxu0 0
        %6128 = vmatpush1.bf16.msra.mxu0 %v5810
        %6129 = vmatprep.subr.bf16.mxu0 0
        %6130 = vmatpush1.bf16.msra.mxu0 %v5811
        %6131 = vmatprep.subr.bf16.mxu0 0
        %6132 = vmatpush1.bf16.msra.mxu0 %v5812
        %6133 = vmatprep.mubr.bf16.mxu0 %v4985
        %6134 = vmatmul.mubr.bf16.gmra.mrb[0].mxu0 %v4984
        %v6135 = vpop.f32.mrb[0].mxu0
        %v6136 = vadd.f32 %v6096, %v6135
        %v6137 = vpop.f32.mrb[0].mxu0
        %v6138 = vpop.f32.mrb[0].mxu0
        %v6139 = vpop.f32.mrb[0].mxu0
        %6140 = vdwg.mxu0
        %6141 = vmatprep.subr.bf16.mxu0 0
        %6142 = vmatpush1.bf16.msra.mxu0 %v5813
        %6143 = vmatprep.subr.bf16.mxu0 0
        %6144 = vmatpush1.bf16.msra.mxu0 %v5814
        %6145 = vmatprep.subr.bf16.mxu0 0
        %6146 = vmatpush1.bf16.msra.mxu0 %v5815
        %6147 = vmatprep.subr.bf16.mxu0 0
        %6148 = vmatpush1.bf16.msra.mxu0 %v5816
        %6149 = vmatprep.subr.bf16.mxu0 0
        %6150 = vmatpush1.bf16.msra.mxu0 %v5817
        %6151 = vmatprep.subr.bf16.mxu0 0
        %6152 = vmatpush1.bf16.msra.mxu0 %v5818
        %6153 = vmatprep.subr.bf16.mxu0 0
        %6154 = vmatpush1.bf16.msra.mxu0 %v5819
        %6155 = vmatprep.subr.bf16.mxu0 0
        %6156 = vmatpush1.bf16.msra.mxu0 %v5820
        %6157 = vmatprep.subr.bf16.mxu0 0
        %6158 = vmatpush1.bf16.msra.mxu0 %v5821
        %6159 = vmatprep.subr.bf16.mxu0 0
        %6160 = vmatpush1.bf16.msra.mxu0 %v5822
        %6161 = vmatprep.subr.bf16.mxu0 0
        %6162 = vmatpush1.bf16.msra.mxu0 %v5823
        %6163 = vmatprep.subr.bf16.mxu0 0
        %6164 = vmatpush1.bf16.msra.mxu0 %v5824
        %6165 = vmatprep.subr.bf16.mxu0 0
        %6166 = vmatpush1.bf16.msra.mxu0 %v5825
        %6167 = vmatprep.subr.bf16.mxu0 0
        %6168 = vmatpush1.bf16.msra.mxu0 %v5826
        %6169 = vmatprep.subr.bf16.mxu0 0
        %6170 = vmatpush1.bf16.msra.mxu0 %v5827
        %6171 = vmatprep.subr.bf16.mxu0 0
        %6172 = vmatpush1.bf16.msra.mxu0 %v5828
        %6173 = vmatprep.mubr.bf16.mxu0 %v4987
        %6174 = vmatmul.mubr.bf16.gmra.mrb[0].mxu0 %v4986
        %v6175 = vpop.f32.mrb[0].mxu0
        %v6176 = vadd.f32 %v6136, %v6175
        %v6177 = vpop.f32.mrb[0].mxu0
        %v6178 = vpop.f32.mrb[0].mxu0
        %v6179 = vpop.f32.mrb[0].mxu0
        %6180 = vdwg.mxu0
        %6181 = vmatprep.subr.bf16.mxu0 0
        %6182 = vmatpush1.bf16.msra.mxu0 %v5829
        %6183 = vmatprep.subr.bf16.mxu0 0
        %6184 = vmatpush1.bf16.msra.mxu0 %v5830
        %6185 = vmatprep.subr.bf16.mxu0 0
        %6186 = vmatpush1.bf16.msra.mxu0 %v5831
        %6187 = vmatprep.subr.bf16.mxu0 0
        %6188 = vmatpush1.bf16.msra.mxu0 %v5832
        %6189 = vmatprep.subr.bf16.mxu0 0
        %6190 = vmatpush1.bf16.msra.mxu0 %v5833
        %6191 = vmatprep.subr.bf16.mxu0 0
        %6192 = vmatpush1.bf16.msra.mxu0 %v5834
        %6193 = vmatprep.subr.bf16.mxu0 0
        %6194 = vmatpush1.bf16.msra.mxu0 %v5835
        %6195 = vmatprep.subr.bf16.mxu0 0
        %6196 = vmatpush1.bf16.msra.mxu0 %v5836
        %6197 = vmatprep.subr.bf16.mxu0 0
        %6198 = vmatpush1.bf16.msra.mxu0 %v5837
        %6199 = vmatprep.subr.bf16.mxu0 0
        %6200 = vmatpush1.bf16.msra.mxu0 %v5838
        %6201 = vmatprep.subr.bf16.mxu0 0
        %6202 = vmatpush1.bf16.msra.mxu0 %v5839
        %6203 = vmatprep.subr.bf16.mxu0 0
        %6204 = vmatpush1.bf16.msra.mxu0 %v5840
        %6205 = vmatprep.subr.bf16.mxu0 0
        %6206 = vmatpush1.bf16.msra.mxu0 %v5841
        %6207 = vmatprep.subr.bf16.mxu0 0
        %6208 = vmatpush1.bf16.msra.mxu0 %v5842
        %6209 = vmatprep.subr.bf16.mxu0 0
        %6210 = vmatpush1.bf16.msra.mxu0 %v5843
        %6211 = vmatprep.subr.bf16.mxu0 0
        %6212 = vmatpush1.bf16.msra.mxu0 %v5844
        %6213 = vmatprep.mubr.bf16.mxu0 %v4989
        %6214 = vmatmul.mubr.bf16.gmra.mrb[0].mxu0 %v4988
        %v6215 = vpop.f32.mrb[0].mxu0
        %v6216 = vadd.f32 %v6176, %v6215
        %v6217 = vpop.f32.mrb[0].mxu0
        %v6218 = vpop.f32.mrb[0].mxu0
        %v6219 = vpop.f32.mrb[0].mxu0
        %6220 = vdwg.mxu0
        %6221 = vmatprep.subr.bf16.mxu0 0
        %6222 = vmatpush1.bf16.msra.mxu0 %v5845
        %6223 = vmatprep.subr.bf16.mxu0 0
        %6224 = vmatpush1.bf16.msra.mxu0 %v5846
        %6225 = vmatprep.subr.bf16.mxu0 0
        %6226 = vmatpush1.bf16.msra.mxu0 %v5847
        %6227 = vmatprep.subr.bf16.mxu0 0
        %6228 = vmatpush1.bf16.msra.mxu0 %v5848
        %6229 = vmatprep.subr.bf16.mxu0 0
        %6230 = vmatpush1.bf16.msra.mxu0 %v5849
        %6231 = vmatprep.subr.bf16.mxu0 0
        %6232 = vmatpush1.bf16.msra.mxu0 %v5850
        %6233 = vmatprep.subr.bf16.mxu0 0
        %6234 = vmatpush1.bf16.msra.mxu0 %v5851
        %6235 = vmatprep.subr.bf16.mxu0 0
        %6236 = vmatpush1.bf16.msra.mxu0 %v5852
        %6237 = vmatprep.subr.bf16.mxu0 0
        %6238 = vmatpush1.bf16.msra.mxu0 %v5853
        %6239 = vmatprep.subr.bf16.mxu0 0
        %6240 = vmatpush1.bf16.msra.mxu0 %v5854
        %6241 = vmatprep.subr.bf16.mxu0 0
        %6242 = vmatpush1.bf16.msra.mxu0 %v5855
        %6243 = vmatprep.subr.bf16.mxu0 0
        %6244 = vmatpush1.bf16.msra.mxu0 %v5856
        %6245 = vmatprep.subr.bf16.mxu0 0
        %6246 = vmatpush1.bf16.msra.mxu0 %v5857
        %6247 = vmatprep.subr.bf16.mxu0 0
        %6248 = vmatpush1.bf16.msra.mxu0 %v5858
        %6249 = vmatprep.subr.bf16.mxu0 0
        %6250 = vmatpush1.bf16.msra.mxu0 %v5859
        %6251 = vmatprep.subr.bf16.mxu0 0
        %6252 = vmatpush1.bf16.msra.mxu0 %v5860
        %6253 = vmatprep.mubr.bf16.mxu0 %v4991
        %6254 = vmatmul.mubr.bf16.gmra.mrb[0].mxu0 %v4990
        %v6255 = vpop.f32.mrb[0].mxu0
        %v6256 = vadd.f32 %v6216, %v6255
        %v6257 = vpop.f32.mrb[0].mxu0
        %v6258 = vpop.f32.mrb[0].mxu0
        %v6259 = vpop.f32.mrb[0].mxu0
        %6260 = vdwg.mxu0
        %6261 = vmatprep.subr.bf16.mxu0 0
        %6262 = vmatpush1.bf16.msra.mxu0 %v5861
        %6263 = vmatprep.subr.bf16.mxu0 0
        %6264 = vmatpush1.bf16.msra.mxu0 %v5862
        %6265 = vmatprep.subr.bf16.mxu0 0
        %6266 = vmatpush1.bf16.msra.mxu0 %v5863
        %6267 = vmatprep.subr.bf16.mxu0 0
        %6268 = vmatpush1.bf16.msra.mxu0 %v5864
        %6269 = vmatprep.subr.bf16.mxu0 0
        %6270 = vmatpush1.bf16.msra.mxu0 %v5865
        %6271 = vmatprep.subr.bf16.mxu0 0
        %6272 = vmatpush1.bf16.msra.mxu0 %v5866
        %6273 = vmatprep.subr.bf16.mxu0 0
        %6274 = vmatpush1.bf16.msra.mxu0 %v5867
        %6275 = vmatprep.subr.bf16.mxu0 0
        %6276 = vmatpush1.bf16.msra.mxu0 %v5868
        %6277 = vmatprep.subr.bf16.mxu0 0
        %6278 = vmatpush1.bf16.msra.mxu0 %v5869
        %6279 = vmatprep.subr.bf16.mxu0 0
        %6280 = vmatpush1.bf16.msra.mxu0 %v5870
        %6281 = vmatprep.subr.bf16.mxu0 0
        %6282 = vmatpush1.bf16.msra.mxu0 %v5871
        %6283 = vmatprep.subr.bf16.mxu0 0
        %6284 = vmatpush1.bf16.msra.mxu0 %v5872
        %6285 = vmatprep.subr.bf16.mxu0 0
        %6286 = vmatpush1.bf16.msra.mxu0 %v5873
        %6287 = vmatprep.subr.bf16.mxu0 0
        %6288 = vmatpush1.bf16.msra.mxu0 %v5874
        %6289 = vmatprep.subr.bf16.mxu0 0
        %6290 = vmatpush1.bf16.msra.mxu0 %v5875
        %6291 = vmatprep.subr.bf16.mxu0 0
        %6292 = vmatpush1.bf16.msra.mxu0 %v5876
        %6293 = vmatprep.mubr.bf16.mxu0 %v4993
        %6294 = vmatmul.mubr.bf16.gmra.mrb[0].mxu0 %v4992
        %v6295 = vpop.f32.mrb[0].mxu0
        %v6296 = vadd.f32 %v6256, %v6295
        %v6297 = vpop.f32.mrb[0].mxu0
        %v6298 = vpop.f32.mrb[0].mxu0
        %v6299 = vpop.f32.mrb[0].mxu0
        %6300 = vdwg.mxu0
        %6301 = vmatprep.subr.bf16.mxu0 0
        %6302 = vmatpush1.bf16.msra.mxu0 %v5877
        %6303 = vmatprep.subr.bf16.mxu0 0
        %6304 = vmatpush1.bf16.msra.mxu0 %v5878
        %6305 = vmatprep.subr.bf16.mxu0 0
        %6306 = vmatpush1.bf16.msra.mxu0 %v5879
        %6307 = vmatprep.subr.bf16.mxu0 0
        %6308 = vmatpush1.bf16.msra.mxu0 %v5880
        %6309 = vmatprep.subr.bf16.mxu0 0
        %6310 = vmatpush1.bf16.msra.mxu0 %v5881
        %6311 = vmatprep.subr.bf16.mxu0 0
        %6312 = vmatpush1.bf16.msra.mxu0 %v5882
        %6313 = vmatprep.subr.bf16.mxu0 0
        %6314 = vmatpush1.bf16.msra.mxu0 %v5883
        %6315 = vmatprep.subr.bf16.mxu0 0
        %6316 = vmatpush1.bf16.msra.mxu0 %v5884
        %6317 = vmatprep.subr.bf16.mxu0 0
        %6318 = vmatpush1.bf16.msra.mxu0 %v5885
        %6319 = vmatprep.subr.bf16.mxu0 0
        %6320 = vmatpush1.bf16.msra.mxu0 %v5886
        %6321 = vmatprep.subr.bf16.mxu0 0
        %6322 = vmatpush1.bf16.msra.mxu0 %v5887
        %6323 = vmatprep.subr.bf16.mxu0 0
        %6324 = vmatpush1.bf16.msra.mxu0 %v5888
        %6325 = vmatprep.subr.bf16.mxu0 0
        %6326 = vmatpush1.bf16.msra.mxu0 %v5889
        %6327 = vmatprep.subr.bf16.mxu0 0
        %6328 = vmatpush1.bf16.msra.mxu0 %v5890
        %6329 = vmatprep.subr.bf16.mxu0 0
        %6330 = vmatpush1.bf16.msra.mxu0 %v5891
        %6331 = vmatprep.subr.bf16.mxu0 0
        %6332 = vmatpush1.bf16.msra.mxu0 %v5892
        %6333 = vmatprep.mubr.bf16.mxu0 %v4995
        %6334 = vmatmul.mubr.bf16.gmra.mrb[0].mxu0 %v4994
        %v6335 = vpop.f32.mrb[0].mxu0
        %v6336 = vadd.f32 %v6296, %v6335
        %v6337 = vpop.f32.mrb[0].mxu0
        %v6338 = vpop.f32.mrb[0].mxu0
        %v6339 = vpop.f32.mrb[0].mxu0
        %6340 = vdwg.mxu0
        %v6341 = vxor.u32 %v6336, 2147483648
        %v6342 = vmul.f32 %v6341, 1.442695
        %v6343 = vpow.pop %v6342
        %v6344 = vadd.f32 %v6343, 1.0
        %v6345 = vrcp.pop %v6344
        %v6346 = vmul.f32 1.0, %v6345
        %6347 = vst [vmem:[%s767] sm:$0x1] %v6346
        %s6348 = scalar_lea.vmem %s762, 64
        %6349 = vst [vmem:[%s6348] sm:$0xff] %v4933
        %6350 = vst [vmem:[%s6348 + $0x8] sm:$0xff] %v4935
        %6351 = vst [vmem:[%s6348 + $0x10] sm:$0xff] %v4937
        %6352 = vst [vmem:[%s6348 + $0x18] sm:$0xff] %v4939
        %6353 = vst [vmem:[%s6348 + $0x20] sm:$0xff] %v4941
        %6354 = vst [vmem:[%s6348 + $0x28] sm:$0xff] %v4943
        %6355 = vst [vmem:[%s6348 + $0x30] sm:$0xff] %v4945
        %6356 = vst [vmem:[%s6348 + $0x38] sm:$0xff] %v4947
        %v6365 = vrot.slane %v4933, 1
        %v6366 = vrot.slane %v4935, 1
        %v6367 = vrot.slane %v4937, 1
        %v6368 = vrot.slane %v4939, 1
        %v6369 = vrot.slane %v4941, 1
        %v6370 = vrot.slane %v4943, 1
        %v6371 = vrot.slane %v4945, 1
        %v6372 = vrot.slane %v4947, 1
        %v6381 = vpack.c.bf16 %v4933, %v4933
        %v6382 = vpack.c.bf16 %v4935, %v4935
        %v6383 = vpack.c.bf16 %v4937, %v4937
        %v6384 = vpack.c.bf16 %v4939, %v4939
        %v6385 = vpack.c.bf16 %v4941, %v4941
        %v6386 = vpack.c.bf16 %v4943, %v4943
        %v6387 = vpack.c.bf16 %v4945, %v4945
        %v6388 = vpack.c.bf16 %v4947, %v4947
        %v6389 = vpack.c.bf16 %v6365, %v6365
        %v6390 = vpack.c.bf16 %v6366, %v6366
        %v6391 = vpack.c.bf16 %v6367, %v6367
        %v6392 = vpack.c.bf16 %v6368, %v6368
        %v6393 = vpack.c.bf16 %v6369, %v6369
        %v6394 = vpack.c.bf16 %v6370, %v6370
        %v6395 = vpack.c.bf16 %v6371, %v6371
        %v6396 = vpack.c.bf16 %v6372, %v6372
        %v6397 = vld [vmem:[%s6] sm:$0xf]
        %v6398 = vld [vmem:[%s6 + $0x4] sm:$0xf]
        %v6399 = vld [vmem:[%s6 + $0x8] sm:$0xf]
        %v6400 = vld [vmem:[%s6 + $0xc] sm:$0xf]
        %v6401 = vld [vmem:[%s6 + $0x10] sm:$0xf]
        %v6402 = vld [vmem:[%s6 + $0x14] sm:$0xf]
        %v6403 = vld [vmem:[%s6 + $0x18] sm:$0xf]
        %v6404 = vld [vmem:[%s6 + $0x1c] sm:$0xf]
        %v6405 = vld [vmem:[%s6 + $0x20] sm:$0xf]
        %v6406 = vld [vmem:[%s6 + $0x24] sm:$0xf]
        %v6407 = vld [vmem:[%s6 + $0x28] sm:$0xf]
        %v6408 = vld [vmem:[%s6 + $0x2c] sm:$0xf]
        %v6409 = vld [vmem:[%s6 + $0x30] sm:$0xf]
        %v6410 = vld [vmem:[%s6 + $0x34] sm:$0xf]
        %v6411 = vld [vmem:[%s6 + $0x38] sm:$0xf]
        %v6412 = vld [vmem:[%s6 + $0x3c] sm:$0xf]
        %v6413 = vld [vmem:[%s6 + $0x40] sm:$0xf]
        %v6414 = vld [vmem:[%s6 + $0x44] sm:$0xf]
        %v6415 = vld [vmem:[%s6 + $0x48] sm:$0xf]
        %v6416 = vld [vmem:[%s6 + $0x4c] sm:$0xf]
        %v6417 = vld [vmem:[%s6 + $0x50] sm:$0xf]
        %v6418 = vld [vmem:[%s6 + $0x54] sm:$0xf]
        %v6419 = vld [vmem:[%s6 + $0x58] sm:$0xf]
        %v6420 = vld [vmem:[%s6 + $0x5c] sm:$0xf]
        %v6421 = vld [vmem:[%s6 + $0x60] sm:$0xf]
        %v6422 = vld [vmem:[%s6 + $0x64] sm:$0xf]
        %v6423 = vld [vmem:[%s6 + $0x68] sm:$0xf]
        %v6424 = vld [vmem:[%s6 + $0x6c] sm:$0xf]
        %v6425 = vld [vmem:[%s6 + $0x70] sm:$0xf]
        %v6426 = vld [vmem:[%s6 + $0x74] sm:$0xf]
        %v6427 = vld [vmem:[%s6 + $0x78] sm:$0xf]
        %v6428 = vld [vmem:[%s6 + $0x7c] sm:$0xf]
        %v6429 = vld [vmem:[%s6 + $0x80] sm:$0xf]
        %v6430 = vld [vmem:[%s6 + $0x84] sm:$0xf]
        %v6431 = vld [vmem:[%s6 + $0x88] sm:$0xf]
        %v6432 = vld [vmem:[%s6 + $0x8c] sm:$0xf]
        %v6433 = vld [vmem:[%s6 + $0x90] sm:$0xf]
        %v6434 = vld [vmem:[%s6 + $0x94] sm:$0xf]
        %v6435 = vld [vmem:[%s6 + $0x98] sm:$0xf]
        %v6436 = vld [vmem:[%s6 + $0x9c] sm:$0xf]
        %v6437 = vld [vmem:[%s6 + $0xa0] sm:$0xf]
        %v6438 = vld [vmem:[%s6 + $0xa4] sm:$0xf]
        %v6439 = vld [vmem:[%s6 + $0xa8] sm:$0xf]
        %v6440 = vld [vmem:[%s6 + $0xac] sm:$0xf]
        %v6441 = vld [vmem:[%s6 + $0xb0] sm:$0xf]
        %v6442 = vld [vmem:[%s6 + $0xb4] sm:$0xf]
        %v6443 = vld [vmem:[%s6 + $0xb8] sm:$0xf]
        %v6444 = vld [vmem:[%s6 + $0xbc] sm:$0xf]
        %v6445 = vld [vmem:[%s6 + $0xc0] sm:$0xf]
        %v6446 = vld [vmem:[%s6 + $0xc4] sm:$0xf]
        %v6447 = vld [vmem:[%s6 + $0xc8] sm:$0xf]
        %v6448 = vld [vmem:[%s6 + $0xcc] sm:$0xf]
        %v6449 = vld [vmem:[%s6 + $0xd0] sm:$0xf]
        %v6450 = vld [vmem:[%s6 + $0xd4] sm:$0xf]
        %v6451 = vld [vmem:[%s6 + $0xd8] sm:$0xf]
        %v6452 = vld [vmem:[%s6 + $0xdc] sm:$0xf]
        %v6453 = vld [vmem:[%s6 + $0xe0] sm:$0xf]
        %v6454 = vld [vmem:[%s6 + $0xe4] sm:$0xf]
        %v6455 = vld [vmem:[%s6 + $0xe8] sm:$0xf]
        %v6456 = vld [vmem:[%s6 + $0xec] sm:$0xf]
        %v6457 = vld [vmem:[%s6 + $0xf0] sm:$0xf]
        %v6458 = vld [vmem:[%s6 + $0xf4] sm:$0xf]
        %v6459 = vld [vmem:[%s6 + $0xf8] sm:$0xf]
        %v6460 = vld [vmem:[%s6 + $0xfc] sm:$0xf]
        %v6461 = vld [vmem:[%s6 + $0x100] sm:$0xf]
        %v6462 = vld [vmem:[%s6 + $0x104] sm:$0xf]
        %v6463 = vld [vmem:[%s6 + $0x108] sm:$0xf]
        %v6464 = vld [vmem:[%s6 + $0x10c] sm:$0xf]
        %v6465 = vld [vmem:[%s6 + $0x110] sm:$0xf]
        %v6466 = vld [vmem:[%s6 + $0x114] sm:$0xf]
        %v6467 = vld [vmem:[%s6 + $0x118] sm:$0xf]
        %v6468 = vld [vmem:[%s6 + $0x11c] sm:$0xf]
        %v6469 = vld [vmem:[%s6 + $0x120] sm:$0xf]
        %v6470 = vld [vmem:[%s6 + $0x124] sm:$0xf]
        %v6471 = vld [vmem:[%s6 + $0x128] sm:$0xf]
        %v6472 = vld [vmem:[%s6 + $0x12c] sm:$0xf]
        %v6473 = vld [vmem:[%s6 + $0x130] sm:$0xf]
        %v6474 = vld [vmem:[%s6 + $0x134] sm:$0xf]
        %v6475 = vld [vmem:[%s6 + $0x138] sm:$0xf]
        %v6476 = vld [vmem:[%s6 + $0x13c] sm:$0xf]
        %v6477 = vld [vmem:[%s6 + $0x140] sm:$0xf]
        %v6478 = vld [vmem:[%s6 + $0x144] sm:$0xf]
        %v6479 = vld [vmem:[%s6 + $0x148] sm:$0xf]
        %v6480 = vld [vmem:[%s6 + $0x14c] sm:$0xf]
        %v6481 = vld [vmem:[%s6 + $0x150] sm:$0xf]
        %v6482 = vld [vmem:[%s6 + $0x154] sm:$0xf]
        %v6483 = vld [vmem:[%s6 + $0x158] sm:$0xf]
        %v6484 = vld [vmem:[%s6 + $0x15c] sm:$0xf]
        %v6485 = vld [vmem:[%s6 + $0x160] sm:$0xf]
        %v6486 = vld [vmem:[%s6 + $0x164] sm:$0xf]
        %v6487 = vld [vmem:[%s6 + $0x168] sm:$0xf]
        %v6488 = vld [vmem:[%s6 + $0x16c] sm:$0xf]
        %v6489 = vld [vmem:[%s6 + $0x170] sm:$0xf]
        %v6490 = vld [vmem:[%s6 + $0x174] sm:$0xf]
        %v6491 = vld [vmem:[%s6 + $0x178] sm:$0xf]
        %v6492 = vld [vmem:[%s6 + $0x17c] sm:$0xf]
        %v6493 = vld [vmem:[%s6 + $0x180] sm:$0xf]
        %v6494 = vld [vmem:[%s6 + $0x184] sm:$0xf]
        %v6495 = vld [vmem:[%s6 + $0x188] sm:$0xf]
        %v6496 = vld [vmem:[%s6 + $0x18c] sm:$0xf]
        %v6497 = vld [vmem:[%s6 + $0x190] sm:$0xf]
        %v6498 = vld [vmem:[%s6 + $0x194] sm:$0xf]
        %v6499 = vld [vmem:[%s6 + $0x198] sm:$0xf]
        %v6500 = vld [vmem:[%s6 + $0x19c] sm:$0xf]
        %v6501 = vld [vmem:[%s6 + $0x1a0] sm:$0xf]
        %v6502 = vld [vmem:[%s6 + $0x1a4] sm:$0xf]
        %v6503 = vld [vmem:[%s6 + $0x1a8] sm:$0xf]
        %v6504 = vld [vmem:[%s6 + $0x1ac] sm:$0xf]
        %v6505 = vld [vmem:[%s6 + $0x1b0] sm:$0xf]
        %v6506 = vld [vmem:[%s6 + $0x1b4] sm:$0xf]
        %v6507 = vld [vmem:[%s6 + $0x1b8] sm:$0xf]
        %v6508 = vld [vmem:[%s6 + $0x1bc] sm:$0xf]
        %v6509 = vld [vmem:[%s6 + $0x1c0] sm:$0xf]
        %v6510 = vld [vmem:[%s6 + $0x1c4] sm:$0xf]
        %v6511 = vld [vmem:[%s6 + $0x1c8] sm:$0xf]
        %v6512 = vld [vmem:[%s6 + $0x1cc] sm:$0xf]
        %v6513 = vld [vmem:[%s6 + $0x1d0] sm:$0xf]
        %v6514 = vld [vmem:[%s6 + $0x1d4] sm:$0xf]
        %v6515 = vld [vmem:[%s6 + $0x1d8] sm:$0xf]
        %v6516 = vld [vmem:[%s6 + $0x1dc] sm:$0xf]
        %v6517 = vld [vmem:[%s6 + $0x1e0] sm:$0xf]
        %v6518 = vld [vmem:[%s6 + $0x1e4] sm:$0xf]
        %v6519 = vld [vmem:[%s6 + $0x1e8] sm:$0xf]
        %v6520 = vld [vmem:[%s6 + $0x1ec] sm:$0xf]
        %v6521 = vld [vmem:[%s6 + $0x1f0] sm:$0xf]
        %v6522 = vld [vmem:[%s6 + $0x1f4] sm:$0xf]
        %v6523 = vld [vmem:[%s6 + $0x1f8] sm:$0xf]
        %v6524 = vld [vmem:[%s6 + $0x1fc] sm:$0xf]
        %v6525 = vld [vmem:[%s6 + $0x200] sm:$0xf]
        %v6526 = vld [vmem:[%s6 + $0x204] sm:$0xf]
        %v6527 = vld [vmem:[%s6 + $0x208] sm:$0xf]
        %v6528 = vld [vmem:[%s6 + $0x20c] sm:$0xf]
        %v6529 = vld [vmem:[%s6 + $0x210] sm:$0xf]
        %v6530 = vld [vmem:[%s6 + $0x214] sm:$0xf]
        %v6531 = vld [vmem:[%s6 + $0x218] sm:$0xf]
        %v6532 = vld [vmem:[%s6 + $0x21c] sm:$0xf]
        %v6533 = vld [vmem:[%s6 + $0x220] sm:$0xf]
        %v6534 = vld [vmem:[%s6 + $0x224] sm:$0xf]
        %v6535 = vld [vmem:[%s6 + $0x228] sm:$0xf]
        %v6536 = vld [vmem:[%s6 + $0x22c] sm:$0xf]
        %v6537 = vld [vmem:[%s6 + $0x230] sm:$0xf]
        %v6538 = vld [vmem:[%s6 + $0x234] sm:$0xf]
        %v6539 = vld [vmem:[%s6 + $0x238] sm:$0xf]
        %v6540 = vld [vmem:[%s6 + $0x23c] sm:$0xf]
        %v6541 = vld [vmem:[%s6 + $0x240] sm:$0xf]
        %v6542 = vld [vmem:[%s6 + $0x244] sm:$0xf]
        %v6543 = vld [vmem:[%s6 + $0x248] sm:$0xf]
        %v6544 = vld [vmem:[%s6 + $0x24c] sm:$0xf]
        %v6545 = vld [vmem:[%s6 + $0x250] sm:$0xf]
        %v6546 = vld [vmem:[%s6 + $0x254] sm:$0xf]
        %v6547 = vld [vmem:[%s6 + $0x258] sm:$0xf]
        %v6548 = vld [vmem:[%s6 + $0x25c] sm:$0xf]
        %v6549 = vld [vmem:[%s6 + $0x260] sm:$0xf]
        %v6550 = vld [vmem:[%s6 + $0x264] sm:$0xf]
        %v6551 = vld [vmem:[%s6 + $0x268] sm:$0xf]
        %v6552 = vld [vmem:[%s6 + $0x26c] sm:$0xf]
        %v6553 = vld [vmem:[%s6 + $0x270] sm:$0xf]
        %v6554 = vld [vmem:[%s6 + $0x274] sm:$0xf]
        %v6555 = vld [vmem:[%s6 + $0x278] sm:$0xf]
        %v6556 = vld [vmem:[%s6 + $0x27c] sm:$0xf]
        %v6557 = vld [vmem:[%s6 + $0x280] sm:$0xf]
        %v6558 = vld [vmem:[%s6 + $0x284] sm:$0xf]
        %v6559 = vld [vmem:[%s6 + $0x288] sm:$0xf]
        %v6560 = vld [vmem:[%s6 + $0x28c] sm:$0xf]
        %v6561 = vld [vmem:[%s6 + $0x290] sm:$0xf]
        %v6562 = vld [vmem:[%s6 + $0x294] sm:$0xf]
        %v6563 = vld [vmem:[%s6 + $0x298] sm:$0xf]
        %v6564 = vld [vmem:[%s6 + $0x29c] sm:$0xf]
        %v6565 = vld [vmem:[%s6 + $0x2a0] sm:$0xf]
        %v6566 = vld [vmem:[%s6 + $0x2a4] sm:$0xf]
        %v6567 = vld [vmem:[%s6 + $0x2a8] sm:$0xf]
        %v6568 = vld [vmem:[%s6 + $0x2ac] sm:$0xf]
        %v6569 = vld [vmem:[%s6 + $0x2b0] sm:$0xf]
        %v6570 = vld [vmem:[%s6 + $0x2b4] sm:$0xf]
        %v6571 = vld [vmem:[%s6 + $0x2b8] sm:$0xf]
        %v6572 = vld [vmem:[%s6 + $0x2bc] sm:$0xf]
        %v6573 = vld [vmem:[%s6 + $0x2c0] sm:$0xf]
        %v6574 = vld [vmem:[%s6 + $0x2c4] sm:$0xf]
        %v6575 = vld [vmem:[%s6 + $0x2c8] sm:$0xf]
        %v6576 = vld [vmem:[%s6 + $0x2cc] sm:$0xf]
        %v6577 = vld [vmem:[%s6 + $0x2d0] sm:$0xf]
        %v6578 = vld [vmem:[%s6 + $0x2d4] sm:$0xf]
        %v6579 = vld [vmem:[%s6 + $0x2d8] sm:$0xf]
        %v6580 = vld [vmem:[%s6 + $0x2dc] sm:$0xf]
        %v6581 = vld [vmem:[%s6 + $0x2e0] sm:$0xf]
        %v6582 = vld [vmem:[%s6 + $0x2e4] sm:$0xf]
        %v6583 = vld [vmem:[%s6 + $0x2e8] sm:$0xf]
        %v6584 = vld [vmem:[%s6 + $0x2ec] sm:$0xf]
        %v6585 = vld [vmem:[%s6 + $0x2f0] sm:$0xf]
        %v6586 = vld [vmem:[%s6 + $0x2f4] sm:$0xf]
        %v6587 = vld [vmem:[%s6 + $0x2f8] sm:$0xf]
        %v6588 = vld [vmem:[%s6 + $0x2fc] sm:$0xf]
        %v6589 = vld [vmem:[%s6 + $0x300] sm:$0xf]
        %v6590 = vld [vmem:[%s6 + $0x304] sm:$0xf]
        %v6591 = vld [vmem:[%s6 + $0x308] sm:$0xf]
        %v6592 = vld [vmem:[%s6 + $0x30c] sm:$0xf]
        %v6593 = vld [vmem:[%s6 + $0x310] sm:$0xf]
        %v6594 = vld [vmem:[%s6 + $0x314] sm:$0xf]
        %v6595 = vld [vmem:[%s6 + $0x318] sm:$0xf]
        %v6596 = vld [vmem:[%s6 + $0x31c] sm:$0xf]
        %v6597 = vld [vmem:[%s6 + $0x320] sm:$0xf]
        %v6598 = vld [vmem:[%s6 + $0x324] sm:$0xf]
        %v6599 = vld [vmem:[%s6 + $0x328] sm:$0xf]
        %v6600 = vld [vmem:[%s6 + $0x32c] sm:$0xf]
        %v6601 = vld [vmem:[%s6 + $0x330] sm:$0xf]
        %v6602 = vld [vmem:[%s6 + $0x334] sm:$0xf]
        %v6603 = vld [vmem:[%s6 + $0x338] sm:$0xf]
        %v6604 = vld [vmem:[%s6 + $0x33c] sm:$0xf]
        %v6605 = vld [vmem:[%s6 + $0x340] sm:$0xf]
        %v6606 = vld [vmem:[%s6 + $0x344] sm:$0xf]
        %v6607 = vld [vmem:[%s6 + $0x348] sm:$0xf]
        %v6608 = vld [vmem:[%s6 + $0x34c] sm:$0xf]
        %v6609 = vld [vmem:[%s6 + $0x350] sm:$0xf]
        %v6610 = vld [vmem:[%s6 + $0x354] sm:$0xf]
        %v6611 = vld [vmem:[%s6 + $0x358] sm:$0xf]
        %v6612 = vld [vmem:[%s6 + $0x35c] sm:$0xf]
        %v6613 = vld [vmem:[%s6 + $0x360] sm:$0xf]
        %v6614 = vld [vmem:[%s6 + $0x364] sm:$0xf]
        %v6615 = vld [vmem:[%s6 + $0x368] sm:$0xf]
        %v6616 = vld [vmem:[%s6 + $0x36c] sm:$0xf]
        %v6617 = vld [vmem:[%s6 + $0x370] sm:$0xf]
        %v6618 = vld [vmem:[%s6 + $0x374] sm:$0xf]
        %v6619 = vld [vmem:[%s6 + $0x378] sm:$0xf]
        %v6620 = vld [vmem:[%s6 + $0x37c] sm:$0xf]
        %v6621 = vld [vmem:[%s6 + $0x380] sm:$0xf]
        %v6622 = vld [vmem:[%s6 + $0x384] sm:$0xf]
        %v6623 = vld [vmem:[%s6 + $0x388] sm:$0xf]
        %v6624 = vld [vmem:[%s6 + $0x38c] sm:$0xf]
        %v6625 = vld [vmem:[%s6 + $0x390] sm:$0xf]
        %v6626 = vld [vmem:[%s6 + $0x394] sm:$0xf]
        %v6627 = vld [vmem:[%s6 + $0x398] sm:$0xf]
        %v6628 = vld [vmem:[%s6 + $0x39c] sm:$0xf]
        %v6629 = vld [vmem:[%s6 + $0x3a0] sm:$0xf]
        %v6630 = vld [vmem:[%s6 + $0x3a4] sm:$0xf]
        %v6631 = vld [vmem:[%s6 + $0x3a8] sm:$0xf]
        %v6632 = vld [vmem:[%s6 + $0x3ac] sm:$0xf]
        %v6633 = vld [vmem:[%s6 + $0x3b0] sm:$0xf]
        %v6634 = vld [vmem:[%s6 + $0x3b4] sm:$0xf]
        %v6635 = vld [vmem:[%s6 + $0x3b8] sm:$0xf]
        %v6636 = vld [vmem:[%s6 + $0x3bc] sm:$0xf]
        %v6637 = vld [vmem:[%s6 + $0x3c0] sm:$0xf]
        %v6638 = vld [vmem:[%s6 + $0x3c4] sm:$0xf]
        %v6639 = vld [vmem:[%s6 + $0x3c8] sm:$0xf]
        %v6640 = vld [vmem:[%s6 + $0x3cc] sm:$0xf]
        %v6641 = vld [vmem:[%s6 + $0x3d0] sm:$0xf]
        %v6642 = vld [vmem:[%s6 + $0x3d4] sm:$0xf]
        %v6643 = vld [vmem:[%s6 + $0x3d8] sm:$0xf]
        %v6644 = vld [vmem:[%s6 + $0x3dc] sm:$0xf]
        %v6645 = vld [vmem:[%s6 + $0x3e0] sm:$0xf]
        %v6646 = vld [vmem:[%s6 + $0x3e4] sm:$0xf]
        %v6647 = vld [vmem:[%s6 + $0x3e8] sm:$0xf]
        %v6648 = vld [vmem:[%s6 + $0x3ec] sm:$0xf]
        %v6649 = vld [vmem:[%s6 + $0x3f0] sm:$0xf]
        %v6650 = vld [vmem:[%s6 + $0x3f4] sm:$0xf]
        %v6651 = vld [vmem:[%s6 + $0x3f8] sm:$0xf]
        %v6652 = vld [vmem:[%s6 + $0x3fc] sm:$0xf]
        %v6653 = vld [vmem:[%s7] sm:$0x1]
        %v6910 = vunpack.c.l.b16 %v6397
        %v6911 = vunpack.c.l.b16 %v6398
        %v6912 = vunpack.c.l.b16 %v6399
        %v6913 = vunpack.c.l.b16 %v6400
        %v6914 = vunpack.c.l.b16 %v6401
        %v6915 = vunpack.c.l.b16 %v6402
        %v6916 = vunpack.c.l.b16 %v6403
        %v6917 = vunpack.c.l.b16 %v6404
        %v6918 = vunpack.c.l.b16 %v6405
        %v6919 = vunpack.c.l.b16 %v6406
        %v6920 = vunpack.c.l.b16 %v6407
        %v6921 = vunpack.c.l.b16 %v6408
        %v6922 = vunpack.c.l.b16 %v6409
        %v6923 = vunpack.c.l.b16 %v6410
        %v6924 = vunpack.c.l.b16 %v6411
        %v6925 = vunpack.c.l.b16 %v6412
        %v6926 = vunpack.c.l.b16 %v6413
        %v6927 = vunpack.c.l.b16 %v6414
        %v6928 = vunpack.c.l.b16 %v6415
        %v6929 = vunpack.c.l.b16 %v6416
        %v6930 = vunpack.c.l.b16 %v6417
        %v6931 = vunpack.c.l.b16 %v6418
        %v6932 = vunpack.c.l.b16 %v6419
        %v6933 = vunpack.c.l.b16 %v6420
        %v6934 = vunpack.c.l.b16 %v6421
        %v6935 = vunpack.c.l.b16 %v6422
        %v6936 = vunpack.c.l.b16 %v6423
        %v6937 = vunpack.c.l.b16 %v6424
        %v6938 = vunpack.c.l.b16 %v6425
        %v6939 = vunpack.c.l.b16 %v6426
        %v6940 = vunpack.c.l.b16 %v6427
        %v6941 = vunpack.c.l.b16 %v6428
        %v6942 = vunpack.c.l.b16 %v6429
        %v6943 = vunpack.c.l.b16 %v6430
        %v6944 = vunpack.c.l.b16 %v6431
        %v6945 = vunpack.c.l.b16 %v6432
        %v6946 = vunpack.c.l.b16 %v6433
        %v6947 = vunpack.c.l.b16 %v6434
        %v6948 = vunpack.c.l.b16 %v6435
        %v6949 = vunpack.c.l.b16 %v6436
        %v6950 = vunpack.c.l.b16 %v6437
        %v6951 = vunpack.c.l.b16 %v6438
        %v6952 = vunpack.c.l.b16 %v6439
        %v6953 = vunpack.c.l.b16 %v6440
        %v6954 = vunpack.c.l.b16 %v6441
        %v6955 = vunpack.c.l.b16 %v6442
        %v6956 = vunpack.c.l.b16 %v6443
        %v6957 = vunpack.c.l.b16 %v6444
        %v6958 = vunpack.c.l.b16 %v6445
        %v6959 = vunpack.c.l.b16 %v6446
        %v6960 = vunpack.c.l.b16 %v6447
        %v6961 = vunpack.c.l.b16 %v6448
        %v6962 = vunpack.c.l.b16 %v6449
        %v6963 = vunpack.c.l.b16 %v6450
        %v6964 = vunpack.c.l.b16 %v6451
        %v6965 = vunpack.c.l.b16 %v6452
        %v6966 = vunpack.c.l.b16 %v6453
        %v6967 = vunpack.c.l.b16 %v6454
        %v6968 = vunpack.c.l.b16 %v6455
        %v6969 = vunpack.c.l.b16 %v6456
        %v6970 = vunpack.c.l.b16 %v6457
        %v6971 = vunpack.c.l.b16 %v6458
        %v6972 = vunpack.c.l.b16 %v6459
        %v6973 = vunpack.c.l.b16 %v6460
        %v6974 = vunpack.c.l.b16 %v6461
        %v6975 = vunpack.c.l.b16 %v6462
        %v6976 = vunpack.c.l.b16 %v6463
        %v6977 = vunpack.c.l.b16 %v6464
        %v6978 = vunpack.c.l.b16 %v6465
        %v6979 = vunpack.c.l.b16 %v6466
        %v6980 = vunpack.c.l.b16 %v6467
        %v6981 = vunpack.c.l.b16 %v6468
        %v6982 = vunpack.c.l.b16 %v6469
        %v6983 = vunpack.c.l.b16 %v6470
        %v6984 = vunpack.c.l.b16 %v6471
        %v6985 = vunpack.c.l.b16 %v6472
        %v6986 = vunpack.c.l.b16 %v6473
        %v6987 = vunpack.c.l.b16 %v6474
        %v6988 = vunpack.c.l.b16 %v6475
        %v6989 = vunpack.c.l.b16 %v6476
        %v6990 = vunpack.c.l.b16 %v6477
        %v6991 = vunpack.c.l.b16 %v6478
        %v6992 = vunpack.c.l.b16 %v6479
        %v6993 = vunpack.c.l.b16 %v6480
        %v6994 = vunpack.c.l.b16 %v6481
        %v6995 = vunpack.c.l.b16 %v6482
        %v6996 = vunpack.c.l.b16 %v6483
        %v6997 = vunpack.c.l.b16 %v6484
        %v6998 = vunpack.c.l.b16 %v6485
        %v6999 = vunpack.c.l.b16 %v6486
        %v7000 = vunpack.c.l.b16 %v6487
        %v7001 = vunpack.c.l.b16 %v6488
        %v7002 = vunpack.c.l.b16 %v6489
        %v7003 = vunpack.c.l.b16 %v6490
        %v7004 = vunpack.c.l.b16 %v6491
        %v7005 = vunpack.c.l.b16 %v6492
        %v7006 = vunpack.c.l.b16 %v6493
        %v7007 = vunpack.c.l.b16 %v6494
        %v7008 = vunpack.c.l.b16 %v6495
        %v7009 = vunpack.c.l.b16 %v6496
        %v7010 = vunpack.c.l.b16 %v6497
        %v7011 = vunpack.c.l.b16 %v6498
        %v7012 = vunpack.c.l.b16 %v6499
        %v7013 = vunpack.c.l.b16 %v6500
        %v7014 = vunpack.c.l.b16 %v6501
        %v7015 = vunpack.c.l.b16 %v6502
        %v7016 = vunpack.c.l.b16 %v6503
        %v7017 = vunpack.c.l.b16 %v6504
        %v7018 = vunpack.c.l.b16 %v6505
        %v7019 = vunpack.c.l.b16 %v6506
        %v7020 = vunpack.c.l.b16 %v6507
        %v7021 = vunpack.c.l.b16 %v6508
        %v7022 = vunpack.c.l.b16 %v6509
        %v7023 = vunpack.c.l.b16 %v6510
        %v7024 = vunpack.c.l.b16 %v6511
        %v7025 = vunpack.c.l.b16 %v6512
        %v7026 = vunpack.c.l.b16 %v6513
        %v7027 = vunpack.c.l.b16 %v6514
        %v7028 = vunpack.c.l.b16 %v6515
        %v7029 = vunpack.c.l.b16 %v6516
        %v7030 = vunpack.c.l.b16 %v6517
        %v7031 = vunpack.c.l.b16 %v6518
        %v7032 = vunpack.c.l.b16 %v6519
        %v7033 = vunpack.c.l.b16 %v6520
        %v7034 = vunpack.c.l.b16 %v6521
        %v7035 = vunpack.c.l.b16 %v6522
        %v7036 = vunpack.c.l.b16 %v6523
        %v7037 = vunpack.c.l.b16 %v6524
        %v7038 = vunpack.c.l.b16 %v6525
        %v7039 = vunpack.c.l.b16 %v6526
        %v7040 = vunpack.c.l.b16 %v6527
        %v7041 = vunpack.c.l.b16 %v6528
        %v7042 = vunpack.c.l.b16 %v6529
        %v7043 = vunpack.c.l.b16 %v6530
        %v7044 = vunpack.c.l.b16 %v6531
        %v7045 = vunpack.c.l.b16 %v6532
        %v7046 = vunpack.c.l.b16 %v6533
        %v7047 = vunpack.c.l.b16 %v6534
        %v7048 = vunpack.c.l.b16 %v6535
        %v7049 = vunpack.c.l.b16 %v6536
        %v7050 = vunpack.c.l.b16 %v6537
        %v7051 = vunpack.c.l.b16 %v6538
        %v7052 = vunpack.c.l.b16 %v6539
        %v7053 = vunpack.c.l.b16 %v6540
        %v7054 = vunpack.c.l.b16 %v6541
        %v7055 = vunpack.c.l.b16 %v6542
        %v7056 = vunpack.c.l.b16 %v6543
        %v7057 = vunpack.c.l.b16 %v6544
        %v7058 = vunpack.c.l.b16 %v6545
        %v7059 = vunpack.c.l.b16 %v6546
        %v7060 = vunpack.c.l.b16 %v6547
        %v7061 = vunpack.c.l.b16 %v6548
        %v7062 = vunpack.c.l.b16 %v6549
        %v7063 = vunpack.c.l.b16 %v6550
        %v7064 = vunpack.c.l.b16 %v6551
        %v7065 = vunpack.c.l.b16 %v6552
        %v7066 = vunpack.c.l.b16 %v6553
        %v7067 = vunpack.c.l.b16 %v6554
        %v7068 = vunpack.c.l.b16 %v6555
        %v7069 = vunpack.c.l.b16 %v6556
        %v7070 = vunpack.c.l.b16 %v6557
        %v7071 = vunpack.c.l.b16 %v6558
        %v7072 = vunpack.c.l.b16 %v6559
        %v7073 = vunpack.c.l.b16 %v6560
        %v7074 = vunpack.c.l.b16 %v6561
        %v7075 = vunpack.c.l.b16 %v6562
        %v7076 = vunpack.c.l.b16 %v6563
        %v7077 = vunpack.c.l.b16 %v6564
        %v7078 = vunpack.c.l.b16 %v6565
        %v7079 = vunpack.c.l.b16 %v6566
        %v7080 = vunpack.c.l.b16 %v6567
        %v7081 = vunpack.c.l.b16 %v6568
        %v7082 = vunpack.c.l.b16 %v6569
        %v7083 = vunpack.c.l.b16 %v6570
        %v7084 = vunpack.c.l.b16 %v6571
        %v7085 = vunpack.c.l.b16 %v6572
        %v7086 = vunpack.c.l.b16 %v6573
        %v7087 = vunpack.c.l.b16 %v6574
        %v7088 = vunpack.c.l.b16 %v6575
        %v7089 = vunpack.c.l.b16 %v6576
        %v7090 = vunpack.c.l.b16 %v6577
        %v7091 = vunpack.c.l.b16 %v6578
        %v7092 = vunpack.c.l.b16 %v6579
        %v7093 = vunpack.c.l.b16 %v6580
        %v7094 = vunpack.c.l.b16 %v6581
        %v7095 = vunpack.c.l.b16 %v6582
        %v7096 = vunpack.c.l.b16 %v6583
        %v7097 = vunpack.c.l.b16 %v6584
        %v7098 = vunpack.c.l.b16 %v6585
        %v7099 = vunpack.c.l.b16 %v6586
        %v7100 = vunpack.c.l.b16 %v6587
        %v7101 = vunpack.c.l.b16 %v6588
        %v7102 = vunpack.c.l.b16 %v6589
        %v7103 = vunpack.c.l.b16 %v6590
        %v7104 = vunpack.c.l.b16 %v6591
        %v7105 = vunpack.c.l.b16 %v6592
        %v7106 = vunpack.c.l.b16 %v6593
        %v7107 = vunpack.c.l.b16 %v6594
        %v7108 = vunpack.c.l.b16 %v6595
        %v7109 = vunpack.c.l.b16 %v6596
        %v7110 = vunpack.c.l.b16 %v6597
        %v7111 = vunpack.c.l.b16 %v6598
        %v7112 = vunpack.c.l.b16 %v6599
        %v7113 = vunpack.c.l.b16 %v6600
        %v7114 = vunpack.c.l.b16 %v6601
        %v7115 = vunpack.c.l.b16 %v6602
        %v7116 = vunpack.c.l.b16 %v6603
        %v7117 = vunpack.c.l.b16 %v6604
        %v7118 = vunpack.c.l.b16 %v6605
        %v7119 = vunpack.c.l.b16 %v6606
        %v7120 = vunpack.c.l.b16 %v6607
        %v7121 = vunpack.c.l.b16 %v6608
        %v7122 = vunpack.c.l.b16 %v6609
        %v7123 = vunpack.c.l.b16 %v6610
        %v7124 = vunpack.c.l.b16 %v6611
        %v7125 = vunpack.c.l.b16 %v6612
        %v7126 = vunpack.c.l.b16 %v6613
        %v7127 = vunpack.c.l.b16 %v6614
        %v7128 = vunpack.c.l.b16 %v6615
        %v7129 = vunpack.c.l.b16 %v6616
        %v7130 = vunpack.c.l.b16 %v6617
        %v7131 = vunpack.c.l.b16 %v6618
        %v7132 = vunpack.c.l.b16 %v6619
        %v7133 = vunpack.c.l.b16 %v6620
        %v7134 = vunpack.c.l.b16 %v6621
        %v7135 = vunpack.c.l.b16 %v6622
        %v7136 = vunpack.c.l.b16 %v6623
        %v7137 = vunpack.c.l.b16 %v6624
        %v7138 = vunpack.c.l.b16 %v6625
        %v7139 = vunpack.c.l.b16 %v6626
        %v7140 = vunpack.c.l.b16 %v6627
        %v7141 = vunpack.c.l.b16 %v6628
        %v7142 = vunpack.c.l.b16 %v6629
        %v7143 = vunpack.c.l.b16 %v6630
        %v7144 = vunpack.c.l.b16 %v6631
        %v7145 = vunpack.c.l.b16 %v6632
        %v7146 = vunpack.c.l.b16 %v6633
        %v7147 = vunpack.c.l.b16 %v6634
        %v7148 = vunpack.c.l.b16 %v6635
        %v7149 = vunpack.c.l.b16 %v6636
        %v7150 = vunpack.c.l.b16 %v6637
        %v7151 = vunpack.c.l.b16 %v6638
        %v7152 = vunpack.c.l.b16 %v6639
        %v7153 = vunpack.c.l.b16 %v6640
        %v7154 = vunpack.c.l.b16 %v6641
        %v7155 = vunpack.c.l.b16 %v6642
        %v7156 = vunpack.c.l.b16 %v6643
        %v7157 = vunpack.c.l.b16 %v6644
        %v7158 = vunpack.c.l.b16 %v6645
        %v7159 = vunpack.c.l.b16 %v6646
        %v7160 = vunpack.c.l.b16 %v6647
        %v7161 = vunpack.c.l.b16 %v6648
        %v7162 = vunpack.c.l.b16 %v6649
        %v7163 = vunpack.c.l.b16 %v6650
        %v7164 = vunpack.c.l.b16 %v6651
        %v7165 = vunpack.c.l.b16 %v6652
        %v7166 = vpack.c.b16 %v6911, %v6910
        %v7167 = vpack.c.b16 %v6913, %v6912
        %v7168 = vpack.c.b16 %v6915, %v6914
        %v7169 = vpack.c.b16 %v6917, %v6916
        %v7170 = vpack.c.b16 %v6919, %v6918
        %v7171 = vpack.c.b16 %v6921, %v6920
        %v7172 = vpack.c.b16 %v6923, %v6922
        %v7173 = vpack.c.b16 %v6925, %v6924
        %v7174 = vpack.c.b16 %v6927, %v6926
        %v7175 = vpack.c.b16 %v6929, %v6928
        %v7176 = vpack.c.b16 %v6931, %v6930
        %v7177 = vpack.c.b16 %v6933, %v6932
        %v7178 = vpack.c.b16 %v6935, %v6934
        %v7179 = vpack.c.b16 %v6937, %v6936
        %v7180 = vpack.c.b16 %v6939, %v6938
        %v7181 = vpack.c.b16 %v6941, %v6940
        %v7182 = vpack.c.b16 %v6943, %v6942
        %v7183 = vpack.c.b16 %v6945, %v6944
        %v7184 = vpack.c.b16 %v6947, %v6946
        %v7185 = vpack.c.b16 %v6949, %v6948
        %v7186 = vpack.c.b16 %v6951, %v6950
        %v7187 = vpack.c.b16 %v6953, %v6952
        %v7188 = vpack.c.b16 %v6955, %v6954
        %v7189 = vpack.c.b16 %v6957, %v6956
        %v7190 = vpack.c.b16 %v6959, %v6958
        %v7191 = vpack.c.b16 %v6961, %v6960
        %v7192 = vpack.c.b16 %v6963, %v6962
        %v7193 = vpack.c.b16 %v6965, %v6964
        %v7194 = vpack.c.b16 %v6967, %v6966
        %v7195 = vpack.c.b16 %v6969, %v6968
        %v7196 = vpack.c.b16 %v6971, %v6970
        %v7197 = vpack.c.b16 %v6973, %v6972
        %v7198 = vpack.c.b16 %v6975, %v6974
        %v7199 = vpack.c.b16 %v6977, %v6976
        %v7200 = vpack.c.b16 %v6979, %v6978
        %v7201 = vpack.c.b16 %v6981, %v6980
        %v7202 = vpack.c.b16 %v6983, %v6982
        %v7203 = vpack.c.b16 %v6985, %v6984
        %v7204 = vpack.c.b16 %v6987, %v6986
        %v7205 = vpack.c.b16 %v6989, %v6988
        %v7206 = vpack.c.b16 %v6991, %v6990
        %v7207 = vpack.c.b16 %v6993, %v6992
        %v7208 = vpack.c.b16 %v6995, %v6994
        %v7209 = vpack.c.b16 %v6997, %v6996
        %v7210 = vpack.c.b16 %v6999, %v6998
        %v7211 = vpack.c.b16 %v7001, %v7000
        %v7212 = vpack.c.b16 %v7003, %v7002
        %v7213 = vpack.c.b16 %v7005, %v7004
        %v7214 = vpack.c.b16 %v7007, %v7006
        %v7215 = vpack.c.b16 %v7009, %v7008
        %v7216 = vpack.c.b16 %v7011, %v7010
        %v7217 = vpack.c.b16 %v7013, %v7012
        %v7218 = vpack.c.b16 %v7015, %v7014
        %v7219 = vpack.c.b16 %v7017, %v7016
        %v7220 = vpack.c.b16 %v7019, %v7018
        %v7221 = vpack.c.b16 %v7021, %v7020
        %v7222 = vpack.c.b16 %v7023, %v7022
        %v7223 = vpack.c.b16 %v7025, %v7024
        %v7224 = vpack.c.b16 %v7027, %v7026
        %v7225 = vpack.c.b16 %v7029, %v7028
        %v7226 = vpack.c.b16 %v7031, %v7030
        %v7227 = vpack.c.b16 %v7033, %v7032
        %v7228 = vpack.c.b16 %v7035, %v7034
        %v7229 = vpack.c.b16 %v7037, %v7036
        %v7230 = vpack.c.b16 %v7039, %v7038
        %v7231 = vpack.c.b16 %v7041, %v7040
        %v7232 = vpack.c.b16 %v7043, %v7042
        %v7233 = vpack.c.b16 %v7045, %v7044
        %v7234 = vpack.c.b16 %v7047, %v7046
        %v7235 = vpack.c.b16 %v7049, %v7048
        %v7236 = vpack.c.b16 %v7051, %v7050
        %v7237 = vpack.c.b16 %v7053, %v7052
        %v7238 = vpack.c.b16 %v7055, %v7054
        %v7239 = vpack.c.b16 %v7057, %v7056
        %v7240 = vpack.c.b16 %v7059, %v7058
        %v7241 = vpack.c.b16 %v7061, %v7060
        %v7242 = vpack.c.b16 %v7063, %v7062
        %v7243 = vpack.c.b16 %v7065, %v7064
        %v7244 = vpack.c.b16 %v7067, %v7066
        %v7245 = vpack.c.b16 %v7069, %v7068
        %v7246 = vpack.c.b16 %v7071, %v7070
        %v7247 = vpack.c.b16 %v7073, %v7072
        %v7248 = vpack.c.b16 %v7075, %v7074
        %v7249 = vpack.c.b16 %v7077, %v7076
        %v7250 = vpack.c.b16 %v7079, %v7078
        %v7251 = vpack.c.b16 %v7081, %v7080
        %v7252 = vpack.c.b16 %v7083, %v7082
        %v7253 = vpack.c.b16 %v7085, %v7084
        %v7254 = vpack.c.b16 %v7087, %v7086
        %v7255 = vpack.c.b16 %v7089, %v7088
        %v7256 = vpack.c.b16 %v7091, %v7090
        %v7257 = vpack.c.b16 %v7093, %v7092
        %v7258 = vpack.c.b16 %v7095, %v7094
        %v7259 = vpack.c.b16 %v7097, %v7096
        %v7260 = vpack.c.b16 %v7099, %v7098
        %v7261 = vpack.c.b16 %v7101, %v7100
        %v7262 = vpack.c.b16 %v7103, %v7102
        %v7263 = vpack.c.b16 %v7105, %v7104
        %v7264 = vpack.c.b16 %v7107, %v7106
        %v7265 = vpack.c.b16 %v7109, %v7108
        %v7266 = vpack.c.b16 %v7111, %v7110
        %v7267 = vpack.c.b16 %v7113, %v7112
        %v7268 = vpack.c.b16 %v7115, %v7114
        %v7269 = vpack.c.b16 %v7117, %v7116
        %v7270 = vpack.c.b16 %v7119, %v7118
        %v7271 = vpack.c.b16 %v7121, %v7120
        %v7272 = vpack.c.b16 %v7123, %v7122
        %v7273 = vpack.c.b16 %v7125, %v7124
        %v7274 = vpack.c.b16 %v7127, %v7126
        %v7275 = vpack.c.b16 %v7129, %v7128
        %v7276 = vpack.c.b16 %v7131, %v7130
        %v7277 = vpack.c.b16 %v7133, %v7132
        %v7278 = vpack.c.b16 %v7135, %v7134
        %v7279 = vpack.c.b16 %v7137, %v7136
        %v7280 = vpack.c.b16 %v7139, %v7138
        %v7281 = vpack.c.b16 %v7141, %v7140
        %v7282 = vpack.c.b16 %v7143, %v7142
        %v7283 = vpack.c.b16 %v7145, %v7144
        %v7284 = vpack.c.b16 %v7147, %v7146
        %v7285 = vpack.c.b16 %v7149, %v7148
        %v7286 = vpack.c.b16 %v7151, %v7150
        %v7287 = vpack.c.b16 %v7153, %v7152
        %v7288 = vpack.c.b16 %v7155, %v7154
        %v7289 = vpack.c.b16 %v7157, %v7156
        %v7290 = vpack.c.b16 %v7159, %v7158
        %v7291 = vpack.c.b16 %v7161, %v7160
        %v7292 = vpack.c.b16 %v7163, %v7162
        %v7293 = vpack.c.b16 %v7165, %v7164
        %7422 = vmatprep.subr.bf16.mxu0 0
        %7423 = vmatpush1.bf16.msra.mxu0 %v7166
        %7424 = vmatprep.subr.bf16.mxu0 0
        %7425 = vmatpush1.bf16.msra.mxu0 %v7167
        %7426 = vmatprep.subr.bf16.mxu0 0
        %7427 = vmatpush1.bf16.msra.mxu0 %v7168
        %7428 = vmatprep.subr.bf16.mxu0 0
        %7429 = vmatpush1.bf16.msra.mxu0 %v7169
        %7430 = vmatprep.subr.bf16.mxu0 0
        %7431 = vmatpush1.bf16.msra.mxu0 %v7170
        %7432 = vmatprep.subr.bf16.mxu0 0
        %7433 = vmatpush1.bf16.msra.mxu0 %v7171
        %7434 = vmatprep.subr.bf16.mxu0 0
        %7435 = vmatpush1.bf16.msra.mxu0 %v7172
        %7436 = vmatprep.subr.bf16.mxu0 0
        %7437 = vmatpush1.bf16.msra.mxu0 %v7173
        %7438 = vmatprep.subr.bf16.mxu0 0
        %7439 = vmatpush1.bf16.msra.mxu0 %v7174
        %7440 = vmatprep.subr.bf16.mxu0 0
        %7441 = vmatpush1.bf16.msra.mxu0 %v7175
        %7442 = vmatprep.subr.bf16.mxu0 0
        %7443 = vmatpush1.bf16.msra.mxu0 %v7176
        %7444 = vmatprep.subr.bf16.mxu0 0
        %7445 = vmatpush1.bf16.msra.mxu0 %v7177
        %7446 = vmatprep.subr.bf16.mxu0 0
        %7447 = vmatpush1.bf16.msra.mxu0 %v7178
        %7448 = vmatprep.subr.bf16.mxu0 0
        %7449 = vmatpush1.bf16.msra.mxu0 %v7179
        %7450 = vmatprep.subr.bf16.mxu0 0
        %7451 = vmatpush1.bf16.msra.mxu0 %v7180
        %7452 = vmatprep.subr.bf16.mxu0 0
        %7453 = vmatpush1.bf16.msra.mxu0 %v7181
        %7454 = vmatprep.mubr.bf16.mxu0 %v6382
        %7455 = vmatmul.mubr.bf16.gmra.mrb[0].mxu0 %v6381
        %v7456 = vpop.f32.mrb[0].mxu0
        %v7457 = vadd.f32 %v6653, %v7456
        %v7458 = vpop.f32.mrb[0].mxu0
        %v7459 = vpop.f32.mrb[0].mxu0
        %v7460 = vpop.f32.mrb[0].mxu0
        %7461 = vdwg.mxu0
        %7462 = vmatprep.subr.bf16.mxu0 0
        %7463 = vmatpush1.bf16.msra.mxu0 %v7182
        %7464 = vmatprep.subr.bf16.mxu0 0
        %7465 = vmatpush1.bf16.msra.mxu0 %v7183
        %7466 = vmatprep.subr.bf16.mxu0 0
        %7467 = vmatpush1.bf16.msra.mxu0 %v7184
        %7468 = vmatprep.subr.bf16.mxu0 0
        %7469 = vmatpush1.bf16.msra.mxu0 %v7185
        %7470 = vmatprep.subr.bf16.mxu0 0
        %7471 = vmatpush1.bf16.msra.mxu0 %v7186
        %7472 = vmatprep.subr.bf16.mxu0 0
        %7473 = vmatpush1.bf16.msra.mxu0 %v7187
        %7474 = vmatprep.subr.bf16.mxu0 0
        %7475 = vmatpush1.bf16.msra.mxu0 %v7188
        %7476 = vmatprep.subr.bf16.mxu0 0
        %7477 = vmatpush1.bf16.msra.mxu0 %v7189
        %7478 = vmatprep.subr.bf16.mxu0 0
        %7479 = vmatpush1.bf16.msra.mxu0 %v7190
        %7480 = vmatprep.subr.bf16.mxu0 0
        %7481 = vmatpush1.bf16.msra.mxu0 %v7191
        %7482 = vmatprep.subr.bf16.mxu0 0
        %7483 = vmatpush1.bf16.msra.mxu0 %v7192
        %7484 = vmatprep.subr.bf16.mxu0 0
        %7485 = vmatpush1.bf16.msra.mxu0 %v7193
        %7486 = vmatprep.subr.bf16.mxu0 0
        %7487 = vmatpush1.bf16.msra.mxu0 %v7194
        %7488 = vmatprep.subr.bf16.mxu0 0
        %7489 = vmatpush1.bf16.msra.mxu0 %v7195
        %7490 = vmatprep.subr.bf16.mxu0 0
        %7491 = vmatpush1.bf16.msra.mxu0 %v7196
        %7492 = vmatprep.subr.bf16.mxu0 0
        %7493 = vmatpush1.bf16.msra.mxu0 %v7197
        %7494 = vmatprep.mubr.bf16.mxu0 %v6384
        %7495 = vmatmul.mubr.bf16.gmra.mrb[0].mxu0 %v6383
        %v7496 = vpop.f32.mrb[0].mxu0
        %v7497 = vadd.f32 %v7457, %v7496
        %v7498 = vpop.f32.mrb[0].mxu0
        %v7499 = vpop.f32.mrb[0].mxu0
        %v7500 = vpop.f32.mrb[0].mxu0
        %7501 = vdwg.mxu0
        %7502 = vmatprep.subr.bf16.mxu0 0
        %7503 = vmatpush1.bf16.msra.mxu0 %v7198
        %7504 = vmatprep.subr.bf16.mxu0 0
        %7505 = vmatpush1.bf16.msra.mxu0 %v7199
        %7506 = vmatprep.subr.bf16.mxu0 0
        %7507 = vmatpush1.bf16.msra.mxu0 %v7200
        %7508 = vmatprep.subr.bf16.mxu0 0
        %7509 = vmatpush1.bf16.msra.mxu0 %v7201
        %7510 = vmatprep.subr.bf16.mxu0 0
        %7511 = vmatpush1.bf16.msra.mxu0 %v7202
        %7512 = vmatprep.subr.bf16.mxu0 0
        %7513 = vmatpush1.bf16.msra.mxu0 %v7203
        %7514 = vmatprep.subr.bf16.mxu0 0
        %7515 = vmatpush1.bf16.msra.mxu0 %v7204
        %7516 = vmatprep.subr.bf16.mxu0 0
        %7517 = vmatpush1.bf16.msra.mxu0 %v7205
        %7518 = vmatprep.subr.bf16.mxu0 0
        %7519 = vmatpush1.bf16.msra.mxu0 %v7206
        %7520 = vmatprep.subr.bf16.mxu0 0
        %7521 = vmatpush1.bf16.msra.mxu0 %v7207
        %7522 = vmatprep.subr.bf16.mxu0 0
        %7523 = vmatpush1.bf16.msra.mxu0 %v7208
        %7524 = vmatprep.subr.bf16.mxu0 0
        %7525 = vmatpush1.bf16.msra.mxu0 %v7209
        %7526 = vmatprep.subr.bf16.mxu0 0
        %7527 = vmatpush1.bf16.msra.mxu0 %v7210
        %7528 = vmatprep.subr.bf16.mxu0 0
        %7529 = vmatpush1.bf16.msra.mxu0 %v7211
        %7530 = vmatprep.subr.bf16.mxu0 0
        %7531 = vmatpush1.bf16.msra.mxu0 %v7212
        %7532 = vmatprep.subr.bf16.mxu0 0
        %7533 = vmatpush1.bf16.msra.mxu0 %v7213
        %7534 = vmatprep.mubr.bf16.mxu0 %v6386
        %7535 = vmatmul.mubr.bf16.gmra.mrb[0].mxu0 %v6385
        %v7536 = vpop.f32.mrb[0].mxu0
        %v7537 = vadd.f32 %v7497, %v7536
        %v7538 = vpop.f32.mrb[0].mxu0
        %v7539 = vpop.f32.mrb[0].mxu0
        %v7540 = vpop.f32.mrb[0].mxu0
        %7541 = vdwg.mxu0
        %7542 = vmatprep.subr.bf16.mxu0 0
        %7543 = vmatpush1.bf16.msra.mxu0 %v7214
        %7544 = vmatprep.subr.bf16.mxu0 0
        %7545 = vmatpush1.bf16.msra.mxu0 %v7215
        %7546 = vmatprep.subr.bf16.mxu0 0
        %7547 = vmatpush1.bf16.msra.mxu0 %v7216
        %7548 = vmatprep.subr.bf16.mxu0 0
        %7549 = vmatpush1.bf16.msra.mxu0 %v7217
        %7550 = vmatprep.subr.bf16.mxu0 0
        %7551 = vmatpush1.bf16.msra.mxu0 %v7218
        %7552 = vmatprep.subr.bf16.mxu0 0
        %7553 = vmatpush1.bf16.msra.mxu0 %v7219
        %7554 = vmatprep.subr.bf16.mxu0 0
        %7555 = vmatpush1.bf16.msra.mxu0 %v7220
        %7556 = vmatprep.subr.bf16.mxu0 0
        %7557 = vmatpush1.bf16.msra.mxu0 %v7221
        %7558 = vmatprep.subr.bf16.mxu0 0
        %7559 = vmatpush1.bf16.msra.mxu0 %v7222
        %7560 = vmatprep.subr.bf16.mxu0 0
        %7561 = vmatpush1.bf16.msra.mxu0 %v7223
        %7562 = vmatprep.subr.bf16.mxu0 0
        %7563 = vmatpush1.bf16.msra.mxu0 %v7224
        %7564 = vmatprep.subr.bf16.mxu0 0
        %7565 = vmatpush1.bf16.msra.mxu0 %v7225
        %7566 = vmatprep.subr.bf16.mxu0 0
        %7567 = vmatpush1.bf16.msra.mxu0 %v7226
        %7568 = vmatprep.subr.bf16.mxu0 0
        %7569 = vmatpush1.bf16.msra.mxu0 %v7227
        %7570 = vmatprep.subr.bf16.mxu0 0
        %7571 = vmatpush1.bf16.msra.mxu0 %v7228
        %7572 = vmatprep.subr.bf16.mxu0 0
        %7573 = vmatpush1.bf16.msra.mxu0 %v7229
        %7574 = vmatprep.mubr.bf16.mxu0 %v6388
        %7575 = vmatmul.mubr.bf16.gmra.mrb[0].mxu0 %v6387
        %v7576 = vpop.f32.mrb[0].mxu0
        %v7577 = vadd.f32 %v7537, %v7576
        %v7578 = vpop.f32.mrb[0].mxu0
        %v7579 = vpop.f32.mrb[0].mxu0
        %v7580 = vpop.f32.mrb[0].mxu0
        %7581 = vdwg.mxu0
        %7582 = vmatprep.subr.bf16.mxu0 0
        %7583 = vmatpush1.bf16.msra.mxu0 %v7230
        %7584 = vmatprep.subr.bf16.mxu0 0
        %7585 = vmatpush1.bf16.msra.mxu0 %v7231
        %7586 = vmatprep.subr.bf16.mxu0 0
        %7587 = vmatpush1.bf16.msra.mxu0 %v7232
        %7588 = vmatprep.subr.bf16.mxu0 0
        %7589 = vmatpush1.bf16.msra.mxu0 %v7233
        %7590 = vmatprep.subr.bf16.mxu0 0
        %7591 = vmatpush1.bf16.msra.mxu0 %v7234
        %7592 = vmatprep.subr.bf16.mxu0 0
        %7593 = vmatpush1.bf16.msra.mxu0 %v7235
        %7594 = vmatprep.subr.bf16.mxu0 0
        %7595 = vmatpush1.bf16.msra.mxu0 %v7236
        %7596 = vmatprep.subr.bf16.mxu0 0
        %7597 = vmatpush1.bf16.msra.mxu0 %v7237
        %7598 = vmatprep.subr.bf16.mxu0 0
        %7599 = vmatpush1.bf16.msra.mxu0 %v7238
        %7600 = vmatprep.subr.bf16.mxu0 0
        %7601 = vmatpush1.bf16.msra.mxu0 %v7239
        %7602 = vmatprep.subr.bf16.mxu0 0
        %7603 = vmatpush1.bf16.msra.mxu0 %v7240
        %7604 = vmatprep.subr.bf16.mxu0 0
        %7605 = vmatpush1.bf16.msra.mxu0 %v7241
        %7606 = vmatprep.subr.bf16.mxu0 0
        %7607 = vmatpush1.bf16.msra.mxu0 %v7242
        %7608 = vmatprep.subr.bf16.mxu0 0
        %7609 = vmatpush1.bf16.msra.mxu0 %v7243
        %7610 = vmatprep.subr.bf16.mxu0 0
        %7611 = vmatpush1.bf16.msra.mxu0 %v7244
        %7612 = vmatprep.subr.bf16.mxu0 0
        %7613 = vmatpush1.bf16.msra.mxu0 %v7245
        %7614 = vmatprep.mubr.bf16.mxu0 %v6390
        %7615 = vmatmul.mubr.bf16.gmra.mrb[0].mxu0 %v6389
        %v7616 = vpop.f32.mrb[0].mxu0
        %v7617 = vadd.f32 %v7577, %v7616
        %v7618 = vpop.f32.mrb[0].mxu0
        %v7619 = vpop.f32.mrb[0].mxu0
        %v7620 = vpop.f32.mrb[0].mxu0
        %7621 = vdwg.mxu0
        %7622 = vmatprep.subr.bf16.mxu0 0
        %7623 = vmatpush1.bf16.msra.mxu0 %v7246
        %7624 = vmatprep.subr.bf16.mxu0 0
        %7625 = vmatpush1.bf16.msra.mxu0 %v7247
        %7626 = vmatprep.subr.bf16.mxu0 0
        %7627 = vmatpush1.bf16.msra.mxu0 %v7248
        %7628 = vmatprep.subr.bf16.mxu0 0
        %7629 = vmatpush1.bf16.msra.mxu0 %v7249
        %7630 = vmatprep.subr.bf16.mxu0 0
        %7631 = vmatpush1.bf16.msra.mxu0 %v7250
        %7632 = vmatprep.subr.bf16.mxu0 0
        %7633 = vmatpush1.bf16.msra.mxu0 %v7251
        %7634 = vmatprep.subr.bf16.mxu0 0
        %7635 = vmatpush1.bf16.msra.mxu0 %v7252
        %7636 = vmatprep.subr.bf16.mxu0 0
        %7637 = vmatpush1.bf16.msra.mxu0 %v7253
        %7638 = vmatprep.subr.bf16.mxu0 0
        %7639 = vmatpush1.bf16.msra.mxu0 %v7254
        %7640 = vmatprep.subr.bf16.mxu0 0
        %7641 = vmatpush1.bf16.msra.mxu0 %v7255
        %7642 = vmatprep.subr.bf16.mxu0 0
        %7643 = vmatpush1.bf16.msra.mxu0 %v7256
        %7644 = vmatprep.subr.bf16.mxu0 0
        %7645 = vmatpush1.bf16.msra.mxu0 %v7257
        %7646 = vmatprep.subr.bf16.mxu0 0
        %7647 = vmatpush1.bf16.msra.mxu0 %v7258
        %7648 = vmatprep.subr.bf16.mxu0 0
        %7649 = vmatpush1.bf16.msra.mxu0 %v7259
        %7650 = vmatprep.subr.bf16.mxu0 0
        %7651 = vmatpush1.bf16.msra.mxu0 %v7260
        %7652 = vmatprep.subr.bf16.mxu0 0
        %7653 = vmatpush1.bf16.msra.mxu0 %v7261
        %7654 = vmatprep.mubr.bf16.mxu0 %v6392
        %7655 = vmatmul.mubr.bf16.gmra.mrb[0].mxu0 %v6391
        %v7656 = vpop.f32.mrb[0].mxu0
        %v7657 = vadd.f32 %v7617, %v7656
        %v7658 = vpop.f32.mrb[0].mxu0
        %v7659 = vpop.f32.mrb[0].mxu0
        %v7660 = vpop.f32.mrb[0].mxu0
        %7661 = vdwg.mxu0
        %7662 = vmatprep.subr.bf16.mxu0 0
        %7663 = vmatpush1.bf16.msra.mxu0 %v7262
        %7664 = vmatprep.subr.bf16.mxu0 0
        %7665 = vmatpush1.bf16.msra.mxu0 %v7263
        %7666 = vmatprep.subr.bf16.mxu0 0
        %7667 = vmatpush1.bf16.msra.mxu0 %v7264
        %7668 = vmatprep.subr.bf16.mxu0 0
        %7669 = vmatpush1.bf16.msra.mxu0 %v7265
        %7670 = vmatprep.subr.bf16.mxu0 0
        %7671 = vmatpush1.bf16.msra.mxu0 %v7266
        %7672 = vmatprep.subr.bf16.mxu0 0
        %7673 = vmatpush1.bf16.msra.mxu0 %v7267
        %7674 = vmatprep.subr.bf16.mxu0 0
        %7675 = vmatpush1.bf16.msra.mxu0 %v7268
        %7676 = vmatprep.subr.bf16.mxu0 0
        %7677 = vmatpush1.bf16.msra.mxu0 %v7269
        %7678 = vmatprep.subr.bf16.mxu0 0
        %7679 = vmatpush1.bf16.msra.mxu0 %v7270
        %7680 = vmatprep.subr.bf16.mxu0 0
        %7681 = vmatpush1.bf16.msra.mxu0 %v7271
        %7682 = vmatprep.subr.bf16.mxu0 0
        %7683 = vmatpush1.bf16.msra.mxu0 %v7272
        %7684 = vmatprep.subr.bf16.mxu0 0
        %7685 = vmatpush1.bf16.msra.mxu0 %v7273
        %7686 = vmatprep.subr.bf16.mxu0 0
        %7687 = vmatpush1.bf16.msra.mxu0 %v7274
        %7688 = vmatprep.subr.bf16.mxu0 0
        %7689 = vmatpush1.bf16.msra.mxu0 %v7275
        %7690 = vmatprep.subr.bf16.mxu0 0
        %7691 = vmatpush1.bf16.msra.mxu0 %v7276
        %7692 = vmatprep.subr.bf16.mxu0 0
        %7693 = vmatpush1.bf16.msra.mxu0 %v7277
        %7694 = vmatprep.mubr.bf16.mxu0 %v6394
        %7695 = vmatmul.mubr.bf16.gmra.mrb[0].mxu0 %v6393
        %v7696 = vpop.f32.mrb[0].mxu0
        %v7697 = vadd.f32 %v7657, %v7696
        %v7698 = vpop.f32.mrb[0].mxu0
        %v7699 = vpop.f32.mrb[0].mxu0
        %v7700 = vpop.f32.mrb[0].mxu0
        %7701 = vdwg.mxu0
        %7702 = vmatprep.subr.bf16.mxu0 0
        %7703 = vmatpush1.bf16.msra.mxu0 %v7278
        %7704 = vmatprep.subr.bf16.mxu0 0
        %7705 = vmatpush1.bf16.msra.mxu0 %v7279
        %7706 = vmatprep.subr.bf16.mxu0 0
        %7707 = vmatpush1.bf16.msra.mxu0 %v7280
        %7708 = vmatprep.subr.bf16.mxu0 0
        %7709 = vmatpush1.bf16.msra.mxu0 %v7281
        %7710 = vmatprep.subr.bf16.mxu0 0
        %7711 = vmatpush1.bf16.msra.mxu0 %v7282
        %7712 = vmatprep.subr.bf16.mxu0 0
        %7713 = vmatpush1.bf16.msra.mxu0 %v7283
        %7714 = vmatprep.subr.bf16.mxu0 0
        %7715 = vmatpush1.bf16.msra.mxu0 %v7284
        %7716 = vmatprep.subr.bf16.mxu0 0
        %7717 = vmatpush1.bf16.msra.mxu0 %v7285
        %7718 = vmatprep.subr.bf16.mxu0 0
        %7719 = vmatpush1.bf16.msra.mxu0 %v7286
        %7720 = vmatprep.subr.bf16.mxu0 0
        %7721 = vmatpush1.bf16.msra.mxu0 %v7287
        %7722 = vmatprep.subr.bf16.mxu0 0
        %7723 = vmatpush1.bf16.msra.mxu0 %v7288
        %7724 = vmatprep.subr.bf16.mxu0 0
        %7725 = vmatpush1.bf16.msra.mxu0 %v7289
        %7726 = vmatprep.subr.bf16.mxu0 0
        %7727 = vmatpush1.bf16.msra.mxu0 %v7290
        %7728 = vmatprep.subr.bf16.mxu0 0
        %7729 = vmatpush1.bf16.msra.mxu0 %v7291
        %7730 = vmatprep.subr.bf16.mxu0 0
        %7731 = vmatpush1.bf16.msra.mxu0 %v7292
        %7732 = vmatprep.subr.bf16.mxu0 0
        %7733 = vmatpush1.bf16.msra.mxu0 %v7293
        %7734 = vmatprep.mubr.bf16.mxu0 %v6396
        %7735 = vmatmul.mubr.bf16.gmra.mrb[0].mxu0 %v6395
        %v7736 = vpop.f32.mrb[0].mxu0
        %v7737 = vadd.f32 %v7697, %v7736
        %v7738 = vpop.f32.mrb[0].mxu0
        %v7739 = vpop.f32.mrb[0].mxu0
        %v7740 = vpop.f32.mrb[0].mxu0
        %7741 = vdwg.mxu0
        %v7742 = vxor.u32 %v7737, 2147483648
        %v7743 = vmul.f32 %v7742, 1.442695
        %v7744 = vpow.pop %v7743
        %v7745 = vadd.f32 %v7744, 1.0
        %v7746 = vrcp.pop %v7745
        %v7747 = vmul.f32 1.0, %v7746
        %s7748 = scalar_lea.vmem %s767, 1
        %7749 = vst [vmem:[%s7748] sm:$0x1] %v7747
        %s7750 = smul.u32 2, %s21
        %p7751 = scmp.lt.s32.totalorder %s7750, 3
        %s7752 = scalar_select %p7751, %s7750, 3
        %s7753 = smul.addr %s7752, 8
        %s7754 = smul.addr %s7753, 8
        %s7755 = scalar_lea.vmem %s8, %s7754
        %s7756 = smul.u32 2, %s21
        %p7757 = scmp.lt.s32.totalorder %s7756, 3
        %s7758 = scalar_select %p7757, %s7756, 3
        %s7759 = scalar_lea.vmem %s9, %s7758
        // Predicated region
        $region94: #{surf_deeppix_forward.1} parent=88 // pred_check
          %p7760 = pneg %p212
        $region95: #{surf_deeppix_forward.1} parent=88 // pred_check_branch
          %7762 = sbr.rel (%p7760) target = $region97
        $region96: #{surf_deeppix_forward.1} parent=88 // pred_region
          %s7763 = smul.u32 2, %s21
        $region97: #{surf_deeppix_forward.1} parent=88 // pred_fallthru
          _
        // Predicated region
        $region98: #{surf_deeppix_forward.1} parent=88 // pred_check
          %p7764 = pneg %p238
        $region99: #{surf_deeppix_forward.1} parent=88 // pred_check_branch
          %7766 = sbr.rel (%p7764) target = $region101
        $region100: #{surf_deeppix_forward.1} parent=88 // pred_region
          %s7767 = smul.u32 2, %s21
        $region101: #{surf_deeppix_forward.1} parent=88 // pred_fallthru
          _
      $region89: #{surf_deeppix_forward.1} parent=5 // pred_fallthru
        _
      %p7768 = scmp.le.s32.totalorder 2, %s16
      // Predicated region
      $region102: #{surf_deeppix_forward.1} parent=5 // pred_check
        %p7769 = pneg %p7768
      $region103: #{surf_deeppix_forward.1} parent=5 // pred_check_branch
        %7771 = sbr.rel (%p7769) target = $region105
      $region104: #{surf_deeppix_forward.1} parent=5 // pred_region
        %s7772 = ssub.s32 %s16, 2
        // Predicated region
        $region106: #{surf_deeppix_forward.1} parent=104 // pred_check
          %p7773 = pneg %p218
        $region107: #{surf_deeppix_forward.1} parent=104 // pred_check_branch
          %7775 = sbr.rel (%p7773) target = $region109
        $region108: #{surf_deeppix_forward.1} parent=104 // pred_region
          %s7776 = smul.u32 2, %s22
          %p7777 = scmp.lt.s32.totalorder %s7776, 3
          %s7778 = scalar_select %p7777, %s7776, 3
          %s7779 = smul.addr %s7778, 8
          %s7780 = smul.addr %s7779, 8
          %s7781 = scalar_lea.vmem %s8, %s7780
        $region109: #{surf_deeppix_forward.1} parent=104 // pred_fallthru
          _
        // Predicated region
        $region110: #{surf_deeppix_forward.1} parent=104 // pred_check
          %p7782 = pneg %p244
        $region111: #{surf_deeppix_forward.1} parent=104 // pred_check_branch
          %7784 = sbr.rel (%p7782) target = $region113
        $region112: #{surf_deeppix_forward.1} parent=104 // pred_region
          %s7785 = smul.u32 2, %s22
          %p7786 = scmp.lt.s32.totalorder %s7785, 3
          %s7787 = scalar_select %p7786, %s7785, 3
          %s7788 = scalar_lea.vmem %s9, %s7787
        $region113: #{surf_deeppix_forward.1} parent=104 // pred_fallthru
          _
      $region105: #{surf_deeppix_forward.1} parent=5 // pred_fallthru
        _
    $region6: #{surf_deeppix_forward.1} parent=1 // loop_footer
      %s20 = sadd.s32 1, %s16
    $region7: #{surf_deeppix_forward.1} parent=1 // loop_footer_branch
      %15 = sbr.rel target = $region3
    $region8: #{surf_deeppix_forward.1} parent=1 // loop_exit
      _

</llo_original>
